<compile_context>
chip_gen: v7x
topology: tpu7x:2x2x1
jax: 0.10.0
libtpu: 0.0.40
codegen_flags: <defaults>
</compile_context>

<pallas_src>
import jax
import jax.numpy as jnp
from jax.experimental import pallas as pl
from jax.experimental.pallas import tpu as pltpu  # noqa: F401  (TPU backend)


# ----------------------------- model hyperparams -----------------------------
B = 2            # batch
C_IN = 3         # video channels
FRAMES = 3       # frames per video
IMG = 16         # spatial H = W
PATCH = 4        # simplified-ViT patch size
HP = IMG // PATCH
HW = HP * HP     # spatial tokens per image
EMBED_DIM = 32   # vit.embed_dim
TL_FF_MULT = 2
TL_TOKENS = 8    # token_learner_num_output_tokens
DEPTH = 2        # transformer depth (constructor arg, small config)
HEADS = 4
DIM_HEAD = 16
FF_MULT = 4
NUM_ACTIONS = 11
ACTION_BINS = 256

N_IMG = B * FRAMES                 # images processed per forward
N_TOK = FRAMES * TL_TOKENS         # learned tokens per batch element
ROWS = B * N_TOK                   # batch flattened into rows for the transformer
SCALE = DIM_HEAD ** -0.5
NEG_INF = -1e30


# ----------------------------- in-kernel helpers ------------------------------
def _gelu(x):
    # tanh-approx GELU (see TODO(synk) above)
    return 0.5 * x * (1.0 + jnp.tanh(0.7978845608028654 * (x + 0.044715 * x * x * x)))


def _layernorm(x, gamma, eps=1e-5):
    mu = jnp.mean(x, axis=-1, keepdims=True)
    var = jnp.mean(jnp.square(x - mu), axis=-1, keepdims=True)
    return (x - mu) * jax.lax.rsqrt(var + eps) * gamma   # beta is a zero buffer


# --------------------------------- fused kernel --------------------------------
def _fused_rt1_kernel(
        patches_ref, pw_ref, pb_ref,
        tlw1_ref, tlb1_ref, tlw2_ref, tlb2_ref,
        pos_ref, mbias_ref,
        g1_ref, wqh_ref, wk_ref, wv_ref, wo_ref,
        g2_ref, wf1_ref, bf1_ref, wf2_ref, bf2_ref,
        pool_ref, hg_ref, hw_ref, hb_ref,
        out_ref):
    f32 = jnp.float32
    bf16 = jnp.bfloat16

    # ---- simplified ViT stem: patchify conv as fused matmul + bias ----
    tokens = jnp.dot(patches_ref[...], pw_ref[...],
                     preferred_element_type=f32) + pb_ref[...]            # (N_IMG*HW, D)
    tokens_b = tokens.astype(bf16)

    # ---- TokenLearner: grouped 1x1-conv MLP -> attention map ----
    h = _gelu(jnp.dot(tokens_b, tlw1_ref[...],
                      preferred_element_type=f32) + tlb1_ref[...])        # (N_IMG*HW, G*cff)
    tl_attn = jnp.dot(h.astype(bf16), tlw2_ref[...],
                      preferred_element_type=f32) + tlb2_ref[...]         # (N_IMG*HW, G)

    # per-image pooling: learned[g, c] = mean_n attn[n, g] * x[n, c]   (module uses
    # a plain spatial mean of x * attn — no softmax)
    inv_hw = 1.0 / HW
    learned = []
    for img in range(N_IMG):
        x_i = tokens[img * HW:(img + 1) * HW, :]                          # (HW, D)
        a_i = tl_attn[img * HW:(img + 1) * HW, :]                         # (HW, G)
        learned.append(jnp.einsum('ng,nc->gc', a_i, x_i,
                                  preferred_element_type=f32) * inv_hw)   # (G, D)
    x = jnp.concatenate(learned, axis=0) + pos_ref[...]                   # (ROWS, D)

    # ---- transformer: DEPTH layers, batch flattened in rows, multi-query attn ----
    mbias = mbias_ref[...]                                                # (HEADS*ROWS, ROWS)
    for l in range(DEPTH):
        xn = _layernorm(x, g1_ref[l])
        xn_b = xn.astype(bf16)

        wq_l = wqh_ref[l]                                                 # (HEADS*D, Dh) bf16
        q = jnp.concatenate(
            [jnp.dot(xn_b, wq_l[hh * EMBED_DIM:(hh + 1) * EMBED_DIM, :],
                     preferred_element_type=f32) for hh in range(HEADS)],
            axis=0) * SCALE                                               # (HEADS*ROWS, Dh)
        k = jnp.dot(xn_b, wk_ref[l], preferred_element_type=f32)          # (ROWS, Dh)
        v = jnp.dot(xn_b, wv_ref[l], preferred_element_type=f32)          # (ROWS, Dh)

        sim = jnp.einsum('id,jd->ij', q.astype(bf16), k.astype(bf16),
                         preferred_element_type=f32) + mbias              # (HEADS*ROWS, ROWS)
        sim = sim - jnp.max(sim, axis=-1, keepdims=True)
        e = jnp.exp(sim)
        p = e * pl.reciprocal(jnp.sum(e, axis=-1, keepdims=True), approx=True)
        o = jnp.dot(p.astype(bf16), v.astype(bf16),
                    preferred_element_type=f32)                           # (HEADS*ROWS, Dh)
        o = jnp.concatenate(
            [o[hh * ROWS:(hh + 1) * ROWS, :] for hh in range(HEADS)], axis=1)  # (ROWS, H*Dh)
        x = x + jnp.dot(o.astype(bf16), wo_ref[l], preferred_element_type=f32)

        xn2 = _layernorm(x, g2_ref[l])
        hdn = _gelu(jnp.dot(xn2.astype(bf16), wf1_ref[l],
                            preferred_element_type=f32) + bf1_ref[l])
        x = x + jnp.dot(hdn.astype(bf16), wf2_ref[l],
                        preferred_element_type=f32) + bf2_ref[l]

    # ---- head: per-frame mean pool (matmul), LayerNorm, logits (lane-dense) ----
    pooled = jnp.dot(pool_ref[...], x.astype(bf16), preferred_element_type=f32)   # (N_IMG, D)
    pooled = _layernorm(pooled, hg_ref[...])
    out_ref[...] = jnp.dot(pooled.astype(bf16), hw_ref[...],
                           preferred_element_type=f32) + hb_ref[...]


# --------------------------------- glue ----------------------------------------
def posemb_sincos_1d(seq, dim, temperature=10000.0):
    n = jnp.arange(seq, dtype=jnp.float32)[:, None]
    omega = jnp.arange(dim // 2, dtype=jnp.float32) / (dim // 2 - 1)
    omega = 1.0 / (temperature ** omega)
    angles = n * omega[None, :]
    return jnp.concatenate([jnp.sin(angles), jnp.cos(angles)], axis=1)


def init_params(key):
    std = 0.02
    ks = iter(jax.random.split(key, 32))
    p = {}
    # simplified ViT patch-embed stem
    p["patch_w"] = std * jax.random.normal(next(ks), (C_IN * PATCH * PATCH, EMBED_DIM), jnp.float32)
    p["patch_b"] = jnp.zeros((1, EMBED_DIM), jnp.float32)
    # TokenLearner (grouped 1x1 convs: conv1 dense over C, conv2 block-diagonal)
    cff = EMBED_DIM * TL_FF_MULT
    p["tl_w1"] = std * jax.random.normal(next(ks), (EMBED_DIM, TL_TOKENS * cff), jnp.float32)
    p["tl_b1"] = jnp.zeros((1, TL_TOKENS * cff), jnp.float32)
    w2_blocks = std * jax.random.normal(next(ks), (TL_TOKENS, cff), jnp.float32)
    w2_full = jnp.zeros((TL_TOKENS, cff, TL_TOKENS), jnp.float32)
    w2_full = w2_full.at[jnp.arange(TL_TOKENS), :, jnp.arange(TL_TOKENS)].set(w2_blocks)
    p["tl_w2"] = w2_full.reshape(TL_TOKENS * cff, TL_TOKENS)
    p["tl_b2"] = jnp.zeros((1, TL_TOKENS), jnp.float32)
    # transformer layers, stacked along a leading DEPTH axis
    inner = HEADS * DIM_HEAD
    p["g1"] = jnp.ones((DEPTH, 1, EMBED_DIM), jnp.float32)
    p["wqh"] = std * jax.random.normal(next(ks), (DEPTH, HEADS * EMBED_DIM, DIM_HEAD), jnp.float32)
    p["wk"] = std * jax.random.normal(next(ks), (DEPTH, EMBED_DIM, DIM_HEAD), jnp.float32)
    p["wv"] = std * jax.random.normal(next(ks), (DEPTH, EMBED_DIM, DIM_HEAD), jnp.float32)
    p["wo"] = std * jax.random.normal(next(ks), (DEPTH, inner, EMBED_DIM), jnp.float32)
    p["g2"] = jnp.ones((DEPTH, 1, EMBED_DIM), jnp.float32)
    p["wf1"] = std * jax.random.normal(next(ks), (DEPTH, EMBED_DIM, FF_MULT * EMBED_DIM), jnp.float32)
    p["bf1"] = jnp.zeros((DEPTH, 1, FF_MULT * EMBED_DIM), jnp.float32)
    p["wf2"] = std * jax.random.normal(next(ks), (DEPTH, FF_MULT * EMBED_DIM, EMBED_DIM), jnp.float32)
    p["bf2"] = jnp.zeros((DEPTH, 1, EMBED_DIM), jnp.float32)
    # to_logits head
    p["head_g"] = jnp.ones((1, EMBED_DIM), jnp.float32)
    p["head_w"] = std * jax.random.normal(next(ks), (EMBED_DIM, NUM_ACTIONS * ACTION_BINS), jnp.float32)
    p["head_b"] = jnp.zeros((1, NUM_ACTIONS * ACTION_BINS), jnp.float32)
    return p


def rt1_forward(video, params):
    # video: (B, C, F, H, W)  (PyTorch convention)
    b, c, f, hgt, wid = video.shape
    hp, wp = hgt // PATCH, wid // PATCH
    n_img = b * f
    bf16 = jnp.bfloat16

    # --- patchify (fused under jit; single HBM pass over the tiny input) ---
    images = jnp.transpose(video, (0, 2, 1, 3, 4)).reshape(n_img, c, hgt, wid)
    patches = images.reshape(n_img, c, hp, PATCH, wp, PATCH)
    patches = jnp.transpose(patches, (0, 2, 4, 1, 3, 5)).reshape(
        n_img * hp * wp, c * PATCH * PATCH).astype(bf16)

    # --- constants (constant-folded by XLA under jit) ---
    pos = posemb_sincos_1d(f, EMBED_DIM)
    pos = jnp.repeat(pos, TL_TOKENS, axis=0)                     # (F*G, D)
    pos_flat = jnp.tile(pos, (b, 1))                             # (B*F*G, D)

    frame_ok = (~jnp.triu(jnp.ones((f, f), dtype=bool), 1)).astype(jnp.float32)
    tok_ok = jnp.repeat(jnp.repeat(frame_ok, TL_TOKENS, axis=0), TL_TOKENS, axis=1)
    allowed = jnp.kron(jnp.eye(b, dtype=jnp.float32), tok_ok)    # block-diag over batch
    bias = jnp.where(allowed > 0.5, 0.0, NEG_INF).astype(jnp.float32)   # (B*N, B*N)
    mask_bias = jnp.tile(bias, (HEADS, 1))                       # (H*B*N, B*N)

    pool = (jnp.kron(jnp.eye(n_img, dtype=jnp.float32),
                     jnp.ones((1, TL_TOKENS), jnp.float32)) / TL_TOKENS).astype(bf16)

    out = pl.pallas_call(
        _fused_rt1_kernel,
        out_shape=jax.ShapeDtypeStruct((n_img, NUM_ACTIONS * ACTION_BINS), jnp.float32),
    )(patches,
      params["patch_w"].astype(bf16), params["patch_b"],
      params["tl_w1"].astype(bf16), params["tl_b1"],
      params["tl_w2"].astype(bf16), params["tl_b2"],
      pos_flat, mask_bias,
      params["g1"], params["wqh"].astype(bf16),
      params["wk"].astype(bf16), params["wv"].astype(bf16), params["wo"].astype(bf16),
      params["g2"], params["wf1"].astype(bf16), params["bf1"],
      params["wf2"].astype(bf16), params["bf2"],
      pool, params["head_g"], params["head_w"].astype(bf16), params["head_b"])

    return out.reshape(b, f, NUM_ACTIONS, ACTION_BINS)           # '... (a b) -> ... a b'


if __name__ == "__main__":
    key = jax.random.PRNGKey(0)
    k_video, k_params = jax.random.split(key)
    video = jax.random.normal(k_video, (B, C_IN, FRAMES, IMG, IMG), jnp.float32)
    params = init_params(k_params)

    fwd = jax.jit(rt1_forward)
    out = fwd(video, params)
    out = jax.block_until_ready(out)
    assert out.shape == (B, FRAMES, NUM_ACTIONS, ACTION_BINS)
    assert jnp.all(jnp.isfinite(out))
    print("KERNEL_OK")
</pallas_src>

<mosaic_0001>
module attributes {stable_mosaic.version = 11 : i64} {
  func.func @_fused_rt1_kernel(%arg0: memref<96x48xbf16, #tpu.memory_space<vmem>>, %arg1: memref<48x32xbf16, #tpu.memory_space<vmem>>, %arg2: memref<1x32xf32, #tpu.memory_space<vmem>>, %arg3: memref<32x512xbf16, #tpu.memory_space<vmem>>, %arg4: memref<1x512xf32, #tpu.memory_space<vmem>>, %arg5: memref<512x8xbf16, #tpu.memory_space<vmem>>, %arg6: memref<1x8xf32, #tpu.memory_space<vmem>>, %arg7: memref<48x32xf32, #tpu.memory_space<vmem>>, %arg8: memref<192x48xf32, #tpu.memory_space<vmem>>, %arg9: memref<2x1x32xf32, #tpu.memory_space<vmem>>, %arg10: memref<2x128x16xbf16, #tpu.memory_space<vmem>>, %arg11: memref<2x32x16xbf16, #tpu.memory_space<vmem>>, %arg12: memref<2x32x16xbf16, #tpu.memory_space<vmem>>, %arg13: memref<2x64x32xbf16, #tpu.memory_space<vmem>>, %arg14: memref<2x1x32xf32, #tpu.memory_space<vmem>>, %arg15: memref<2x32x128xbf16, #tpu.memory_space<vmem>>, %arg16: memref<2x1x128xf32, #tpu.memory_space<vmem>>, %arg17: memref<2x128x32xbf16, #tpu.memory_space<vmem>>, %arg18: memref<2x1x32xf32, #tpu.memory_space<vmem>>, %arg19: memref<6x48xbf16, #tpu.memory_space<vmem>>, %arg20: memref<1x32xf32, #tpu.memory_space<vmem>>, %arg21: memref<32x2816xbf16, #tpu.memory_space<vmem>>, %arg22: memref<1x2816xf32, #tpu.memory_space<vmem>>, %arg23: memref<6x2816xf32, #tpu.memory_space<vmem>>) attributes {dimension_semantics = [], scalar_prefetch = 0 : i64, scratch_operands = 0 : i64, tpu.core_type = #tpu.core_type<tc>} {
    %c0 = arith.constant 0 : index
    %c0_0 = arith.constant 0 : index
    %0 = vector.load %arg0[%c0, %c0_0] : memref<96x48xbf16, #tpu.memory_space<vmem>>, vector<96x48xbf16>
    %c0_1 = arith.constant 0 : index
    %c0_2 = arith.constant 0 : index
    %1 = vector.load %arg1[%c0_1, %c0_2] : memref<48x32xbf16, #tpu.memory_space<vmem>>, vector<48x32xbf16>
    %cst = arith.constant dense<0.000000e+00> : vector<96x32xf32>
    %2 = tpu.matmul %0, %1, %cst {dimension_numbers = #tpu.dot_dimension_numbers<[1], [0], [0], [1], [0, 0, 1, 1], [], []>} : vector<96x48xbf16>, vector<48x32xbf16>, vector<96x32xf32> -> vector<96x32xf32>
    %c0_3 = arith.constant 0 : index
    %c0_4 = arith.constant 0 : index
    %3 = vector.load %arg2[%c0_3, %c0_4] : memref<1x32xf32, #tpu.memory_space<vmem>>, vector<1x32xf32>
    %4 = vector.broadcast %3 : vector<1x32xf32> to vector<96x32xf32>
    %5 = arith.addf %2, %4 : vector<96x32xf32>
    %6 = arith.truncf %5 : vector<96x32xf32> to vector<96x32xbf16>
    %c0_5 = arith.constant 0 : index
    %c0_6 = arith.constant 0 : index
    %7 = vector.load %arg3[%c0_5, %c0_6] : memref<32x512xbf16, #tpu.memory_space<vmem>>, vector<32x512xbf16>
    %cst_7 = arith.constant dense<0.000000e+00> : vector<96x512xf32>
    %8 = tpu.matmul %6, %7, %cst_7 {dimension_numbers = #tpu.dot_dimension_numbers<[1], [0], [0], [1], [0, 0, 1, 1], [], []>} : vector<96x32xbf16>, vector<32x512xbf16>, vector<96x512xf32> -> vector<96x512xf32>
    %c0_8 = arith.constant 0 : index
    %c0_9 = arith.constant 0 : index
    %9 = vector.load %arg4[%c0_8, %c0_9] : memref<1x512xf32, #tpu.memory_space<vmem>>, vector<1x512xf32>
    %10 = vector.broadcast %9 : vector<1x512xf32> to vector<96x512xf32>
    %11 = arith.addf %8, %10 : vector<96x512xf32>
    %cst_10 = arith.constant 5.000000e-01 : f32
    %12 = vector.broadcast %cst_10 : f32 to vector<96x512xf32>
    %13 = arith.mulf %12, %11 : vector<96x512xf32>
    %cst_11 = arith.constant 4.471500e-02 : f32
    %14 = vector.broadcast %cst_11 : f32 to vector<96x512xf32>
    %15 = arith.mulf %14, %11 : vector<96x512xf32>
    %16 = arith.mulf %15, %11 : vector<96x512xf32>
    %17 = arith.mulf %16, %11 : vector<96x512xf32>
    %18 = arith.addf %11, %17 : vector<96x512xf32>
    %cst_12 = arith.constant 0.797884583 : f32
    %19 = vector.broadcast %cst_12 : f32 to vector<96x512xf32>
    %20 = arith.mulf %19, %18 : vector<96x512xf32>
    %21 = math.tanh %20 : vector<96x512xf32>
    %cst_13 = arith.constant 1.000000e+00 : f32
    %22 = vector.broadcast %cst_13 : f32 to vector<96x512xf32>
    %23 = arith.addf %22, %21 : vector<96x512xf32>
    %24 = arith.mulf %13, %23 : vector<96x512xf32>
    %25 = arith.truncf %24 : vector<96x512xf32> to vector<96x512xbf16>
    %c0_14 = arith.constant 0 : index
    %c0_15 = arith.constant 0 : index
    %26 = vector.load %arg5[%c0_14, %c0_15] : memref<512x8xbf16, #tpu.memory_space<vmem>>, vector<512x8xbf16>
    %cst_16 = arith.constant dense<0.000000e+00> : vector<96x8xf32>
    %27 = tpu.matmul %25, %26, %cst_16 {dimension_numbers = #tpu.dot_dimension_numbers<[1], [0], [0], [1], [0, 0, 1, 1], [], []>} : vector<96x512xbf16>, vector<512x8xbf16>, vector<96x8xf32> -> vector<96x8xf32>
    %c0_17 = arith.constant 0 : index
    %c0_18 = arith.constant 0 : index
    %28 = vector.load %arg6[%c0_17, %c0_18] : memref<1x8xf32, #tpu.memory_space<vmem>>, vector<1x8xf32>
    %29 = vector.broadcast %28 : vector<1x8xf32> to vector<96x8xf32>
    %30 = arith.addf %27, %29 : vector<96x8xf32>
    %31 = vector.extract_strided_slice %5 {offsets = [0, 0], sizes = [16, 32], strides = [1, 1]} : vector<96x32xf32> to vector<16x32xf32>
    %32 = vector.extract_strided_slice %30 {offsets = [0, 0], sizes = [16, 8], strides = [1, 1]} : vector<96x8xf32> to vector<16x8xf32>
    "tpu.trace_start"() <{level = 10 : i32, message = "ng,nc->gc"}> : () -> ()
    %cst_19 = arith.constant dense<0.000000e+00> : vector<8x32xf32>
    %33 = tpu.matmul %32, %31, %cst_19 {dimension_numbers = #tpu.dot_dimension_numbers<[0], [0], [1], [1], [0, 1, 1, 1], [], []>} : vector<16x8xf32>, vector<16x32xf32>, vector<8x32xf32> -> vector<8x32xf32>
    "tpu.trace_stop"() : () -> ()
    %cst_20 = arith.constant 6.250000e-02 : f32
    %34 = vector.broadcast %cst_20 : f32 to vector<8x32xf32>
    %35 = arith.mulf %33, %34 : vector<8x32xf32>
    %36 = vector.extract_strided_slice %5 {offsets = [16, 0], sizes = [16, 32], strides = [1, 1]} : vector<96x32xf32> to vector<16x32xf32>
    %37 = vector.extract_strided_slice %30 {offsets = [16, 0], sizes = [16, 8], strides = [1, 1]} : vector<96x8xf32> to vector<16x8xf32>
    "tpu.trace_start"() <{level = 10 : i32, message = "ng,nc->gc"}> : () -> ()
    %cst_21 = arith.constant dense<0.000000e+00> : vector<8x32xf32>
    %38 = tpu.matmul %37, %36, %cst_21 {dimension_numbers = #tpu.dot_dimension_numbers<[0], [0], [1], [1], [0, 1, 1, 1], [], []>} : vector<16x8xf32>, vector<16x32xf32>, vector<8x32xf32> -> vector<8x32xf32>
    "tpu.trace_stop"() : () -> ()
    %cst_22 = arith.constant 6.250000e-02 : f32
    %39 = vector.broadcast %cst_22 : f32 to vector<8x32xf32>
    %40 = arith.mulf %38, %39 : vector<8x32xf32>
    %41 = vector.extract_strided_slice %5 {offsets = [32, 0], sizes = [16, 32], strides = [1, 1]} : vector<96x32xf32> to vector<16x32xf32>
    %42 = vector.extract_strided_slice %30 {offsets = [32, 0], sizes = [16, 8], strides = [1, 1]} : vector<96x8xf32> to vector<16x8xf32>
    "tpu.trace_start"() <{level = 10 : i32, message = "ng,nc->gc"}> : () -> ()
    %cst_23 = arith.constant dense<0.000000e+00> : vector<8x32xf32>
    %43 = tpu.matmul %42, %41, %cst_23 {dimension_numbers = #tpu.dot_dimension_numbers<[0], [0], [1], [1], [0, 1, 1, 1], [], []>} : vector<16x8xf32>, vector<16x32xf32>, vector<8x32xf32> -> vector<8x32xf32>
    "tpu.trace_stop"() : () -> ()
    %cst_24 = arith.constant 6.250000e-02 : f32
    %44 = vector.broadcast %cst_24 : f32 to vector<8x32xf32>
    %45 = arith.mulf %43, %44 : vector<8x32xf32>
    %46 = vector.extract_strided_slice %5 {offsets = [48, 0], sizes = [16, 32], strides = [1, 1]} : vector<96x32xf32> to vector<16x32xf32>
    %47 = vector.extract_strided_slice %30 {offsets = [48, 0], sizes = [16, 8], strides = [1, 1]} : vector<96x8xf32> to vector<16x8xf32>
    "tpu.trace_start"() <{level = 10 : i32, message = "ng,nc->gc"}> : () -> ()
    %cst_25 = arith.constant dense<0.000000e+00> : vector<8x32xf32>
    %48 = tpu.matmul %47, %46, %cst_25 {dimension_numbers = #tpu.dot_dimension_numbers<[0], [0], [1], [1], [0, 1, 1, 1], [], []>} : vector<16x8xf32>, vector<16x32xf32>, vector<8x32xf32> -> vector<8x32xf32>
    "tpu.trace_stop"() : () -> ()
    %cst_26 = arith.constant 6.250000e-02 : f32
    %49 = vector.broadcast %cst_26 : f32 to vector<8x32xf32>
    %50 = arith.mulf %48, %49 : vector<8x32xf32>
    %51 = vector.extract_strided_slice %5 {offsets = [64, 0], sizes = [16, 32], strides = [1, 1]} : vector<96x32xf32> to vector<16x32xf32>
    %52 = vector.extract_strided_slice %30 {offsets = [64, 0], sizes = [16, 8], strides = [1, 1]} : vector<96x8xf32> to vector<16x8xf32>
    "tpu.trace_start"() <{level = 10 : i32, message = "ng,nc->gc"}> : () -> ()
    %cst_27 = arith.constant dense<0.000000e+00> : vector<8x32xf32>
    %53 = tpu.matmul %52, %51, %cst_27 {dimension_numbers = #tpu.dot_dimension_numbers<[0], [0], [1], [1], [0, 1, 1, 1], [], []>} : vector<16x8xf32>, vector<16x32xf32>, vector<8x32xf32> -> vector<8x32xf32>
    "tpu.trace_stop"() : () -> ()
    %cst_28 = arith.constant 6.250000e-02 : f32
    %54 = vector.broadcast %cst_28 : f32 to vector<8x32xf32>
    %55 = arith.mulf %53, %54 : vector<8x32xf32>
    %56 = vector.extract_strided_slice %5 {offsets = [80, 0], sizes = [16, 32], strides = [1, 1]} : vector<96x32xf32> to vector<16x32xf32>
    %57 = vector.extract_strided_slice %30 {offsets = [80, 0], sizes = [16, 8], strides = [1, 1]} : vector<96x8xf32> to vector<16x8xf32>
    "tpu.trace_start"() <{level = 10 : i32, message = "ng,nc->gc"}> : () -> ()
    %cst_29 = arith.constant dense<0.000000e+00> : vector<8x32xf32>
    %58 = tpu.matmul %57, %56, %cst_29 {dimension_numbers = #tpu.dot_dimension_numbers<[0], [0], [1], [1], [0, 1, 1, 1], [], []>} : vector<16x8xf32>, vector<16x32xf32>, vector<8x32xf32> -> vector<8x32xf32>
    "tpu.trace_stop"() : () -> ()
    %cst_30 = arith.constant 6.250000e-02 : f32
    %59 = vector.broadcast %cst_30 : f32 to vector<8x32xf32>
    %60 = arith.mulf %58, %59 : vector<8x32xf32>
    %61 = tpu.concatenate %35, %40, %45, %50, %55, %60 in 0 : vector<8x32xf32>, vector<8x32xf32>, vector<8x32xf32>, vector<8x32xf32>, vector<8x32xf32>, vector<8x32xf32> -> vector<48x32xf32>
    %c0_31 = arith.constant 0 : index
    %c0_32 = arith.constant 0 : index
    %62 = vector.load %arg7[%c0_31, %c0_32] : memref<48x32xf32, #tpu.memory_space<vmem>>, vector<48x32xf32>
    %63 = arith.addf %61, %62 : vector<48x32xf32>
    %c0_33 = arith.constant 0 : index
    %c0_34 = arith.constant 0 : index
    %64 = vector.load %arg8[%c0_33, %c0_34] : memref<192x48xf32, #tpu.memory_space<vmem>>, vector<192x48xf32>
    %c0_35 = arith.constant 0 : index
    %c0_36 = arith.constant 0 : index
    %c0_37 = arith.constant 0 : index
    %65 = vector.load %arg9[%c0_35, %c0_36, %c0_37] : memref<2x1x32xf32, #tpu.memory_space<vmem>>, vector<1x1x32xf32>
    %66 = vector.shape_cast %65 : vector<1x1x32xf32> to vector<1x32xf32>
    %cst_38 = arith.constant dense<0.000000e+00> : vector<48xf32>
    %67 = vector.multi_reduction <add>, %63, %cst_38 [1] : vector<48x32xf32> to vector<48xf32>
    %68 = vector.shape_cast %67 : vector<48xf32> to vector<48x1xf32>
    %cst_39 = arith.constant 3.200000e+01 : f32
    %69 = vector.broadcast %cst_39 : f32 to vector<48x1xf32>
    %70 = arith.divf %68, %69 : vector<48x1xf32>
    %71 = vector.broadcast %70 : vector<48x1xf32> to vector<48x32xf32>
    %72 = arith.subf %63, %71 : vector<48x32xf32>
    %73 = arith.mulf %72, %72 : vector<48x32xf32>
    %cst_40 = arith.constant dense<0.000000e+00> : vector<48xf32>
    %74 = vector.multi_reduction <add>, %73, %cst_40 [1] : vector<48x32xf32> to vector<48xf32>
    %75 = vector.shape_cast %74 : vector<48xf32> to vector<48x1xf32>
    %cst_41 = arith.constant 3.200000e+01 : f32
    %76 = vector.broadcast %cst_41 : f32 to vector<48x1xf32>
    %77 = arith.divf %75, %76 : vector<48x1xf32>
    %78 = vector.broadcast %70 : vector<48x1xf32> to vector<48x32xf32>
    %79 = arith.subf %63, %78 : vector<48x32xf32>
    %cst_42 = arith.constant 9.99999974E-6 : f32
    %80 = vector.broadcast %cst_42 : f32 to vector<48x1xf32>
    %81 = arith.addf %77, %80 : vector<48x1xf32>
    %82 = math.rsqrt %81 : vector<48x1xf32>
    %83 = vector.broadcast %82 : vector<48x1xf32> to vector<48x32xf32>
    %84 = arith.mulf %79, %83 : vector<48x32xf32>
    %85 = vector.broadcast %66 : vector<1x32xf32> to vector<48x32xf32>
    %86 = arith.mulf %84, %85 : vector<48x32xf32>
    %87 = arith.truncf %86 : vector<48x32xf32> to vector<48x32xbf16>
    %c0_43 = arith.constant 0 : index
    %c0_44 = arith.constant 0 : index
    %c0_45 = arith.constant 0 : index
    %88 = vector.load %arg10[%c0_43, %c0_44, %c0_45] : memref<2x128x16xbf16, #tpu.memory_space<vmem>>, vector<1x128x16xbf16>
    %89 = vector.shape_cast %88 : vector<1x128x16xbf16> to vector<128x16xbf16>
    %90 = vector.extract_strided_slice %89 {offsets = [0, 0], sizes = [32, 16], strides = [1, 1]} : vector<128x16xbf16> to vector<32x16xbf16>
    %cst_46 = arith.constant dense<0.000000e+00> : vector<48x16xf32>
    %91 = tpu.matmul %87, %90, %cst_46 {dimension_numbers = #tpu.dot_dimension_numbers<[1], [0], [0], [1], [0, 0, 1, 1], [], []>} : vector<48x32xbf16>, vector<32x16xbf16>, vector<48x16xf32> -> vector<48x16xf32>
    %92 = vector.extract_strided_slice %89 {offsets = [32, 0], sizes = [32, 16], strides = [1, 1]} : vector<128x16xbf16> to vector<32x16xbf16>
    %cst_47 = arith.constant dense<0.000000e+00> : vector<48x16xf32>
    %93 = tpu.matmul %87, %92, %cst_47 {dimension_numbers = #tpu.dot_dimension_numbers<[1], [0], [0], [1], [0, 0, 1, 1], [], []>} : vector<48x32xbf16>, vector<32x16xbf16>, vector<48x16xf32> -> vector<48x16xf32>
    %94 = vector.extract_strided_slice %89 {offsets = [64, 0], sizes = [32, 16], strides = [1, 1]} : vector<128x16xbf16> to vector<32x16xbf16>
    %cst_48 = arith.constant dense<0.000000e+00> : vector<48x16xf32>
    %95 = tpu.matmul %87, %94, %cst_48 {dimension_numbers = #tpu.dot_dimension_numbers<[1], [0], [0], [1], [0, 0, 1, 1], [], []>} : vector<48x32xbf16>, vector<32x16xbf16>, vector<48x16xf32> -> vector<48x16xf32>
    %96 = vector.extract_strided_slice %89 {offsets = [96, 0], sizes = [32, 16], strides = [1, 1]} : vector<128x16xbf16> to vector<32x16xbf16>
    %cst_49 = arith.constant dense<0.000000e+00> : vector<48x16xf32>
    %97 = tpu.matmul %87, %96, %cst_49 {dimension_numbers = #tpu.dot_dimension_numbers<[1], [0], [0], [1], [0, 0, 1, 1], [], []>} : vector<48x32xbf16>, vector<32x16xbf16>, vector<48x16xf32> -> vector<48x16xf32>
    %98 = tpu.concatenate %91, %93, %95, %97 in 0 : vector<48x16xf32>, vector<48x16xf32>, vector<48x16xf32>, vector<48x16xf32> -> vector<192x16xf32>
    %cst_50 = arith.constant 2.500000e-01 : f32
    %99 = vector.broadcast %cst_50 : f32 to vector<192x16xf32>
    %100 = arith.mulf %98, %99 : vector<192x16xf32>
    %c0_51 = arith.constant 0 : index
    %c0_52 = arith.constant 0 : index
    %c0_53 = arith.constant 0 : index
    %101 = vector.load %arg11[%c0_51, %c0_52, %c0_53] : memref<2x32x16xbf16, #tpu.memory_space<vmem>>, vector<1x32x16xbf16>
    %102 = vector.shape_cast %101 : vector<1x32x16xbf16> to vector<32x16xbf16>
    %cst_54 = arith.constant dense<0.000000e+00> : vector<48x16xf32>
    %103 = tpu.matmul %87, %102, %cst_54 {dimension_numbers = #tpu.dot_dimension_numbers<[1], [0], [0], [1], [0, 0, 1, 1], [], []>} : vector<48x32xbf16>, vector<32x16xbf16>, vector<48x16xf32> -> vector<48x16xf32>
    %c0_55 = arith.constant 0 : index
    %c0_56 = arith.constant 0 : index
    %c0_57 = arith.constant 0 : index
    %104 = vector.load %arg12[%c0_55, %c0_56, %c0_57] : memref<2x32x16xbf16, #tpu.memory_space<vmem>>, vector<1x32x16xbf16>
    %105 = vector.shape_cast %104 : vector<1x32x16xbf16> to vector<32x16xbf16>
    %cst_58 = arith.constant dense<0.000000e+00> : vector<48x16xf32>
    %106 = tpu.matmul %87, %105, %cst_58 {dimension_numbers = #tpu.dot_dimension_numbers<[1], [0], [0], [1], [0, 0, 1, 1], [], []>} : vector<48x32xbf16>, vector<32x16xbf16>, vector<48x16xf32> -> vector<48x16xf32>
    %107 = arith.truncf %100 : vector<192x16xf32> to vector<192x16xbf16>
    %108 = arith.truncf %103 : vector<48x16xf32> to vector<48x16xbf16>
    "tpu.trace_start"() <{level = 10 : i32, message = "id,jd->ij"}> : () -> ()
    %cst_59 = arith.constant dense<0.000000e+00> : vector<192x48xf32>
    %109 = tpu.matmul %107, %108, %cst_59 {dimension_numbers = #tpu.dot_dimension_numbers<[1], [1], [0], [0], [0, 0, 1, 0], [], []>} : vector<192x16xbf16>, vector<48x16xbf16>, vector<192x48xf32> -> vector<192x48xf32>
    "tpu.trace_stop"() : () -> ()
    %110 = arith.addf %109, %64 : vector<192x48xf32>
    %cst_60 = arith.constant dense<0xFF800000> : vector<192xf32>
    %111 = vector.multi_reduction <maximumf>, %110, %cst_60 [1] : vector<192x48xf32> to vector<192xf32>
    %112 = vector.shape_cast %111 : vector<192xf32> to vector<192x1xf32>
    %113 = vector.broadcast %112 : vector<192x1xf32> to vector<192x48xf32>
    %114 = arith.subf %110, %113 : vector<192x48xf32>
    %115 = math.exp %114 : vector<192x48xf32>
    %cst_61 = arith.constant dense<0.000000e+00> : vector<192xf32>
    %116 = vector.multi_reduction <add>, %115, %cst_61 [1] : vector<192x48xf32> to vector<192xf32>
    %117 = vector.shape_cast %116 : vector<192xf32> to vector<192x1xf32>
    %118 = tpu.reciprocal %117 {approx = true} : vector<192x1xf32> -> vector<192x1xf32>
    %119 = vector.broadcast %118 : vector<192x1xf32> to vector<192x48xf32>
    %120 = arith.mulf %115, %119 : vector<192x48xf32>
    %121 = arith.truncf %120 : vector<192x48xf32> to vector<192x48xbf16>
    %122 = arith.truncf %106 : vector<48x16xf32> to vector<48x16xbf16>
    %cst_62 = arith.constant dense<0.000000e+00> : vector<192x16xf32>
    %123 = tpu.matmul %121, %122, %cst_62 {dimension_numbers = #tpu.dot_dimension_numbers<[1], [0], [0], [1], [0, 0, 1, 1], [], []>} : vector<192x48xbf16>, vector<48x16xbf16>, vector<192x16xf32> -> vector<192x16xf32>
    %124 = vector.extract_strided_slice %123 {offsets = [0, 0], sizes = [48, 16], strides = [1, 1]} : vector<192x16xf32> to vector<48x16xf32>
    %125 = vector.extract_strided_slice %123 {offsets = [48, 0], sizes = [48, 16], strides = [1, 1]} : vector<192x16xf32> to vector<48x16xf32>
    %126 = vector.extract_strided_slice %123 {offsets = [96, 0], sizes = [48, 16], strides = [1, 1]} : vector<192x16xf32> to vector<48x16xf32>
    %127 = vector.extract_strided_slice %123 {offsets = [144, 0], sizes = [48, 16], strides = [1, 1]} : vector<192x16xf32> to vector<48x16xf32>
    %128 = tpu.concatenate %124, %125, %126, %127 in 1 : vector<48x16xf32>, vector<48x16xf32>, vector<48x16xf32>, vector<48x16xf32> -> vector<48x64xf32>
    %129 = arith.truncf %128 : vector<48x64xf32> to vector<48x64xbf16>
    %c0_63 = arith.constant 0 : index
    %c0_64 = arith.constant 0 : index
    %c0_65 = arith.constant 0 : index
    %130 = vector.load %arg13[%c0_63, %c0_64, %c0_65] : memref<2x64x32xbf16, #tpu.memory_space<vmem>>, vector<1x64x32xbf16>
    %131 = vector.shape_cast %130 : vector<1x64x32xbf16> to vector<64x32xbf16>
    %cst_66 = arith.constant dense<0.000000e+00> : vector<48x32xf32>
    %132 = tpu.matmul %129, %131, %cst_66 {dimension_numbers = #tpu.dot_dimension_numbers<[1], [0], [0], [1], [0, 0, 1, 1], [], []>} : vector<48x64xbf16>, vector<64x32xbf16>, vector<48x32xf32> -> vector<48x32xf32>
    %133 = arith.addf %63, %132 : vector<48x32xf32>
    %c0_67 = arith.constant 0 : index
    %c0_68 = arith.constant 0 : index
    %c0_69 = arith.constant 0 : index
    %134 = vector.load %arg14[%c0_67, %c0_68, %c0_69] : memref<2x1x32xf32, #tpu.memory_space<vmem>>, vector<1x1x32xf32>
    %135 = vector.shape_cast %134 : vector<1x1x32xf32> to vector<1x32xf32>
    %cst_70 = arith.constant dense<0.000000e+00> : vector<48xf32>
    %136 = vector.multi_reduction <add>, %133, %cst_70 [1] : vector<48x32xf32> to vector<48xf32>
    %137 = vector.shape_cast %136 : vector<48xf32> to vector<48x1xf32>
    %cst_71 = arith.constant 3.200000e+01 : f32
    %138 = vector.broadcast %cst_71 : f32 to vector<48x1xf32>
    %139 = arith.divf %137, %138 : vector<48x1xf32>
    %140 = vector.broadcast %139 : vector<48x1xf32> to vector<48x32xf32>
    %141 = arith.subf %133, %140 : vector<48x32xf32>
    %142 = arith.mulf %141, %141 : vector<48x32xf32>
    %cst_72 = arith.constant dense<0.000000e+00> : vector<48xf32>
    %143 = vector.multi_reduction <add>, %142, %cst_72 [1] : vector<48x32xf32> to vector<48xf32>
    %144 = vector.shape_cast %143 : vector<48xf32> to vector<48x1xf32>
    %cst_73 = arith.constant 3.200000e+01 : f32
    %145 = vector.broadcast %cst_73 : f32 to vector<48x1xf32>
    %146 = arith.divf %144, %145 : vector<48x1xf32>
    %147 = vector.broadcast %139 : vector<48x1xf32> to vector<48x32xf32>
    %148 = arith.subf %133, %147 : vector<48x32xf32>
    %cst_74 = arith.constant 9.99999974E-6 : f32
    %149 = vector.broadcast %cst_74 : f32 to vector<48x1xf32>
    %150 = arith.addf %146, %149 : vector<48x1xf32>
    %151 = math.rsqrt %150 : vector<48x1xf32>
    %152 = vector.broadcast %151 : vector<48x1xf32> to vector<48x32xf32>
    %153 = arith.mulf %148, %152 : vector<48x32xf32>
    %154 = vector.broadcast %135 : vector<1x32xf32> to vector<48x32xf32>
    %155 = arith.mulf %153, %154 : vector<48x32xf32>
    %156 = arith.truncf %155 : vector<48x32xf32> to vector<48x32xbf16>
    %c0_75 = arith.constant 0 : index
    %c0_76 = arith.constant 0 : index
    %c0_77 = arith.constant 0 : index
    %157 = vector.load %arg15[%c0_75, %c0_76, %c0_77] : memref<2x32x128xbf16, #tpu.memory_space<vmem>>, vector<1x32x128xbf16>
    %158 = vector.shape_cast %157 : vector<1x32x128xbf16> to vector<32x128xbf16>
    %cst_78 = arith.constant dense<0.000000e+00> : vector<48x128xf32>
    %159 = tpu.matmul %156, %158, %cst_78 {dimension_numbers = #tpu.dot_dimension_numbers<[1], [0], [0], [1], [0, 0, 1, 1], [], []>} : vector<48x32xbf16>, vector<32x128xbf16>, vector<48x128xf32> -> vector<48x128xf32>
    %c0_79 = arith.constant 0 : index
    %c0_80 = arith.constant 0 : index
    %c0_81 = arith.constant 0 : index
    %160 = vector.load %arg16[%c0_79, %c0_80, %c0_81] : memref<2x1x128xf32, #tpu.memory_space<vmem>>, vector<1x1x128xf32>
    %161 = vector.shape_cast %160 : vector<1x1x128xf32> to vector<1x128xf32>
    %162 = vector.broadcast %161 : vector<1x128xf32> to vector<48x128xf32>
    %163 = arith.addf %159, %162 : vector<48x128xf32>
    %cst_82 = arith.constant 5.000000e-01 : f32
    %164 = vector.broadcast %cst_82 : f32 to vector<48x128xf32>
    %165 = arith.mulf %164, %163 : vector<48x128xf32>
    %cst_83 = arith.constant 4.471500e-02 : f32
    %166 = vector.broadcast %cst_83 : f32 to vector<48x128xf32>
    %167 = arith.mulf %166, %163 : vector<48x128xf32>
    %168 = arith.mulf %167, %163 : vector<48x128xf32>
    %169 = arith.mulf %168, %163 : vector<48x128xf32>
    %170 = arith.addf %163, %169 : vector<48x128xf32>
    %cst_84 = arith.constant 0.797884583 : f32
    %171 = vector.broadcast %cst_84 : f32 to vector<48x128xf32>
    %172 = arith.mulf %171, %170 : vector<48x128xf32>
    %173 = math.tanh %172 : vector<48x128xf32>
    %cst_85 = arith.constant 1.000000e+00 : f32
    %174 = vector.broadcast %cst_85 : f32 to vector<48x128xf32>
    %175 = arith.addf %174, %173 : vector<48x128xf32>
    %176 = arith.mulf %165, %175 : vector<48x128xf32>
    %177 = arith.truncf %176 : vector<48x128xf32> to vector<48x128xbf16>
    %c0_86 = arith.constant 0 : index
    %c0_87 = arith.constant 0 : index
    %c0_88 = arith.constant 0 : index
    %178 = vector.load %arg17[%c0_86, %c0_87, %c0_88] : memref<2x128x32xbf16, #tpu.memory_space<vmem>>, vector<1x128x32xbf16>
    %179 = vector.shape_cast %178 : vector<1x128x32xbf16> to vector<128x32xbf16>
    %cst_89 = arith.constant dense<0.000000e+00> : vector<48x32xf32>
    %180 = tpu.matmul %177, %179, %cst_89 {dimension_numbers = #tpu.dot_dimension_numbers<[1], [0], [0], [1], [0, 0, 1, 1], [], []>} : vector<48x128xbf16>, vector<128x32xbf16>, vector<48x32xf32> -> vector<48x32xf32>
    %181 = arith.addf %133, %180 : vector<48x32xf32>
    %c0_90 = arith.constant 0 : index
    %c0_91 = arith.constant 0 : index
    %c0_92 = arith.constant 0 : index
    %182 = vector.load %arg18[%c0_90, %c0_91, %c0_92] : memref<2x1x32xf32, #tpu.memory_space<vmem>>, vector<1x1x32xf32>
    %183 = vector.shape_cast %182 : vector<1x1x32xf32> to vector<1x32xf32>
    %184 = vector.broadcast %183 : vector<1x32xf32> to vector<48x32xf32>
    %185 = arith.addf %181, %184 : vector<48x32xf32>
    %c1 = arith.constant 1 : index
    %c0_93 = arith.constant 0 : index
    %c0_94 = arith.constant 0 : index
    %186 = vector.load %arg9[%c1, %c0_93, %c0_94] : memref<2x1x32xf32, #tpu.memory_space<vmem>>, vector<1x1x32xf32>
    %187 = vector.shape_cast %186 : vector<1x1x32xf32> to vector<1x32xf32>
    %cst_95 = arith.constant dense<0.000000e+00> : vector<48xf32>
    %188 = vector.multi_reduction <add>, %185, %cst_95 [1] : vector<48x32xf32> to vector<48xf32>
    %189 = vector.shape_cast %188 : vector<48xf32> to vector<48x1xf32>
    %cst_96 = arith.constant 3.200000e+01 : f32
    %190 = vector.broadcast %cst_96 : f32 to vector<48x1xf32>
    %191 = arith.divf %189, %190 : vector<48x1xf32>
    %192 = vector.broadcast %191 : vector<48x1xf32> to vector<48x32xf32>
    %193 = arith.subf %185, %192 : vector<48x32xf32>
    %194 = arith.mulf %193, %193 : vector<48x32xf32>
    %cst_97 = arith.constant dense<0.000000e+00> : vector<48xf32>
    %195 = vector.multi_reduction <add>, %194, %cst_97 [1] : vector<48x32xf32> to vector<48xf32>
    %196 = vector.shape_cast %195 : vector<48xf32> to vector<48x1xf32>
    %cst_98 = arith.constant 3.200000e+01 : f32
    %197 = vector.broadcast %cst_98 : f32 to vector<48x1xf32>
    %198 = arith.divf %196, %197 : vector<48x1xf32>
    %199 = vector.broadcast %191 : vector<48x1xf32> to vector<48x32xf32>
    %200 = arith.subf %185, %199 : vector<48x32xf32>
    %cst_99 = arith.constant 9.99999974E-6 : f32
    %201 = vector.broadcast %cst_99 : f32 to vector<48x1xf32>
    %202 = arith.addf %198, %201 : vector<48x1xf32>
    %203 = math.rsqrt %202 : vector<48x1xf32>
    %204 = vector.broadcast %203 : vector<48x1xf32> to vector<48x32xf32>
    %205 = arith.mulf %200, %204 : vector<48x32xf32>
    %206 = vector.broadcast %187 : vector<1x32xf32> to vector<48x32xf32>
    %207 = arith.mulf %205, %206 : vector<48x32xf32>
    %208 = arith.truncf %207 : vector<48x32xf32> to vector<48x32xbf16>
    %c1_100 = arith.constant 1 : index
    %c0_101 = arith.constant 0 : index
    %c0_102 = arith.constant 0 : index
    %209 = vector.load %arg10[%c1_100, %c0_101, %c0_102] : memref<2x128x16xbf16, #tpu.memory_space<vmem>>, vector<1x128x16xbf16>
    %210 = vector.shape_cast %209 : vector<1x128x16xbf16> to vector<128x16xbf16>
    %211 = vector.extract_strided_slice %210 {offsets = [0, 0], sizes = [32, 16], strides = [1, 1]} : vector<128x16xbf16> to vector<32x16xbf16>
    %cst_103 = arith.constant dense<0.000000e+00> : vector<48x16xf32>
    %212 = tpu.matmul %208, %211, %cst_103 {dimension_numbers = #tpu.dot_dimension_numbers<[1], [0], [0], [1], [0, 0, 1, 1], [], []>} : vector<48x32xbf16>, vector<32x16xbf16>, vector<48x16xf32> -> vector<48x16xf32>
    %213 = vector.extract_strided_slice %210 {offsets = [32, 0], sizes = [32, 16], strides = [1, 1]} : vector<128x16xbf16> to vector<32x16xbf16>
    %cst_104 = arith.constant dense<0.000000e+00> : vector<48x16xf32>
    %214 = tpu.matmul %208, %213, %cst_104 {dimension_numbers = #tpu.dot_dimension_numbers<[1], [0], [0], [1], [0, 0, 1, 1], [], []>} : vector<48x32xbf16>, vector<32x16xbf16>, vector<48x16xf32> -> vector<48x16xf32>
    %215 = vector.extract_strided_slice %210 {offsets = [64, 0], sizes = [32, 16], strides = [1, 1]} : vector<128x16xbf16> to vector<32x16xbf16>
    %cst_105 = arith.constant dense<0.000000e+00> : vector<48x16xf32>
    %216 = tpu.matmul %208, %215, %cst_105 {dimension_numbers = #tpu.dot_dimension_numbers<[1], [0], [0], [1], [0, 0, 1, 1], [], []>} : vector<48x32xbf16>, vector<32x16xbf16>, vector<48x16xf32> -> vector<48x16xf32>
    %217 = vector.extract_strided_slice %210 {offsets = [96, 0], sizes = [32, 16], strides = [1, 1]} : vector<128x16xbf16> to vector<32x16xbf16>
    %cst_106 = arith.constant dense<0.000000e+00> : vector<48x16xf32>
    %218 = tpu.matmul %208, %217, %cst_106 {dimension_numbers = #tpu.dot_dimension_numbers<[1], [0], [0], [1], [0, 0, 1, 1], [], []>} : vector<48x32xbf16>, vector<32x16xbf16>, vector<48x16xf32> -> vector<48x16xf32>
    %219 = tpu.concatenate %212, %214, %216, %218 in 0 : vector<48x16xf32>, vector<48x16xf32>, vector<48x16xf32>, vector<48x16xf32> -> vector<192x16xf32>
    %cst_107 = arith.constant 2.500000e-01 : f32
    %220 = vector.broadcast %cst_107 : f32 to vector<192x16xf32>
    %221 = arith.mulf %219, %220 : vector<192x16xf32>
    %c1_108 = arith.constant 1 : index
    %c0_109 = arith.constant 0 : index
    %c0_110 = arith.constant 0 : index
    %222 = vector.load %arg11[%c1_108, %c0_109, %c0_110] : memref<2x32x16xbf16, #tpu.memory_space<vmem>>, vector<1x32x16xbf16>
    %223 = vector.shape_cast %222 : vector<1x32x16xbf16> to vector<32x16xbf16>
    %cst_111 = arith.constant dense<0.000000e+00> : vector<48x16xf32>
    %224 = tpu.matmul %208, %223, %cst_111 {dimension_numbers = #tpu.dot_dimension_numbers<[1], [0], [0], [1], [0, 0, 1, 1], [], []>} : vector<48x32xbf16>, vector<32x16xbf16>, vector<48x16xf32> -> vector<48x16xf32>
    %c1_112 = arith.constant 1 : index
    %c0_113 = arith.constant 0 : index
    %c0_114 = arith.constant 0 : index
    %225 = vector.load %arg12[%c1_112, %c0_113, %c0_114] : memref<2x32x16xbf16, #tpu.memory_space<vmem>>, vector<1x32x16xbf16>
    %226 = vector.shape_cast %225 : vector<1x32x16xbf16> to vector<32x16xbf16>
    %cst_115 = arith.constant dense<0.000000e+00> : vector<48x16xf32>
    %227 = tpu.matmul %208, %226, %cst_115 {dimension_numbers = #tpu.dot_dimension_numbers<[1], [0], [0], [1], [0, 0, 1, 1], [], []>} : vector<48x32xbf16>, vector<32x16xbf16>, vector<48x16xf32> -> vector<48x16xf32>
    %228 = arith.truncf %221 : vector<192x16xf32> to vector<192x16xbf16>
    %229 = arith.truncf %224 : vector<48x16xf32> to vector<48x16xbf16>
    "tpu.trace_start"() <{level = 10 : i32, message = "id,jd->ij"}> : () -> ()
    %cst_116 = arith.constant dense<0.000000e+00> : vector<192x48xf32>
    %230 = tpu.matmul %228, %229, %cst_116 {dimension_numbers = #tpu.dot_dimension_numbers<[1], [1], [0], [0], [0, 0, 1, 0], [], []>} : vector<192x16xbf16>, vector<48x16xbf16>, vector<192x48xf32> -> vector<192x48xf32>
    "tpu.trace_stop"() : () -> ()
    %231 = arith.addf %230, %64 : vector<192x48xf32>
    %cst_117 = arith.constant dense<0xFF800000> : vector<192xf32>
    %232 = vector.multi_reduction <maximumf>, %231, %cst_117 [1] : vector<192x48xf32> to vector<192xf32>
    %233 = vector.shape_cast %232 : vector<192xf32> to vector<192x1xf32>
    %234 = vector.broadcast %233 : vector<192x1xf32> to vector<192x48xf32>
    %235 = arith.subf %231, %234 : vector<192x48xf32>
    %236 = math.exp %235 : vector<192x48xf32>
    %cst_118 = arith.constant dense<0.000000e+00> : vector<192xf32>
    %237 = vector.multi_reduction <add>, %236, %cst_118 [1] : vector<192x48xf32> to vector<192xf32>
    %238 = vector.shape_cast %237 : vector<192xf32> to vector<192x1xf32>
    %239 = tpu.reciprocal %238 {approx = true} : vector<192x1xf32> -> vector<192x1xf32>
    %240 = vector.broadcast %239 : vector<192x1xf32> to vector<192x48xf32>
    %241 = arith.mulf %236, %240 : vector<192x48xf32>
    %242 = arith.truncf %241 : vector<192x48xf32> to vector<192x48xbf16>
    %243 = arith.truncf %227 : vector<48x16xf32> to vector<48x16xbf16>
    %cst_119 = arith.constant dense<0.000000e+00> : vector<192x16xf32>
    %244 = tpu.matmul %242, %243, %cst_119 {dimension_numbers = #tpu.dot_dimension_numbers<[1], [0], [0], [1], [0, 0, 1, 1], [], []>} : vector<192x48xbf16>, vector<48x16xbf16>, vector<192x16xf32> -> vector<192x16xf32>
    %245 = vector.extract_strided_slice %244 {offsets = [0, 0], sizes = [48, 16], strides = [1, 1]} : vector<192x16xf32> to vector<48x16xf32>
    %246 = vector.extract_strided_slice %244 {offsets = [48, 0], sizes = [48, 16], strides = [1, 1]} : vector<192x16xf32> to vector<48x16xf32>
    %247 = vector.extract_strided_slice %244 {offsets = [96, 0], sizes = [48, 16], strides = [1, 1]} : vector<192x16xf32> to vector<48x16xf32>
    %248 = vector.extract_strided_slice %244 {offsets = [144, 0], sizes = [48, 16], strides = [1, 1]} : vector<192x16xf32> to vector<48x16xf32>
    %249 = tpu.concatenate %245, %246, %247, %248 in 1 : vector<48x16xf32>, vector<48x16xf32>, vector<48x16xf32>, vector<48x16xf32> -> vector<48x64xf32>
    %250 = arith.truncf %249 : vector<48x64xf32> to vector<48x64xbf16>
    %c1_120 = arith.constant 1 : index
    %c0_121 = arith.constant 0 : index
    %c0_122 = arith.constant 0 : index
    %251 = vector.load %arg13[%c1_120, %c0_121, %c0_122] : memref<2x64x32xbf16, #tpu.memory_space<vmem>>, vector<1x64x32xbf16>
    %252 = vector.shape_cast %251 : vector<1x64x32xbf16> to vector<64x32xbf16>
    %cst_123 = arith.constant dense<0.000000e+00> : vector<48x32xf32>
    %253 = tpu.matmul %250, %252, %cst_123 {dimension_numbers = #tpu.dot_dimension_numbers<[1], [0], [0], [1], [0, 0, 1, 1], [], []>} : vector<48x64xbf16>, vector<64x32xbf16>, vector<48x32xf32> -> vector<48x32xf32>
    %254 = arith.addf %185, %253 : vector<48x32xf32>
    %c1_124 = arith.constant 1 : index
    %c0_125 = arith.constant 0 : index
    %c0_126 = arith.constant 0 : index
    %255 = vector.load %arg14[%c1_124, %c0_125, %c0_126] : memref<2x1x32xf32, #tpu.memory_space<vmem>>, vector<1x1x32xf32>
    %256 = vector.shape_cast %255 : vector<1x1x32xf32> to vector<1x32xf32>
    %cst_127 = arith.constant dense<0.000000e+00> : vector<48xf32>
    %257 = vector.multi_reduction <add>, %254, %cst_127 [1] : vector<48x32xf32> to vector<48xf32>
    %258 = vector.shape_cast %257 : vector<48xf32> to vector<48x1xf32>
    %cst_128 = arith.constant 3.200000e+01 : f32
    %259 = vector.broadcast %cst_128 : f32 to vector<48x1xf32>
    %260 = arith.divf %258, %259 : vector<48x1xf32>
    %261 = vector.broadcast %260 : vector<48x1xf32> to vector<48x32xf32>
    %262 = arith.subf %254, %261 : vector<48x32xf32>
    %263 = arith.mulf %262, %262 : vector<48x32xf32>
    %cst_129 = arith.constant dense<0.000000e+00> : vector<48xf32>
    %264 = vector.multi_reduction <add>, %263, %cst_129 [1] : vector<48x32xf32> to vector<48xf32>
    %265 = vector.shape_cast %264 : vector<48xf32> to vector<48x1xf32>
    %cst_130 = arith.constant 3.200000e+01 : f32
    %266 = vector.broadcast %cst_130 : f32 to vector<48x1xf32>
    %267 = arith.divf %265, %266 : vector<48x1xf32>
    %268 = vector.broadcast %260 : vector<48x1xf32> to vector<48x32xf32>
    %269 = arith.subf %254, %268 : vector<48x32xf32>
    %cst_131 = arith.constant 9.99999974E-6 : f32
    %270 = vector.broadcast %cst_131 : f32 to vector<48x1xf32>
    %271 = arith.addf %267, %270 : vector<48x1xf32>
    %272 = math.rsqrt %271 : vector<48x1xf32>
    %273 = vector.broadcast %272 : vector<48x1xf32> to vector<48x32xf32>
    %274 = arith.mulf %269, %273 : vector<48x32xf32>
    %275 = vector.broadcast %256 : vector<1x32xf32> to vector<48x32xf32>
    %276 = arith.mulf %274, %275 : vector<48x32xf32>
    %277 = arith.truncf %276 : vector<48x32xf32> to vector<48x32xbf16>
    %c1_132 = arith.constant 1 : index
    %c0_133 = arith.constant 0 : index
    %c0_134 = arith.constant 0 : index
    %278 = vector.load %arg15[%c1_132, %c0_133, %c0_134] : memref<2x32x128xbf16, #tpu.memory_space<vmem>>, vector<1x32x128xbf16>
    %279 = vector.shape_cast %278 : vector<1x32x128xbf16> to vector<32x128xbf16>
    %cst_135 = arith.constant dense<0.000000e+00> : vector<48x128xf32>
    %280 = tpu.matmul %277, %279, %cst_135 {dimension_numbers = #tpu.dot_dimension_numbers<[1], [0], [0], [1], [0, 0, 1, 1], [], []>} : vector<48x32xbf16>, vector<32x128xbf16>, vector<48x128xf32> -> vector<48x128xf32>
    %c1_136 = arith.constant 1 : index
    %c0_137 = arith.constant 0 : index
    %c0_138 = arith.constant 0 : index
    %281 = vector.load %arg16[%c1_136, %c0_137, %c0_138] : memref<2x1x128xf32, #tpu.memory_space<vmem>>, vector<1x1x128xf32>
    %282 = vector.shape_cast %281 : vector<1x1x128xf32> to vector<1x128xf32>
    %283 = vector.broadcast %282 : vector<1x128xf32> to vector<48x128xf32>
    %284 = arith.addf %280, %283 : vector<48x128xf32>
    %cst_139 = arith.constant 5.000000e-01 : f32
    %285 = vector.broadcast %cst_139 : f32 to vector<48x128xf32>
    %286 = arith.mulf %285, %284 : vector<48x128xf32>
    %cst_140 = arith.constant 4.471500e-02 : f32
    %287 = vector.broadcast %cst_140 : f32 to vector<48x128xf32>
    %288 = arith.mulf %287, %284 : vector<48x128xf32>
    %289 = arith.mulf %288, %284 : vector<48x128xf32>
    %290 = arith.mulf %289, %284 : vector<48x128xf32>
    %291 = arith.addf %284, %290 : vector<48x128xf32>
    %cst_141 = arith.constant 0.797884583 : f32
    %292 = vector.broadcast %cst_141 : f32 to vector<48x128xf32>
    %293 = arith.mulf %292, %291 : vector<48x128xf32>
    %294 = math.tanh %293 : vector<48x128xf32>
    %cst_142 = arith.constant 1.000000e+00 : f32
    %295 = vector.broadcast %cst_142 : f32 to vector<48x128xf32>
    %296 = arith.addf %295, %294 : vector<48x128xf32>
    %297 = arith.mulf %286, %296 : vector<48x128xf32>
    %298 = arith.truncf %297 : vector<48x128xf32> to vector<48x128xbf16>
    %c1_143 = arith.constant 1 : index
    %c0_144 = arith.constant 0 : index
    %c0_145 = arith.constant 0 : index
    %299 = vector.load %arg17[%c1_143, %c0_144, %c0_145] : memref<2x128x32xbf16, #tpu.memory_space<vmem>>, vector<1x128x32xbf16>
    %300 = vector.shape_cast %299 : vector<1x128x32xbf16> to vector<128x32xbf16>
    %cst_146 = arith.constant dense<0.000000e+00> : vector<48x32xf32>
    %301 = tpu.matmul %298, %300, %cst_146 {dimension_numbers = #tpu.dot_dimension_numbers<[1], [0], [0], [1], [0, 0, 1, 1], [], []>} : vector<48x128xbf16>, vector<128x32xbf16>, vector<48x32xf32> -> vector<48x32xf32>
    %302 = arith.addf %254, %301 : vector<48x32xf32>
    %c1_147 = arith.constant 1 : index
    %c0_148 = arith.constant 0 : index
    %c0_149 = arith.constant 0 : index
    %303 = vector.load %arg18[%c1_147, %c0_148, %c0_149] : memref<2x1x32xf32, #tpu.memory_space<vmem>>, vector<1x1x32xf32>
    %304 = vector.shape_cast %303 : vector<1x1x32xf32> to vector<1x32xf32>
    %305 = vector.broadcast %304 : vector<1x32xf32> to vector<48x32xf32>
    %306 = arith.addf %302, %305 : vector<48x32xf32>
    %c0_150 = arith.constant 0 : index
    %c0_151 = arith.constant 0 : index
    %307 = vector.load %arg19[%c0_150, %c0_151] : memref<6x48xbf16, #tpu.memory_space<vmem>>, vector<6x48xbf16>
    %308 = arith.truncf %306 : vector<48x32xf32> to vector<48x32xbf16>
    %cst_152 = arith.constant dense<0.000000e+00> : vector<6x32xf32>
    %309 = tpu.matmul %307, %308, %cst_152 {dimension_numbers = #tpu.dot_dimension_numbers<[1], [0], [0], [1], [0, 0, 1, 1], [], []>} : vector<6x48xbf16>, vector<48x32xbf16>, vector<6x32xf32> -> vector<6x32xf32>
    %c0_153 = arith.constant 0 : index
    %c0_154 = arith.constant 0 : index
    %310 = vector.load %arg20[%c0_153, %c0_154] : memref<1x32xf32, #tpu.memory_space<vmem>>, vector<1x32xf32>
    %cst_155 = arith.constant dense<0.000000e+00> : vector<6xf32>
    %311 = vector.multi_reduction <add>, %309, %cst_155 [1] : vector<6x32xf32> to vector<6xf32>
    %312 = vector.shape_cast %311 : vector<6xf32> to vector<6x1xf32>
    %cst_156 = arith.constant 3.200000e+01 : f32
    %313 = vector.broadcast %cst_156 : f32 to vector<6x1xf32>
    %314 = arith.divf %312, %313 : vector<6x1xf32>
    %315 = vector.broadcast %314 : vector<6x1xf32> to vector<6x32xf32>
    %316 = arith.subf %309, %315 : vector<6x32xf32>
    %317 = arith.mulf %316, %316 : vector<6x32xf32>
    %cst_157 = arith.constant dense<0.000000e+00> : vector<6xf32>
    %318 = vector.multi_reduction <add>, %317, %cst_157 [1] : vector<6x32xf32> to vector<6xf32>
    %319 = vector.shape_cast %318 : vector<6xf32> to vector<6x1xf32>
    %cst_158 = arith.constant 3.200000e+01 : f32
    %320 = vector.broadcast %cst_158 : f32 to vector<6x1xf32>
    %321 = arith.divf %319, %320 : vector<6x1xf32>
    %322 = vector.broadcast %314 : vector<6x1xf32> to vector<6x32xf32>
    %323 = arith.subf %309, %322 : vector<6x32xf32>
    %cst_159 = arith.constant 9.99999974E-6 : f32
    %324 = vector.broadcast %cst_159 : f32 to vector<6x1xf32>
    %325 = arith.addf %321, %324 : vector<6x1xf32>
    %326 = math.rsqrt %325 : vector<6x1xf32>
    %327 = vector.broadcast %326 : vector<6x1xf32> to vector<6x32xf32>
    %328 = arith.mulf %323, %327 : vector<6x32xf32>
    %329 = vector.broadcast %310 : vector<1x32xf32> to vector<6x32xf32>
    %330 = arith.mulf %328, %329 : vector<6x32xf32>
    %331 = arith.truncf %330 : vector<6x32xf32> to vector<6x32xbf16>
    %c0_160 = arith.constant 0 : index
    %c0_161 = arith.constant 0 : index
    %332 = vector.load %arg21[%c0_160, %c0_161] : memref<32x2816xbf16, #tpu.memory_space<vmem>>, vector<32x2816xbf16>
    %cst_162 = arith.constant dense<0.000000e+00> : vector<6x2816xf32>
    %333 = tpu.matmul %331, %332, %cst_162 {dimension_numbers = #tpu.dot_dimension_numbers<[1], [0], [0], [1], [0, 0, 1, 1], [], []>} : vector<6x32xbf16>, vector<32x2816xbf16>, vector<6x2816xf32> -> vector<6x2816xf32>
    %c0_163 = arith.constant 0 : index
    %c0_164 = arith.constant 0 : index
    %334 = vector.load %arg22[%c0_163, %c0_164] : memref<1x2816xf32, #tpu.memory_space<vmem>>, vector<1x2816xf32>
    %335 = vector.broadcast %334 : vector<1x2816xf32> to vector<6x2816xf32>
    %336 = arith.addf %333, %335 : vector<6x2816xf32>
    %c0_165 = arith.constant 0 : index
    %c0_166 = arith.constant 0 : index
    %337 = vector.load %arg23[%c0_165, %c0_166] : memref<6x2816xf32, #tpu.memory_space<vmem>>, vector<6x2816xf32>
    tpu.vector_store %arg23[%c0_165, %c0_166], %336 {strides = array<i32>} : memref<6x2816xf32, #tpu.memory_space<vmem>>, vector<6x2816xf32>,
    return
  }
}

</mosaic_0001>

<llo_original>
// kernel: rt1_forward.1
$region0: #{rt1_forward.1}
  #allocation0 [shape = 'u32[]', space=smem, size = 0x4, offset = 0x4, fixed_abs, tag = 'smem constant byte address 0x4 - core index']
  #allocation1 [shape = 'u32[144,128]{1,0:T(1,128)}', space=vmem, size = 0x12000, scoped, tag = 'internal scratch']
  %s0 = inlined_call_operand.vmem [shape: bf16[96,48], index: 0, kind: input, shape index: {}]
  %s1 = inlined_call_operand.vmem [shape: bf16[48,32], index: 1, kind: input, shape index: {}]
  %s2 = inlined_call_operand.vmem [shape: f32[1,32], index: 2, kind: input, shape index: {}]
  %s3 = inlined_call_operand.vmem [shape: bf16[32,512], index: 3, kind: input, shape index: {}]
  %s4 = inlined_call_operand.vmem [shape: f32[1,512], index: 4, kind: input, shape index: {}]
  %s5 = inlined_call_operand.vmem [shape: bf16[512,8], index: 5, kind: input, shape index: {}]
  %s6 = inlined_call_operand.vmem [shape: f32[1,8], index: 6, kind: input, shape index: {}]
  %s7 = inlined_call_operand.vmem [shape: f32[48,32], index: 7, kind: input, shape index: {}]
  %s8 = inlined_call_operand.vmem [shape: f32[192,48], index: 8, kind: input, shape index: {}]
  %s9 = inlined_call_operand.vmem [shape: f32[2,1,32], index: 9, kind: input, shape index: {}]
  %s10 = inlined_call_operand.vmem [shape: bf16[2,128,16], index: 10, kind: input, shape index: {}]
  %s11 = inlined_call_operand.vmem [shape: bf16[2,32,16], index: 11, kind: input, shape index: {}]
  %s12 = inlined_call_operand.vmem [shape: bf16[2,32,16], index: 12, kind: input, shape index: {}]
  %s13 = inlined_call_operand.vmem [shape: bf16[2,64,32], index: 13, kind: input, shape index: {}]
  %s14 = inlined_call_operand.vmem [shape: f32[2,1,32], index: 14, kind: input, shape index: {}]
  %s15 = inlined_call_operand.vmem [shape: bf16[2,32,128], index: 15, kind: input, shape index: {}]
  %s16 = inlined_call_operand.vmem [shape: f32[2,1,128], index: 16, kind: input, shape index: {}]
  %s17 = inlined_call_operand.vmem [shape: bf16[2,128,32], index: 17, kind: input, shape index: {}]
  %s18 = inlined_call_operand.vmem [shape: f32[2,1,32], index: 18, kind: input, shape index: {}]
  %s19 = inlined_call_operand.vmem [shape: bf16[6,48], index: 19, kind: input, shape index: {}]
  %s20 = inlined_call_operand.vmem [shape: f32[1,32], index: 20, kind: input, shape index: {}]
  %s21 = inlined_call_operand.vmem [shape: bf16[32,2816], index: 21, kind: input, shape index: {}]
  %s22 = inlined_call_operand.vmem [shape: f32[1,2816], index: 22, kind: input, shape index: {}]
  %s23 = inlined_call_operand.vmem [shape: f32[6,2816], index: 23, kind: output, shape index: {}]
  %s24 = sld [smem:[#allocation0]]
  $region102: #{rt1_forward.1} parent=0
    _
  %s26 = ssub.s32 1, %s24
  %s27 = scalar_select 0, %s26, %s24
  // Predicated region
  $region2: #{rt1_forward.1} parent=0 // pred_check
    _
  $region3: #{rt1_forward.1} parent=0 // pred_check_branch
    %29 = sbr.rel (0) target = $region5
  $region4: #{rt1_forward.1} parent=0 // pred_region
    _
  $region5: #{rt1_forward.1} parent=0 // pred_fallthru
    _
  // Predicated region
  $region6: #{rt1_forward.1} parent=0 // pred_check
    _
  $region7: #{rt1_forward.1} parent=0 // pred_check_branch
    %31 = sbr.rel (0) target = $region9
  $region8: #{rt1_forward.1} parent=0 // pred_region
    _
  $region9: #{rt1_forward.1} parent=0 // pred_fallthru
    _
  // Predicated region
  $region10: #{rt1_forward.1} parent=0 // pred_check
    _
  $region11: #{rt1_forward.1} parent=0 // pred_check_branch
    %33 = sbr.rel (0) target = $region13
  $region12: #{rt1_forward.1} parent=0 // pred_region
    _
  $region13: #{rt1_forward.1} parent=0 // pred_fallthru
    _
  // Predicated region
  $region14: #{rt1_forward.1} parent=0 // pred_check
    _
  $region15: #{rt1_forward.1} parent=0 // pred_check_branch
    %35 = sbr.rel (0) target = $region17
  $region16: #{rt1_forward.1} parent=0 // pred_region
    _
  $region17: #{rt1_forward.1} parent=0 // pred_fallthru
    _
  // Predicated region
  $region18: #{rt1_forward.1} parent=0 // pred_check
    _
  $region19: #{rt1_forward.1} parent=0 // pred_check_branch
    %37 = sbr.rel (0) target = $region21
  $region20: #{rt1_forward.1} parent=0 // pred_region
    _
  $region21: #{rt1_forward.1} parent=0 // pred_fallthru
    _
  // Predicated region
  $region22: #{rt1_forward.1} parent=0 // pred_check
    _
  $region23: #{rt1_forward.1} parent=0 // pred_check_branch
    %39 = sbr.rel (0) target = $region25
  $region24: #{rt1_forward.1} parent=0 // pred_region
    _
  $region25: #{rt1_forward.1} parent=0 // pred_fallthru
    _
  // Predicated region
  $region26: #{rt1_forward.1} parent=0 // pred_check
    _
  $region27: #{rt1_forward.1} parent=0 // pred_check_branch
    %41 = sbr.rel (0) target = $region29
  $region28: #{rt1_forward.1} parent=0 // pred_region
    _
  $region29: #{rt1_forward.1} parent=0 // pred_fallthru
    _
  // Predicated region
  $region30: #{rt1_forward.1} parent=0 // pred_check
    _
  $region31: #{rt1_forward.1} parent=0 // pred_check_branch
    %43 = sbr.rel (0) target = $region33
  $region32: #{rt1_forward.1} parent=0 // pred_region
    _
  $region33: #{rt1_forward.1} parent=0 // pred_fallthru
    _
  // Predicated region
  $region34: #{rt1_forward.1} parent=0 // pred_check
    _
  $region35: #{rt1_forward.1} parent=0 // pred_check_branch
    %45 = sbr.rel (0) target = $region37
  $region36: #{rt1_forward.1} parent=0 // pred_region
    _
  $region37: #{rt1_forward.1} parent=0 // pred_fallthru
    _
  // Predicated region
  $region38: #{rt1_forward.1} parent=0 // pred_check
    _
  $region39: #{rt1_forward.1} parent=0 // pred_check_branch
    %47 = sbr.rel (0) target = $region41
  $region40: #{rt1_forward.1} parent=0 // pred_region
    _
  $region41: #{rt1_forward.1} parent=0 // pred_fallthru
    _
  // Predicated region
  $region42: #{rt1_forward.1} parent=0 // pred_check
    _
  $region43: #{rt1_forward.1} parent=0 // pred_check_branch
    %49 = sbr.rel (0) target = $region45
  $region44: #{rt1_forward.1} parent=0 // pred_region
    _
  $region45: #{rt1_forward.1} parent=0 // pred_fallthru
    _
  // Predicated region
  $region46: #{rt1_forward.1} parent=0 // pred_check
    _
  $region47: #{rt1_forward.1} parent=0 // pred_check_branch
    %51 = sbr.rel (0) target = $region49
  $region48: #{rt1_forward.1} parent=0 // pred_region
    _
  $region49: #{rt1_forward.1} parent=0 // pred_fallthru
    _
  // Predicated region
  $region50: #{rt1_forward.1} parent=0 // pred_check
    _
  $region51: #{rt1_forward.1} parent=0 // pred_check_branch
    %53 = sbr.rel (0) target = $region53
  $region52: #{rt1_forward.1} parent=0 // pred_region
    _
  $region53: #{rt1_forward.1} parent=0 // pred_fallthru
    _
  // Predicated region
  $region54: #{rt1_forward.1} parent=0 // pred_check
    _
  $region55: #{rt1_forward.1} parent=0 // pred_check_branch
    %55 = sbr.rel (0) target = $region57
  $region56: #{rt1_forward.1} parent=0 // pred_region
    _
  $region57: #{rt1_forward.1} parent=0 // pred_fallthru
    _
  // Predicated region
  $region58: #{rt1_forward.1} parent=0 // pred_check
    _
  $region59: #{rt1_forward.1} parent=0 // pred_check_branch
    %57 = sbr.rel (0) target = $region61
  $region60: #{rt1_forward.1} parent=0 // pred_region
    _
  $region61: #{rt1_forward.1} parent=0 // pred_fallthru
    _
  // Predicated region
  $region62: #{rt1_forward.1} parent=0 // pred_check
    _
  $region63: #{rt1_forward.1} parent=0 // pred_check_branch
    %59 = sbr.rel (0) target = $region65
  $region64: #{rt1_forward.1} parent=0 // pred_region
    _
  $region65: #{rt1_forward.1} parent=0 // pred_fallthru
    _
  // Predicated region
  $region66: #{rt1_forward.1} parent=0 // pred_check
    _
  $region67: #{rt1_forward.1} parent=0 // pred_check_branch
    %61 = sbr.rel (0) target = $region69
  $region68: #{rt1_forward.1} parent=0 // pred_region
    _
  $region69: #{rt1_forward.1} parent=0 // pred_fallthru
    _
  // Predicated region
  $region70: #{rt1_forward.1} parent=0 // pred_check
    _
  $region71: #{rt1_forward.1} parent=0 // pred_check_branch
    %63 = sbr.rel (0) target = $region73
  $region72: #{rt1_forward.1} parent=0 // pred_region
    _
  $region73: #{rt1_forward.1} parent=0 // pred_fallthru
    _
  // Predicated region
  $region74: #{rt1_forward.1} parent=0 // pred_check
    _
  $region75: #{rt1_forward.1} parent=0 // pred_check_branch
    %65 = sbr.rel (0) target = $region77
  $region76: #{rt1_forward.1} parent=0 // pred_region
    _
  $region77: #{rt1_forward.1} parent=0 // pred_fallthru
    _
  // Predicated region
  $region78: #{rt1_forward.1} parent=0 // pred_check
    _
  $region79: #{rt1_forward.1} parent=0 // pred_check_branch
    %67 = sbr.rel (0) target = $region81
  $region80: #{rt1_forward.1} parent=0 // pred_region
    _
  $region81: #{rt1_forward.1} parent=0 // pred_fallthru
    _
  // Predicated region
  $region82: #{rt1_forward.1} parent=0 // pred_check
    _
  $region83: #{rt1_forward.1} parent=0 // pred_check_branch
    %69 = sbr.rel (0) target = $region85
  $region84: #{rt1_forward.1} parent=0 // pred_region
    _
  $region85: #{rt1_forward.1} parent=0 // pred_fallthru
    _
  // Predicated region
  $region86: #{rt1_forward.1} parent=0 // pred_check
    _
  $region87: #{rt1_forward.1} parent=0 // pred_check_branch
    %71 = sbr.rel (0) target = $region89
  $region88: #{rt1_forward.1} parent=0 // pred_region
    _
  $region89: #{rt1_forward.1} parent=0 // pred_fallthru
    _
  // Predicated region
  $region90: #{rt1_forward.1} parent=0 // pred_check
    _
  $region91: #{rt1_forward.1} parent=0 // pred_check_branch
    %73 = sbr.rel (0) target = $region93
  $region92: #{rt1_forward.1} parent=0 // pred_region
    _
  $region93: #{rt1_forward.1} parent=0 // pred_fallthru
    _
  %v75 = vld [vmem:[%s0] sm:$0xf]
  %v76 = vld [vmem:[%s0 + $0x4] sm:$0xf]
  %v77 = vld [vmem:[%s0 + $0x8] sm:$0xf]
  %v78 = vld [vmem:[%s0 + $0xc] sm:$0xf]
  %v79 = vld [vmem:[%s0 + $0x10] sm:$0xf]
  %v80 = vld [vmem:[%s0 + $0x14] sm:$0xf]
  %v81 = vld [vmem:[%s0 + $0x18] sm:$0xf]
  %v82 = vld [vmem:[%s0 + $0x1c] sm:$0xf]
  %v83 = vld [vmem:[%s0 + $0x20] sm:$0xf]
  %v84 = vld [vmem:[%s0 + $0x24] sm:$0xf]
  %v85 = vld [vmem:[%s0 + $0x28] sm:$0xf]
  %v86 = vld [vmem:[%s0 + $0x2c] sm:$0xf]
  %v87 = vld [vmem:[%s1] sm:$0xf]
  %v88 = vld [vmem:[%s1 + $0x4] sm:$0xf]
  %v89 = vld [vmem:[%s1 + $0x8] sm:$0xf]
  %v90 = vld [vmem:[%s1 + $0xc] sm:$0xf]
  %v91 = vld [vmem:[%s1 + $0x10] sm:$0xf]
  %v92 = vld [vmem:[%s1 + $0x14] sm:$0xf]
  %v93 = vld [vmem:[%s2] sm:$0x1]
  %v95 = vlaneseq
  %v96 = vshrl.u32 %v95, 7
  %v97 = vsub.s32 0, %v96
  %v98 = vrot.slane %v93, %v97
  %v112 = vunpack.c.l.b16 %v75
  %v113 = vunpack.c.l.b16 %v76
  %v114 = vunpack.c.l.b16 %v77
  %v115 = vunpack.c.l.b16 %v78
  %v116 = vunpack.c.l.b16 %v79
  %v117 = vunpack.c.l.b16 %v80
  %v118 = vunpack.c.l.b16 %v81
  %v119 = vunpack.c.l.b16 %v82
  %v120 = vunpack.c.l.b16 %v83
  %v121 = vunpack.c.l.b16 %v84
  %v122 = vunpack.c.l.b16 %v85
  %v123 = vunpack.c.l.b16 %v86
  %v124 = vpack.c.b16 %v113, %v112
  %v125 = vpack.c.b16 %v115, %v114
  %v126 = vpack.c.b16 %v117, %v116
  %v127 = vpack.c.b16 %v119, %v118
  %v128 = vpack.c.b16 %v121, %v120
  %v129 = vpack.c.b16 %v123, %v122
  %v136 = vunpack.c.l.b16 %v87
  %v137 = vunpack.c.l.b16 %v88
  %v138 = vunpack.c.l.b16 %v89
  %v139 = vunpack.c.l.b16 %v90
  %v140 = vunpack.c.l.b16 %v91
  %v141 = vunpack.c.l.b16 %v92
  %v142 = vpack.c.b16 %v137, %v136
  %v143 = vpack.c.b16 %v139, %v138
  %v144 = vpack.c.b16 %v141, %v140
  %vm148 = vcmask 392192
  %v150 = vsel %vm148, %v124, 0
  %v153 = vsel %vm148, %v125, 0
  %v156 = vsel %vm148, %v126, 0
  %v159 = vsel %vm148, %v127, 0
  %v162 = vsel %vm148, %v128, 0
  %v165 = vsel %vm148, %v129, 0
  %167 = vmatprep.subr.bf16.mxu0 0
  %168 = vmatpush1.bf16.msra.mxu0 %v142
  %169 = vmatprep.subr.bf16.mxu0 0
  %170 = vmatpush1.bf16.msra.mxu0 %v143
  %171 = vmatprep.subr.bf16.mxu0 0
  %172 = vmatpush1.bf16.msra.mxu0 %v144
  %173 = vmatprep.subr.bf16.mxu0 0
  %174 = vmatpush1.bf16.msra.mxu0 0
  %175 = vmatprep.subr.bf16.mxu0 0
  %176 = vmatpush1.bf16.msra.mxu0 0
  %177 = vmatprep.subr.bf16.mxu0 0
  %178 = vmatpush1.bf16.msra.mxu0 0
  %179 = vmatprep.subr.bf16.mxu0 0
  %180 = vmatpush1.bf16.msra.mxu0 0
  %181 = vmatprep.subr.bf16.mxu0 0
  %182 = vmatpush1.bf16.msra.mxu0 0
  %183 = vmatprep.subr.bf16.mxu0 0
  %184 = vmatpush1.bf16.msra.mxu0 0
  %185 = vmatprep.subr.bf16.mxu0 0
  %186 = vmatpush1.bf16.msra.mxu0 0
  %187 = vmatprep.subr.bf16.mxu0 0
  %188 = vmatpush1.bf16.msra.mxu0 0
  %189 = vmatprep.subr.bf16.mxu0 0
  %190 = vmatpush1.bf16.msra.mxu0 0
  %191 = vmatprep.subr.bf16.mxu0 0
  %192 = vmatpush1.bf16.msra.mxu0 0
  %193 = vmatprep.subr.bf16.mxu0 0
  %194 = vmatpush1.bf16.msra.mxu0 0
  %195 = vmatprep.subr.bf16.mxu0 0
  %196 = vmatpush1.bf16.msra.mxu0 0
  %197 = vmatprep.subr.bf16.mxu0 0
  %198 = vmatpush1.bf16.msra.mxu0 0
  %199 = vmatprep.mubr.bf16.mxu0 0
  %200 = vmatmul.mubr.bf16.gmra.mrb[0].mxu0 %v150
  %v201 = vpop.f32.mrb[0].mxu0
  %v202 = vadd.f32 %v98, %v201
  %v203 = vpop.f32.mrb[0].mxu0
  %v204 = vpop.f32.mrb[0].mxu0
  %v205 = vadd.f32 %v98, %v204
  %v206 = vpop.f32.mrb[0].mxu0
  %207 = vmatprep.mubr.bf16.mxu0 0
  %208 = vmatmul.mubr.bf16.gmra.mrb[0].mxu0 %v153
  %v209 = vpop.f32.mrb[0].mxu0
  %v210 = vadd.f32 %v98, %v209
  %v211 = vpop.f32.mrb[0].mxu0
  %v212 = vpop.f32.mrb[0].mxu0
  %v213 = vadd.f32 %v98, %v212
  %v214 = vpop.f32.mrb[0].mxu0
  %215 = vmatprep.mubr.bf16.mxu0 0
  %216 = vmatmul.mubr.bf16.gmra.mrb[0].mxu0 %v156
  %v217 = vpop.f32.mrb[0].mxu0
  %v218 = vadd.f32 %v98, %v217
  %v219 = vpop.f32.mrb[0].mxu0
  %v220 = vpop.f32.mrb[0].mxu0
  %v221 = vadd.f32 %v98, %v220
  %v222 = vpop.f32.mrb[0].mxu0
  %223 = vmatprep.mubr.bf16.mxu0 0
  %224 = vmatmul.mubr.bf16.gmra.mrb[0].mxu0 %v159
  %v225 = vpop.f32.mrb[0].mxu0
  %v226 = vadd.f32 %v98, %v225
  %v227 = vpop.f32.mrb[0].mxu0
  %v228 = vpop.f32.mrb[0].mxu0
  %v229 = vadd.f32 %v98, %v228
  %v230 = vpop.f32.mrb[0].mxu0
  %231 = vmatprep.mubr.bf16.mxu0 0
  %232 = vmatmul.mubr.bf16.gmra.mrb[0].mxu0 %v162
  %v233 = vpop.f32.mrb[0].mxu0
  %v234 = vadd.f32 %v98, %v233
  %v235 = vpop.f32.mrb[0].mxu0
  %v236 = vpop.f32.mrb[0].mxu0
  %v237 = vadd.f32 %v98, %v236
  %v238 = vpop.f32.mrb[0].mxu0
  %239 = vmatprep.mubr.bf16.mxu0 0
  %240 = vmatmul.mubr.bf16.gmra.mrb[0].mxu0 %v165
  %v241 = vpop.f32.mrb[0].mxu0
  %v242 = vadd.f32 %v98, %v241
  %v243 = vpop.f32.mrb[0].mxu0
  %v244 = vpop.f32.mrb[0].mxu0
  %v245 = vadd.f32 %v98, %v244
  %v246 = vpop.f32.mrb[0].mxu0
  %247 = vdwg.mxu0
  %v248 = vpack.c.bf16 %v205, %v202
  %v249 = vpack.c.bf16 %v213, %v210
  %v250 = vpack.c.bf16 %v221, %v218
  %v251 = vpack.c.bf16 %v229, %v226
  %v252 = vpack.c.bf16 %v237, %v234
  %v253 = vpack.c.bf16 %v245, %v242
  %v254 = vld [vmem:[%s3] sm:$0xff]
  %v255 = vld [vmem:[%s3 + $0x8] sm:$0xff]
  %v256 = vld [vmem:[%s3 + $0x10] sm:$0xff]
  %v257 = vld [vmem:[%s3 + $0x18] sm:$0xff]
  %v258 = vld [vmem:[%s3 + $0x20] sm:$0xff]
  %v259 = vld [vmem:[%s3 + $0x28] sm:$0xff]
  %v260 = vld [vmem:[%s3 + $0x30] sm:$0xff]
  %v261 = vld [vmem:[%s3 + $0x38] sm:$0xff]
  %v262 = vld [vmem:[%s4] sm:$0xf]
  %v264 = vlaneseq
  %v265 = vshrl.u32 %v264, 7
  %v266 = vsub.s32 0, %v265
  %v267 = vrot.slane %v262, %v266
  %v268 = vlaneseq
  %v269 = vshrl.u32 %v268, 7
  %v270 = vsub.s32 1, %v269
  %v271 = vrot.slane %v262, %v270
  %v272 = vlaneseq
  %v273 = vshrl.u32 %v272, 7
  %v274 = vsub.s32 2, %v273
  %v275 = vrot.slane %v262, %v274
  %v276 = vlaneseq
  %v277 = vshrl.u32 %v276, 7
  %v278 = vsub.s32 3, %v277
  %v279 = vrot.slane %v262, %v278
  %v292 = vunpack.c.l.b16 %v254
  %v293 = vunpack.c.h.b16 %v254
  %v294 = vunpack.c.l.b16 %v255
  %v295 = vunpack.c.h.b16 %v255
  %v296 = vunpack.c.l.b16 %v256
  %v297 = vunpack.c.h.b16 %v256
  %v298 = vunpack.c.l.b16 %v257
  %v299 = vunpack.c.h.b16 %v257
  %v300 = vunpack.c.l.b16 %v258
  %v301 = vunpack.c.h.b16 %v258
  %v302 = vunpack.c.l.b16 %v259
  %v303 = vunpack.c.h.b16 %v259
  %v304 = vunpack.c.l.b16 %v260
  %v305 = vunpack.c.h.b16 %v260
  %v306 = vunpack.c.l.b16 %v261
  %v307 = vunpack.c.h.b16 %v261
  %v308 = vpack.c.b16 %v296, %v292
  %v309 = vpack.c.b16 %v297, %v293
  %v310 = vpack.c.b16 %v298, %v294
  %v311 = vpack.c.b16 %v299, %v295
  %v312 = vpack.c.b16 %v304, %v300
  %v313 = vpack.c.b16 %v305, %v301
  %v314 = vpack.c.b16 %v306, %v302
  %v315 = vpack.c.b16 %v307, %v303
  %vm324 = vcmask 261120
  %v326 = vsel %vm324, %v248, 0
  %v329 = vsel %vm324, %v249, 0
  %v332 = vsel %vm324, %v250, 0
  %v335 = vsel %vm324, %v251, 0
  %v338 = vsel %vm324, %v252, 0
  %v341 = vsel %vm324, %v253, 0
  %343 = vmatprep.subr.bf16.mxu0 %v309
  %344 = vmatpush1.bf16.msra.mxu0 %v308
  %345 = vmatprep.subr.bf16.mxu0 %v313
  %346 = vmatpush1.bf16.msra.mxu0 %v312
  %347 = vmatprep.subr.bf16.mxu0 0
  %348 = vmatpush1.bf16.msra.mxu0 0
  %349 = vmatprep.subr.bf16.mxu0 0
  %350 = vmatpush1.bf16.msra.mxu0 0
  %351 = vmatprep.subr.bf16.mxu0 0
  %352 = vmatpush1.bf16.msra.mxu0 0
  %353 = vmatprep.subr.bf16.mxu0 0
  %354 = vmatpush1.bf16.msra.mxu0 0
  %355 = vmatprep.subr.bf16.mxu0 0
  %356 = vmatpush1.bf16.msra.mxu0 0
  %357 = vmatprep.subr.bf16.mxu0 0
  %358 = vmatpush1.bf16.msra.mxu0 0
  %359 = vmatprep.subr.bf16.mxu0 0
  %360 = vmatpush1.bf16.msra.mxu0 0
  %361 = vmatprep.subr.bf16.mxu0 0
  %362 = vmatpush1.bf16.msra.mxu0 0
  %363 = vmatprep.subr.bf16.mxu0 0
  %364 = vmatpush1.bf16.msra.mxu0 0
  %365 = vmatprep.subr.bf16.mxu0 0
  %366 = vmatpush1.bf16.msra.mxu0 0
  %367 = vmatprep.subr.bf16.mxu0 0
  %368 = vmatpush1.bf16.msra.mxu0 0
  %369 = vmatprep.subr.bf16.mxu0 0
  %370 = vmatpush1.bf16.msra.mxu0 0
  %371 = vmatprep.subr.bf16.mxu0 0
  %372 = vmatpush1.bf16.msra.mxu0 0
  %373 = vmatprep.subr.bf16.mxu0 0
  %374 = vmatpush1.bf16.msra.mxu0 0
  %375 = vmatprep.mubr.bf16.mxu0 0
  %376 = vmatmul.mubr.bf16.gmra.mrb[0].mxu0 %v326
  %v377 = vpop.f32.mrb[0].mxu0
  %v378 = vadd.f32 %v267, %v377
  %v379 = vpop.f32.mrb[0].mxu0
  %v380 = vadd.f32 %v271, %v379
  %v381 = vpop.f32.mrb[0].mxu0
  %v382 = vadd.f32 %v267, %v381
  %v383 = vpop.f32.mrb[0].mxu0
  %v384 = vadd.f32 %v271, %v383
  %385 = vmatprep.mubr.bf16.mxu0 0
  %386 = vmatmul.mubr.bf16.gmra.mrb[0].mxu0 %v329
  %v387 = vpop.f32.mrb[0].mxu0
  %v388 = vadd.f32 %v267, %v387
  %v389 = vpop.f32.mrb[0].mxu0
  %v390 = vadd.f32 %v271, %v389
  %v391 = vpop.f32.mrb[0].mxu0
  %v392 = vadd.f32 %v267, %v391
  %v393 = vpop.f32.mrb[0].mxu0
  %v394 = vadd.f32 %v271, %v393
  %395 = vmatprep.mubr.bf16.mxu0 0
  %396 = vmatmul.mubr.bf16.gmra.mrb[0].mxu0 %v332
  %v397 = vpop.f32.mrb[0].mxu0
  %v398 = vadd.f32 %v267, %v397
  %v399 = vpop.f32.mrb[0].mxu0
  %v400 = vadd.f32 %v271, %v399
  %v401 = vpop.f32.mrb[0].mxu0
  %v402 = vadd.f32 %v267, %v401
  %v403 = vpop.f32.mrb[0].mxu0
  %v404 = vadd.f32 %v271, %v403
  %405 = vmatprep.mubr.bf16.mxu0 0
  %406 = vmatmul.mubr.bf16.gmra.mrb[0].mxu0 %v335
  %v407 = vpop.f32.mrb[0].mxu0
  %v408 = vadd.f32 %v267, %v407
  %v409 = vpop.f32.mrb[0].mxu0
  %v410 = vadd.f32 %v271, %v409
  %v411 = vpop.f32.mrb[0].mxu0
  %v412 = vadd.f32 %v267, %v411
  %v413 = vpop.f32.mrb[0].mxu0
  %v414 = vadd.f32 %v271, %v413
  %415 = vmatprep.mubr.bf16.mxu0 0
  %416 = vmatmul.mubr.bf16.gmra.mrb[0].mxu0 %v338
  %v417 = vpop.f32.mrb[0].mxu0
  %v418 = vadd.f32 %v267, %v417
  %v419 = vpop.f32.mrb[0].mxu0
  %v420 = vadd.f32 %v271, %v419
  %v421 = vpop.f32.mrb[0].mxu0
  %v422 = vadd.f32 %v267, %v421
  %v423 = vpop.f32.mrb[0].mxu0
  %v424 = vadd.f32 %v271, %v423
  %425 = vmatprep.mubr.bf16.mxu0 0
  %426 = vmatmul.mubr.bf16.gmra.mrb[0].mxu0 %v341
  %v427 = vpop.f32.mrb[0].mxu0
  %v428 = vadd.f32 %v267, %v427
  %v429 = vpop.f32.mrb[0].mxu0
  %v430 = vadd.f32 %v271, %v429
  %v431 = vpop.f32.mrb[0].mxu0
  %v432 = vadd.f32 %v267, %v431
  %v433 = vpop.f32.mrb[0].mxu0
  %v434 = vadd.f32 %v271, %v433
  %435 = vdwg.mxu0
  %436 = vmatprep.subr.bf16.mxu0 %v311
  %437 = vmatpush1.bf16.msra.mxu0 %v310
  %438 = vmatprep.subr.bf16.mxu0 %v315
  %439 = vmatpush1.bf16.msra.mxu0 %v314
  %440 = vmatprep.subr.bf16.mxu0 0
  %441 = vmatpush1.bf16.msra.mxu0 0
  %442 = vmatprep.subr.bf16.mxu0 0
  %443 = vmatpush1.bf16.msra.mxu0 0
  %444 = vmatprep.subr.bf16.mxu0 0
  %445 = vmatpush1.bf16.msra.mxu0 0
  %446 = vmatprep.subr.bf16.mxu0 0
  %447 = vmatpush1.bf16.msra.mxu0 0
  %448 = vmatprep.subr.bf16.mxu0 0
  %449 = vmatpush1.bf16.msra.mxu0 0
  %450 = vmatprep.subr.bf16.mxu0 0
  %451 = vmatpush1.bf16.msra.mxu0 0
  %452 = vmatprep.subr.bf16.mxu0 0
  %453 = vmatpush1.bf16.msra.mxu0 0
  %454 = vmatprep.subr.bf16.mxu0 0
  %455 = vmatpush1.bf16.msra.mxu0 0
  %456 = vmatprep.subr.bf16.mxu0 0
  %457 = vmatpush1.bf16.msra.mxu0 0
  %458 = vmatprep.subr.bf16.mxu0 0
  %459 = vmatpush1.bf16.msra.mxu0 0
  %460 = vmatprep.subr.bf16.mxu0 0
  %461 = vmatpush1.bf16.msra.mxu0 0
  %462 = vmatprep.subr.bf16.mxu0 0
  %463 = vmatpush1.bf16.msra.mxu0 0
  %464 = vmatprep.subr.bf16.mxu0 0
  %465 = vmatpush1.bf16.msra.mxu0 0
  %466 = vmatprep.subr.bf16.mxu0 0
  %467 = vmatpush1.bf16.msra.mxu0 0
  %468 = vmatprep.mubr.bf16.mxu0 0
  %469 = vmatmul.mubr.bf16.gmra.mrb[0].mxu0 %v326
  %v470 = vpop.f32.mrb[0].mxu0
  %v471 = vadd.f32 %v275, %v470
  %v472 = vpop.f32.mrb[0].mxu0
  %v473 = vadd.f32 %v279, %v472
  %v474 = vpop.f32.mrb[0].mxu0
  %v475 = vadd.f32 %v275, %v474
  %v476 = vpop.f32.mrb[0].mxu0
  %v477 = vadd.f32 %v279, %v476
  %478 = vmatprep.mubr.bf16.mxu0 0
  %479 = vmatmul.mubr.bf16.gmra.mrb[0].mxu0 %v329
  %v480 = vpop.f32.mrb[0].mxu0
  %v481 = vadd.f32 %v275, %v480
  %v482 = vpop.f32.mrb[0].mxu0
  %v483 = vadd.f32 %v279, %v482
  %v484 = vpop.f32.mrb[0].mxu0
  %v485 = vadd.f32 %v275, %v484
  %v486 = vpop.f32.mrb[0].mxu0
  %v487 = vadd.f32 %v279, %v486
  %488 = vmatprep.mubr.bf16.mxu0 0
  %489 = vmatmul.mubr.bf16.gmra.mrb[0].mxu0 %v332
  %v490 = vpop.f32.mrb[0].mxu0
  %v491 = vadd.f32 %v275, %v490
  %v492 = vpop.f32.mrb[0].mxu0
  %v493 = vadd.f32 %v279, %v492
  %v494 = vpop.f32.mrb[0].mxu0
  %v495 = vadd.f32 %v275, %v494
  %v496 = vpop.f32.mrb[0].mxu0
  %v497 = vadd.f32 %v279, %v496
  %498 = vmatprep.mubr.bf16.mxu0 0
  %499 = vmatmul.mubr.bf16.gmra.mrb[0].mxu0 %v335
  %v500 = vpop.f32.mrb[0].mxu0
  %v501 = vadd.f32 %v275, %v500
  %v502 = vpop.f32.mrb[0].mxu0
  %v503 = vadd.f32 %v279, %v502
  %v504 = vpop.f32.mrb[0].mxu0
  %v505 = vadd.f32 %v275, %v504
  %v506 = vpop.f32.mrb[0].mxu0
  %v507 = vadd.f32 %v279, %v506
  %508 = vmatprep.mubr.bf16.mxu0 0
  %509 = vmatmul.mubr.bf16.gmra.mrb[0].mxu0 %v338
  %v510 = vpop.f32.mrb[0].mxu0
  %v511 = vadd.f32 %v275, %v510
  %v512 = vpop.f32.mrb[0].mxu0
  %v513 = vadd.f32 %v279, %v512
  %v514 = vpop.f32.mrb[0].mxu0
  %v515 = vadd.f32 %v275, %v514
  %v516 = vpop.f32.mrb[0].mxu0
  %v517 = vadd.f32 %v279, %v516
  %518 = vmatprep.mubr.bf16.mxu0 0
  %519 = vmatmul.mubr.bf16.gmra.mrb[0].mxu0 %v341
  %v520 = vpop.f32.mrb[0].mxu0
  %v521 = vadd.f32 %v275, %v520
  %v522 = vpop.f32.mrb[0].mxu0
  %v523 = vadd.f32 %v279, %v522
  %v524 = vpop.f32.mrb[0].mxu0
  %v525 = vadd.f32 %v275, %v524
  %v526 = vpop.f32.mrb[0].mxu0
  %v527 = vadd.f32 %v279, %v526
  %528 = vdwg.mxu0
  %v529 = vmul.f32 %v378, 0.5
  %v530 = vmul.f32 %v380, 0.5
  %v531 = vmul.f32 %v471, 0.5
  %v532 = vmul.f32 %v473, 0.5
  %v533 = vmul.f32 %v382, 0.5
  %v534 = vmul.f32 %v384, 0.5
  %v535 = vmul.f32 %v475, 0.5
  %v536 = vmul.f32 %v477, 0.5
  %v537 = vmul.f32 %v388, 0.5
  %v538 = vmul.f32 %v390, 0.5
  %v539 = vmul.f32 %v481, 0.5
  %v540 = vmul.f32 %v483, 0.5
  %v541 = vmul.f32 %v392, 0.5
  %v542 = vmul.f32 %v394, 0.5
  %v543 = vmul.f32 %v485, 0.5
  %v544 = vmul.f32 %v487, 0.5
  %v545 = vmul.f32 %v398, 0.5
  %v546 = vmul.f32 %v400, 0.5
  %v547 = vmul.f32 %v491, 0.5
  %v548 = vmul.f32 %v493, 0.5
  %v549 = vmul.f32 %v402, 0.5
  %v550 = vmul.f32 %v404, 0.5
  %v551 = vmul.f32 %v495, 0.5
  %v552 = vmul.f32 %v497, 0.5
  %v553 = vmul.f32 %v408, 0.5
  %v554 = vmul.f32 %v410, 0.5
  %v555 = vmul.f32 %v501, 0.5
  %v556 = vmul.f32 %v503, 0.5
  %v557 = vmul.f32 %v412, 0.5
  %v558 = vmul.f32 %v414, 0.5
  %v559 = vmul.f32 %v505, 0.5
  %v560 = vmul.f32 %v507, 0.5
  %v561 = vmul.f32 %v418, 0.5
  %v562 = vmul.f32 %v420, 0.5
  %v563 = vmul.f32 %v511, 0.5
  %v564 = vmul.f32 %v513, 0.5
  %v565 = vmul.f32 %v422, 0.5
  %v566 = vmul.f32 %v424, 0.5
  %v567 = vmul.f32 %v515, 0.5
  %v568 = vmul.f32 %v517, 0.5
  %v569 = vmul.f32 %v428, 0.5
  %v570 = vmul.f32 %v430, 0.5
  %v571 = vmul.f32 %v521, 0.5
  %v572 = vmul.f32 %v523, 0.5
  %v573 = vmul.f32 %v432, 0.5
  %v574 = vmul.f32 %v434, 0.5
  %v575 = vmul.f32 %v525, 0.5
  %v576 = vmul.f32 %v527, 0.5
  %v577 = vmul.f32 %v378, 0.044715
  %v578 = vmul.f32 %v380, 0.044715
  %v579 = vmul.f32 %v471, 0.044715
  %v580 = vmul.f32 %v473, 0.044715
  %v581 = vmul.f32 %v382, 0.044715
  %v582 = vmul.f32 %v384, 0.044715
  %v583 = vmul.f32 %v475, 0.044715
  %v584 = vmul.f32 %v477, 0.044715
  %v585 = vmul.f32 %v388, 0.044715
  %v586 = vmul.f32 %v390, 0.044715
  %v587 = vmul.f32 %v481, 0.044715
  %v588 = vmul.f32 %v483, 0.044715
  %v589 = vmul.f32 %v392, 0.044715
  %v590 = vmul.f32 %v394, 0.044715
  %v591 = vmul.f32 %v485, 0.044715
  %v592 = vmul.f32 %v487, 0.044715
  %v593 = vmul.f32 %v398, 0.044715
  %v594 = vmul.f32 %v400, 0.044715
  %v595 = vmul.f32 %v491, 0.044715
  %v596 = vmul.f32 %v493, 0.044715
  %v597 = vmul.f32 %v402, 0.044715
  %v598 = vmul.f32 %v404, 0.044715
  %v599 = vmul.f32 %v495, 0.044715
  %v600 = vmul.f32 %v497, 0.044715
  %v601 = vmul.f32 %v408, 0.044715
  %v602 = vmul.f32 %v410, 0.044715
  %v603 = vmul.f32 %v501, 0.044715
  %v604 = vmul.f32 %v503, 0.044715
  %v605 = vmul.f32 %v412, 0.044715
  %v606 = vmul.f32 %v414, 0.044715
  %v607 = vmul.f32 %v505, 0.044715
  %v608 = vmul.f32 %v507, 0.044715
  %v609 = vmul.f32 %v418, 0.044715
  %v610 = vmul.f32 %v420, 0.044715
  %v611 = vmul.f32 %v511, 0.044715
  %v612 = vmul.f32 %v513, 0.044715
  %v613 = vmul.f32 %v422, 0.044715
  %v614 = vmul.f32 %v424, 0.044715
  %v615 = vmul.f32 %v515, 0.044715
  %v616 = vmul.f32 %v517, 0.044715
  %v617 = vmul.f32 %v428, 0.044715
  %v618 = vmul.f32 %v430, 0.044715
  %v619 = vmul.f32 %v521, 0.044715
  %v620 = vmul.f32 %v523, 0.044715
  %v621 = vmul.f32 %v432, 0.044715
  %v622 = vmul.f32 %v434, 0.044715
  %v623 = vmul.f32 %v525, 0.044715
  %v624 = vmul.f32 %v527, 0.044715
  %v625 = vmul.f32 %v577, %v378
  %v626 = vmul.f32 %v578, %v380
  %v627 = vmul.f32 %v579, %v471
  %v628 = vmul.f32 %v580, %v473
  %v629 = vmul.f32 %v581, %v382
  %v630 = vmul.f32 %v582, %v384
  %v631 = vmul.f32 %v583, %v475
  %v632 = vmul.f32 %v584, %v477
  %v633 = vmul.f32 %v585, %v388
  %v634 = vmul.f32 %v586, %v390
  %v635 = vmul.f32 %v587, %v481
  %v636 = vmul.f32 %v588, %v483
  %v637 = vmul.f32 %v589, %v392
  %v638 = vmul.f32 %v590, %v394
  %v639 = vmul.f32 %v591, %v485
  %v640 = vmul.f32 %v592, %v487
  %v641 = vmul.f32 %v593, %v398
  %v642 = vmul.f32 %v594, %v400
  %v643 = vmul.f32 %v595, %v491
  %v644 = vmul.f32 %v596, %v493
  %v645 = vmul.f32 %v597, %v402
  %v646 = vmul.f32 %v598, %v404
  %v647 = vmul.f32 %v599, %v495
  %v648 = vmul.f32 %v600, %v497
  %v649 = vmul.f32 %v601, %v408
  %v650 = vmul.f32 %v602, %v410
  %v651 = vmul.f32 %v603, %v501
  %v652 = vmul.f32 %v604, %v503
  %v653 = vmul.f32 %v605, %v412
  %v654 = vmul.f32 %v606, %v414
  %v655 = vmul.f32 %v607, %v505
  %v656 = vmul.f32 %v608, %v507
  %v657 = vmul.f32 %v609, %v418
  %v658 = vmul.f32 %v610, %v420
  %v659 = vmul.f32 %v611, %v511
  %v660 = vmul.f32 %v612, %v513
  %v661 = vmul.f32 %v613, %v422
  %v662 = vmul.f32 %v614, %v424
  %v663 = vmul.f32 %v615, %v515
  %v664 = vmul.f32 %v616, %v517
  %v665 = vmul.f32 %v617, %v428
  %v666 = vmul.f32 %v618, %v430
  %v667 = vmul.f32 %v619, %v521
  %v668 = vmul.f32 %v620, %v523
  %v669 = vmul.f32 %v621, %v432
  %v670 = vmul.f32 %v622, %v434
  %v671 = vmul.f32 %v623, %v525
  %v672 = vmul.f32 %v624, %v527
  %v673 = vmul.f32 %v625, %v378
  %v674 = vmul.f32 %v626, %v380
  %v675 = vmul.f32 %v627, %v471
  %v676 = vmul.f32 %v628, %v473
  %v677 = vmul.f32 %v629, %v382
  %v678 = vmul.f32 %v630, %v384
  %v679 = vmul.f32 %v631, %v475
  %v680 = vmul.f32 %v632, %v477
  %v681 = vmul.f32 %v633, %v388
  %v682 = vmul.f32 %v634, %v390
  %v683 = vmul.f32 %v635, %v481
  %v684 = vmul.f32 %v636, %v483
  %v685 = vmul.f32 %v637, %v392
  %v686 = vmul.f32 %v638, %v394
  %v687 = vmul.f32 %v639, %v485
  %v688 = vmul.f32 %v640, %v487
  %v689 = vmul.f32 %v641, %v398
  %v690 = vmul.f32 %v642, %v400
  %v691 = vmul.f32 %v643, %v491
  %v692 = vmul.f32 %v644, %v493
  %v693 = vmul.f32 %v645, %v402
  %v694 = vmul.f32 %v646, %v404
  %v695 = vmul.f32 %v647, %v495
  %v696 = vmul.f32 %v648, %v497
  %v697 = vmul.f32 %v649, %v408
  %v698 = vmul.f32 %v650, %v410
  %v699 = vmul.f32 %v651, %v501
  %v700 = vmul.f32 %v652, %v503
  %v701 = vmul.f32 %v653, %v412
  %v702 = vmul.f32 %v654, %v414
  %v703 = vmul.f32 %v655, %v505
  %v704 = vmul.f32 %v656, %v507
  %v705 = vmul.f32 %v657, %v418
  %v706 = vmul.f32 %v658, %v420
  %v707 = vmul.f32 %v659, %v511
  %v708 = vmul.f32 %v660, %v513
  %v709 = vmul.f32 %v661, %v422
  %v710 = vmul.f32 %v662, %v424
  %v711 = vmul.f32 %v663, %v515
  %v712 = vmul.f32 %v664, %v517
  %v713 = vmul.f32 %v665, %v428
  %v714 = vmul.f32 %v666, %v430
  %v715 = vmul.f32 %v667, %v521
  %v716 = vmul.f32 %v668, %v523
  %v717 = vmul.f32 %v669, %v432
  %v718 = vmul.f32 %v670, %v434
  %v719 = vmul.f32 %v671, %v525
  %v720 = vmul.f32 %v672, %v527
  %v721 = vadd.f32 %v378, %v673
  %v722 = vadd.f32 %v380, %v674
  %v723 = vadd.f32 %v471, %v675
  %v724 = vadd.f32 %v473, %v676
  %v725 = vadd.f32 %v382, %v677
  %v726 = vadd.f32 %v384, %v678
  %v727 = vadd.f32 %v475, %v679
  %v728 = vadd.f32 %v477, %v680
  %v729 = vadd.f32 %v388, %v681
  %v730 = vadd.f32 %v390, %v682
  %v731 = vadd.f32 %v481, %v683
  %v732 = vadd.f32 %v483, %v684
  %v733 = vadd.f32 %v392, %v685
  %v734 = vadd.f32 %v394, %v686
  %v735 = vadd.f32 %v485, %v687
  %v736 = vadd.f32 %v487, %v688
  %v737 = vadd.f32 %v398, %v689
  %v738 = vadd.f32 %v400, %v690
  %v739 = vadd.f32 %v491, %v691
  %v740 = vadd.f32 %v493, %v692
  %v741 = vadd.f32 %v402, %v693
  %v742 = vadd.f32 %v404, %v694
  %v743 = vadd.f32 %v495, %v695
  %v744 = vadd.f32 %v497, %v696
  %v745 = vadd.f32 %v408, %v697
  %v746 = vadd.f32 %v410, %v698
  %v747 = vadd.f32 %v501, %v699
  %v748 = vadd.f32 %v503, %v700
  %v749 = vadd.f32 %v412, %v701
  %v750 = vadd.f32 %v414, %v702
  %v751 = vadd.f32 %v505, %v703
  %v752 = vadd.f32 %v507, %v704
  %v753 = vadd.f32 %v418, %v705
  %v754 = vadd.f32 %v420, %v706
  %v755 = vadd.f32 %v511, %v707
  %v756 = vadd.f32 %v513, %v708
  %v757 = vadd.f32 %v422, %v709
  %v758 = vadd.f32 %v424, %v710
  %v759 = vadd.f32 %v515, %v711
  %v760 = vadd.f32 %v517, %v712
  %v761 = vadd.f32 %v428, %v713
  %v762 = vadd.f32 %v430, %v714
  %v763 = vadd.f32 %v521, %v715
  %v764 = vadd.f32 %v523, %v716
  %v765 = vadd.f32 %v432, %v717
  %v766 = vadd.f32 %v434, %v718
  %v767 = vadd.f32 %v525, %v719
  %v768 = vadd.f32 %v527, %v720
  %v769 = vmul.f32 %v721, 0.7978846
  %v770 = vmul.f32 %v722, 0.7978846
  %v771 = vmul.f32 %v723, 0.7978846
  %v772 = vmul.f32 %v724, 0.7978846
  %v773 = vmul.f32 %v725, 0.7978846
  %v774 = vmul.f32 %v726, 0.7978846
  %v775 = vmul.f32 %v727, 0.7978846
  %v776 = vmul.f32 %v728, 0.7978846
  %v777 = vmul.f32 %v729, 0.7978846
  %v778 = vmul.f32 %v730, 0.7978846
  %v779 = vmul.f32 %v731, 0.7978846
  %v780 = vmul.f32 %v732, 0.7978846
  %v781 = vmul.f32 %v733, 0.7978846
  %v782 = vmul.f32 %v734, 0.7978846
  %v783 = vmul.f32 %v735, 0.7978846
  %v784 = vmul.f32 %v736, 0.7978846
  %v785 = vmul.f32 %v737, 0.7978846
  %v786 = vmul.f32 %v738, 0.7978846
  %v787 = vmul.f32 %v739, 0.7978846
  %v788 = vmul.f32 %v740, 0.7978846
  %v789 = vmul.f32 %v741, 0.7978846
  %v790 = vmul.f32 %v742, 0.7978846
  %v791 = vmul.f32 %v743, 0.7978846
  %v792 = vmul.f32 %v744, 0.7978846
  %v793 = vmul.f32 %v745, 0.7978846
  %v794 = vmul.f32 %v746, 0.7978846
  %v795 = vmul.f32 %v747, 0.7978846
  %v796 = vmul.f32 %v748, 0.7978846
  %v797 = vmul.f32 %v749, 0.7978846
  %v798 = vmul.f32 %v750, 0.7978846
  %v799 = vmul.f32 %v751, 0.7978846
  %v800 = vmul.f32 %v752, 0.7978846
  %v801 = vmul.f32 %v753, 0.7978846
  %v802 = vmul.f32 %v754, 0.7978846
  %v803 = vmul.f32 %v755, 0.7978846
  %v804 = vmul.f32 %v756, 0.7978846
  %v805 = vmul.f32 %v757, 0.7978846
  %v806 = vmul.f32 %v758, 0.7978846
  %v807 = vmul.f32 %v759, 0.7978846
  %v808 = vmul.f32 %v760, 0.7978846
  %v809 = vmul.f32 %v761, 0.7978846
  %v810 = vmul.f32 %v762, 0.7978846
  %v811 = vmul.f32 %v763, 0.7978846
  %v812 = vmul.f32 %v764, 0.7978846
  %v813 = vmul.f32 %v765, 0.7978846
  %v814 = vmul.f32 %v766, 0.7978846
  %v815 = vmul.f32 %v767, 0.7978846
  %v816 = vmul.f32 %v768, 0.7978846
  %v817 = vtanh.pop %v769
  %v818 = vtanh.pop %v770
  %v819 = vtanh.pop %v771
  %v820 = vtanh.pop %v772
  %v821 = vtanh.pop %v773
  %v822 = vtanh.pop %v774
  %v823 = vtanh.pop %v775
  %v824 = vtanh.pop %v776
  %v825 = vtanh.pop %v777
  %v826 = vtanh.pop %v778
  %v827 = vtanh.pop %v779
  %v828 = vtanh.pop %v780
  %v829 = vtanh.pop %v781
  %v830 = vtanh.pop %v782
  %v831 = vtanh.pop %v783
  %v832 = vtanh.pop %v784
  %v833 = vtanh.pop %v785
  %v834 = vtanh.pop %v786
  %v835 = vtanh.pop %v787
  %v836 = vtanh.pop %v788
  %v837 = vtanh.pop %v789
  %v838 = vtanh.pop %v790
  %v839 = vtanh.pop %v791
  %v840 = vtanh.pop %v792
  %v841 = vtanh.pop %v793
  %v842 = vtanh.pop %v794
  %v843 = vtanh.pop %v795
  %v844 = vtanh.pop %v796
  %v845 = vtanh.pop %v797
  %v846 = vtanh.pop %v798
  %v847 = vtanh.pop %v799
  %v848 = vtanh.pop %v800
  %v849 = vtanh.pop %v801
  %v850 = vtanh.pop %v802
  %v851 = vtanh.pop %v803
  %v852 = vtanh.pop %v804
  %v853 = vtanh.pop %v805
  %v854 = vtanh.pop %v806
  %v855 = vtanh.pop %v807
  %v856 = vtanh.pop %v808
  %v857 = vtanh.pop %v809
  %v858 = vtanh.pop %v810
  %v859 = vtanh.pop %v811
  %v860 = vtanh.pop %v812
  %v861 = vtanh.pop %v813
  %v862 = vtanh.pop %v814
  %v863 = vtanh.pop %v815
  %v864 = vtanh.pop %v816
  %v865 = vadd.f32 %v817, 1.0
  %v866 = vadd.f32 %v818, 1.0
  %v867 = vadd.f32 %v819, 1.0
  %v868 = vadd.f32 %v820, 1.0
  %v869 = vadd.f32 %v821, 1.0
  %v870 = vadd.f32 %v822, 1.0
  %v871 = vadd.f32 %v823, 1.0
  %v872 = vadd.f32 %v824, 1.0
  %v873 = vadd.f32 %v825, 1.0
  %v874 = vadd.f32 %v826, 1.0
  %v875 = vadd.f32 %v827, 1.0
  %v876 = vadd.f32 %v828, 1.0
  %v877 = vadd.f32 %v829, 1.0
  %v878 = vadd.f32 %v830, 1.0
  %v879 = vadd.f32 %v831, 1.0
  %v880 = vadd.f32 %v832, 1.0
  %v881 = vadd.f32 %v833, 1.0
  %v882 = vadd.f32 %v834, 1.0
  %v883 = vadd.f32 %v835, 1.0
  %v884 = vadd.f32 %v836, 1.0
  %v885 = vadd.f32 %v837, 1.0
  %v886 = vadd.f32 %v838, 1.0
  %v887 = vadd.f32 %v839, 1.0
  %v888 = vadd.f32 %v840, 1.0
  %v889 = vadd.f32 %v841, 1.0
  %v890 = vadd.f32 %v842, 1.0
  %v891 = vadd.f32 %v843, 1.0
  %v892 = vadd.f32 %v844, 1.0
  %v893 = vadd.f32 %v845, 1.0
  %v894 = vadd.f32 %v846, 1.0
  %v895 = vadd.f32 %v847, 1.0
  %v896 = vadd.f32 %v848, 1.0
  %v897 = vadd.f32 %v849, 1.0
  %v898 = vadd.f32 %v850, 1.0
  %v899 = vadd.f32 %v851, 1.0
  %v900 = vadd.f32 %v852, 1.0
  %v901 = vadd.f32 %v853, 1.0
  %v902 = vadd.f32 %v854, 1.0
  %v903 = vadd.f32 %v855, 1.0
  %v904 = vadd.f32 %v856, 1.0
  %v905 = vadd.f32 %v857, 1.0
  %v906 = vadd.f32 %v858, 1.0
  %v907 = vadd.f32 %v859, 1.0
  %v908 = vadd.f32 %v860, 1.0
  %v909 = vadd.f32 %v861, 1.0
  %v910 = vadd.f32 %v862, 1.0
  %v911 = vadd.f32 %v863, 1.0
  %v912 = vadd.f32 %v864, 1.0
  %v913 = vmul.f32 %v529, %v865
  %v914 = vmul.f32 %v530, %v866
  %v915 = vmul.f32 %v531, %v867
  %v916 = vmul.f32 %v532, %v868
  %v917 = vmul.f32 %v533, %v869
  %v918 = vmul.f32 %v534, %v870
  %v919 = vmul.f32 %v535, %v871
  %v920 = vmul.f32 %v536, %v872
  %v921 = vmul.f32 %v537, %v873
  %v922 = vmul.f32 %v538, %v874
  %v923 = vmul.f32 %v539, %v875
  %v924 = vmul.f32 %v540, %v876
  %v925 = vmul.f32 %v541, %v877
  %v926 = vmul.f32 %v542, %v878
  %v927 = vmul.f32 %v543, %v879
  %v928 = vmul.f32 %v544, %v880
  %v929 = vmul.f32 %v545, %v881
  %v930 = vmul.f32 %v546, %v882
  %v931 = vmul.f32 %v547, %v883
  %v932 = vmul.f32 %v548, %v884
  %v933 = vmul.f32 %v549, %v885
  %v934 = vmul.f32 %v550, %v886
  %v935 = vmul.f32 %v551, %v887
  %v936 = vmul.f32 %v552, %v888
  %v937 = vmul.f32 %v553, %v889
  %v938 = vmul.f32 %v554, %v890
  %v939 = vmul.f32 %v555, %v891
  %v940 = vmul.f32 %v556, %v892
  %v941 = vmul.f32 %v557, %v893
  %v942 = vmul.f32 %v558, %v894
  %v943 = vmul.f32 %v559, %v895
  %v944 = vmul.f32 %v560, %v896
  %v945 = vmul.f32 %v561, %v897
  %v946 = vmul.f32 %v562, %v898
  %v947 = vmul.f32 %v563, %v899
  %v948 = vmul.f32 %v564, %v900
  %v949 = vmul.f32 %v565, %v901
  %v950 = vmul.f32 %v566, %v902
  %v951 = vmul.f32 %v567, %v903
  %v952 = vmul.f32 %v568, %v904
  %v953 = vmul.f32 %v569, %v905
  %v954 = vmul.f32 %v570, %v906
  %v955 = vmul.f32 %v571, %v907
  %v956 = vmul.f32 %v572, %v908
  %v957 = vmul.f32 %v573, %v909
  %v958 = vmul.f32 %v574, %v910
  %v959 = vmul.f32 %v575, %v911
  %v960 = vmul.f32 %v576, %v912
  %v961 = vpack.c.bf16 %v917, %v913
  %v962 = vpack.c.bf16 %v918, %v914
  %v963 = vpack.c.bf16 %v919, %v915
  %v964 = vpack.c.bf16 %v920, %v916
  %v965 = vpack.c.bf16 %v925, %v921
  %v966 = vpack.c.bf16 %v926, %v922
  %v967 = vpack.c.bf16 %v927, %v923
  %v968 = vpack.c.bf16 %v928, %v924
  %v969 = vpack.c.bf16 %v933, %v929
  %v970 = vpack.c.bf16 %v934, %v930
  %v971 = vpack.c.bf16 %v935, %v931
  %v972 = vpack.c.bf16 %v936, %v932
  %v973 = vpack.c.bf16 %v941, %v937
  %v974 = vpack.c.bf16 %v942, %v938
  %v975 = vpack.c.bf16 %v943, %v939
  %v976 = vpack.c.bf16 %v944, %v940
  %v977 = vpack.c.bf16 %v949, %v945
  %v978 = vpack.c.bf16 %v950, %v946
  %v979 = vpack.c.bf16 %v951, %v947
  %v980 = vpack.c.bf16 %v952, %v948
  %v981 = vpack.c.bf16 %v957, %v953
  %v982 = vpack.c.bf16 %v958, %v954
  %v983 = vpack.c.bf16 %v959, %v955
  %v984 = vpack.c.bf16 %v960, %v956
  %v985 = vld [vmem:[%s5] sm:$0xf]
  %v986 = vld [vmem:[%s5 + $0x4] sm:$0xf]
  %v987 = vld [vmem:[%s5 + $0x8] sm:$0xf]
  %v988 = vld [vmem:[%s5 + $0xc] sm:$0xf]
  %v989 = vld [vmem:[%s5 + $0x10] sm:$0xf]
  %v990 = vld [vmem:[%s5 + $0x14] sm:$0xf]
  %v991 = vld [vmem:[%s5 + $0x18] sm:$0xf]
  %v992 = vld [vmem:[%s5 + $0x1c] sm:$0xf]
  %v993 = vld [vmem:[%s5 + $0x20] sm:$0xf]
  %v994 = vld [vmem:[%s5 + $0x24] sm:$0xf]
  %v995 = vld [vmem:[%s5 + $0x28] sm:$0xf]
  %v996 = vld [vmem:[%s5 + $0x2c] sm:$0xf]
  %v997 = vld [vmem:[%s5 + $0x30] sm:$0xf]
  %v998 = vld [vmem:[%s5 + $0x34] sm:$0xf]
  %v999 = vld [vmem:[%s5 + $0x38] sm:$0xf]
  %v1000 = vld [vmem:[%s5 + $0x3c] sm:$0xf]
  %v1001 = vld [vmem:[%s5 + $0x40] sm:$0xf]
  %v1002 = vld [vmem:[%s5 + $0x44] sm:$0xf]
  %v1003 = vld [vmem:[%s5 + $0x48] sm:$0xf]
  %v1004 = vld [vmem:[%s5 + $0x4c] sm:$0xf]
  %v1005 = vld [vmem:[%s5 + $0x50] sm:$0xf]
  %v1006 = vld [vmem:[%s5 + $0x54] sm:$0xf]
  %v1007 = vld [vmem:[%s5 + $0x58] sm:$0xf]
  %v1008 = vld [vmem:[%s5 + $0x5c] sm:$0xf]
  %v1009 = vld [vmem:[%s5 + $0x60] sm:$0xf]
  %v1010 = vld [vmem:[%s5 + $0x64] sm:$0xf]
  %v1011 = vld [vmem:[%s5 + $0x68] sm:$0xf]
  %v1012 = vld [vmem:[%s5 + $0x6c] sm:$0xf]
  %v1013 = vld [vmem:[%s5 + $0x70] sm:$0xf]
  %v1014 = vld [vmem:[%s5 + $0x74] sm:$0xf]
  %v1015 = vld [vmem:[%s5 + $0x78] sm:$0xf]
  %v1016 = vld [vmem:[%s5 + $0x7c] sm:$0xf]
  %v1017 = vld [vmem:[%s5 + $0x80] sm:$0xf]
  %v1018 = vld [vmem:[%s5 + $0x84] sm:$0xf]
  %v1019 = vld [vmem:[%s5 + $0x88] sm:$0xf]
  %v1020 = vld [vmem:[%s5 + $0x8c] sm:$0xf]
  %v1021 = vld [vmem:[%s5 + $0x90] sm:$0xf]
  %v1022 = vld [vmem:[%s5 + $0x94] sm:$0xf]
  %v1023 = vld [vmem:[%s5 + $0x98] sm:$0xf]
  %v1024 = vld [vmem:[%s5 + $0x9c] sm:$0xf]
  %v1025 = vld [vmem:[%s5 + $0xa0] sm:$0xf]
  %v1026 = vld [vmem:[%s5 + $0xa4] sm:$0xf]
  %v1027 = vld [vmem:[%s5 + $0xa8] sm:$0xf]
  %v1028 = vld [vmem:[%s5 + $0xac] sm:$0xf]
  %v1029 = vld [vmem:[%s5 + $0xb0] sm:$0xf]
  %v1030 = vld [vmem:[%s5 + $0xb4] sm:$0xf]
  %v1031 = vld [vmem:[%s5 + $0xb8] sm:$0xf]
  %v1032 = vld [vmem:[%s5 + $0xbc] sm:$0xf]
  %v1033 = vld [vmem:[%s5 + $0xc0] sm:$0xf]
  %v1034 = vld [vmem:[%s5 + $0xc4] sm:$0xf]
  %v1035 = vld [vmem:[%s5 + $0xc8] sm:$0xf]
  %v1036 = vld [vmem:[%s5 + $0xcc] sm:$0xf]
  %v1037 = vld [vmem:[%s5 + $0xd0] sm:$0xf]
  %v1038 = vld [vmem:[%s5 + $0xd4] sm:$0xf]
  %v1039 = vld [vmem:[%s5 + $0xd8] sm:$0xf]
  %v1040 = vld [vmem:[%s5 + $0xdc] sm:$0xf]
  %v1041 = vld [vmem:[%s5 + $0xe0] sm:$0xf]
  %v1042 = vld [vmem:[%s5 + $0xe4] sm:$0xf]
  %v1043 = vld [vmem:[%s5 + $0xe8] sm:$0xf]
  %v1044 = vld [vmem:[%s5 + $0xec] sm:$0xf]
  %v1045 = vld [vmem:[%s5 + $0xf0] sm:$0xf]
  %v1046 = vld [vmem:[%s5 + $0xf4] sm:$0xf]
  %v1047 = vld [vmem:[%s5 + $0xf8] sm:$0xf]
  %v1048 = vld [vmem:[%s5 + $0xfc] sm:$0xf]
  %v1049 = vld [vmem:[%s6] sm:$0x1]
  %v1051 = vlaneseq
  %v1052 = vshrl.u32 %v1051, 7
  %v1053 = vsub.s32 0, %v1052
  %v1054 = vrot.slane %v1049, %v1053
  %v1120 = vunpack.c.l.b16 %v985
  %v1121 = vunpack.c.l.b16 %v986
  %v1122 = vunpack.c.l.b16 %v987
  %v1123 = vunpack.c.l.b16 %v988
  %v1124 = vunpack.c.l.b16 %v989
  %v1125 = vunpack.c.l.b16 %v990
  %v1126 = vunpack.c.l.b16 %v991
  %v1127 = vunpack.c.l.b16 %v992
  %v1128 = vunpack.c.l.b16 %v993
  %v1129 = vunpack.c.l.b16 %v994
  %v1130 = vunpack.c.l.b16 %v995
  %v1131 = vunpack.c.l.b16 %v996
  %v1132 = vunpack.c.l.b16 %v997
  %v1133 = vunpack.c.l.b16 %v998
  %v1134 = vunpack.c.l.b16 %v999
  %v1135 = vunpack.c.l.b16 %v1000
  %v1136 = vunpack.c.l.b16 %v1001
  %v1137 = vunpack.c.l.b16 %v1002
  %v1138 = vunpack.c.l.b16 %v1003
  %v1139 = vunpack.c.l.b16 %v1004
  %v1140 = vunpack.c.l.b16 %v1005
  %v1141 = vunpack.c.l.b16 %v1006
  %v1142 = vunpack.c.l.b16 %v1007
  %v1143 = vunpack.c.l.b16 %v1008
  %v1144 = vunpack.c.l.b16 %v1009
  %v1145 = vunpack.c.l.b16 %v1010
  %v1146 = vunpack.c.l.b16 %v1011
  %v1147 = vunpack.c.l.b16 %v1012
  %v1148 = vunpack.c.l.b16 %v1013
  %v1149 = vunpack.c.l.b16 %v1014
  %v1150 = vunpack.c.l.b16 %v1015
  %v1151 = vunpack.c.l.b16 %v1016
  %v1152 = vunpack.c.l.b16 %v1017
  %v1153 = vunpack.c.l.b16 %v1018
  %v1154 = vunpack.c.l.b16 %v1019
  %v1155 = vunpack.c.l.b16 %v1020
  %v1156 = vunpack.c.l.b16 %v1021
  %v1157 = vunpack.c.l.b16 %v1022
  %v1158 = vunpack.c.l.b16 %v1023
  %v1159 = vunpack.c.l.b16 %v1024
  %v1160 = vunpack.c.l.b16 %v1025
  %v1161 = vunpack.c.l.b16 %v1026
  %v1162 = vunpack.c.l.b16 %v1027
  %v1163 = vunpack.c.l.b16 %v1028
  %v1164 = vunpack.c.l.b16 %v1029
  %v1165 = vunpack.c.l.b16 %v1030
  %v1166 = vunpack.c.l.b16 %v1031
  %v1167 = vunpack.c.l.b16 %v1032
  %v1168 = vunpack.c.l.b16 %v1033
  %v1169 = vunpack.c.l.b16 %v1034
  %v1170 = vunpack.c.l.b16 %v1035
  %v1171 = vunpack.c.l.b16 %v1036
  %v1172 = vunpack.c.l.b16 %v1037
  %v1173 = vunpack.c.l.b16 %v1038
  %v1174 = vunpack.c.l.b16 %v1039
  %v1175 = vunpack.c.l.b16 %v1040
  %v1176 = vunpack.c.l.b16 %v1041
  %v1177 = vunpack.c.l.b16 %v1042
  %v1178 = vunpack.c.l.b16 %v1043
  %v1179 = vunpack.c.l.b16 %v1044
  %v1180 = vunpack.c.l.b16 %v1045
  %v1181 = vunpack.c.l.b16 %v1046
  %v1182 = vunpack.c.l.b16 %v1047
  %v1183 = vunpack.c.l.b16 %v1048
  %v1184 = vpack.c.b16 %v1121, %v1120
  %v1185 = vpack.c.b16 %v1123, %v1122
  %v1186 = vpack.c.b16 %v1125, %v1124
  %v1187 = vpack.c.b16 %v1127, %v1126
  %v1188 = vpack.c.b16 %v1129, %v1128
  %v1189 = vpack.c.b16 %v1131, %v1130
  %v1190 = vpack.c.b16 %v1133, %v1132
  %v1191 = vpack.c.b16 %v1135, %v1134
  %v1192 = vpack.c.b16 %v1137, %v1136
  %v1193 = vpack.c.b16 %v1139, %v1138
  %v1194 = vpack.c.b16 %v1141, %v1140
  %v1195 = vpack.c.b16 %v1143, %v1142
  %v1196 = vpack.c.b16 %v1145, %v1144
  %v1197 = vpack.c.b16 %v1147, %v1146
  %v1198 = vpack.c.b16 %v1149, %v1148
  %v1199 = vpack.c.b16 %v1151, %v1150
  %v1200 = vpack.c.b16 %v1153, %v1152
  %v1201 = vpack.c.b16 %v1155, %v1154
  %v1202 = vpack.c.b16 %v1157, %v1156
  %v1203 = vpack.c.b16 %v1159, %v1158
  %v1204 = vpack.c.b16 %v1161, %v1160
  %v1205 = vpack.c.b16 %v1163, %v1162
  %v1206 = vpack.c.b16 %v1165, %v1164
  %v1207 = vpack.c.b16 %v1167, %v1166
  %v1208 = vpack.c.b16 %v1169, %v1168
  %v1209 = vpack.c.b16 %v1171, %v1170
  %v1210 = vpack.c.b16 %v1173, %v1172
  %v1211 = vpack.c.b16 %v1175, %v1174
  %v1212 = vpack.c.b16 %v1177, %v1176
  %v1213 = vpack.c.b16 %v1179, %v1178
  %v1214 = vpack.c.b16 %v1181, %v1180
  %v1215 = vpack.c.b16 %v1183, %v1182
  %1248 = vmatprep.subr.bf16.mxu0 0
  %1249 = vmatpush1.bf16.msra.mxu0 %v1184
  %1250 = vmatprep.subr.bf16.mxu0 0
  %1251 = vmatpush1.bf16.msra.mxu0 %v1185
  %1252 = vmatprep.subr.bf16.mxu0 0
  %1253 = vmatpush1.bf16.msra.mxu0 %v1186
  %1254 = vmatprep.subr.bf16.mxu0 0
  %1255 = vmatpush1.bf16.msra.mxu0 %v1187
  %1256 = vmatprep.subr.bf16.mxu0 0
  %1257 = vmatpush1.bf16.msra.mxu0 %v1188
  %1258 = vmatprep.subr.bf16.mxu0 0
  %1259 = vmatpush1.bf16.msra.mxu0 %v1189
  %1260 = vmatprep.subr.bf16.mxu0 0
  %1261 = vmatpush1.bf16.msra.mxu0 %v1190
  %1262 = vmatprep.subr.bf16.mxu0 0
  %1263 = vmatpush1.bf16.msra.mxu0 %v1191
  %1264 = vmatprep.subr.bf16.mxu0 0
  %1265 = vmatpush1.bf16.msra.mxu0 %v1192
  %1266 = vmatprep.subr.bf16.mxu0 0
  %1267 = vmatpush1.bf16.msra.mxu0 %v1193
  %1268 = vmatprep.subr.bf16.mxu0 0
  %1269 = vmatpush1.bf16.msra.mxu0 %v1194
  %1270 = vmatprep.subr.bf16.mxu0 0
  %1271 = vmatpush1.bf16.msra.mxu0 %v1195
  %1272 = vmatprep.subr.bf16.mxu0 0
  %1273 = vmatpush1.bf16.msra.mxu0 %v1196
  %1274 = vmatprep.subr.bf16.mxu0 0
  %1275 = vmatpush1.bf16.msra.mxu0 %v1197
  %1276 = vmatprep.subr.bf16.mxu0 0
  %1277 = vmatpush1.bf16.msra.mxu0 %v1198
  %1278 = vmatprep.subr.bf16.mxu0 0
  %1279 = vmatpush1.bf16.msra.mxu0 %v1199
  %1280 = vmatprep.mubr.bf16.mxu0 %v962
  %1281 = vmatmul.mubr.bf16.gmra.mrb[0].mxu0 %v961
  %v1282 = vpop.f32.mrb[0].mxu0
  %v1283 = vadd.f32 %v1054, %v1282
  %v1284 = vpop.f32.mrb[0].mxu0
  %v1285 = vpop.f32.mrb[0].mxu0
  %v1286 = vadd.f32 %v1054, %v1285
  %v1287 = vpop.f32.mrb[0].mxu0
  %1288 = vmatprep.mubr.bf16.mxu0 %v966
  %1289 = vmatmul.mubr.bf16.gmra.mrb[0].mxu0 %v965
  %v1290 = vpop.f32.mrb[0].mxu0
  %v1291 = vadd.f32 %v1054, %v1290
  %v1292 = vpop.f32.mrb[0].mxu0
  %v1293 = vpop.f32.mrb[0].mxu0
  %v1294 = vadd.f32 %v1054, %v1293
  %v1295 = vpop.f32.mrb[0].mxu0
  %1296 = vmatprep.mubr.bf16.mxu0 %v970
  %1297 = vmatmul.mubr.bf16.gmra.mrb[0].mxu0 %v969
  %v1298 = vpop.f32.mrb[0].mxu0
  %v1299 = vadd.f32 %v1054, %v1298
  %v1300 = vpop.f32.mrb[0].mxu0
  %v1301 = vpop.f32.mrb[0].mxu0
  %v1302 = vadd.f32 %v1054, %v1301
  %v1303 = vpop.f32.mrb[0].mxu0
  %1304 = vmatprep.mubr.bf16.mxu0 %v974
  %1305 = vmatmul.mubr.bf16.gmra.mrb[0].mxu0 %v973
  %v1306 = vpop.f32.mrb[0].mxu0
  %v1307 = vadd.f32 %v1054, %v1306
  %v1308 = vpop.f32.mrb[0].mxu0
  %v1309 = vpop.f32.mrb[0].mxu0
  %v1310 = vadd.f32 %v1054, %v1309
  %v1311 = vpop.f32.mrb[0].mxu0
  %1312 = vmatprep.mubr.bf16.mxu0 %v978
  %1313 = vmatmul.mubr.bf16.gmra.mrb[0].mxu0 %v977
  %v1314 = vpop.f32.mrb[0].mxu0
  %v1315 = vadd.f32 %v1054, %v1314
  %v1316 = vpop.f32.mrb[0].mxu0
  %v1317 = vpop.f32.mrb[0].mxu0
  %v1318 = vadd.f32 %v1054, %v1317
  %v1319 = vpop.f32.mrb[0].mxu0
  %1320 = vmatprep.mubr.bf16.mxu0 %v982
  %1321 = vmatmul.mubr.bf16.gmra.mrb[0].mxu0 %v981
  %v1322 = vpop.f32.mrb[0].mxu0
  %v1323 = vadd.f32 %v1054, %v1322
  %v1324 = vpop.f32.mrb[0].mxu0
  %v1325 = vpop.f32.mrb[0].mxu0
  %v1326 = vadd.f32 %v1054, %v1325
  %v1327 = vpop.f32.mrb[0].mxu0
  %1328 = vdwg.mxu0
  %1329 = vmatprep.subr.bf16.mxu0 0
  %1330 = vmatpush1.bf16.msra.mxu0 %v1200
  %1331 = vmatprep.subr.bf16.mxu0 0
  %1332 = vmatpush1.bf16.msra.mxu0 %v1201
  %1333 = vmatprep.subr.bf16.mxu0 0
  %1334 = vmatpush1.bf16.msra.mxu0 %v1202
  %1335 = vmatprep.subr.bf16.mxu0 0
  %1336 = vmatpush1.bf16.msra.mxu0 %v1203
  %1337 = vmatprep.subr.bf16.mxu0 0
  %1338 = vmatpush1.bf16.msra.mxu0 %v1204
  %1339 = vmatprep.subr.bf16.mxu0 0
  %1340 = vmatpush1.bf16.msra.mxu0 %v1205
  %1341 = vmatprep.subr.bf16.mxu0 0
  %1342 = vmatpush1.bf16.msra.mxu0 %v1206
  %1343 = vmatprep.subr.bf16.mxu0 0
  %1344 = vmatpush1.bf16.msra.mxu0 %v1207
  %1345 = vmatprep.subr.bf16.mxu0 0
  %1346 = vmatpush1.bf16.msra.mxu0 %v1208
  %1347 = vmatprep.subr.bf16.mxu0 0
  %1348 = vmatpush1.bf16.msra.mxu0 %v1209
  %1349 = vmatprep.subr.bf16.mxu0 0
  %1350 = vmatpush1.bf16.msra.mxu0 %v1210
  %1351 = vmatprep.subr.bf16.mxu0 0
  %1352 = vmatpush1.bf16.msra.mxu0 %v1211
  %1353 = vmatprep.subr.bf16.mxu0 0
  %1354 = vmatpush1.bf16.msra.mxu0 %v1212
  %1355 = vmatprep.subr.bf16.mxu0 0
  %1356 = vmatpush1.bf16.msra.mxu0 %v1213
  %1357 = vmatprep.subr.bf16.mxu0 0
  %1358 = vmatpush1.bf16.msra.mxu0 %v1214
  %1359 = vmatprep.subr.bf16.mxu0 0
  %1360 = vmatpush1.bf16.msra.mxu0 %v1215
  %1361 = vmatprep.mubr.bf16.mxu0 %v964
  %1362 = vmatmul.mubr.bf16.gmra.mrb[0].mxu0 %v963
  %v1363 = vpop.f32.mrb[0].mxu0
  %v1364 = vadd.f32 %v1283, %v1363
  %v1365 = vpop.f32.mrb[0].mxu0
  %v1366 = vpop.f32.mrb[0].mxu0
  %v1367 = vadd.f32 %v1286, %v1366
  %v1368 = vpop.f32.mrb[0].mxu0
  %1369 = vmatprep.mubr.bf16.mxu0 %v968
  %1370 = vmatmul.mubr.bf16.gmra.mrb[0].mxu0 %v967
  %v1371 = vpop.f32.mrb[0].mxu0
  %v1372 = vadd.f32 %v1291, %v1371
  %v1373 = vpop.f32.mrb[0].mxu0
  %v1374 = vpop.f32.mrb[0].mxu0
  %v1375 = vadd.f32 %v1294, %v1374
  %v1376 = vpop.f32.mrb[0].mxu0
  %1377 = vmatprep.mubr.bf16.mxu0 %v972
  %1378 = vmatmul.mubr.bf16.gmra.mrb[0].mxu0 %v971
  %v1379 = vpop.f32.mrb[0].mxu0
  %v1380 = vadd.f32 %v1299, %v1379
  %v1381 = vpop.f32.mrb[0].mxu0
  %v1382 = vpop.f32.mrb[0].mxu0
  %v1383 = vadd.f32 %v1302, %v1382
  %v1384 = vpop.f32.mrb[0].mxu0
  %1385 = vmatprep.mubr.bf16.mxu0 %v976
  %1386 = vmatmul.mubr.bf16.gmra.mrb[0].mxu0 %v975
  %v1387 = vpop.f32.mrb[0].mxu0
  %v1388 = vadd.f32 %v1307, %v1387
  %v1389 = vpop.f32.mrb[0].mxu0
  %v1390 = vpop.f32.mrb[0].mxu0
  %v1391 = vadd.f32 %v1310, %v1390
  %v1392 = vpop.f32.mrb[0].mxu0
  %1393 = vmatprep.mubr.bf16.mxu0 %v980
  %1394 = vmatmul.mubr.bf16.gmra.mrb[0].mxu0 %v979
  %v1395 = vpop.f32.mrb[0].mxu0
  %v1396 = vadd.f32 %v1315, %v1395
  %v1397 = vpop.f32.mrb[0].mxu0
  %v1398 = vpop.f32.mrb[0].mxu0
  %v1399 = vadd.f32 %v1318, %v1398
  %v1400 = vpop.f32.mrb[0].mxu0
  %1401 = vmatprep.mubr.bf16.mxu0 %v984
  %1402 = vmatmul.mubr.bf16.gmra.mrb[0].mxu0 %v983
  %v1403 = vpop.f32.mrb[0].mxu0
  %v1404 = vadd.f32 %v1323, %v1403
  %v1405 = vpop.f32.mrb[0].mxu0
  %v1406 = vpop.f32.mrb[0].mxu0
  %v1407 = vadd.f32 %v1326, %v1406
  %v1408 = vpop.f32.mrb[0].mxu0
  %1409 = vdwg.mxu0
  %1410 = vxpose.xlu0.b32.start [1/16] %v1364, 128
  %1411 = vxpose.xlu0.b32.cont [2/16] %v1367, 128
  %1412 = vxpose.xlu0.b32.cont [3/16] 0.0, 128
  %1413 = vxpose.xlu0.b32.cont [4/16] 0.0, 128
  %1414 = vxpose.xlu0.b32.cont [5/16] 0.0, 128
  %1415 = vxpose.xlu0.b32.cont [6/16] 0.0, 128
  %1416 = vxpose.xlu0.b32.cont [7/16] 0.0, 128
  %1417 = vxpose.xlu0.b32.cont [8/16] 0.0, 128
  %1418 = vxpose.xlu0.b32.cont [9/16] 0.0, 128
  %1419 = vxpose.xlu0.b32.cont [10/16] 0.0, 128
  %1420 = vxpose.xlu0.b32.cont [11/16] 0.0, 128
  %1421 = vxpose.xlu0.b32.cont [12/16] 0.0, 128
  %1422 = vxpose.xlu0.b32.cont [13/16] 0.0, 128
  %1423 = vxpose.xlu0.b32.cont [14/16] 0.0, 128
  %1424 = vxpose.xlu0.b32.cont [15/16] 0.0, 128
  %1425 = vxpose.xlu0.b32.end [16/16] 0.0, 128
  %v1426 = vpop.trf.xlu0
  %v1427 = vpop.trf.xlu0
  %v1428 = vpop.trf.xlu0
  %v1429 = vpop.trf.xlu0
  %v1430 = vpop.trf.xlu0
  %v1431 = vpop.trf.xlu0
  %v1432 = vpop.trf.xlu0
  %v1433 = vpop.trf.xlu0
  %v1434 = vpop.trf.xlu0
  %v1435 = vpop.trf.xlu0
  %v1436 = vpop.trf.xlu0
  %v1437 = vpop.trf.xlu0
  %v1438 = vpop.trf.xlu0
  %v1439 = vpop.trf.xlu0
  %v1440 = vpop.trf.xlu0
  %v1441 = vpop.trf.xlu0
  %vm1442 = vcmask 130048
  %v1444 = vsel %vm1442, %v1426, 0
  %1446 = vmatprep.subr.mxu0 0.0
  %1447 = vmatpush1.msra.mxu0 %v202
  %1448 = vmatprep.subr.mxu0 0.0
  %1449 = vmatpush1.msra.mxu0 %v205
  %1450 = vmatprep.subr.mxu0 0.0
  %1451 = vmatpush1.msra.mxu0 0.0
  %1452 = vmatprep.subr.mxu0 0.0
  %1453 = vmatpush1.msra.mxu0 0.0
  %1454 = vmatprep.subr.mxu0 0.0
  %1455 = vmatpush1.msra.mxu0 0.0
  %1456 = vmatprep.subr.mxu0 0.0
  %1457 = vmatpush1.msra.mxu0 0.0
  %1458 = vmatprep.subr.mxu0 0.0
  %1459 = vmatpush1.msra.mxu0 0.0
  %1460 = vmatprep.subr.mxu0 0.0
  %1461 = vmatpush1.msra.mxu0 0.0
  %1462 = vmatprep.subr.mxu0 0.0
  %1463 = vmatpush1.msra.mxu0 0.0
  %1464 = vmatprep.subr.mxu0 0.0
  %1465 = vmatpush1.msra.mxu0 0.0
  %1466 = vmatprep.subr.mxu0 0.0
  %1467 = vmatpush1.msra.mxu0 0.0
  %1468 = vmatprep.subr.mxu0 0.0
  %1469 = vmatpush1.msra.mxu0 0.0
  %1470 = vmatprep.subr.mxu0 0.0
  %1471 = vmatpush1.msra.mxu0 0.0
  %1472 = vmatprep.subr.mxu0 0.0
  %1473 = vmatpush1.msra.mxu0 0.0
  %1474 = vmatprep.subr.mxu0 0.0
  %1475 = vmatpush1.msra.mxu0 0.0
  %1476 = vmatprep.subr.mxu0 0.0
  %1477 = vmatpush1.msra.mxu0 0.0
  %1478 = vmatprep.subr.mxu0 0.0
  %1479 = vmatpush1.msra.mxu0 0.0
  %1480 = vmatprep.subr.mxu0 0.0
  %1481 = vmatpush1.msra.mxu0 0.0
  %1482 = vmatprep.subr.mxu0 0.0
  %1483 = vmatpush1.msra.mxu0 0.0
  %1484 = vmatprep.subr.mxu0 0.0
  %1485 = vmatpush1.msra.mxu0 0.0
  %1486 = vmatprep.subr.mxu0 0.0
  %1487 = vmatpush1.msra.mxu0 0.0
  %1488 = vmatprep.subr.mxu0 0.0
  %1489 = vmatpush1.msra.mxu0 0.0
  %1490 = vmatprep.subr.mxu0 0.0
  %1491 = vmatpush1.msra.mxu0 0.0
  %1492 = vmatprep.subr.mxu0 0.0
  %1493 = vmatpush1.msra.mxu0 0.0
  %1494 = vmatprep.subr.mxu0 0.0
  %1495 = vmatpush1.msra.mxu0 0.0
  %1496 = vmatprep.subr.mxu0 0.0
  %1497 = vmatpush1.msra.mxu0 0.0
  %1498 = vmatprep.subr.mxu0 0.0
  %1499 = vmatpush1.msra.mxu0 0.0
  %1500 = vmatprep.subr.mxu0 0.0
  %1501 = vmatpush1.msra.mxu0 0.0
  %1502 = vmatprep.subr.mxu0 0.0
  %1503 = vmatpush1.msra.mxu0 0.0
  %1504 = vmatprep.subr.mxu0 0.0
  %1505 = vmatpush1.msra.mxu0 0.0
  %1506 = vmatprep.subr.mxu0 0.0
  %1507 = vmatpush1.msra.mxu0 0.0
  %1508 = vmatprep.subr.mxu0 0.0
  %1509 = vmatpush1.msra.mxu0 0.0
  %1510 = vmatprep.mubr.f32.mxu0 0.0
  %1511 = vmatmul.mubr.f32.gmra.mrb[0].mxu0 %v1444
  %v1512 = vpop.f32.mrb[0].mxu0
  %v1513 = vadd.f32 0.0, %v1512
  %v1514 = vpop.f32.mrb[0].mxu0
  %1515 = vdwg.mxu0
  %v1516 = vmul.f32 %v1513, 0.0625
  %1517 = vxpose.xlu0.b32.start [1/16] %v1372, 128
  %1518 = vxpose.xlu0.b32.cont [2/16] %v1375, 128
  %1519 = vxpose.xlu0.b32.cont [3/16] 0.0, 128
  %1520 = vxpose.xlu0.b32.cont [4/16] 0.0, 128
  %1521 = vxpose.xlu0.b32.cont [5/16] 0.0, 128
  %1522 = vxpose.xlu0.b32.cont [6/16] 0.0, 128
  %1523 = vxpose.xlu0.b32.cont [7/16] 0.0, 128
  %1524 = vxpose.xlu0.b32.cont [8/16] 0.0, 128
  %1525 = vxpose.xlu0.b32.cont [9/16] 0.0, 128
  %1526 = vxpose.xlu0.b32.cont [10/16] 0.0, 128
  %1527 = vxpose.xlu0.b32.cont [11/16] 0.0, 128
  %1528 = vxpose.xlu0.b32.cont [12/16] 0.0, 128
  %1529 = vxpose.xlu0.b32.cont [13/16] 0.0, 128
  %1530 = vxpose.xlu0.b32.cont [14/16] 0.0, 128
  %1531 = vxpose.xlu0.b32.cont [15/16] 0.0, 128
  %1532 = vxpose.xlu0.b32.end [16/16] 0.0, 128
  %v1533 = vpop.trf.xlu0
  %v1534 = vpop.trf.xlu0
  %v1535 = vpop.trf.xlu0
  %v1536 = vpop.trf.xlu0
  %v1537 = vpop.trf.xlu0
  %v1538 = vpop.trf.xlu0
  %v1539 = vpop.trf.xlu0
  %v1540 = vpop.trf.xlu0
  %v1541 = vpop.trf.xlu0
  %v1542 = vpop.trf.xlu0
  %v1543 = vpop.trf.xlu0
  %v1544 = vpop.trf.xlu0
  %v1545 = vpop.trf.xlu0
  %v1546 = vpop.trf.xlu0
  %v1547 = vpop.trf.xlu0
  %v1548 = vpop.trf.xlu0
  %v1550 = vsel %vm1442, %v1533, 0
  %1552 = vmatprep.subr.mxu0 0.0
  %1553 = vmatpush1.msra.mxu0 %v210
  %1554 = vmatprep.subr.mxu0 0.0
  %1555 = vmatpush1.msra.mxu0 %v213
  %1556 = vmatprep.subr.mxu0 0.0
  %1557 = vmatpush1.msra.mxu0 0.0
  %1558 = vmatprep.subr.mxu0 0.0
  %1559 = vmatpush1.msra.mxu0 0.0
  %1560 = vmatprep.subr.mxu0 0.0
  %1561 = vmatpush1.msra.mxu0 0.0
  %1562 = vmatprep.subr.mxu0 0.0
  %1563 = vmatpush1.msra.mxu0 0.0
  %1564 = vmatprep.subr.mxu0 0.0
  %1565 = vmatpush1.msra.mxu0 0.0
  %1566 = vmatprep.subr.mxu0 0.0
  %1567 = vmatpush1.msra.mxu0 0.0
  %1568 = vmatprep.subr.mxu0 0.0
  %1569 = vmatpush1.msra.mxu0 0.0
  %1570 = vmatprep.subr.mxu0 0.0
  %1571 = vmatpush1.msra.mxu0 0.0
  %1572 = vmatprep.subr.mxu0 0.0
  %1573 = vmatpush1.msra.mxu0 0.0
  %1574 = vmatprep.subr.mxu0 0.0
  %1575 = vmatpush1.msra.mxu0 0.0
  %1576 = vmatprep.subr.mxu0 0.0
  %1577 = vmatpush1.msra.mxu0 0.0
  %1578 = vmatprep.subr.mxu0 0.0
  %1579 = vmatpush1.msra.mxu0 0.0
  %1580 = vmatprep.subr.mxu0 0.0
  %1581 = vmatpush1.msra.mxu0 0.0
  %1582 = vmatprep.subr.mxu0 0.0
  %1583 = vmatpush1.msra.mxu0 0.0
  %1584 = vmatprep.subr.mxu0 0.0
  %1585 = vmatpush1.msra.mxu0 0.0
  %1586 = vmatprep.subr.mxu0 0.0
  %1587 = vmatpush1.msra.mxu0 0.0
  %1588 = vmatprep.subr.mxu0 0.0
  %1589 = vmatpush1.msra.mxu0 0.0
  %1590 = vmatprep.subr.mxu0 0.0
  %1591 = vmatpush1.msra.mxu0 0.0
  %1592 = vmatprep.subr.mxu0 0.0
  %1593 = vmatpush1.msra.mxu0 0.0
  %1594 = vmatprep.subr.mxu0 0.0
  %1595 = vmatpush1.msra.mxu0 0.0
  %1596 = vmatprep.subr.mxu0 0.0
  %1597 = vmatpush1.msra.mxu0 0.0
  %1598 = vmatprep.subr.mxu0 0.0
  %1599 = vmatpush1.msra.mxu0 0.0
  %1600 = vmatprep.subr.mxu0 0.0
  %1601 = vmatpush1.msra.mxu0 0.0
  %1602 = vmatprep.subr.mxu0 0.0
  %1603 = vmatpush1.msra.mxu0 0.0
  %1604 = vmatprep.subr.mxu0 0.0
  %1605 = vmatpush1.msra.mxu0 0.0
  %1606 = vmatprep.subr.mxu0 0.0
  %1607 = vmatpush1.msra.mxu0 0.0
  %1608 = vmatprep.subr.mxu0 0.0
  %1609 = vmatpush1.msra.mxu0 0.0
  %1610 = vmatprep.subr.mxu0 0.0
  %1611 = vmatpush1.msra.mxu0 0.0
  %1612 = vmatprep.subr.mxu0 0.0
  %1613 = vmatpush1.msra.mxu0 0.0
  %1614 = vmatprep.subr.mxu0 0.0
  %1615 = vmatpush1.msra.mxu0 0.0
  %1616 = vmatprep.mubr.f32.mxu0 0.0
  %1617 = vmatmul.mubr.f32.gmra.mrb[0].mxu0 %v1550
  %v1618 = vpop.f32.mrb[0].mxu0
  %v1619 = vadd.f32 0.0, %v1618
  %v1620 = vpop.f32.mrb[0].mxu0
  %1621 = vdwg.mxu0
  %v1622 = vmul.f32 %v1619, 0.0625
  %1623 = vxpose.xlu0.b32.start [1/16] %v1380, 128
  %1624 = vxpose.xlu0.b32.cont [2/16] %v1383, 128
  %1625 = vxpose.xlu0.b32.cont [3/16] 0.0, 128
  %1626 = vxpose.xlu0.b32.cont [4/16] 0.0, 128
  %1627 = vxpose.xlu0.b32.cont [5/16] 0.0, 128
  %1628 = vxpose.xlu0.b32.cont [6/16] 0.0, 128
  %1629 = vxpose.xlu0.b32.cont [7/16] 0.0, 128
  %1630 = vxpose.xlu0.b32.cont [8/16] 0.0, 128
  %1631 = vxpose.xlu0.b32.cont [9/16] 0.0, 128
  %1632 = vxpose.xlu0.b32.cont [10/16] 0.0, 128
  %1633 = vxpose.xlu0.b32.cont [11/16] 0.0, 128
  %1634 = vxpose.xlu0.b32.cont [12/16] 0.0, 128
  %1635 = vxpose.xlu0.b32.cont [13/16] 0.0, 128
  %1636 = vxpose.xlu0.b32.cont [14/16] 0.0, 128
  %1637 = vxpose.xlu0.b32.cont [15/16] 0.0, 128
  %1638 = vxpose.xlu0.b32.end [16/16] 0.0, 128
  %v1639 = vpop.trf.xlu0
  %v1640 = vpop.trf.xlu0
  %v1641 = vpop.trf.xlu0
  %v1642 = vpop.trf.xlu0
  %v1643 = vpop.trf.xlu0
  %v1644 = vpop.trf.xlu0
  %v1645 = vpop.trf.xlu0
  %v1646 = vpop.trf.xlu0
  %v1647 = vpop.trf.xlu0
  %v1648 = vpop.trf.xlu0
  %v1649 = vpop.trf.xlu0
  %v1650 = vpop.trf.xlu0
  %v1651 = vpop.trf.xlu0
  %v1652 = vpop.trf.xlu0
  %v1653 = vpop.trf.xlu0
  %v1654 = vpop.trf.xlu0
  %v1656 = vsel %vm1442, %v1639, 0
  %1658 = vmatprep.subr.mxu0 0.0
  %1659 = vmatpush1.msra.mxu0 %v218
  %1660 = vmatprep.subr.mxu0 0.0
  %1661 = vmatpush1.msra.mxu0 %v221
  %1662 = vmatprep.subr.mxu0 0.0
  %1663 = vmatpush1.msra.mxu0 0.0
  %1664 = vmatprep.subr.mxu0 0.0
  %1665 = vmatpush1.msra.mxu0 0.0
  %1666 = vmatprep.subr.mxu0 0.0
  %1667 = vmatpush1.msra.mxu0 0.0
  %1668 = vmatprep.subr.mxu0 0.0
  %1669 = vmatpush1.msra.mxu0 0.0
  %1670 = vmatprep.subr.mxu0 0.0
  %1671 = vmatpush1.msra.mxu0 0.0
  %1672 = vmatprep.subr.mxu0 0.0
  %1673 = vmatpush1.msra.mxu0 0.0
  %1674 = vmatprep.subr.mxu0 0.0
  %1675 = vmatpush1.msra.mxu0 0.0
  %1676 = vmatprep.subr.mxu0 0.0
  %1677 = vmatpush1.msra.mxu0 0.0
  %1678 = vmatprep.subr.mxu0 0.0
  %1679 = vmatpush1.msra.mxu0 0.0
  %1680 = vmatprep.subr.mxu0 0.0
  %1681 = vmatpush1.msra.mxu0 0.0
  %1682 = vmatprep.subr.mxu0 0.0
  %1683 = vmatpush1.msra.mxu0 0.0
  %1684 = vmatprep.subr.mxu0 0.0
  %1685 = vmatpush1.msra.mxu0 0.0
  %1686 = vmatprep.subr.mxu0 0.0
  %1687 = vmatpush1.msra.mxu0 0.0
  %1688 = vmatprep.subr.mxu0 0.0
  %1689 = vmatpush1.msra.mxu0 0.0
  %1690 = vmatprep.subr.mxu0 0.0
  %1691 = vmatpush1.msra.mxu0 0.0
  %1692 = vmatprep.subr.mxu0 0.0
  %1693 = vmatpush1.msra.mxu0 0.0
  %1694 = vmatprep.subr.mxu0 0.0
  %1695 = vmatpush1.msra.mxu0 0.0
  %1696 = vmatprep.subr.mxu0 0.0
  %1697 = vmatpush1.msra.mxu0 0.0
  %1698 = vmatprep.subr.mxu0 0.0
  %1699 = vmatpush1.msra.mxu0 0.0
  %1700 = vmatprep.subr.mxu0 0.0
  %1701 = vmatpush1.msra.mxu0 0.0
  %1702 = vmatprep.subr.mxu0 0.0
  %1703 = vmatpush1.msra.mxu0 0.0
  %1704 = vmatprep.subr.mxu0 0.0
  %1705 = vmatpush1.msra.mxu0 0.0
  %1706 = vmatprep.subr.mxu0 0.0
  %1707 = vmatpush1.msra.mxu0 0.0
  %1708 = vmatprep.subr.mxu0 0.0
  %1709 = vmatpush1.msra.mxu0 0.0
  %1710 = vmatprep.subr.mxu0 0.0
  %1711 = vmatpush1.msra.mxu0 0.0
  %1712 = vmatprep.subr.mxu0 0.0
  %1713 = vmatpush1.msra.mxu0 0.0
  %1714 = vmatprep.subr.mxu0 0.0
  %1715 = vmatpush1.msra.mxu0 0.0
  %1716 = vmatprep.subr.mxu0 0.0
  %1717 = vmatpush1.msra.mxu0 0.0
  %1718 = vmatprep.subr.mxu0 0.0
  %1719 = vmatpush1.msra.mxu0 0.0
  %1720 = vmatprep.subr.mxu0 0.0
  %1721 = vmatpush1.msra.mxu0 0.0
  %1722 = vmatprep.mubr.f32.mxu0 0.0
  %1723 = vmatmul.mubr.f32.gmra.mrb[0].mxu0 %v1656
  %v1724 = vpop.f32.mrb[0].mxu0
  %v1725 = vadd.f32 0.0, %v1724
  %v1726 = vpop.f32.mrb[0].mxu0
  %1727 = vdwg.mxu0
  %v1728 = vmul.f32 %v1725, 0.0625
  %1729 = vxpose.xlu0.b32.start [1/16] %v1388, 128
  %1730 = vxpose.xlu0.b32.cont [2/16] %v1391, 128
  %1731 = vxpose.xlu0.b32.cont [3/16] 0.0, 128
  %1732 = vxpose.xlu0.b32.cont [4/16] 0.0, 128
  %1733 = vxpose.xlu0.b32.cont [5/16] 0.0, 128
  %1734 = vxpose.xlu0.b32.cont [6/16] 0.0, 128
  %1735 = vxpose.xlu0.b32.cont [7/16] 0.0, 128
  %1736 = vxpose.xlu0.b32.cont [8/16] 0.0, 128
  %1737 = vxpose.xlu0.b32.cont [9/16] 0.0, 128
  %1738 = vxpose.xlu0.b32.cont [10/16] 0.0, 128
  %1739 = vxpose.xlu0.b32.cont [11/16] 0.0, 128
  %1740 = vxpose.xlu0.b32.cont [12/16] 0.0, 128
  %1741 = vxpose.xlu0.b32.cont [13/16] 0.0, 128
  %1742 = vxpose.xlu0.b32.cont [14/16] 0.0, 128
  %1743 = vxpose.xlu0.b32.cont [15/16] 0.0, 128
  %1744 = vxpose.xlu0.b32.end [16/16] 0.0, 128
  %v1745 = vpop.trf.xlu0
  %v1746 = vpop.trf.xlu0
  %v1747 = vpop.trf.xlu0
  %v1748 = vpop.trf.xlu0
  %v1749 = vpop.trf.xlu0
  %v1750 = vpop.trf.xlu0
  %v1751 = vpop.trf.xlu0
  %v1752 = vpop.trf.xlu0
  %v1753 = vpop.trf.xlu0
  %v1754 = vpop.trf.xlu0
  %v1755 = vpop.trf.xlu0
  %v1756 = vpop.trf.xlu0
  %v1757 = vpop.trf.xlu0
  %v1758 = vpop.trf.xlu0
  %v1759 = vpop.trf.xlu0
  %v1760 = vpop.trf.xlu0
  %v1762 = vsel %vm1442, %v1745, 0
  %1764 = vmatprep.subr.mxu0 0.0
  %1765 = vmatpush1.msra.mxu0 %v226
  %1766 = vmatprep.subr.mxu0 0.0
  %1767 = vmatpush1.msra.mxu0 %v229
  %1768 = vmatprep.subr.mxu0 0.0
  %1769 = vmatpush1.msra.mxu0 0.0
  %1770 = vmatprep.subr.mxu0 0.0
  %1771 = vmatpush1.msra.mxu0 0.0
  %1772 = vmatprep.subr.mxu0 0.0
  %1773 = vmatpush1.msra.mxu0 0.0
  %1774 = vmatprep.subr.mxu0 0.0
  %1775 = vmatpush1.msra.mxu0 0.0
  %1776 = vmatprep.subr.mxu0 0.0
  %1777 = vmatpush1.msra.mxu0 0.0
  %1778 = vmatprep.subr.mxu0 0.0
  %1779 = vmatpush1.msra.mxu0 0.0
  %1780 = vmatprep.subr.mxu0 0.0
  %1781 = vmatpush1.msra.mxu0 0.0
  %1782 = vmatprep.subr.mxu0 0.0
  %1783 = vmatpush1.msra.mxu0 0.0
  %1784 = vmatprep.subr.mxu0 0.0
  %1785 = vmatpush1.msra.mxu0 0.0
  %1786 = vmatprep.subr.mxu0 0.0
  %1787 = vmatpush1.msra.mxu0 0.0
  %1788 = vmatprep.subr.mxu0 0.0
  %1789 = vmatpush1.msra.mxu0 0.0
  %1790 = vmatprep.subr.mxu0 0.0
  %1791 = vmatpush1.msra.mxu0 0.0
  %1792 = vmatprep.subr.mxu0 0.0
  %1793 = vmatpush1.msra.mxu0 0.0
  %1794 = vmatprep.subr.mxu0 0.0
  %1795 = vmatpush1.msra.mxu0 0.0
  %1796 = vmatprep.subr.mxu0 0.0
  %1797 = vmatpush1.msra.mxu0 0.0
  %1798 = vmatprep.subr.mxu0 0.0
  %1799 = vmatpush1.msra.mxu0 0.0
  %1800 = vmatprep.subr.mxu0 0.0
  %1801 = vmatpush1.msra.mxu0 0.0
  %1802 = vmatprep.subr.mxu0 0.0
  %1803 = vmatpush1.msra.mxu0 0.0
  %1804 = vmatprep.subr.mxu0 0.0
  %1805 = vmatpush1.msra.mxu0 0.0
  %1806 = vmatprep.subr.mxu0 0.0
  %1807 = vmatpush1.msra.mxu0 0.0
  %1808 = vmatprep.subr.mxu0 0.0
  %1809 = vmatpush1.msra.mxu0 0.0
  %1810 = vmatprep.subr.mxu0 0.0
  %1811 = vmatpush1.msra.mxu0 0.0
  %1812 = vmatprep.subr.mxu0 0.0
  %1813 = vmatpush1.msra.mxu0 0.0
  %1814 = vmatprep.subr.mxu0 0.0
  %1815 = vmatpush1.msra.mxu0 0.0
  %1816 = vmatprep.subr.mxu0 0.0
  %1817 = vmatpush1.msra.mxu0 0.0
  %1818 = vmatprep.subr.mxu0 0.0
  %1819 = vmatpush1.msra.mxu0 0.0
  %1820 = vmatprep.subr.mxu0 0.0
  %1821 = vmatpush1.msra.mxu0 0.0
  %1822 = vmatprep.subr.mxu0 0.0
  %1823 = vmatpush1.msra.mxu0 0.0
  %1824 = vmatprep.subr.mxu0 0.0
  %1825 = vmatpush1.msra.mxu0 0.0
  %1826 = vmatprep.subr.mxu0 0.0
  %1827 = vmatpush1.msra.mxu0 0.0
  %1828 = vmatprep.mubr.f32.mxu0 0.0
  %1829 = vmatmul.mubr.f32.gmra.mrb[0].mxu0 %v1762
  %v1830 = vpop.f32.mrb[0].mxu0
  %v1831 = vadd.f32 0.0, %v1830
  %v1832 = vpop.f32.mrb[0].mxu0
  %1833 = vdwg.mxu0
  %v1834 = vmul.f32 %v1831, 0.0625
  %1835 = vxpose.xlu0.b32.start [1/16] %v1396, 128
  %1836 = vxpose.xlu0.b32.cont [2/16] %v1399, 128
  %1837 = vxpose.xlu0.b32.cont [3/16] 0.0, 128
  %1838 = vxpose.xlu0.b32.cont [4/16] 0.0, 128
  %1839 = vxpose.xlu0.b32.cont [5/16] 0.0, 128
  %1840 = vxpose.xlu0.b32.cont [6/16] 0.0, 128
  %1841 = vxpose.xlu0.b32.cont [7/16] 0.0, 128
  %1842 = vxpose.xlu0.b32.cont [8/16] 0.0, 128
  %1843 = vxpose.xlu0.b32.cont [9/16] 0.0, 128
  %1844 = vxpose.xlu0.b32.cont [10/16] 0.0, 128
  %1845 = vxpose.xlu0.b32.cont [11/16] 0.0, 128
  %1846 = vxpose.xlu0.b32.cont [12/16] 0.0, 128
  %1847 = vxpose.xlu0.b32.cont [13/16] 0.0, 128
  %1848 = vxpose.xlu0.b32.cont [14/16] 0.0, 128
  %1849 = vxpose.xlu0.b32.cont [15/16] 0.0, 128
  %1850 = vxpose.xlu0.b32.end [16/16] 0.0, 128
  %v1851 = vpop.trf.xlu0
  %v1852 = vpop.trf.xlu0
  %v1853 = vpop.trf.xlu0
  %v1854 = vpop.trf.xlu0
  %v1855 = vpop.trf.xlu0
  %v1856 = vpop.trf.xlu0
  %v1857 = vpop.trf.xlu0
  %v1858 = vpop.trf.xlu0
  %v1859 = vpop.trf.xlu0
  %v1860 = vpop.trf.xlu0
  %v1861 = vpop.trf.xlu0
  %v1862 = vpop.trf.xlu0
  %v1863 = vpop.trf.xlu0
  %v1864 = vpop.trf.xlu0
  %v1865 = vpop.trf.xlu0
  %v1866 = vpop.trf.xlu0
  %v1868 = vsel %vm1442, %v1851, 0
  %1870 = vmatprep.subr.mxu0 0.0
  %1871 = vmatpush1.msra.mxu0 %v234
  %1872 = vmatprep.subr.mxu0 0.0
  %1873 = vmatpush1.msra.mxu0 %v237
  %1874 = vmatprep.subr.mxu0 0.0
  %1875 = vmatpush1.msra.mxu0 0.0
  %1876 = vmatprep.subr.mxu0 0.0
  %1877 = vmatpush1.msra.mxu0 0.0
  %1878 = vmatprep.subr.mxu0 0.0
  %1879 = vmatpush1.msra.mxu0 0.0
  %1880 = vmatprep.subr.mxu0 0.0
  %1881 = vmatpush1.msra.mxu0 0.0
  %1882 = vmatprep.subr.mxu0 0.0
  %1883 = vmatpush1.msra.mxu0 0.0
  %1884 = vmatprep.subr.mxu0 0.0
  %1885 = vmatpush1.msra.mxu0 0.0
  %1886 = vmatprep.subr.mxu0 0.0
  %1887 = vmatpush1.msra.mxu0 0.0
  %1888 = vmatprep.subr.mxu0 0.0
  %1889 = vmatpush1.msra.mxu0 0.0
  %1890 = vmatprep.subr.mxu0 0.0
  %1891 = vmatpush1.msra.mxu0 0.0
  %1892 = vmatprep.subr.mxu0 0.0
  %1893 = vmatpush1.msra.mxu0 0.0
  %1894 = vmatprep.subr.mxu0 0.0
  %1895 = vmatpush1.msra.mxu0 0.0
  %1896 = vmatprep.subr.mxu0 0.0
  %1897 = vmatpush1.msra.mxu0 0.0
  %1898 = vmatprep.subr.mxu0 0.0
  %1899 = vmatpush1.msra.mxu0 0.0
  %1900 = vmatprep.subr.mxu0 0.0
  %1901 = vmatpush1.msra.mxu0 0.0
  %1902 = vmatprep.subr.mxu0 0.0
  %1903 = vmatpush1.msra.mxu0 0.0
  %1904 = vmatprep.subr.mxu0 0.0
  %1905 = vmatpush1.msra.mxu0 0.0
  %1906 = vmatprep.subr.mxu0 0.0
  %1907 = vmatpush1.msra.mxu0 0.0
  %1908 = vmatprep.subr.mxu0 0.0
  %1909 = vmatpush1.msra.mxu0 0.0
  %1910 = vmatprep.subr.mxu0 0.0
  %1911 = vmatpush1.msra.mxu0 0.0
  %1912 = vmatprep.subr.mxu0 0.0
  %1913 = vmatpush1.msra.mxu0 0.0
  %1914 = vmatprep.subr.mxu0 0.0
  %1915 = vmatpush1.msra.mxu0 0.0
  %1916 = vmatprep.subr.mxu0 0.0
  %1917 = vmatpush1.msra.mxu0 0.0
  %1918 = vmatprep.subr.mxu0 0.0
  %1919 = vmatpush1.msra.mxu0 0.0
  %1920 = vmatprep.subr.mxu0 0.0
  %1921 = vmatpush1.msra.mxu0 0.0
  %1922 = vmatprep.subr.mxu0 0.0
  %1923 = vmatpush1.msra.mxu0 0.0
  %1924 = vmatprep.subr.mxu0 0.0
  %1925 = vmatpush1.msra.mxu0 0.0
  %1926 = vmatprep.subr.mxu0 0.0
  %1927 = vmatpush1.msra.mxu0 0.0
  %1928 = vmatprep.subr.mxu0 0.0
  %1929 = vmatpush1.msra.mxu0 0.0
  %1930 = vmatprep.subr.mxu0 0.0
  %1931 = vmatpush1.msra.mxu0 0.0
  %1932 = vmatprep.subr.mxu0 0.0
  %1933 = vmatpush1.msra.mxu0 0.0
  %1934 = vmatprep.mubr.f32.mxu0 0.0
  %1935 = vmatmul.mubr.f32.gmra.mrb[0].mxu0 %v1868
  %v1936 = vpop.f32.mrb[0].mxu0
  %v1937 = vadd.f32 0.0, %v1936
  %v1938 = vpop.f32.mrb[0].mxu0
  %1939 = vdwg.mxu0
  %v1940 = vmul.f32 %v1937, 0.0625
  %1941 = vxpose.xlu0.b32.start [1/16] %v1404, 128
  %1942 = vxpose.xlu0.b32.cont [2/16] %v1407, 128
  %1943 = vxpose.xlu0.b32.cont [3/16] 0.0, 128
  %1944 = vxpose.xlu0.b32.cont [4/16] 0.0, 128
  %1945 = vxpose.xlu0.b32.cont [5/16] 0.0, 128
  %1946 = vxpose.xlu0.b32.cont [6/16] 0.0, 128
  %1947 = vxpose.xlu0.b32.cont [7/16] 0.0, 128
  %1948 = vxpose.xlu0.b32.cont [8/16] 0.0, 128
  %1949 = vxpose.xlu0.b32.cont [9/16] 0.0, 128
  %1950 = vxpose.xlu0.b32.cont [10/16] 0.0, 128
  %1951 = vxpose.xlu0.b32.cont [11/16] 0.0, 128
  %1952 = vxpose.xlu0.b32.cont [12/16] 0.0, 128
  %1953 = vxpose.xlu0.b32.cont [13/16] 0.0, 128
  %1954 = vxpose.xlu0.b32.cont [14/16] 0.0, 128
  %1955 = vxpose.xlu0.b32.cont [15/16] 0.0, 128
  %1956 = vxpose.xlu0.b32.end [16/16] 0.0, 128
  %v1957 = vpop.trf.xlu0
  %v1958 = vpop.trf.xlu0
  %v1959 = vpop.trf.xlu0
  %v1960 = vpop.trf.xlu0
  %v1961 = vpop.trf.xlu0
  %v1962 = vpop.trf.xlu0
  %v1963 = vpop.trf.xlu0
  %v1964 = vpop.trf.xlu0
  %v1965 = vpop.trf.xlu0
  %v1966 = vpop.trf.xlu0
  %v1967 = vpop.trf.xlu0
  %v1968 = vpop.trf.xlu0
  %v1969 = vpop.trf.xlu0
  %v1970 = vpop.trf.xlu0
  %v1971 = vpop.trf.xlu0
  %v1972 = vpop.trf.xlu0
  %v1974 = vsel %vm1442, %v1957, 0
  %1976 = vmatprep.subr.mxu0 0.0
  %1977 = vmatpush1.msra.mxu0 %v242
  %1978 = vmatprep.subr.mxu0 0.0
  %1979 = vmatpush1.msra.mxu0 %v245
  %1980 = vmatprep.subr.mxu0 0.0
  %1981 = vmatpush1.msra.mxu0 0.0
  %1982 = vmatprep.subr.mxu0 0.0
  %1983 = vmatpush1.msra.mxu0 0.0
  %1984 = vmatprep.subr.mxu0 0.0
  %1985 = vmatpush1.msra.mxu0 0.0
  %1986 = vmatprep.subr.mxu0 0.0
  %1987 = vmatpush1.msra.mxu0 0.0
  %1988 = vmatprep.subr.mxu0 0.0
  %1989 = vmatpush1.msra.mxu0 0.0
  %1990 = vmatprep.subr.mxu0 0.0
  %1991 = vmatpush1.msra.mxu0 0.0
  %1992 = vmatprep.subr.mxu0 0.0
  %1993 = vmatpush1.msra.mxu0 0.0
  %1994 = vmatprep.subr.mxu0 0.0
  %1995 = vmatpush1.msra.mxu0 0.0
  %1996 = vmatprep.subr.mxu0 0.0
  %1997 = vmatpush1.msra.mxu0 0.0
  %1998 = vmatprep.subr.mxu0 0.0
  %1999 = vmatpush1.msra.mxu0 0.0
  %2000 = vmatprep.subr.mxu0 0.0
  %2001 = vmatpush1.msra.mxu0 0.0
  %2002 = vmatprep.subr.mxu0 0.0
  %2003 = vmatpush1.msra.mxu0 0.0
  %2004 = vmatprep.subr.mxu0 0.0
  %2005 = vmatpush1.msra.mxu0 0.0
  %2006 = vmatprep.subr.mxu0 0.0
  %2007 = vmatpush1.msra.mxu0 0.0
  %2008 = vmatprep.subr.mxu0 0.0
  %2009 = vmatpush1.msra.mxu0 0.0
  %2010 = vmatprep.subr.mxu0 0.0
  %2011 = vmatpush1.msra.mxu0 0.0
  %2012 = vmatprep.subr.mxu0 0.0
  %2013 = vmatpush1.msra.mxu0 0.0
  %2014 = vmatprep.subr.mxu0 0.0
  %2015 = vmatpush1.msra.mxu0 0.0
  %2016 = vmatprep.subr.mxu0 0.0
  %2017 = vmatpush1.msra.mxu0 0.0
  %2018 = vmatprep.subr.mxu0 0.0
  %2019 = vmatpush1.msra.mxu0 0.0
  %2020 = vmatprep.subr.mxu0 0.0
  %2021 = vmatpush1.msra.mxu0 0.0
  %2022 = vmatprep.subr.mxu0 0.0
  %2023 = vmatpush1.msra.mxu0 0.0
  %2024 = vmatprep.subr.mxu0 0.0
  %2025 = vmatpush1.msra.mxu0 0.0
  %2026 = vmatprep.subr.mxu0 0.0
  %2027 = vmatpush1.msra.mxu0 0.0
  %2028 = vmatprep.subr.mxu0 0.0
  %2029 = vmatpush1.msra.mxu0 0.0
  %2030 = vmatprep.subr.mxu0 0.0
  %2031 = vmatpush1.msra.mxu0 0.0
  %2032 = vmatprep.subr.mxu0 0.0
  %2033 = vmatpush1.msra.mxu0 0.0
  %2034 = vmatprep.subr.mxu0 0.0
  %2035 = vmatpush1.msra.mxu0 0.0
  %2036 = vmatprep.subr.mxu0 0.0
  %2037 = vmatpush1.msra.mxu0 0.0
  %2038 = vmatprep.subr.mxu0 0.0
  %2039 = vmatpush1.msra.mxu0 0.0
  %2040 = vmatprep.mubr.f32.mxu0 0.0
  %2041 = vmatmul.mubr.f32.gmra.mrb[0].mxu0 %v1974
  %v2042 = vpop.f32.mrb[0].mxu0
  %v2043 = vadd.f32 0.0, %v2042
  %v2044 = vpop.f32.mrb[0].mxu0
  %2045 = vdwg.mxu0
  %v2046 = vmul.f32 %v2043, 0.0625
  %v2047 = vld [vmem:[%s7] sm:$0xff]
  %v2048 = vld [vmem:[%s7 + $0x8] sm:$0xff]
  %v2049 = vld [vmem:[%s7 + $0x10] sm:$0xff]
  %v2050 = vld [vmem:[%s7 + $0x18] sm:$0xff]
  %v2051 = vld [vmem:[%s7 + $0x20] sm:$0xff]
  %v2052 = vld [vmem:[%s7 + $0x28] sm:$0xff]
  %v2053 = vadd.f32 %v1516, %v2047
  %v2054 = vadd.f32 %v1622, %v2048
  %v2055 = vadd.f32 %v1728, %v2049
  %v2056 = vadd.f32 %v1834, %v2050
  %v2057 = vadd.f32 %v1940, %v2051
  %v2058 = vadd.f32 %v2046, %v2052
  %v2059 = vld [vmem:[%s8] sm:$0xff]
  %v2060 = vld [vmem:[%s8 + $0x8] sm:$0xff]
  %v2061 = vld [vmem:[%s8 + $0x10] sm:$0xff]
  %v2062 = vld [vmem:[%s8 + $0x18] sm:$0xff]
  %v2063 = vld [vmem:[%s8 + $0x20] sm:$0xff]
  %v2064 = vld [vmem:[%s8 + $0x28] sm:$0xff]
  %v2065 = vld [vmem:[%s8 + $0x30] sm:$0xff]
  %v2066 = vld [vmem:[%s8 + $0x38] sm:$0xff]
  %v2067 = vld [vmem:[%s8 + $0x40] sm:$0xff]
  %v2068 = vld [vmem:[%s8 + $0x48] sm:$0xff]
  %v2069 = vld [vmem:[%s8 + $0x50] sm:$0xff]
  %v2070 = vld [vmem:[%s8 + $0x58] sm:$0xff]
  %v2071 = vld [vmem:[%s8 + $0x60] sm:$0xff]
  %v2072 = vld [vmem:[%s8 + $0x68] sm:$0xff]
  %v2073 = vld [vmem:[%s8 + $0x70] sm:$0xff]
  %v2074 = vld [vmem:[%s8 + $0x78] sm:$0xff]
  %v2075 = vld [vmem:[%s8 + $0x80] sm:$0xff]
  %v2076 = vld [vmem:[%s8 + $0x88] sm:$0xff]
  %v2077 = vld [vmem:[%s8 + $0x90] sm:$0xff]
  %v2078 = vld [vmem:[%s8 + $0x98] sm:$0xff]
  %v2079 = vld [vmem:[%s8 + $0xa0] sm:$0xff]
  %v2080 = vld [vmem:[%s8 + $0xa8] sm:$0xff]
  %v2081 = vld [vmem:[%s8 + $0xb0] sm:$0xff]
  %v2082 = vld [vmem:[%s8 + $0xb8] sm:$0xff]
  %v2083 = vld [vmem:[%s9] sm:$0x1]
  %v2084 = vsel %vm324, %v2053, 0.0
  %2085 = vadd.xlane.f32.xlu0 %v2084
  %v2086 = vpop.xlane.xlu0 %2085
  %v2087 = vsel %vm324, %v2054, 0.0
  %2088 = vadd.xlane.f32.xlu0 %v2087
  %v2089 = vpop.xlane.xlu0 %2088
  %v2090 = vsel %vm324, %v2055, 0.0
  %2091 = vadd.xlane.f32.xlu0 %v2090
  %v2092 = vpop.xlane.xlu0 %2091
  %v2093 = vsel %vm324, %v2056, 0.0
  %2094 = vadd.xlane.f32.xlu0 %v2093
  %v2095 = vpop.xlane.xlu0 %2094
  %v2096 = vsel %vm324, %v2057, 0.0
  %2097 = vadd.xlane.f32.xlu0 %v2096
  %v2098 = vpop.xlane.xlu0 %2097
  %v2099 = vsel %vm324, %v2058, 0.0
  %2100 = vadd.xlane.f32.xlu0 %v2099
  %v2101 = vpop.xlane.xlu0 %2100
  %v2102 = vrcp.pop 32.0
  %v2103 = vmul.f32 %v2086, %v2102
  %v2104 = vmul.f32 %v2089, %v2102
  %v2105 = vmul.f32 %v2092, %v2102
  %v2106 = vmul.f32 %v2095, %v2102
  %v2107 = vmul.f32 %v2098, %v2102
  %v2108 = vmul.f32 %v2101, %v2102
  %v2109 = vsub.f32 %v2053, %v2103
  %v2110 = vsub.f32 %v2054, %v2104
  %v2111 = vsub.f32 %v2055, %v2105
  %v2112 = vsub.f32 %v2056, %v2106
  %v2113 = vsub.f32 %v2057, %v2107
  %v2114 = vsub.f32 %v2058, %v2108
  %v2115 = vmul.f32 %v2109, %v2109
  %v2116 = vmul.f32 %v2110, %v2110
  %v2117 = vmul.f32 %v2111, %v2111
  %v2118 = vmul.f32 %v2112, %v2112
  %v2119 = vmul.f32 %v2113, %v2113
  %v2120 = vmul.f32 %v2114, %v2114
  %v2121 = vsel %vm324, %v2115, 0.0
  %2122 = vadd.xlane.f32.xlu0 %v2121
  %v2123 = vpop.xlane.xlu0 %2122
  %v2124 = vsel %vm324, %v2116, 0.0
  %2125 = vadd.xlane.f32.xlu0 %v2124
  %v2126 = vpop.xlane.xlu0 %2125
  %v2127 = vsel %vm324, %v2117, 0.0
  %2128 = vadd.xlane.f32.xlu0 %v2127
  %v2129 = vpop.xlane.xlu0 %2128
  %v2130 = vsel %vm324, %v2118, 0.0
  %2131 = vadd.xlane.f32.xlu0 %v2130
  %v2132 = vpop.xlane.xlu0 %2131
  %v2133 = vsel %vm324, %v2119, 0.0
  %2134 = vadd.xlane.f32.xlu0 %v2133
  %v2135 = vpop.xlane.xlu0 %2134
  %v2136 = vsel %vm324, %v2120, 0.0
  %2137 = vadd.xlane.f32.xlu0 %v2136
  %v2138 = vpop.xlane.xlu0 %2137
  %v2139 = vmul.f32 %v2123, %v2102
  %v2140 = vmul.f32 %v2126, %v2102
  %v2141 = vmul.f32 %v2129, %v2102
  %v2142 = vmul.f32 %v2132, %v2102
  %v2143 = vmul.f32 %v2135, %v2102
  %v2144 = vmul.f32 %v2138, %v2102
  %v2145 = vadd.f32 %v2139, 1e-05
  %v2146 = vadd.f32 %v2140, 1e-05
  %v2147 = vadd.f32 %v2141, 1e-05
  %v2148 = vadd.f32 %v2142, 1e-05
  %v2149 = vadd.f32 %v2143, 1e-05
  %v2150 = vadd.f32 %v2144, 1e-05
  %v2151 = vrsqrt.pop %v2145
  %v2152 = vrsqrt.pop %v2146
  %v2153 = vrsqrt.pop %v2147
  %v2154 = vrsqrt.pop %v2148
  %v2155 = vrsqrt.pop %v2149
  %v2156 = vrsqrt.pop %v2150
  %v2157 = vmul.f32 %v2109, %v2151
  %v2158 = vmul.f32 %v2110, %v2152
  %v2159 = vmul.f32 %v2111, %v2153
  %v2160 = vmul.f32 %v2112, %v2154
  %v2161 = vmul.f32 %v2113, %v2155
  %v2162 = vmul.f32 %v2114, %v2156
  %v2164 = vlaneseq
  %v2165 = vshrl.u32 %v2164, 7
  %v2166 = vsub.s32 0, %v2165
  %v2167 = vrot.slane %v2083, %v2166
  %v2169 = vmul.f32 %v2157, %v2167
  %v2170 = vmul.f32 %v2158, %v2167
  %v2171 = vmul.f32 %v2159, %v2167
  %v2172 = vmul.f32 %v2160, %v2167
  %v2173 = vmul.f32 %v2161, %v2167
  %v2174 = vmul.f32 %v2162, %v2167
  %v2175 = vpack.c.bf16 %v2170, %v2169
  %v2176 = vpack.c.bf16 %v2172, %v2171
  %v2177 = vpack.c.bf16 %v2174, %v2173
  %v2178 = vld [vmem:[%s10] sm:$0xf]
  %v2179 = vld [vmem:[%s10 + $0x4] sm:$0xf]
  %v2180 = vld [vmem:[%s10 + $0x8] sm:$0xf]
  %v2181 = vld [vmem:[%s10 + $0xc] sm:$0xf]
  %v2182 = vld [vmem:[%s10 + $0x10] sm:$0xf]
  %v2183 = vld [vmem:[%s10 + $0x14] sm:$0xf]
  %v2184 = vld [vmem:[%s10 + $0x18] sm:$0xf]
  %v2185 = vld [vmem:[%s10 + $0x1c] sm:$0xf]
  %v2186 = vld [vmem:[%s10 + $0x20] sm:$0xf]
  %v2187 = vld [vmem:[%s10 + $0x24] sm:$0xf]
  %v2188 = vld [vmem:[%s10 + $0x28] sm:$0xf]
  %v2189 = vld [vmem:[%s10 + $0x2c] sm:$0xf]
  %v2190 = vld [vmem:[%s10 + $0x30] sm:$0xf]
  %v2191 = vld [vmem:[%s10 + $0x34] sm:$0xf]
  %v2192 = vld [vmem:[%s10 + $0x38] sm:$0xf]
  %v2193 = vld [vmem:[%s10 + $0x3c] sm:$0xf]
  %v2198 = vunpack.c.l.b16 %v2178
  %v2199 = vunpack.c.l.b16 %v2179
  %v2200 = vunpack.c.l.b16 %v2180
  %v2201 = vunpack.c.l.b16 %v2181
  %v2202 = vpack.c.b16 %v2199, %v2198
  %v2203 = vpack.c.b16 %v2201, %v2200
  %v2207 = vsel %vm324, %v2175, 0
  %v2210 = vsel %vm324, %v2176, 0
  %v2213 = vsel %vm324, %v2177, 0
  %2215 = vmatprep.subr.bf16.mxu0 0
  %2216 = vmatpush1.bf16.msra.mxu0 %v2202
  %2217 = vmatprep.subr.bf16.mxu0 0
  %2218 = vmatpush1.bf16.msra.mxu0 %v2203
  %2219 = vmatprep.subr.bf16.mxu0 0
  %2220 = vmatpush1.bf16.msra.mxu0 0
  %2221 = vmatprep.subr.bf16.mxu0 0
  %2222 = vmatpush1.bf16.msra.mxu0 0
  %2223 = vmatprep.subr.bf16.mxu0 0
  %2224 = vmatpush1.bf16.msra.mxu0 0
  %2225 = vmatprep.subr.bf16.mxu0 0
  %2226 = vmatpush1.bf16.msra.mxu0 0
  %2227 = vmatprep.subr.bf16.mxu0 0
  %2228 = vmatpush1.bf16.msra.mxu0 0
  %2229 = vmatprep.subr.bf16.mxu0 0
  %2230 = vmatpush1.bf16.msra.mxu0 0
  %2231 = vmatprep.subr.bf16.mxu0 0
  %2232 = vmatpush1.bf16.msra.mxu0 0
  %2233 = vmatprep.subr.bf16.mxu0 0
  %2234 = vmatpush1.bf16.msra.mxu0 0
  %2235 = vmatprep.subr.bf16.mxu0 0
  %2236 = vmatpush1.bf16.msra.mxu0 0
  %2237 = vmatprep.subr.bf16.mxu0 0
  %2238 = vmatpush1.bf16.msra.mxu0 0
  %2239 = vmatprep.subr.bf16.mxu0 0
  %2240 = vmatpush1.bf16.msra.mxu0 0
  %2241 = vmatprep.subr.bf16.mxu0 0
  %2242 = vmatpush1.bf16.msra.mxu0 0
  %2243 = vmatprep.subr.bf16.mxu0 0
  %2244 = vmatpush1.bf16.msra.mxu0 0
  %2245 = vmatprep.subr.bf16.mxu0 0
  %2246 = vmatpush1.bf16.msra.mxu0 0
  %2247 = vmatprep.mubr.bf16.mxu0 0
  %2248 = vmatmul.mubr.bf16.gmra.mrb[0].mxu0 %v2207
  %v2249 = vpop.f32.mrb[0].mxu0
  %v2250 = vadd.f32 0.0, %v2249
  %v2251 = vpop.f32.mrb[0].mxu0
  %v2252 = vpop.f32.mrb[0].mxu0
  %v2253 = vadd.f32 0.0, %v2252
  %v2254 = vpop.f32.mrb[0].mxu0
  %2255 = vmatprep.mubr.bf16.mxu0 0
  %2256 = vmatmul.mubr.bf16.gmra.mrb[0].mxu0 %v2210
  %v2257 = vpop.f32.mrb[0].mxu0
  %v2258 = vadd.f32 0.0, %v2257
  %v2259 = vpop.f32.mrb[0].mxu0
  %v2260 = vpop.f32.mrb[0].mxu0
  %v2261 = vadd.f32 0.0, %v2260
  %v2262 = vpop.f32.mrb[0].mxu0
  %2263 = vmatprep.mubr.bf16.mxu0 0
  %2264 = vmatmul.mubr.bf16.gmra.mrb[0].mxu0 %v2213
  %v2265 = vpop.f32.mrb[0].mxu0
  %v2266 = vadd.f32 0.0, %v2265
  %v2267 = vpop.f32.mrb[0].mxu0
  %v2268 = vpop.f32.mrb[0].mxu0
  %v2269 = vadd.f32 0.0, %v2268
  %v2270 = vpop.f32.mrb[0].mxu0
  %2271 = vdwg.mxu0
  %v2276 = vunpack.c.l.b16 %v2182
  %v2277 = vunpack.c.l.b16 %v2183
  %v2278 = vunpack.c.l.b16 %v2184
  %v2279 = vunpack.c.l.b16 %v2185
  %v2280 = vpack.c.b16 %v2277, %v2276
  %v2281 = vpack.c.b16 %v2279, %v2278
  %2284 = vmatprep.subr.bf16.mxu0 0
  %2285 = vmatpush1.bf16.msra.mxu0 %v2280
  %2286 = vmatprep.subr.bf16.mxu0 0
  %2287 = vmatpush1.bf16.msra.mxu0 %v2281
  %2288 = vmatprep.subr.bf16.mxu0 0
  %2289 = vmatpush1.bf16.msra.mxu0 0
  %2290 = vmatprep.subr.bf16.mxu0 0
  %2291 = vmatpush1.bf16.msra.mxu0 0
  %2292 = vmatprep.subr.bf16.mxu0 0
  %2293 = vmatpush1.bf16.msra.mxu0 0
  %2294 = vmatprep.subr.bf16.mxu0 0
  %2295 = vmatpush1.bf16.msra.mxu0 0
  %2296 = vmatprep.subr.bf16.mxu0 0
  %2297 = vmatpush1.bf16.msra.mxu0 0
  %2298 = vmatprep.subr.bf16.mxu0 0
  %2299 = vmatpush1.bf16.msra.mxu0 0
  %2300 = vmatprep.subr.bf16.mxu0 0
  %2301 = vmatpush1.bf16.msra.mxu0 0
  %2302 = vmatprep.subr.bf16.mxu0 0
  %2303 = vmatpush1.bf16.msra.mxu0 0
  %2304 = vmatprep.subr.bf16.mxu0 0
  %2305 = vmatpush1.bf16.msra.mxu0 0
  %2306 = vmatprep.subr.bf16.mxu0 0
  %2307 = vmatpush1.bf16.msra.mxu0 0
  %2308 = vmatprep.subr.bf16.mxu0 0
  %2309 = vmatpush1.bf16.msra.mxu0 0
  %2310 = vmatprep.subr.bf16.mxu0 0
  %2311 = vmatpush1.bf16.msra.mxu0 0
  %2312 = vmatprep.subr.bf16.mxu0 0
  %2313 = vmatpush1.bf16.msra.mxu0 0
  %2314 = vmatprep.subr.bf16.mxu0 0
  %2315 = vmatpush1.bf16.msra.mxu0 0
  %2316 = vmatprep.mubr.bf16.mxu0 0
  %2317 = vmatmul.mubr.bf16.gmra.mrb[0].mxu0 %v2207
  %v2318 = vpop.f32.mrb[0].mxu0
  %v2319 = vadd.f32 0.0, %v2318
  %v2320 = vpop.f32.mrb[0].mxu0
  %v2321 = vpop.f32.mrb[0].mxu0
  %v2322 = vadd.f32 0.0, %v2321
  %v2323 = vpop.f32.mrb[0].mxu0
  %2324 = vmatprep.mubr.bf16.mxu0 0
  %2325 = vmatmul.mubr.bf16.gmra.mrb[0].mxu0 %v2210
  %v2326 = vpop.f32.mrb[0].mxu0
  %v2327 = vadd.f32 0.0, %v2326
  %v2328 = vpop.f32.mrb[0].mxu0
  %v2329 = vpop.f32.mrb[0].mxu0
  %v2330 = vadd.f32 0.0, %v2329
  %v2331 = vpop.f32.mrb[0].mxu0
  %2332 = vmatprep.mubr.bf16.mxu0 0
  %2333 = vmatmul.mubr.bf16.gmra.mrb[0].mxu0 %v2213
  %v2334 = vpop.f32.mrb[0].mxu0
  %v2335 = vadd.f32 0.0, %v2334
  %v2336 = vpop.f32.mrb[0].mxu0
  %v2337 = vpop.f32.mrb[0].mxu0
  %v2338 = vadd.f32 0.0, %v2337
  %v2339 = vpop.f32.mrb[0].mxu0
  %2340 = vdwg.mxu0
  %v2345 = vunpack.c.l.b16 %v2186
  %v2346 = vunpack.c.l.b16 %v2187
  %v2347 = vunpack.c.l.b16 %v2188
  %v2348 = vunpack.c.l.b16 %v2189
  %v2349 = vpack.c.b16 %v2346, %v2345
  %v2350 = vpack.c.b16 %v2348, %v2347
  %2353 = vmatprep.subr.bf16.mxu0 0
  %2354 = vmatpush1.bf16.msra.mxu0 %v2349
  %2355 = vmatprep.subr.bf16.mxu0 0
  %2356 = vmatpush1.bf16.msra.mxu0 %v2350
  %2357 = vmatprep.subr.bf16.mxu0 0
  %2358 = vmatpush1.bf16.msra.mxu0 0
  %2359 = vmatprep.subr.bf16.mxu0 0
  %2360 = vmatpush1.bf16.msra.mxu0 0
  %2361 = vmatprep.subr.bf16.mxu0 0
  %2362 = vmatpush1.bf16.msra.mxu0 0
  %2363 = vmatprep.subr.bf16.mxu0 0
  %2364 = vmatpush1.bf16.msra.mxu0 0
  %2365 = vmatprep.subr.bf16.mxu0 0
  %2366 = vmatpush1.bf16.msra.mxu0 0
  %2367 = vmatprep.subr.bf16.mxu0 0
  %2368 = vmatpush1.bf16.msra.mxu0 0
  %2369 = vmatprep.subr.bf16.mxu0 0
  %2370 = vmatpush1.bf16.msra.mxu0 0
  %2371 = vmatprep.subr.bf16.mxu0 0
  %2372 = vmatpush1.bf16.msra.mxu0 0
  %2373 = vmatprep.subr.bf16.mxu0 0
  %2374 = vmatpush1.bf16.msra.mxu0 0
  %2375 = vmatprep.subr.bf16.mxu0 0
  %2376 = vmatpush1.bf16.msra.mxu0 0
  %2377 = vmatprep.subr.bf16.mxu0 0
  %2378 = vmatpush1.bf16.msra.mxu0 0
  %2379 = vmatprep.subr.bf16.mxu0 0
  %2380 = vmatpush1.bf16.msra.mxu0 0
  %2381 = vmatprep.subr.bf16.mxu0 0
  %2382 = vmatpush1.bf16.msra.mxu0 0
  %2383 = vmatprep.subr.bf16.mxu0 0
  %2384 = vmatpush1.bf16.msra.mxu0 0
  %2385 = vmatprep.mubr.bf16.mxu0 0
  %2386 = vmatmul.mubr.bf16.gmra.mrb[0].mxu0 %v2207
  %v2387 = vpop.f32.mrb[0].mxu0
  %v2388 = vadd.f32 0.0, %v2387
  %v2389 = vpop.f32.mrb[0].mxu0
  %v2390 = vpop.f32.mrb[0].mxu0
  %v2391 = vadd.f32 0.0, %v2390
  %v2392 = vpop.f32.mrb[0].mxu0
  %2393 = vmatprep.mubr.bf16.mxu0 0
  %2394 = vmatmul.mubr.bf16.gmra.mrb[0].mxu0 %v2210
  %v2395 = vpop.f32.mrb[0].mxu0
  %v2396 = vadd.f32 0.0, %v2395
  %v2397 = vpop.f32.mrb[0].mxu0
  %v2398 = vpop.f32.mrb[0].mxu0
  %v2399 = vadd.f32 0.0, %v2398
  %v2400 = vpop.f32.mrb[0].mxu0
  %2401 = vmatprep.mubr.bf16.mxu0 0
  %2402 = vmatmul.mubr.bf16.gmra.mrb[0].mxu0 %v2213
  %v2403 = vpop.f32.mrb[0].mxu0
  %v2404 = vadd.f32 0.0, %v2403
  %v2405 = vpop.f32.mrb[0].mxu0
  %v2406 = vpop.f32.mrb[0].mxu0
  %v2407 = vadd.f32 0.0, %v2406
  %v2408 = vpop.f32.mrb[0].mxu0
  %2409 = vdwg.mxu0
  %v2414 = vunpack.c.l.b16 %v2190
  %v2415 = vunpack.c.l.b16 %v2191
  %v2416 = vunpack.c.l.b16 %v2192
  %v2417 = vunpack.c.l.b16 %v2193
  %v2418 = vpack.c.b16 %v2415, %v2414
  %v2419 = vpack.c.b16 %v2417, %v2416
  %2422 = vmatprep.subr.bf16.mxu0 0
  %2423 = vmatpush1.bf16.msra.mxu0 %v2418
  %2424 = vmatprep.subr.bf16.mxu0 0
  %2425 = vmatpush1.bf16.msra.mxu0 %v2419
  %2426 = vmatprep.subr.bf16.mxu0 0
  %2427 = vmatpush1.bf16.msra.mxu0 0
  %2428 = vmatprep.subr.bf16.mxu0 0
  %2429 = vmatpush1.bf16.msra.mxu0 0
  %2430 = vmatprep.subr.bf16.mxu0 0
  %2431 = vmatpush1.bf16.msra.mxu0 0
  %2432 = vmatprep.subr.bf16.mxu0 0
  %2433 = vmatpush1.bf16.msra.mxu0 0
  %2434 = vmatprep.subr.bf16.mxu0 0
  %2435 = vmatpush1.bf16.msra.mxu0 0
  %2436 = vmatprep.subr.bf16.mxu0 0
  %2437 = vmatpush1.bf16.msra.mxu0 0
  %2438 = vmatprep.subr.bf16.mxu0 0
  %2439 = vmatpush1.bf16.msra.mxu0 0
  %2440 = vmatprep.subr.bf16.mxu0 0
  %2441 = vmatpush1.bf16.msra.mxu0 0
  %2442 = vmatprep.subr.bf16.mxu0 0
  %2443 = vmatpush1.bf16.msra.mxu0 0
  %2444 = vmatprep.subr.bf16.mxu0 0
  %2445 = vmatpush1.bf16.msra.mxu0 0
  %2446 = vmatprep.subr.bf16.mxu0 0
  %2447 = vmatpush1.bf16.msra.mxu0 0
  %2448 = vmatprep.subr.bf16.mxu0 0
  %2449 = vmatpush1.bf16.msra.mxu0 0
  %2450 = vmatprep.subr.bf16.mxu0 0
  %2451 = vmatpush1.bf16.msra.mxu0 0
  %2452 = vmatprep.subr.bf16.mxu0 0
  %2453 = vmatpush1.bf16.msra.mxu0 0
  %2454 = vmatprep.mubr.bf16.mxu0 0
  %2455 = vmatmul.mubr.bf16.gmra.mrb[0].mxu0 %v2207
  %v2456 = vpop.f32.mrb[0].mxu0
  %v2457 = vadd.f32 0.0, %v2456
  %v2458 = vpop.f32.mrb[0].mxu0
  %v2459 = vpop.f32.mrb[0].mxu0
  %v2460 = vadd.f32 0.0, %v2459
  %v2461 = vpop.f32.mrb[0].mxu0
  %2462 = vmatprep.mubr.bf16.mxu0 0
  %2463 = vmatmul.mubr.bf16.gmra.mrb[0].mxu0 %v2210
  %v2464 = vpop.f32.mrb[0].mxu0
  %v2465 = vadd.f32 0.0, %v2464
  %v2466 = vpop.f32.mrb[0].mxu0
  %v2467 = vpop.f32.mrb[0].mxu0
  %v2468 = vadd.f32 0.0, %v2467
  %v2469 = vpop.f32.mrb[0].mxu0
  %2470 = vmatprep.mubr.bf16.mxu0 0
  %2471 = vmatmul.mubr.bf16.gmra.mrb[0].mxu0 %v2213
  %v2472 = vpop.f32.mrb[0].mxu0
  %v2473 = vadd.f32 0.0, %v2472
  %v2474 = vpop.f32.mrb[0].mxu0
  %v2475 = vpop.f32.mrb[0].mxu0
  %v2476 = vadd.f32 0.0, %v2475
  %v2477 = vpop.f32.mrb[0].mxu0
  %2478 = vdwg.mxu0
  %v2479 = vmul.f32 %v2250, 0.25
  %v2480 = vmul.f32 %v2253, 0.25
  %v2481 = vmul.f32 %v2258, 0.25
  %v2482 = vmul.f32 %v2261, 0.25
  %v2483 = vmul.f32 %v2266, 0.25
  %v2484 = vmul.f32 %v2269, 0.25
  %v2485 = vmul.f32 %v2319, 0.25
  %v2486 = vmul.f32 %v2322, 0.25
  %v2487 = vmul.f32 %v2327, 0.25
  %v2488 = vmul.f32 %v2330, 0.25
  %v2489 = vmul.f32 %v2335, 0.25
  %v2490 = vmul.f32 %v2338, 0.25
  %v2491 = vmul.f32 %v2388, 0.25
  %v2492 = vmul.f32 %v2391, 0.25
  %v2493 = vmul.f32 %v2396, 0.25
  %v2494 = vmul.f32 %v2399, 0.25
  %v2495 = vmul.f32 %v2404, 0.25
  %v2496 = vmul.f32 %v2407, 0.25
  %v2497 = vmul.f32 %v2457, 0.25
  %v2498 = vmul.f32 %v2460, 0.25
  %v2499 = vmul.f32 %v2465, 0.25
  %v2500 = vmul.f32 %v2468, 0.25
  %v2501 = vmul.f32 %v2473, 0.25
  %v2502 = vmul.f32 %v2476, 0.25
  %v2503 = vld [vmem:[%s11] sm:$0xf]
  %v2504 = vld [vmem:[%s11 + $0x4] sm:$0xf]
  %v2505 = vld [vmem:[%s11 + $0x8] sm:$0xf]
  %v2506 = vld [vmem:[%s11 + $0xc] sm:$0xf]
  %v2511 = vunpack.c.l.b16 %v2503
  %v2512 = vunpack.c.l.b16 %v2504
  %v2513 = vunpack.c.l.b16 %v2505
  %v2514 = vunpack.c.l.b16 %v2506
  %v2515 = vpack.c.b16 %v2512, %v2511
  %v2516 = vpack.c.b16 %v2514, %v2513
  %2519 = vmatprep.subr.bf16.mxu0 0
  %2520 = vmatpush1.bf16.msra.mxu0 %v2515
  %2521 = vmatprep.subr.bf16.mxu0 0
  %2522 = vmatpush1.bf16.msra.mxu0 %v2516
  %2523 = vmatprep.subr.bf16.mxu0 0
  %2524 = vmatpush1.bf16.msra.mxu0 0
  %2525 = vmatprep.subr.bf16.mxu0 0
  %2526 = vmatpush1.bf16.msra.mxu0 0
  %2527 = vmatprep.subr.bf16.mxu0 0
  %2528 = vmatpush1.bf16.msra.mxu0 0
  %2529 = vmatprep.subr.bf16.mxu0 0
  %2530 = vmatpush1.bf16.msra.mxu0 0
  %2531 = vmatprep.subr.bf16.mxu0 0
  %2532 = vmatpush1.bf16.msra.mxu0 0
  %2533 = vmatprep.subr.bf16.mxu0 0
  %2534 = vmatpush1.bf16.msra.mxu0 0
  %2535 = vmatprep.subr.bf16.mxu0 0
  %2536 = vmatpush1.bf16.msra.mxu0 0
  %2537 = vmatprep.subr.bf16.mxu0 0
  %2538 = vmatpush1.bf16.msra.mxu0 0
  %2539 = vmatprep.subr.bf16.mxu0 0
  %2540 = vmatpush1.bf16.msra.mxu0 0
  %2541 = vmatprep.subr.bf16.mxu0 0
  %2542 = vmatpush1.bf16.msra.mxu0 0
  %2543 = vmatprep.subr.bf16.mxu0 0
  %2544 = vmatpush1.bf16.msra.mxu0 0
  %2545 = vmatprep.subr.bf16.mxu0 0
  %2546 = vmatpush1.bf16.msra.mxu0 0
  %2547 = vmatprep.subr.bf16.mxu0 0
  %2548 = vmatpush1.bf16.msra.mxu0 0
  %2549 = vmatprep.subr.bf16.mxu0 0
  %2550 = vmatpush1.bf16.msra.mxu0 0
  %2551 = vmatprep.mubr.bf16.mxu0 0
  %2552 = vmatmul.mubr.bf16.gmra.mrb[0].mxu0 %v2207
  %v2553 = vpop.f32.mrb[0].mxu0
  %v2554 = vadd.f32 0.0, %v2553
  %v2555 = vpop.f32.mrb[0].mxu0
  %v2556 = vpop.f32.mrb[0].mxu0
  %v2557 = vadd.f32 0.0, %v2556
  %v2558 = vpop.f32.mrb[0].mxu0
  %2559 = vmatprep.mubr.bf16.mxu0 0
  %2560 = vmatmul.mubr.bf16.gmra.mrb[0].mxu0 %v2210
  %v2561 = vpop.f32.mrb[0].mxu0
  %v2562 = vadd.f32 0.0, %v2561
  %v2563 = vpop.f32.mrb[0].mxu0
  %v2564 = vpop.f32.mrb[0].mxu0
  %v2565 = vadd.f32 0.0, %v2564
  %v2566 = vpop.f32.mrb[0].mxu0
  %2567 = vmatprep.mubr.bf16.mxu0 0
  %2568 = vmatmul.mubr.bf16.gmra.mrb[0].mxu0 %v2213
  %v2569 = vpop.f32.mrb[0].mxu0
  %v2570 = vadd.f32 0.0, %v2569
  %v2571 = vpop.f32.mrb[0].mxu0
  %v2572 = vpop.f32.mrb[0].mxu0
  %v2573 = vadd.f32 0.0, %v2572
  %v2574 = vpop.f32.mrb[0].mxu0
  %2575 = vdwg.mxu0
  %v2576 = vld [vmem:[%s12] sm:$0xf]
  %v2577 = vld [vmem:[%s12 + $0x4] sm:$0xf]
  %v2578 = vld [vmem:[%s12 + $0x8] sm:$0xf]
  %v2579 = vld [vmem:[%s12 + $0xc] sm:$0xf]
  %v2584 = vunpack.c.l.b16 %v2576
  %v2585 = vunpack.c.l.b16 %v2577
  %v2586 = vunpack.c.l.b16 %v2578
  %v2587 = vunpack.c.l.b16 %v2579
  %v2588 = vpack.c.b16 %v2585, %v2584
  %v2589 = vpack.c.b16 %v2587, %v2586
  %2592 = vmatprep.subr.bf16.mxu0 0
  %2593 = vmatpush1.bf16.msra.mxu0 %v2588
  %2594 = vmatprep.subr.bf16.mxu0 0
  %2595 = vmatpush1.bf16.msra.mxu0 %v2589
  %2596 = vmatprep.subr.bf16.mxu0 0
  %2597 = vmatpush1.bf16.msra.mxu0 0
  %2598 = vmatprep.subr.bf16.mxu0 0
  %2599 = vmatpush1.bf16.msra.mxu0 0
  %2600 = vmatprep.subr.bf16.mxu0 0
  %2601 = vmatpush1.bf16.msra.mxu0 0
  %2602 = vmatprep.subr.bf16.mxu0 0
  %2603 = vmatpush1.bf16.msra.mxu0 0
  %2604 = vmatprep.subr.bf16.mxu0 0
  %2605 = vmatpush1.bf16.msra.mxu0 0
  %2606 = vmatprep.subr.bf16.mxu0 0
  %2607 = vmatpush1.bf16.msra.mxu0 0
  %2608 = vmatprep.subr.bf16.mxu0 0
  %2609 = vmatpush1.bf16.msra.mxu0 0
  %2610 = vmatprep.subr.bf16.mxu0 0
  %2611 = vmatpush1.bf16.msra.mxu0 0
  %2612 = vmatprep.subr.bf16.mxu0 0
  %2613 = vmatpush1.bf16.msra.mxu0 0
  %2614 = vmatprep.subr.bf16.mxu0 0
  %2615 = vmatpush1.bf16.msra.mxu0 0
  %2616 = vmatprep.subr.bf16.mxu0 0
  %2617 = vmatpush1.bf16.msra.mxu0 0
  %2618 = vmatprep.subr.bf16.mxu0 0
  %2619 = vmatpush1.bf16.msra.mxu0 0
  %2620 = vmatprep.subr.bf16.mxu0 0
  %2621 = vmatpush1.bf16.msra.mxu0 0
  %2622 = vmatprep.subr.bf16.mxu0 0
  %2623 = vmatpush1.bf16.msra.mxu0 0
  %2624 = vmatprep.mubr.bf16.mxu0 0
  %2625 = vmatmul.mubr.bf16.gmra.mrb[0].mxu0 %v2207
  %v2626 = vpop.f32.mrb[0].mxu0
  %v2627 = vadd.f32 0.0, %v2626
  %v2628 = vpop.f32.mrb[0].mxu0
  %v2629 = vpop.f32.mrb[0].mxu0
  %v2630 = vadd.f32 0.0, %v2629
  %v2631 = vpop.f32.mrb[0].mxu0
  %2632 = vmatprep.mubr.bf16.mxu0 0
  %2633 = vmatmul.mubr.bf16.gmra.mrb[0].mxu0 %v2210
  %v2634 = vpop.f32.mrb[0].mxu0
  %v2635 = vadd.f32 0.0, %v2634
  %v2636 = vpop.f32.mrb[0].mxu0
  %v2637 = vpop.f32.mrb[0].mxu0
  %v2638 = vadd.f32 0.0, %v2637
  %v2639 = vpop.f32.mrb[0].mxu0
  %2640 = vmatprep.mubr.bf16.mxu0 0
  %2641 = vmatmul.mubr.bf16.gmra.mrb[0].mxu0 %v2213
  %v2642 = vpop.f32.mrb[0].mxu0
  %v2643 = vadd.f32 0.0, %v2642
  %v2644 = vpop.f32.mrb[0].mxu0
  %v2645 = vpop.f32.mrb[0].mxu0
  %v2646 = vadd.f32 0.0, %v2645
  %v2647 = vpop.f32.mrb[0].mxu0
  %2648 = vdwg.mxu0
  %v2649 = vpack.c.bf16 %v2480, %v2479
  %v2650 = vpack.c.bf16 %v2482, %v2481
  %v2651 = vpack.c.bf16 %v2484, %v2483
  %v2652 = vpack.c.bf16 %v2486, %v2485
  %v2653 = vpack.c.bf16 %v2488, %v2487
  %v2654 = vpack.c.bf16 %v2490, %v2489
  %v2655 = vpack.c.bf16 %v2492, %v2491
  %v2656 = vpack.c.bf16 %v2494, %v2493
  %v2657 = vpack.c.bf16 %v2496, %v2495
  %v2658 = vpack.c.bf16 %v2498, %v2497
  %v2659 = vpack.c.bf16 %v2500, %v2499
  %v2660 = vpack.c.bf16 %v2502, %v2501
  %v2661 = vpack.c.bf16 %v2557, %v2554
  %v2662 = vpack.c.bf16 %v2565, %v2562
  %v2663 = vpack.c.bf16 %v2573, %v2570
  %v2665 = vsel %vm1442, %v2649, 0
  %v2668 = vsel %vm1442, %v2650, 0
  %v2671 = vsel %vm1442, %v2651, 0
  %v2674 = vsel %vm1442, %v2652, 0
  %v2677 = vsel %vm1442, %v2653, 0
  %v2680 = vsel %vm1442, %v2654, 0
  %v2683 = vsel %vm1442, %v2655, 0
  %v2686 = vsel %vm1442, %v2656, 0
  %v2689 = vsel %vm1442, %v2657, 0
  %v2692 = vsel %vm1442, %v2658, 0
  %v2695 = vsel %vm1442, %v2659, 0
  %v2698 = vsel %vm1442, %v2660, 0
  %v2701 = vsel %vm1442, %v2661, 0
  %v2704 = vsel %vm1442, %v2662, 0
  %v2707 = vsel %vm1442, %v2663, 0
  %2709 = vmatprep.subr.bf16.mxu0 0
  %2710 = vmatpush1.bf16.xpose.msra.mxu0 %v2701
  %2711 = vmatprep.subr.bf16.mxu0 0
  %2712 = vmatpush1.bf16.xpose.msra.mxu0 %v2704
  %2713 = vmatprep.subr.bf16.mxu0 0
  %2714 = vmatpush1.bf16.xpose.msra.mxu0 %v2707
  %2715 = vmatprep.subr.bf16.mxu0 0
  %2716 = vmatpush1.bf16.xpose.msra.mxu0 0
  %2717 = vmatprep.subr.bf16.mxu0 0
  %2718 = vmatpush1.bf16.xpose.msra.mxu0 0
  %2719 = vmatprep.subr.bf16.mxu0 0
  %2720 = vmatpush1.bf16.xpose.msra.mxu0 0
  %2721 = vmatprep.subr.bf16.mxu0 0
  %2722 = vmatpush1.bf16.xpose.msra.mxu0 0
  %2723 = vmatprep.subr.bf16.mxu0 0
  %2724 = vmatpush1.bf16.xpose.msra.mxu0 0
  %2725 = vmatprep.subr.bf16.mxu0 0
  %2726 = vmatpush1.bf16.xpose.msra.mxu0 0
  %2727 = vmatprep.subr.bf16.mxu0 0
  %2728 = vmatpush1.bf16.xpose.msra.mxu0 0
  %2729 = vmatprep.subr.bf16.mxu0 0
  %2730 = vmatpush1.bf16.xpose.msra.mxu0 0
  %2731 = vmatprep.subr.bf16.mxu0 0
  %2732 = vmatpush1.bf16.xpose.msra.mxu0 0
  %2733 = vmatprep.subr.bf16.mxu0 0
  %2734 = vmatpush1.bf16.xpose.msra.mxu0 0
  %2735 = vmatprep.subr.bf16.mxu0 0
  %2736 = vmatpush1.bf16.xpose.msra.mxu0 0
  %2737 = vmatprep.subr.bf16.mxu0 0
  %2738 = vmatpush1.bf16.xpose.msra.mxu0 0
  %2739 = vmatprep.subr.bf16.mxu0 0
  %2740 = vmatpush1.bf16.xpose.msra.mxu0 0
  %2741 = vmatprep.mubr.bf16.mxu0 0
  %2742 = vmatmul.mubr.bf16.gmra.mrb[0].mxu0 %v2665
  %v2743 = vpop.f32.mrb[0].mxu0
  %v2744 = vadd.f32 %v2059, %v2743
  %v2745 = vpop.f32.mrb[0].mxu0
  %v2746 = vpop.f32.mrb[0].mxu0
  %v2747 = vadd.f32 %v2060, %v2746
  %v2748 = vpop.f32.mrb[0].mxu0
  %2749 = vmatprep.mubr.bf16.mxu0 0
  %2750 = vmatmul.mubr.bf16.gmra.mrb[0].mxu0 %v2668
  %v2751 = vpop.f32.mrb[0].mxu0
  %v2752 = vadd.f32 %v2061, %v2751
  %v2753 = vpop.f32.mrb[0].mxu0
  %v2754 = vpop.f32.mrb[0].mxu0
  %v2755 = vadd.f32 %v2062, %v2754
  %v2756 = vpop.f32.mrb[0].mxu0
  %2757 = vmatprep.mubr.bf16.mxu0 0
  %2758 = vmatmul.mubr.bf16.gmra.mrb[0].mxu0 %v2671
  %v2759 = vpop.f32.mrb[0].mxu0
  %v2760 = vadd.f32 %v2063, %v2759
  %v2761 = vpop.f32.mrb[0].mxu0
  %v2762 = vpop.f32.mrb[0].mxu0
  %v2763 = vadd.f32 %v2064, %v2762
  %v2764 = vpop.f32.mrb[0].mxu0
  %2765 = vmatprep.mubr.bf16.mxu0 0
  %2766 = vmatmul.mubr.bf16.gmra.mrb[0].mxu0 %v2674
  %v2767 = vpop.f32.mrb[0].mxu0
  %v2768 = vadd.f32 %v2065, %v2767
  %v2769 = vpop.f32.mrb[0].mxu0
  %v2770 = vpop.f32.mrb[0].mxu0
  %v2771 = vadd.f32 %v2066, %v2770
  %v2772 = vpop.f32.mrb[0].mxu0
  %2773 = vmatprep.mubr.bf16.mxu0 0
  %2774 = vmatmul.mubr.bf16.gmra.mrb[0].mxu0 %v2677
  %v2775 = vpop.f32.mrb[0].mxu0
  %v2776 = vadd.f32 %v2067, %v2775
  %v2777 = vpop.f32.mrb[0].mxu0
  %v2778 = vpop.f32.mrb[0].mxu0
  %v2779 = vadd.f32 %v2068, %v2778
  %v2780 = vpop.f32.mrb[0].mxu0
  %2781 = vmatprep.mubr.bf16.mxu0 0
  %2782 = vmatmul.mubr.bf16.gmra.mrb[0].mxu0 %v2680
  %v2783 = vpop.f32.mrb[0].mxu0
  %v2784 = vadd.f32 %v2069, %v2783
  %v2785 = vpop.f32.mrb[0].mxu0
  %v2786 = vpop.f32.mrb[0].mxu0
  %v2787 = vadd.f32 %v2070, %v2786
  %v2788 = vpop.f32.mrb[0].mxu0
  %2789 = vmatprep.mubr.bf16.mxu0 0
  %2790 = vmatmul.mubr.bf16.gmra.mrb[0].mxu0 %v2683
  %v2791 = vpop.f32.mrb[0].mxu0
  %v2792 = vadd.f32 %v2071, %v2791
  %v2793 = vpop.f32.mrb[0].mxu0
  %v2794 = vpop.f32.mrb[0].mxu0
  %v2795 = vadd.f32 %v2072, %v2794
  %v2796 = vpop.f32.mrb[0].mxu0
  %2797 = vmatprep.mubr.bf16.mxu0 0
  %2798 = vmatmul.mubr.bf16.gmra.mrb[0].mxu0 %v2686
  %v2799 = vpop.f32.mrb[0].mxu0
  %v2800 = vadd.f32 %v2073, %v2799
  %v2801 = vpop.f32.mrb[0].mxu0
  %v2802 = vpop.f32.mrb[0].mxu0
  %v2803 = vadd.f32 %v2074, %v2802
  %v2804 = vpop.f32.mrb[0].mxu0
  %2805 = vmatprep.mubr.bf16.mxu0 0
  %2806 = vmatmul.mubr.bf16.gmra.mrb[0].mxu0 %v2689
  %v2807 = vpop.f32.mrb[0].mxu0
  %v2808 = vadd.f32 %v2075, %v2807
  %v2809 = vpop.f32.mrb[0].mxu0
  %v2810 = vpop.f32.mrb[0].mxu0
  %v2811 = vadd.f32 %v2076, %v2810
  %v2812 = vpop.f32.mrb[0].mxu0
  %2813 = vmatprep.mubr.bf16.mxu0 0
  %2814 = vmatmul.mubr.bf16.gmra.mrb[0].mxu0 %v2692
  %v2815 = vpop.f32.mrb[0].mxu0
  %v2816 = vadd.f32 %v2077, %v2815
  %v2817 = vpop.f32.mrb[0].mxu0
  %v2818 = vpop.f32.mrb[0].mxu0
  %v2819 = vadd.f32 %v2078, %v2818
  %v2820 = vpop.f32.mrb[0].mxu0
  %2821 = vmatprep.mubr.bf16.mxu0 0
  %2822 = vmatmul.mubr.bf16.gmra.mrb[0].mxu0 %v2695
  %v2823 = vpop.f32.mrb[0].mxu0
  %v2824 = vadd.f32 %v2079, %v2823
  %v2825 = vpop.f32.mrb[0].mxu0
  %v2826 = vpop.f32.mrb[0].mxu0
  %v2827 = vadd.f32 %v2080, %v2826
  %v2828 = vpop.f32.mrb[0].mxu0
  %2829 = vmatprep.mubr.bf16.mxu0 0
  %2830 = vmatmul.mubr.bf16.gmra.mrb[0].mxu0 %v2698
  %v2831 = vpop.f32.mrb[0].mxu0
  %v2832 = vadd.f32 %v2081, %v2831
  %v2833 = vpop.f32.mrb[0].mxu0
  %v2834 = vpop.f32.mrb[0].mxu0
  %v2835 = vadd.f32 %v2082, %v2834
  %v2836 = vpop.f32.mrb[0].mxu0
  %2837 = vdwg.mxu0
  %v2838 = vsel %vm148, %v2744, -inf
  %2839 = vmax.xlane.f32.xlu0 %v2838
  %v2840 = vpop.xlane.xlu0 %2839
  %v2841 = vsel %vm148, %v2747, -inf
  %2842 = vmax.xlane.f32.xlu0 %v2841
  %v2843 = vpop.xlane.xlu0 %2842
  %v2844 = vsel %vm148, %v2752, -inf
  %2845 = vmax.xlane.f32.xlu0 %v2844
  %v2846 = vpop.xlane.xlu0 %2845
  %v2847 = vsel %vm148, %v2755, -inf
  %2848 = vmax.xlane.f32.xlu0 %v2847
  %v2849 = vpop.xlane.xlu0 %2848
  %v2850 = vsel %vm148, %v2760, -inf
  %2851 = vmax.xlane.f32.xlu0 %v2850
  %v2852 = vpop.xlane.xlu0 %2851
  %v2853 = vsel %vm148, %v2763, -inf
  %2854 = vmax.xlane.f32.xlu0 %v2853
  %v2855 = vpop.xlane.xlu0 %2854
  %v2856 = vsel %vm148, %v2768, -inf
  %2857 = vmax.xlane.f32.xlu0 %v2856
  %v2858 = vpop.xlane.xlu0 %2857
  %v2859 = vsel %vm148, %v2771, -inf
  %2860 = vmax.xlane.f32.xlu0 %v2859
  %v2861 = vpop.xlane.xlu0 %2860
  %v2862 = vsel %vm148, %v2776, -inf
  %2863 = vmax.xlane.f32.xlu0 %v2862
  %v2864 = vpop.xlane.xlu0 %2863
  %v2865 = vsel %vm148, %v2779, -inf
  %2866 = vmax.xlane.f32.xlu0 %v2865
  %v2867 = vpop.xlane.xlu0 %2866
  %v2868 = vsel %vm148, %v2784, -inf
  %2869 = vmax.xlane.f32.xlu0 %v2868
  %v2870 = vpop.xlane.xlu0 %2869
  %v2871 = vsel %vm148, %v2787, -inf
  %2872 = vmax.xlane.f32.xlu0 %v2871
  %v2873 = vpop.xlane.xlu0 %2872
  %v2874 = vsel %vm148, %v2792, -inf
  %2875 = vmax.xlane.f32.xlu0 %v2874
  %v2876 = vpop.xlane.xlu0 %2875
  %v2877 = vsel %vm148, %v2795, -inf
  %2878 = vmax.xlane.f32.xlu0 %v2877
  %v2879 = vpop.xlane.xlu0 %2878
  %v2880 = vsel %vm148, %v2800, -inf
  %2881 = vmax.xlane.f32.xlu0 %v2880
  %v2882 = vpop.xlane.xlu0 %2881
  %v2883 = vsel %vm148, %v2803, -inf
  %2884 = vmax.xlane.f32.xlu0 %v2883
  %v2885 = vpop.xlane.xlu0 %2884
  %v2886 = vsel %vm148, %v2808, -inf
  %2887 = vmax.xlane.f32.xlu0 %v2886
  %v2888 = vpop.xlane.xlu0 %2887
  %v2889 = vsel %vm148, %v2811, -inf
  %2890 = vmax.xlane.f32.xlu0 %v2889
  %v2891 = vpop.xlane.xlu0 %2890
  %v2892 = vsel %vm148, %v2816, -inf
  %2893 = vmax.xlane.f32.xlu0 %v2892
  %v2894 = vpop.xlane.xlu0 %2893
  %v2895 = vsel %vm148, %v2819, -inf
  %2896 = vmax.xlane.f32.xlu0 %v2895
  %v2897 = vpop.xlane.xlu0 %2896
  %v2898 = vsel %vm148, %v2824, -inf
  %2899 = vmax.xlane.f32.xlu0 %v2898
  %v2900 = vpop.xlane.xlu0 %2899
  %v2901 = vsel %vm148, %v2827, -inf
  %2902 = vmax.xlane.f32.xlu0 %v2901
  %v2903 = vpop.xlane.xlu0 %2902
  %v2904 = vsel %vm148, %v2832, -inf
  %2905 = vmax.xlane.f32.xlu0 %v2904
  %v2906 = vpop.xlane.xlu0 %2905
  %v2907 = vsel %vm148, %v2835, -inf
  %2908 = vmax.xlane.f32.xlu0 %v2907
  %v2909 = vpop.xlane.xlu0 %2908
  %v2910 = vsub.f32 %v2744, %v2840
  %v2911 = vsub.f32 %v2747, %v2843
  %v2912 = vsub.f32 %v2752, %v2846
  %v2913 = vsub.f32 %v2755, %v2849
  %v2914 = vsub.f32 %v2760, %v2852
  %v2915 = vsub.f32 %v2763, %v2855
  %v2916 = vsub.f32 %v2768, %v2858
  %v2917 = vsub.f32 %v2771, %v2861
  %v2918 = vsub.f32 %v2776, %v2864
  %v2919 = vsub.f32 %v2779, %v2867
  %v2920 = vsub.f32 %v2784, %v2870
  %v2921 = vsub.f32 %v2787, %v2873
  %v2922 = vsub.f32 %v2792, %v2876
  %v2923 = vsub.f32 %v2795, %v2879
  %v2924 = vsub.f32 %v2800, %v2882
  %v2925 = vsub.f32 %v2803, %v2885
  %v2926 = vsub.f32 %v2808, %v2888
  %v2927 = vsub.f32 %v2811, %v2891
  %v2928 = vsub.f32 %v2816, %v2894
  %v2929 = vsub.f32 %v2819, %v2897
  %v2930 = vsub.f32 %v2824, %v2900
  %v2931 = vsub.f32 %v2827, %v2903
  %v2932 = vsub.f32 %v2832, %v2906
  %v2933 = vsub.f32 %v2835, %v2909
  %v2934 = vmul.f32 %v2910, 1.442695
  %v2935 = vpow.pop %v2934
  %v2936 = vmul.f32 %v2911, 1.442695
  %v2937 = vpow.pop %v2936
  %v2938 = vmul.f32 %v2912, 1.442695
  %v2939 = vpow.pop %v2938
  %v2940 = vmul.f32 %v2913, 1.442695
  %v2941 = vpow.pop %v2940
  %v2942 = vmul.f32 %v2914, 1.442695
  %v2943 = vpow.pop %v2942
  %v2944 = vmul.f32 %v2915, 1.442695
  %v2945 = vpow.pop %v2944
  %v2946 = vmul.f32 %v2916, 1.442695
  %v2947 = vpow.pop %v2946
  %v2948 = vmul.f32 %v2917, 1.442695
  %v2949 = vpow.pop %v2948
  %v2950 = vmul.f32 %v2918, 1.442695
  %v2951 = vpow.pop %v2950
  %v2952 = vmul.f32 %v2919, 1.442695
  %v2953 = vpow.pop %v2952
  %v2954 = vmul.f32 %v2920, 1.442695
  %v2955 = vpow.pop %v2954
  %v2956 = vmul.f32 %v2921, 1.442695
  %v2957 = vpow.pop %v2956
  %v2958 = vmul.f32 %v2922, 1.442695
  %v2959 = vpow.pop %v2958
  %v2960 = vmul.f32 %v2923, 1.442695
  %v2961 = vpow.pop %v2960
  %v2962 = vmul.f32 %v2924, 1.442695
  %v2963 = vpow.pop %v2962
  %v2964 = vmul.f32 %v2925, 1.442695
  %v2965 = vpow.pop %v2964
  %v2966 = vmul.f32 %v2926, 1.442695
  %v2967 = vpow.pop %v2966
  %v2968 = vmul.f32 %v2927, 1.442695
  %v2969 = vpow.pop %v2968
  %v2970 = vmul.f32 %v2928, 1.442695
  %v2971 = vpow.pop %v2970
  %v2972 = vmul.f32 %v2929, 1.442695
  %v2973 = vpow.pop %v2972
  %v2974 = vmul.f32 %v2930, 1.442695
  %v2975 = vpow.pop %v2974
  %v2976 = vmul.f32 %v2931, 1.442695
  %v2977 = vpow.pop %v2976
  %v2978 = vmul.f32 %v2932, 1.442695
  %v2979 = vpow.pop %v2978
  %v2980 = vmul.f32 %v2933, 1.442695
  %v2981 = vpow.pop %v2980
  %v2982 = vsel %vm148, %v2935, 0.0
  %2983 = vadd.xlane.f32.xlu0 %v2982
  %v2984 = vpop.xlane.xlu0 %2983
  %v2985 = vsel %vm148, %v2937, 0.0
  %2986 = vadd.xlane.f32.xlu0 %v2985
  %v2987 = vpop.xlane.xlu0 %2986
  %v2988 = vsel %vm148, %v2939, 0.0
  %2989 = vadd.xlane.f32.xlu0 %v2988
  %v2990 = vpop.xlane.xlu0 %2989
  %v2991 = vsel %vm148, %v2941, 0.0
  %2992 = vadd.xlane.f32.xlu0 %v2991
  %v2993 = vpop.xlane.xlu0 %2992
  %v2994 = vsel %vm148, %v2943, 0.0
  %2995 = vadd.xlane.f32.xlu0 %v2994
  %v2996 = vpop.xlane.xlu0 %2995
  %v2997 = vsel %vm148, %v2945, 0.0
  %2998 = vadd.xlane.f32.xlu0 %v2997
  %v2999 = vpop.xlane.xlu0 %2998
  %v3000 = vsel %vm148, %v2947, 0.0
  %3001 = vadd.xlane.f32.xlu0 %v3000
  %v3002 = vpop.xlane.xlu0 %3001
  %v3003 = vsel %vm148, %v2949, 0.0
  %3004 = vadd.xlane.f32.xlu0 %v3003
  %v3005 = vpop.xlane.xlu0 %3004
  %v3006 = vsel %vm148, %v2951, 0.0
  %3007 = vadd.xlane.f32.xlu0 %v3006
  %v3008 = vpop.xlane.xlu0 %3007
  %v3009 = vsel %vm148, %v2953, 0.0
  %3010 = vadd.xlane.f32.xlu0 %v3009
  %v3011 = vpop.xlane.xlu0 %3010
  %v3012 = vsel %vm148, %v2955, 0.0
  %3013 = vadd.xlane.f32.xlu0 %v3012
  %v3014 = vpop.xlane.xlu0 %3013
  %v3015 = vsel %vm148, %v2957, 0.0
  %3016 = vadd.xlane.f32.xlu0 %v3015
  %v3017 = vpop.xlane.xlu0 %3016
  %v3018 = vsel %vm148, %v2959, 0.0
  %3019 = vadd.xlane.f32.xlu0 %v3018
  %v3020 = vpop.xlane.xlu0 %3019
  %v3021 = vsel %vm148, %v2961, 0.0
  %3022 = vadd.xlane.f32.xlu0 %v3021
  %v3023 = vpop.xlane.xlu0 %3022
  %v3024 = vsel %vm148, %v2963, 0.0
  %3025 = vadd.xlane.f32.xlu0 %v3024
  %v3026 = vpop.xlane.xlu0 %3025
  %v3027 = vsel %vm148, %v2965, 0.0
  %3028 = vadd.xlane.f32.xlu0 %v3027
  %v3029 = vpop.xlane.xlu0 %3028
  %v3030 = vsel %vm148, %v2967, 0.0
  %3031 = vadd.xlane.f32.xlu0 %v3030
  %v3032 = vpop.xlane.xlu0 %3031
  %v3033 = vsel %vm148, %v2969, 0.0
  %3034 = vadd.xlane.f32.xlu0 %v3033
  %v3035 = vpop.xlane.xlu0 %3034
  %v3036 = vsel %vm148, %v2971, 0.0
  %3037 = vadd.xlane.f32.xlu0 %v3036
  %v3038 = vpop.xlane.xlu0 %3037
  %v3039 = vsel %vm148, %v2973, 0.0
  %3040 = vadd.xlane.f32.xlu0 %v3039
  %v3041 = vpop.xlane.xlu0 %3040
  %v3042 = vsel %vm148, %v2975, 0.0
  %3043 = vadd.xlane.f32.xlu0 %v3042
  %v3044 = vpop.xlane.xlu0 %3043
  %v3045 = vsel %vm148, %v2977, 0.0
  %3046 = vadd.xlane.f32.xlu0 %v3045
  %v3047 = vpop.xlane.xlu0 %3046
  %v3048 = vsel %vm148, %v2979, 0.0
  %3049 = vadd.xlane.f32.xlu0 %v3048
  %v3050 = vpop.xlane.xlu0 %3049
  %v3051 = vsel %vm148, %v2981, 0.0
  %3052 = vadd.xlane.f32.xlu0 %v3051
  %v3053 = vpop.xlane.xlu0 %3052
  %v3054 = vrcp.pop %v2984
  %v3055 = vrcp.pop %v2987
  %v3056 = vrcp.pop %v2990
  %v3057 = vrcp.pop %v2993
  %v3058 = vrcp.pop %v2996
  %v3059 = vrcp.pop %v2999
  %v3060 = vrcp.pop %v3002
  %v3061 = vrcp.pop %v3005
  %v3062 = vrcp.pop %v3008
  %v3063 = vrcp.pop %v3011
  %v3064 = vrcp.pop %v3014
  %v3065 = vrcp.pop %v3017
  %v3066 = vrcp.pop %v3020
  %v3067 = vrcp.pop %v3023
  %v3068 = vrcp.pop %v3026
  %v3069 = vrcp.pop %v3029
  %v3070 = vrcp.pop %v3032
  %v3071 = vrcp.pop %v3035
  %v3072 = vrcp.pop %v3038
  %v3073 = vrcp.pop %v3041
  %v3074 = vrcp.pop %v3044
  %v3075 = vrcp.pop %v3047
  %v3076 = vrcp.pop %v3050
  %v3077 = vrcp.pop %v3053
  %v3078 = vmul.f32 %v2935, %v3054
  %v3079 = vmul.f32 %v2937, %v3055
  %v3080 = vmul.f32 %v2939, %v3056
  %v3081 = vmul.f32 %v2941, %v3057
  %v3082 = vmul.f32 %v2943, %v3058
  %v3083 = vmul.f32 %v2945, %v3059
  %v3084 = vmul.f32 %v2947, %v3060
  %v3085 = vmul.f32 %v2949, %v3061
  %v3086 = vmul.f32 %v2951, %v3062
  %v3087 = vmul.f32 %v2953, %v3063
  %v3088 = vmul.f32 %v2955, %v3064
  %v3089 = vmul.f32 %v2957, %v3065
  %v3090 = vmul.f32 %v2959, %v3066
  %v3091 = vmul.f32 %v2961, %v3067
  %v3092 = vmul.f32 %v2963, %v3068
  %v3093 = vmul.f32 %v2965, %v3069
  %v3094 = vmul.f32 %v2967, %v3070
  %v3095 = vmul.f32 %v2969, %v3071
  %v3096 = vmul.f32 %v2971, %v3072
  %v3097 = vmul.f32 %v2973, %v3073
  %v3098 = vmul.f32 %v2975, %v3074
  %v3099 = vmul.f32 %v2977, %v3075
  %v3100 = vmul.f32 %v2979, %v3076
  %v3101 = vmul.f32 %v2981, %v3077
  %v3102 = vpack.c.bf16 %v3079, %v3078
  %v3103 = vpack.c.bf16 %v3081, %v3080
  %v3104 = vpack.c.bf16 %v3083, %v3082
  %v3105 = vpack.c.bf16 %v3085, %v3084
  %v3106 = vpack.c.bf16 %v3087, %v3086
  %v3107 = vpack.c.bf16 %v3089, %v3088
  %v3108 = vpack.c.bf16 %v3091, %v3090
  %v3109 = vpack.c.bf16 %v3093, %v3092
  %v3110 = vpack.c.bf16 %v3095, %v3094
  %v3111 = vpack.c.bf16 %v3097, %v3096
  %v3112 = vpack.c.bf16 %v3099, %v3098
  %v3113 = vpack.c.bf16 %v3101, %v3100
  %v3114 = vpack.c.bf16 %v2630, %v2627
  %v3115 = vpack.c.bf16 %v2638, %v2635
  %v3116 = vpack.c.bf16 %v2646, %v2643
  %v3118 = vsel %vm148, %v3102, 0
  %v3121 = vsel %vm148, %v3103, 0
  %v3124 = vsel %vm148, %v3104, 0
  %v3127 = vsel %vm148, %v3105, 0
  %v3130 = vsel %vm148, %v3106, 0
  %v3133 = vsel %vm148, %v3107, 0
  %v3136 = vsel %vm148, %v3108, 0
  %v3139 = vsel %vm148, %v3109, 0
  %v3142 = vsel %vm148, %v3110, 0
  %v3145 = vsel %vm148, %v3111, 0
  %v3148 = vsel %vm148, %v3112, 0
  %v3151 = vsel %vm148, %v3113, 0
  %3153 = vmatprep.subr.bf16.mxu0 0
  %3154 = vmatpush1.bf16.msra.mxu0 %v3114
  %3155 = vmatprep.subr.bf16.mxu0 0
  %3156 = vmatpush1.bf16.msra.mxu0 %v3115
  %3157 = vmatprep.subr.bf16.mxu0 0
  %3158 = vmatpush1.bf16.msra.mxu0 %v3116
  %3159 = vmatprep.subr.bf16.mxu0 0
  %3160 = vmatpush1.bf16.msra.mxu0 0
  %3161 = vmatprep.subr.bf16.mxu0 0
  %3162 = vmatpush1.bf16.msra.mxu0 0
  %3163 = vmatprep.subr.bf16.mxu0 0
  %3164 = vmatpush1.bf16.msra.mxu0 0
  %3165 = vmatprep.subr.bf16.mxu0 0
  %3166 = vmatpush1.bf16.msra.mxu0 0
  %3167 = vmatprep.subr.bf16.mxu0 0
  %3168 = vmatpush1.bf16.msra.mxu0 0
  %3169 = vmatprep.subr.bf16.mxu0 0
  %3170 = vmatpush1.bf16.msra.mxu0 0
  %3171 = vmatprep.subr.bf16.mxu0 0
  %3172 = vmatpush1.bf16.msra.mxu0 0
  %3173 = vmatprep.subr.bf16.mxu0 0
  %3174 = vmatpush1.bf16.msra.mxu0 0
  %3175 = vmatprep.subr.bf16.mxu0 0
  %3176 = vmatpush1.bf16.msra.mxu0 0
  %3177 = vmatprep.subr.bf16.mxu0 0
  %3178 = vmatpush1.bf16.msra.mxu0 0
  %3179 = vmatprep.subr.bf16.mxu0 0
  %3180 = vmatpush1.bf16.msra.mxu0 0
  %3181 = vmatprep.subr.bf16.mxu0 0
  %3182 = vmatpush1.bf16.msra.mxu0 0
  %3183 = vmatprep.subr.bf16.mxu0 0
  %3184 = vmatpush1.bf16.msra.mxu0 0
  %3185 = vmatprep.mubr.bf16.mxu0 0
  %3186 = vmatmul.mubr.bf16.gmra.mrb[0].mxu0 %v3118
  %v3187 = vpop.f32.mrb[0].mxu0
  %v3188 = vadd.f32 0.0, %v3187
  %v3189 = vpop.f32.mrb[0].mxu0
  %v3190 = vpop.f32.mrb[0].mxu0
  %v3191 = vadd.f32 0.0, %v3190
  %v3192 = vpop.f32.mrb[0].mxu0
  %3193 = vmatprep.mubr.bf16.mxu0 0
  %3194 = vmatmul.mubr.bf16.gmra.mrb[0].mxu0 %v3121
  %v3195 = vpop.f32.mrb[0].mxu0
  %v3196 = vadd.f32 0.0, %v3195
  %v3197 = vpop.f32.mrb[0].mxu0
  %v3198 = vpop.f32.mrb[0].mxu0
  %v3199 = vadd.f32 0.0, %v3198
  %v3200 = vpop.f32.mrb[0].mxu0
  %3201 = vmatprep.mubr.bf16.mxu0 0
  %3202 = vmatmul.mubr.bf16.gmra.mrb[0].mxu0 %v3124
  %v3203 = vpop.f32.mrb[0].mxu0
  %v3204 = vadd.f32 0.0, %v3203
  %v3205 = vpop.f32.mrb[0].mxu0
  %v3206 = vpop.f32.mrb[0].mxu0
  %v3207 = vadd.f32 0.0, %v3206
  %v3208 = vpop.f32.mrb[0].mxu0
  %3209 = vmatprep.mubr.bf16.mxu0 0
  %3210 = vmatmul.mubr.bf16.gmra.mrb[0].mxu0 %v3127
  %v3211 = vpop.f32.mrb[0].mxu0
  %v3212 = vadd.f32 0.0, %v3211
  %v3213 = vpop.f32.mrb[0].mxu0
  %v3214 = vpop.f32.mrb[0].mxu0
  %v3215 = vadd.f32 0.0, %v3214
  %v3216 = vpop.f32.mrb[0].mxu0
  %3217 = vmatprep.mubr.bf16.mxu0 0
  %3218 = vmatmul.mubr.bf16.gmra.mrb[0].mxu0 %v3130
  %v3219 = vpop.f32.mrb[0].mxu0
  %v3220 = vadd.f32 0.0, %v3219
  %v3221 = vpop.f32.mrb[0].mxu0
  %v3222 = vpop.f32.mrb[0].mxu0
  %v3223 = vadd.f32 0.0, %v3222
  %v3224 = vpop.f32.mrb[0].mxu0
  %3225 = vmatprep.mubr.bf16.mxu0 0
  %3226 = vmatmul.mubr.bf16.gmra.mrb[0].mxu0 %v3133
  %v3227 = vpop.f32.mrb[0].mxu0
  %v3228 = vadd.f32 0.0, %v3227
  %v3229 = vpop.f32.mrb[0].mxu0
  %v3230 = vpop.f32.mrb[0].mxu0
  %v3231 = vadd.f32 0.0, %v3230
  %v3232 = vpop.f32.mrb[0].mxu0
  %3233 = vmatprep.mubr.bf16.mxu0 0
  %3234 = vmatmul.mubr.bf16.gmra.mrb[0].mxu0 %v3136
  %v3235 = vpop.f32.mrb[0].mxu0
  %v3236 = vadd.f32 0.0, %v3235
  %v3237 = vpop.f32.mrb[0].mxu0
  %v3238 = vpop.f32.mrb[0].mxu0
  %v3239 = vadd.f32 0.0, %v3238
  %v3240 = vpop.f32.mrb[0].mxu0
  %3241 = vmatprep.mubr.bf16.mxu0 0
  %3242 = vmatmul.mubr.bf16.gmra.mrb[0].mxu0 %v3139
  %v3243 = vpop.f32.mrb[0].mxu0
  %v3244 = vadd.f32 0.0, %v3243
  %v3245 = vpop.f32.mrb[0].mxu0
  %v3246 = vpop.f32.mrb[0].mxu0
  %v3247 = vadd.f32 0.0, %v3246
  %v3248 = vpop.f32.mrb[0].mxu0
  %3249 = vmatprep.mubr.bf16.mxu0 0
  %3250 = vmatmul.mubr.bf16.gmra.mrb[0].mxu0 %v3142
  %v3251 = vpop.f32.mrb[0].mxu0
  %v3252 = vadd.f32 0.0, %v3251
  %v3253 = vpop.f32.mrb[0].mxu0
  %v3254 = vpop.f32.mrb[0].mxu0
  %v3255 = vadd.f32 0.0, %v3254
  %v3256 = vpop.f32.mrb[0].mxu0
  %3257 = vmatprep.mubr.bf16.mxu0 0
  %3258 = vmatmul.mubr.bf16.gmra.mrb[0].mxu0 %v3145
  %v3259 = vpop.f32.mrb[0].mxu0
  %v3260 = vadd.f32 0.0, %v3259
  %v3261 = vpop.f32.mrb[0].mxu0
  %v3262 = vpop.f32.mrb[0].mxu0
  %v3263 = vadd.f32 0.0, %v3262
  %v3264 = vpop.f32.mrb[0].mxu0
  %3265 = vmatprep.mubr.bf16.mxu0 0
  %3266 = vmatmul.mubr.bf16.gmra.mrb[0].mxu0 %v3148
  %v3267 = vpop.f32.mrb[0].mxu0
  %v3268 = vadd.f32 0.0, %v3267
  %v3269 = vpop.f32.mrb[0].mxu0
  %v3270 = vpop.f32.mrb[0].mxu0
  %v3271 = vadd.f32 0.0, %v3270
  %v3272 = vpop.f32.mrb[0].mxu0
  %3273 = vmatprep.mubr.bf16.mxu0 0
  %3274 = vmatmul.mubr.bf16.gmra.mrb[0].mxu0 %v3151
  %v3275 = vpop.f32.mrb[0].mxu0
  %v3276 = vadd.f32 0.0, %v3275
  %v3277 = vpop.f32.mrb[0].mxu0
  %v3278 = vpop.f32.mrb[0].mxu0
  %v3279 = vadd.f32 0.0, %v3278
  %v3280 = vpop.f32.mrb[0].mxu0
  %3281 = vdwg.mxu0
  %3288 = vrot.lane.b32.xlu0 %v3212, 16
  %v3289 = vpop.permute.xlu0 %3288
  %3290 = vrot.lane.b32.xlu0 %v3215, 16
  %v3291 = vpop.permute.xlu0 %3290
  %3292 = vrot.lane.b32.xlu0 %v3220, 16
  %v3293 = vpop.permute.xlu0 %3292
  %3294 = vrot.lane.b32.xlu0 %v3223, 16
  %v3295 = vpop.permute.xlu0 %3294
  %3296 = vrot.lane.b32.xlu0 %v3228, 16
  %v3297 = vpop.permute.xlu0 %3296
  %3298 = vrot.lane.b32.xlu0 %v3231, 16
  %v3299 = vpop.permute.xlu0 %3298
  %3312 = vrot.lane.b32.xlu0 %v3236, 32
  %v3313 = vpop.permute.xlu0 %3312
  %3314 = vrot.lane.b32.xlu0 %v3239, 32
  %v3315 = vpop.permute.xlu0 %3314
  %3316 = vrot.lane.b32.xlu0 %v3244, 32
  %v3317 = vpop.permute.xlu0 %3316
  %3318 = vrot.lane.b32.xlu0 %v3247, 32
  %v3319 = vpop.permute.xlu0 %3318
  %3320 = vrot.lane.b32.xlu0 %v3252, 32
  %v3321 = vpop.permute.xlu0 %3320
  %3322 = vrot.lane.b32.xlu0 %v3255, 32
  %v3323 = vpop.permute.xlu0 %3322
  %3336 = vrot.lane.b32.xlu0 %v3260, 48
  %v3337 = vpop.permute.xlu0 %3336
  %3338 = vrot.lane.b32.xlu0 %v3263, 48
  %v3339 = vpop.permute.xlu0 %3338
  %3340 = vrot.lane.b32.xlu0 %v3268, 48
  %v3341 = vpop.permute.xlu0 %3340
  %3342 = vrot.lane.b32.xlu0 %v3271, 48
  %v3343 = vpop.permute.xlu0 %3342
  %3344 = vrot.lane.b32.xlu0 %v3276, 48
  %v3345 = vpop.permute.xlu0 %3344
  %3346 = vrot.lane.b32.xlu0 %v3279, 48
  %v3347 = vpop.permute.xlu0 %3346
  %v3354 = vsel %vm1442, %v3188, %v3289
  %v3355 = vsel %vm1442, %v3191, %v3291
  %v3356 = vsel %vm1442, %v3196, %v3293
  %v3357 = vsel %vm1442, %v3199, %v3295
  %v3358 = vsel %vm1442, %v3204, %v3297
  %v3359 = vsel %vm1442, %v3207, %v3299
  %v3360 = vsel %vm324, %v3354, %v3313
  %v3361 = vsel %vm324, %v3355, %v3315
  %v3362 = vsel %vm324, %v3356, %v3317
  %v3363 = vsel %vm324, %v3357, %v3319
  %v3364 = vsel %vm324, %v3358, %v3321
  %v3365 = vsel %vm324, %v3359, %v3323
  %v3366 = vsel %vm148, %v3360, %v3337
  %v3367 = vsel %vm148, %v3361, %v3339
  %v3368 = vsel %vm148, %v3362, %v3341
  %v3369 = vsel %vm148, %v3363, %v3343
  %v3370 = vsel %vm148, %v3364, %v3345
  %v3371 = vsel %vm148, %v3365, %v3347
  %v3372 = vpack.c.bf16 %v3367, %v3366
  %v3373 = vpack.c.bf16 %v3369, %v3368
  %v3374 = vpack.c.bf16 %v3371, %v3370
  %v3375 = vld [vmem:[%s13] sm:$0xf]
  %v3376 = vld [vmem:[%s13 + $0x4] sm:$0xf]
  %v3377 = vld [vmem:[%s13 + $0x8] sm:$0xf]
  %v3378 = vld [vmem:[%s13 + $0xc] sm:$0xf]
  %v3379 = vld [vmem:[%s13 + $0x10] sm:$0xf]
  %v3380 = vld [vmem:[%s13 + $0x14] sm:$0xf]
  %v3381 = vld [vmem:[%s13 + $0x18] sm:$0xf]
  %v3382 = vld [vmem:[%s13 + $0x1c] sm:$0xf]
  %v3391 = vunpack.c.l.b16 %v3375
  %v3392 = vunpack.c.l.b16 %v3376
  %v3393 = vunpack.c.l.b16 %v3377
  %v3394 = vunpack.c.l.b16 %v3378
  %v3395 = vunpack.c.l.b16 %v3379
  %v3396 = vunpack.c.l.b16 %v3380
  %v3397 = vunpack.c.l.b16 %v3381
  %v3398 = vunpack.c.l.b16 %v3382
  %v3399 = vpack.c.b16 %v3392, %v3391
  %v3400 = vpack.c.b16 %v3394, %v3393
  %v3401 = vpack.c.b16 %v3396, %v3395
  %v3402 = vpack.c.b16 %v3398, %v3397
  %vm3407 = vcmask 523264
  %v3409 = vsel %vm3407, %v3372, 0
  %v3412 = vsel %vm3407, %v3373, 0
  %v3415 = vsel %vm3407, %v3374, 0
  %3417 = vmatprep.subr.bf16.mxu0 0
  %3418 = vmatpush1.bf16.msra.mxu0 %v3399
  %3419 = vmatprep.subr.bf16.mxu0 0
  %3420 = vmatpush1.bf16.msra.mxu0 %v3400
  %3421 = vmatprep.subr.bf16.mxu0 0
  %3422 = vmatpush1.bf16.msra.mxu0 %v3401
  %3423 = vmatprep.subr.bf16.mxu0 0
  %3424 = vmatpush1.bf16.msra.mxu0 %v3402
  %3425 = vmatprep.subr.bf16.mxu0 0
  %3426 = vmatpush1.bf16.msra.mxu0 0
  %3427 = vmatprep.subr.bf16.mxu0 0
  %3428 = vmatpush1.bf16.msra.mxu0 0
  %3429 = vmatprep.subr.bf16.mxu0 0
  %3430 = vmatpush1.bf16.msra.mxu0 0
  %3431 = vmatprep.subr.bf16.mxu0 0
  %3432 = vmatpush1.bf16.msra.mxu0 0
  %3433 = vmatprep.subr.bf16.mxu0 0
  %3434 = vmatpush1.bf16.msra.mxu0 0
  %3435 = vmatprep.subr.bf16.mxu0 0
  %3436 = vmatpush1.bf16.msra.mxu0 0
  %3437 = vmatprep.subr.bf16.mxu0 0
  %3438 = vmatpush1.bf16.msra.mxu0 0
  %3439 = vmatprep.subr.bf16.mxu0 0
  %3440 = vmatpush1.bf16.msra.mxu0 0
  %3441 = vmatprep.subr.bf16.mxu0 0
  %3442 = vmatpush1.bf16.msra.mxu0 0
  %3443 = vmatprep.subr.bf16.mxu0 0
  %3444 = vmatpush1.bf16.msra.mxu0 0
  %3445 = vmatprep.subr.bf16.mxu0 0
  %3446 = vmatpush1.bf16.msra.mxu0 0
  %3447 = vmatprep.subr.bf16.mxu0 0
  %3448 = vmatpush1.bf16.msra.mxu0 0
  %3449 = vmatprep.mubr.bf16.mxu0 0
  %3450 = vmatmul.mubr.bf16.gmra.mrb[0].mxu0 %v3409
  %v3451 = vpop.f32.mrb[0].mxu0
  %v3452 = vadd.f32 0.0, %v3451
  %v3453 = vpop.f32.mrb[0].mxu0
  %v3454 = vpop.f32.mrb[0].mxu0
  %v3455 = vadd.f32 0.0, %v3454
  %v3456 = vpop.f32.mrb[0].mxu0
  %3457 = vmatprep.mubr.bf16.mxu0 0
  %3458 = vmatmul.mubr.bf16.gmra.mrb[0].mxu0 %v3412
  %v3459 = vpop.f32.mrb[0].mxu0
  %v3460 = vadd.f32 0.0, %v3459
  %v3461 = vpop.f32.mrb[0].mxu0
  %v3462 = vpop.f32.mrb[0].mxu0
  %v3463 = vadd.f32 0.0, %v3462
  %v3464 = vpop.f32.mrb[0].mxu0
  %3465 = vmatprep.mubr.bf16.mxu0 0
  %3466 = vmatmul.mubr.bf16.gmra.mrb[0].mxu0 %v3415
  %v3467 = vpop.f32.mrb[0].mxu0
  %v3468 = vadd.f32 0.0, %v3467
  %v3469 = vpop.f32.mrb[0].mxu0
  %v3470 = vpop.f32.mrb[0].mxu0
  %v3471 = vadd.f32 0.0, %v3470
  %v3472 = vpop.f32.mrb[0].mxu0
  %3473 = vdwg.mxu0
  %v3474 = vadd.f32 %v2053, %v3452
  %v3475 = vadd.f32 %v2054, %v3455
  %v3476 = vadd.f32 %v2055, %v3460
  %v3477 = vadd.f32 %v2056, %v3463
  %v3478 = vadd.f32 %v2057, %v3468
  %v3479 = vadd.f32 %v2058, %v3471
  %v3480 = vld [vmem:[%s14] sm:$0x1]
  %v3481 = vsel %vm324, %v3474, 0.0
  %3482 = vadd.xlane.f32.xlu0 %v3481
  %v3483 = vpop.xlane.xlu0 %3482
  %v3484 = vsel %vm324, %v3475, 0.0
  %3485 = vadd.xlane.f32.xlu0 %v3484
  %v3486 = vpop.xlane.xlu0 %3485
  %v3487 = vsel %vm324, %v3476, 0.0
  %3488 = vadd.xlane.f32.xlu0 %v3487
  %v3489 = vpop.xlane.xlu0 %3488
  %v3490 = vsel %vm324, %v3477, 0.0
  %3491 = vadd.xlane.f32.xlu0 %v3490
  %v3492 = vpop.xlane.xlu0 %3491
  %v3493 = vsel %vm324, %v3478, 0.0
  %3494 = vadd.xlane.f32.xlu0 %v3493
  %v3495 = vpop.xlane.xlu0 %3494
  %v3496 = vsel %vm324, %v3479, 0.0
  %3497 = vadd.xlane.f32.xlu0 %v3496
  %v3498 = vpop.xlane.xlu0 %3497
  %v3499 = vmul.f32 %v3483, %v2102
  %v3500 = vmul.f32 %v3486, %v2102
  %v3501 = vmul.f32 %v3489, %v2102
  %v3502 = vmul.f32 %v3492, %v2102
  %v3503 = vmul.f32 %v3495, %v2102
  %v3504 = vmul.f32 %v3498, %v2102
  %v3505 = vsub.f32 %v3474, %v3499
  %v3506 = vsub.f32 %v3475, %v3500
  %v3507 = vsub.f32 %v3476, %v3501
  %v3508 = vsub.f32 %v3477, %v3502
  %v3509 = vsub.f32 %v3478, %v3503
  %v3510 = vsub.f32 %v3479, %v3504
  %v3511 = vmul.f32 %v3505, %v3505
  %v3512 = vmul.f32 %v3506, %v3506
  %v3513 = vmul.f32 %v3507, %v3507
  %v3514 = vmul.f32 %v3508, %v3508
  %v3515 = vmul.f32 %v3509, %v3509
  %v3516 = vmul.f32 %v3510, %v3510
  %v3517 = vsel %vm324, %v3511, 0.0
  %3518 = vadd.xlane.f32.xlu0 %v3517
  %v3519 = vpop.xlane.xlu0 %3518
  %v3520 = vsel %vm324, %v3512, 0.0
  %3521 = vadd.xlane.f32.xlu0 %v3520
  %v3522 = vpop.xlane.xlu0 %3521
  %v3523 = vsel %vm324, %v3513, 0.0
  %3524 = vadd.xlane.f32.xlu0 %v3523
  %v3525 = vpop.xlane.xlu0 %3524
  %v3526 = vsel %vm324, %v3514, 0.0
  %3527 = vadd.xlane.f32.xlu0 %v3526
  %v3528 = vpop.xlane.xlu0 %3527
  %v3529 = vsel %vm324, %v3515, 0.0
  %3530 = vadd.xlane.f32.xlu0 %v3529
  %v3531 = vpop.xlane.xlu0 %3530
  %v3532 = vsel %vm324, %v3516, 0.0
  %3533 = vadd.xlane.f32.xlu0 %v3532
  %v3534 = vpop.xlane.xlu0 %3533
  %v3535 = vmul.f32 %v3519, %v2102
  %v3536 = vmul.f32 %v3522, %v2102
  %v3537 = vmul.f32 %v3525, %v2102
  %v3538 = vmul.f32 %v3528, %v2102
  %v3539 = vmul.f32 %v3531, %v2102
  %v3540 = vmul.f32 %v3534, %v2102
  %v3541 = vadd.f32 %v3535, 1e-05
  %v3542 = vadd.f32 %v3536, 1e-05
  %v3543 = vadd.f32 %v3537, 1e-05
  %v3544 = vadd.f32 %v3538, 1e-05
  %v3545 = vadd.f32 %v3539, 1e-05
  %v3546 = vadd.f32 %v3540, 1e-05
  %v3547 = vrsqrt.pop %v3541
  %v3548 = vrsqrt.pop %v3542
  %v3549 = vrsqrt.pop %v3543
  %v3550 = vrsqrt.pop %v3544
  %v3551 = vrsqrt.pop %v3545
  %v3552 = vrsqrt.pop %v3546
  %v3553 = vmul.f32 %v3505, %v3547
  %v3554 = vmul.f32 %v3506, %v3548
  %v3555 = vmul.f32 %v3507, %v3549
  %v3556 = vmul.f32 %v3508, %v3550
  %v3557 = vmul.f32 %v3509, %v3551
  %v3558 = vmul.f32 %v3510, %v3552
  %v3560 = vlaneseq
  %v3561 = vshrl.u32 %v3560, 7
  %v3562 = vsub.s32 0, %v3561
  %v3563 = vrot.slane %v3480, %v3562
  %v3565 = vmul.f32 %v3553, %v3563
  %v3566 = vmul.f32 %v3554, %v3563
  %v3567 = vmul.f32 %v3555, %v3563
  %v3568 = vmul.f32 %v3556, %v3563
  %v3569 = vmul.f32 %v3557, %v3563
  %v3570 = vmul.f32 %v3558, %v3563
  %v3571 = vpack.c.bf16 %v3566, %v3565
  %v3572 = vpack.c.bf16 %v3568, %v3567
  %v3573 = vpack.c.bf16 %v3570, %v3569
  %v3574 = vld [vmem:[%s15] sm:$0xf]
  %v3575 = vld [vmem:[%s15 + $0x4] sm:$0xf]
  %v3576 = vld [vmem:[%s15 + $0x8] sm:$0xf]
  %v3577 = vld [vmem:[%s15 + $0xc] sm:$0xf]
  %v3578 = vld [vmem:[%s16] sm:$0x1]
  %v3580 = vlaneseq
  %v3581 = vshrl.u32 %v3580, 7
  %v3582 = vsub.s32 0, %v3581
  %v3583 = vrot.slane %v3578, %v3582
  %v3589 = vunpack.c.l.b16 %v3574
  %v3590 = vunpack.c.l.b16 %v3575
  %v3591 = vunpack.c.l.b16 %v3576
  %v3592 = vunpack.c.l.b16 %v3577
  %v3593 = vpack.c.b16 %v3590, %v3589
  %v3594 = vpack.c.b16 %v3592, %v3591
  %v3598 = vsel %vm324, %v3571, 0
  %v3601 = vsel %vm324, %v3572, 0
  %v3604 = vsel %vm324, %v3573, 0
  %3606 = vmatprep.subr.bf16.mxu0 0
  %3607 = vmatpush1.bf16.msra.mxu0 %v3593
  %3608 = vmatprep.subr.bf16.mxu0 0
  %3609 = vmatpush1.bf16.msra.mxu0 %v3594
  %3610 = vmatprep.subr.bf16.mxu0 0
  %3611 = vmatpush1.bf16.msra.mxu0 0
  %3612 = vmatprep.subr.bf16.mxu0 0
  %3613 = vmatpush1.bf16.msra.mxu0 0
  %3614 = vmatprep.subr.bf16.mxu0 0
  %3615 = vmatpush1.bf16.msra.mxu0 0
  %3616 = vmatprep.subr.bf16.mxu0 0
  %3617 = vmatpush1.bf16.msra.mxu0 0
  %3618 = vmatprep.subr.bf16.mxu0 0
  %3619 = vmatpush1.bf16.msra.mxu0 0
  %3620 = vmatprep.subr.bf16.mxu0 0
  %3621 = vmatpush1.bf16.msra.mxu0 0
  %3622 = vmatprep.subr.bf16.mxu0 0
  %3623 = vmatpush1.bf16.msra.mxu0 0
  %3624 = vmatprep.subr.bf16.mxu0 0
  %3625 = vmatpush1.bf16.msra.mxu0 0
  %3626 = vmatprep.subr.bf16.mxu0 0
  %3627 = vmatpush1.bf16.msra.mxu0 0
  %3628 = vmatprep.subr.bf16.mxu0 0
  %3629 = vmatpush1.bf16.msra.mxu0 0
  %3630 = vmatprep.subr.bf16.mxu0 0
  %3631 = vmatpush1.bf16.msra.mxu0 0
  %3632 = vmatprep.subr.bf16.mxu0 0
  %3633 = vmatpush1.bf16.msra.mxu0 0
  %3634 = vmatprep.subr.bf16.mxu0 0
  %3635 = vmatpush1.bf16.msra.mxu0 0
  %3636 = vmatprep.subr.bf16.mxu0 0
  %3637 = vmatpush1.bf16.msra.mxu0 0
  %3638 = vmatprep.mubr.bf16.mxu0 0
  %3639 = vmatmul.mubr.bf16.gmra.mrb[0].mxu0 %v3598
  %v3640 = vpop.f32.mrb[0].mxu0
  %v3641 = vadd.f32 %v3583, %v3640
  %v3642 = vpop.f32.mrb[0].mxu0
  %v3643 = vpop.f32.mrb[0].mxu0
  %v3644 = vadd.f32 %v3583, %v3643
  %v3645 = vpop.f32.mrb[0].mxu0
  %3646 = vmatprep.mubr.bf16.mxu0 0
  %3647 = vmatmul.mubr.bf16.gmra.mrb[0].mxu0 %v3601
  %v3648 = vpop.f32.mrb[0].mxu0
  %v3649 = vadd.f32 %v3583, %v3648
  %v3650 = vpop.f32.mrb[0].mxu0
  %v3651 = vpop.f32.mrb[0].mxu0
  %v3652 = vadd.f32 %v3583, %v3651
  %v3653 = vpop.f32.mrb[0].mxu0
  %3654 = vmatprep.mubr.bf16.mxu0 0
  %3655 = vmatmul.mubr.bf16.gmra.mrb[0].mxu0 %v3604
  %v3656 = vpop.f32.mrb[0].mxu0
  %v3657 = vadd.f32 %v3583, %v3656
  %v3658 = vpop.f32.mrb[0].mxu0
  %v3659 = vpop.f32.mrb[0].mxu0
  %v3660 = vadd.f32 %v3583, %v3659
  %v3661 = vpop.f32.mrb[0].mxu0
  %3662 = vdwg.mxu0
  %v3663 = vmul.f32 %v3641, 0.5
  %v3664 = vmul.f32 %v3644, 0.5
  %v3665 = vmul.f32 %v3649, 0.5
  %v3666 = vmul.f32 %v3652, 0.5
  %v3667 = vmul.f32 %v3657, 0.5
  %v3668 = vmul.f32 %v3660, 0.5
  %v3669 = vmul.f32 %v3641, 0.044715
  %v3670 = vmul.f32 %v3644, 0.044715
  %v3671 = vmul.f32 %v3649, 0.044715
  %v3672 = vmul.f32 %v3652, 0.044715
  %v3673 = vmul.f32 %v3657, 0.044715
  %v3674 = vmul.f32 %v3660, 0.044715
  %v3675 = vmul.f32 %v3669, %v3641
  %v3676 = vmul.f32 %v3670, %v3644
  %v3677 = vmul.f32 %v3671, %v3649
  %v3678 = vmul.f32 %v3672, %v3652
  %v3679 = vmul.f32 %v3673, %v3657
  %v3680 = vmul.f32 %v3674, %v3660
  %v3681 = vmul.f32 %v3675, %v3641
  %v3682 = vmul.f32 %v3676, %v3644
  %v3683 = vmul.f32 %v3677, %v3649
  %v3684 = vmul.f32 %v3678, %v3652
  %v3685 = vmul.f32 %v3679, %v3657
  %v3686 = vmul.f32 %v3680, %v3660
  %v3687 = vadd.f32 %v3641, %v3681
  %v3688 = vadd.f32 %v3644, %v3682
  %v3689 = vadd.f32 %v3649, %v3683
  %v3690 = vadd.f32 %v3652, %v3684
  %v3691 = vadd.f32 %v3657, %v3685
  %v3692 = vadd.f32 %v3660, %v3686
  %v3693 = vmul.f32 %v3687, 0.7978846
  %v3694 = vmul.f32 %v3688, 0.7978846
  %v3695 = vmul.f32 %v3689, 0.7978846
  %v3696 = vmul.f32 %v3690, 0.7978846
  %v3697 = vmul.f32 %v3691, 0.7978846
  %v3698 = vmul.f32 %v3692, 0.7978846
  %v3699 = vtanh.pop %v3693
  %v3700 = vtanh.pop %v3694
  %v3701 = vtanh.pop %v3695
  %v3702 = vtanh.pop %v3696
  %v3703 = vtanh.pop %v3697
  %v3704 = vtanh.pop %v3698
  %v3705 = vadd.f32 %v3699, 1.0
  %v3706 = vadd.f32 %v3700, 1.0
  %v3707 = vadd.f32 %v3701, 1.0
  %v3708 = vadd.f32 %v3702, 1.0
  %v3709 = vadd.f32 %v3703, 1.0
  %v3710 = vadd.f32 %v3704, 1.0
  %v3711 = vmul.f32 %v3663, %v3705
  %v3712 = vmul.f32 %v3664, %v3706
  %v3713 = vmul.f32 %v3665, %v3707
  %v3714 = vmul.f32 %v3666, %v3708
  %v3715 = vmul.f32 %v3667, %v3709
  %v3716 = vmul.f32 %v3668, %v3710
  %v3717 = vpack.c.bf16 %v3712, %v3711
  %v3718 = vpack.c.bf16 %v3714, %v3713
  %v3719 = vpack.c.bf16 %v3716, %v3715
  %v3720 = vld [vmem:[%s17] sm:$0xf]
  %v3721 = vld [vmem:[%s17 + $0x4] sm:$0xf]
  %v3722 = vld [vmem:[%s17 + $0x8] sm:$0xf]
  %v3723 = vld [vmem:[%s17 + $0xc] sm:$0xf]
  %v3724 = vld [vmem:[%s17 + $0x10] sm:$0xf]
  %v3725 = vld [vmem:[%s17 + $0x14] sm:$0xf]
  %v3726 = vld [vmem:[%s17 + $0x18] sm:$0xf]
  %v3727 = vld [vmem:[%s17 + $0x1c] sm:$0xf]
  %v3728 = vld [vmem:[%s17 + $0x20] sm:$0xf]
  %v3729 = vld [vmem:[%s17 + $0x24] sm:$0xf]
  %v3730 = vld [vmem:[%s17 + $0x28] sm:$0xf]
  %v3731 = vld [vmem:[%s17 + $0x2c] sm:$0xf]
  %v3732 = vld [vmem:[%s17 + $0x30] sm:$0xf]
  %v3733 = vld [vmem:[%s17 + $0x34] sm:$0xf]
  %v3734 = vld [vmem:[%s17 + $0x38] sm:$0xf]
  %v3735 = vld [vmem:[%s17 + $0x3c] sm:$0xf]
  %v3752 = vunpack.c.l.b16 %v3720
  %v3753 = vunpack.c.l.b16 %v3721
  %v3754 = vunpack.c.l.b16 %v3722
  %v3755 = vunpack.c.l.b16 %v3723
  %v3756 = vunpack.c.l.b16 %v3724
  %v3757 = vunpack.c.l.b16 %v3725
  %v3758 = vunpack.c.l.b16 %v3726
  %v3759 = vunpack.c.l.b16 %v3727
  %v3760 = vunpack.c.l.b16 %v3728
  %v3761 = vunpack.c.l.b16 %v3729
  %v3762 = vunpack.c.l.b16 %v3730
  %v3763 = vunpack.c.l.b16 %v3731
  %v3764 = vunpack.c.l.b16 %v3732
  %v3765 = vunpack.c.l.b16 %v3733
  %v3766 = vunpack.c.l.b16 %v3734
  %v3767 = vunpack.c.l.b16 %v3735
  %v3768 = vpack.c.b16 %v3753, %v3752
  %v3769 = vpack.c.b16 %v3755, %v3754
  %v3770 = vpack.c.b16 %v3757, %v3756
  %v3771 = vpack.c.b16 %v3759, %v3758
  %v3772 = vpack.c.b16 %v3761, %v3760
  %v3773 = vpack.c.b16 %v3763, %v3762
  %v3774 = vpack.c.b16 %v3765, %v3764
  %v3775 = vpack.c.b16 %v3767, %v3766
  %3784 = vmatprep.subr.bf16.mxu0 0
  %3785 = vmatpush1.bf16.msra.mxu0 %v3768
  %3786 = vmatprep.subr.bf16.mxu0 0
  %3787 = vmatpush1.bf16.msra.mxu0 %v3769
  %3788 = vmatprep.subr.bf16.mxu0 0
  %3789 = vmatpush1.bf16.msra.mxu0 %v3770
  %3790 = vmatprep.subr.bf16.mxu0 0
  %3791 = vmatpush1.bf16.msra.mxu0 %v3771
  %3792 = vmatprep.subr.bf16.mxu0 0
  %3793 = vmatpush1.bf16.msra.mxu0 %v3772
  %3794 = vmatprep.subr.bf16.mxu0 0
  %3795 = vmatpush1.bf16.msra.mxu0 %v3773
  %3796 = vmatprep.subr.bf16.mxu0 0
  %3797 = vmatpush1.bf16.msra.mxu0 %v3774
  %3798 = vmatprep.subr.bf16.mxu0 0
  %3799 = vmatpush1.bf16.msra.mxu0 %v3775
  %3800 = vmatprep.subr.bf16.mxu0 0
  %3801 = vmatpush1.bf16.msra.mxu0 0
  %3802 = vmatprep.subr.bf16.mxu0 0
  %3803 = vmatpush1.bf16.msra.mxu0 0
  %3804 = vmatprep.subr.bf16.mxu0 0
  %3805 = vmatpush1.bf16.msra.mxu0 0
  %3806 = vmatprep.subr.bf16.mxu0 0
  %3807 = vmatpush1.bf16.msra.mxu0 0
  %3808 = vmatprep.subr.bf16.mxu0 0
  %3809 = vmatpush1.bf16.msra.mxu0 0
  %3810 = vmatprep.subr.bf16.mxu0 0
  %3811 = vmatpush1.bf16.msra.mxu0 0
  %3812 = vmatprep.subr.bf16.mxu0 0
  %3813 = vmatpush1.bf16.msra.mxu0 0
  %3814 = vmatprep.subr.bf16.mxu0 0
  %3815 = vmatpush1.bf16.msra.mxu0 0
  %3816 = vmatprep.mubr.bf16.mxu0 0
  %3817 = vmatmul.mubr.bf16.gmra.mrb[0].mxu0 %v3717
  %v3818 = vpop.f32.mrb[0].mxu0
  %v3819 = vadd.f32 0.0, %v3818
  %v3820 = vpop.f32.mrb[0].mxu0
  %v3821 = vpop.f32.mrb[0].mxu0
  %v3822 = vadd.f32 0.0, %v3821
  %v3823 = vpop.f32.mrb[0].mxu0
  %3824 = vmatprep.mubr.bf16.mxu0 0
  %3825 = vmatmul.mubr.bf16.gmra.mrb[0].mxu0 %v3718
  %v3826 = vpop.f32.mrb[0].mxu0
  %v3827 = vadd.f32 0.0, %v3826
  %v3828 = vpop.f32.mrb[0].mxu0
  %v3829 = vpop.f32.mrb[0].mxu0
  %v3830 = vadd.f32 0.0, %v3829
  %v3831 = vpop.f32.mrb[0].mxu0
  %3832 = vmatprep.mubr.bf16.mxu0 0
  %3833 = vmatmul.mubr.bf16.gmra.mrb[0].mxu0 %v3719
  %v3834 = vpop.f32.mrb[0].mxu0
  %v3835 = vadd.f32 0.0, %v3834
  %v3836 = vpop.f32.mrb[0].mxu0
  %v3837 = vpop.f32.mrb[0].mxu0
  %v3838 = vadd.f32 0.0, %v3837
  %v3839 = vpop.f32.mrb[0].mxu0
  %3840 = vdwg.mxu0
  %v3841 = vadd.f32 %v3474, %v3819
  %v3842 = vadd.f32 %v3475, %v3822
  %v3843 = vadd.f32 %v3476, %v3827
  %v3844 = vadd.f32 %v3477, %v3830
  %v3845 = vadd.f32 %v3478, %v3835
  %v3846 = vadd.f32 %v3479, %v3838
  %v3847 = vld [vmem:[%s18] sm:$0x1]
  %v3849 = vlaneseq
  %v3850 = vshrl.u32 %v3849, 7
  %v3851 = vsub.s32 0, %v3850
  %v3852 = vrot.slane %v3847, %v3851
  %v3854 = vadd.f32 %v3841, %v3852
  %v3855 = vadd.f32 %v3842, %v3852
  %v3856 = vadd.f32 %v3843, %v3852
  %v3857 = vadd.f32 %v3844, %v3852
  %v3858 = vadd.f32 %v3845, %v3852
  %v3859 = vadd.f32 %v3846, %v3852
  %s3860 = scalar_lea.vmem %s9, 1
  %v3861 = vld [vmem:[%s3860] sm:$0x1]
  %v3862 = vsel %vm324, %v3854, 0.0
  %3863 = vadd.xlane.f32.xlu0 %v3862
  %v3864 = vpop.xlane.xlu0 %3863
  %v3865 = vsel %vm324, %v3855, 0.0
  %3866 = vadd.xlane.f32.xlu0 %v3865
  %v3867 = vpop.xlane.xlu0 %3866
  %v3868 = vsel %vm324, %v3856, 0.0
  %3869 = vadd.xlane.f32.xlu0 %v3868
  %v3870 = vpop.xlane.xlu0 %3869
  %v3871 = vsel %vm324, %v3857, 0.0
  %3872 = vadd.xlane.f32.xlu0 %v3871
  %v3873 = vpop.xlane.xlu0 %3872
  %v3874 = vsel %vm324, %v3858, 0.0
  %3875 = vadd.xlane.f32.xlu0 %v3874
  %v3876 = vpop.xlane.xlu0 %3875
  %v3877 = vsel %vm324, %v3859, 0.0
  %3878 = vadd.xlane.f32.xlu0 %v3877
  %v3879 = vpop.xlane.xlu0 %3878
  %v3880 = vmul.f32 %v3864, %v2102
  %v3881 = vmul.f32 %v3867, %v2102
  %v3882 = vmul.f32 %v3870, %v2102
  %v3883 = vmul.f32 %v3873, %v2102
  %v3884 = vmul.f32 %v3876, %v2102
  %v3885 = vmul.f32 %v3879, %v2102
  %v3886 = vsub.f32 %v3854, %v3880
  %v3887 = vsub.f32 %v3855, %v3881
  %v3888 = vsub.f32 %v3856, %v3882
  %v3889 = vsub.f32 %v3857, %v3883
  %v3890 = vsub.f32 %v3858, %v3884
  %v3891 = vsub.f32 %v3859, %v3885
  %v3892 = vmul.f32 %v3886, %v3886
  %v3893 = vmul.f32 %v3887, %v3887
  %v3894 = vmul.f32 %v3888, %v3888
  %v3895 = vmul.f32 %v3889, %v3889
  %v3896 = vmul.f32 %v3890, %v3890
  %v3897 = vmul.f32 %v3891, %v3891
  %v3898 = vsel %vm324, %v3892, 0.0
  %3899 = vadd.xlane.f32.xlu0 %v3898
  %v3900 = vpop.xlane.xlu0 %3899
  %v3901 = vsel %vm324, %v3893, 0.0
  %3902 = vadd.xlane.f32.xlu0 %v3901
  %v3903 = vpop.xlane.xlu0 %3902
  %v3904 = vsel %vm324, %v3894, 0.0
  %3905 = vadd.xlane.f32.xlu0 %v3904
  %v3906 = vpop.xlane.xlu0 %3905
  %v3907 = vsel %vm324, %v3895, 0.0
  %3908 = vadd.xlane.f32.xlu0 %v3907
  %v3909 = vpop.xlane.xlu0 %3908
  %v3910 = vsel %vm324, %v3896, 0.0
  %3911 = vadd.xlane.f32.xlu0 %v3910
  %v3912 = vpop.xlane.xlu0 %3911
  %v3913 = vsel %vm324, %v3897, 0.0
  %3914 = vadd.xlane.f32.xlu0 %v3913
  %v3915 = vpop.xlane.xlu0 %3914
  %v3916 = vmul.f32 %v3900, %v2102
  %v3917 = vmul.f32 %v3903, %v2102
  %v3918 = vmul.f32 %v3906, %v2102
  %v3919 = vmul.f32 %v3909, %v2102
  %v3920 = vmul.f32 %v3912, %v2102
  %v3921 = vmul.f32 %v3915, %v2102
  %v3922 = vadd.f32 %v3916, 1e-05
  %v3923 = vadd.f32 %v3917, 1e-05
  %v3924 = vadd.f32 %v3918, 1e-05
  %v3925 = vadd.f32 %v3919, 1e-05
  %v3926 = vadd.f32 %v3920, 1e-05
  %v3927 = vadd.f32 %v3921, 1e-05
  %v3928 = vrsqrt.pop %v3922
  %v3929 = vrsqrt.pop %v3923
  %v3930 = vrsqrt.pop %v3924
  %v3931 = vrsqrt.pop %v3925
  %v3932 = vrsqrt.pop %v3926
  %v3933 = vrsqrt.pop %v3927
  %v3934 = vmul.f32 %v3886, %v3928
  %v3935 = vmul.f32 %v3887, %v3929
  %v3936 = vmul.f32 %v3888, %v3930
  %v3937 = vmul.f32 %v3889, %v3931
  %v3938 = vmul.f32 %v3890, %v3932
  %v3939 = vmul.f32 %v3891, %v3933
  %v3941 = vlaneseq
  %v3942 = vshrl.u32 %v3941, 7
  %v3943 = vsub.s32 0, %v3942
  %v3944 = vrot.slane %v3861, %v3943
  %v3946 = vmul.f32 %v3934, %v3944
  %v3947 = vmul.f32 %v3935, %v3944
  %v3948 = vmul.f32 %v3936, %v3944
  %v3949 = vmul.f32 %v3937, %v3944
  %v3950 = vmul.f32 %v3938, %v3944
  %v3951 = vmul.f32 %v3939, %v3944
  %v3952 = vpack.c.bf16 %v3947, %v3946
  %v3953 = vpack.c.bf16 %v3949, %v3948
  %v3954 = vpack.c.bf16 %v3951, %v3950
  %s3955 = scalar_lea.vmem %s10, 64
  %v3956 = vld [vmem:[%s3955] sm:$0xf]
  %v3957 = vld [vmem:[%s3955 + $0x4] sm:$0xf]
  %v3958 = vld [vmem:[%s3955 + $0x8] sm:$0xf]
  %v3959 = vld [vmem:[%s3955 + $0xc] sm:$0xf]
  %v3960 = vld [vmem:[%s3955 + $0x10] sm:$0xf]
  %v3961 = vld [vmem:[%s3955 + $0x14] sm:$0xf]
  %v3962 = vld [vmem:[%s3955 + $0x18] sm:$0xf]
  %v3963 = vld [vmem:[%s3955 + $0x1c] sm:$0xf]
  %v3964 = vld [vmem:[%s3955 + $0x20] sm:$0xf]
  %v3965 = vld [vmem:[%s3955 + $0x24] sm:$0xf]
  %v3966 = vld [vmem:[%s3955 + $0x28] sm:$0xf]
  %v3967 = vld [vmem:[%s3955 + $0x2c] sm:$0xf]
  %v3968 = vld [vmem:[%s3955 + $0x30] sm:$0xf]
  %v3969 = vld [vmem:[%s3955 + $0x34] sm:$0xf]
  %v3970 = vld [vmem:[%s3955 + $0x38] sm:$0xf]
  %v3971 = vld [vmem:[%s3955 + $0x3c] sm:$0xf]
  %v3976 = vunpack.c.l.b16 %v3956
  %v3977 = vunpack.c.l.b16 %v3957
  %v3978 = vunpack.c.l.b16 %v3958
  %v3979 = vunpack.c.l.b16 %v3959
  %v3980 = vpack.c.b16 %v3977, %v3976
  %v3981 = vpack.c.b16 %v3979, %v3978
  %v3985 = vsel %vm324, %v3952, 0
  %v3988 = vsel %vm324, %v3953, 0
  %v3991 = vsel %vm324, %v3954, 0
  %3993 = vmatprep.subr.bf16.mxu0 0
  %3994 = vmatpush1.bf16.msra.mxu0 %v3980
  %3995 = vmatprep.subr.bf16.mxu0 0
  %3996 = vmatpush1.bf16.msra.mxu0 %v3981
  %3997 = vmatprep.subr.bf16.mxu0 0
  %3998 = vmatpush1.bf16.msra.mxu0 0
  %3999 = vmatprep.subr.bf16.mxu0 0
  %4000 = vmatpush1.bf16.msra.mxu0 0
  %4001 = vmatprep.subr.bf16.mxu0 0
  %4002 = vmatpush1.bf16.msra.mxu0 0
  %4003 = vmatprep.subr.bf16.mxu0 0
  %4004 = vmatpush1.bf16.msra.mxu0 0
  %4005 = vmatprep.subr.bf16.mxu0 0
  %4006 = vmatpush1.bf16.msra.mxu0 0
  %4007 = vmatprep.subr.bf16.mxu0 0
  %4008 = vmatpush1.bf16.msra.mxu0 0
  %4009 = vmatprep.subr.bf16.mxu0 0
  %4010 = vmatpush1.bf16.msra.mxu0 0
  %4011 = vmatprep.subr.bf16.mxu0 0
  %4012 = vmatpush1.bf16.msra.mxu0 0
  %4013 = vmatprep.subr.bf16.mxu0 0
  %4014 = vmatpush1.bf16.msra.mxu0 0
  %4015 = vmatprep.subr.bf16.mxu0 0
  %4016 = vmatpush1.bf16.msra.mxu0 0
  %4017 = vmatprep.subr.bf16.mxu0 0
  %4018 = vmatpush1.bf16.msra.mxu0 0
  %4019 = vmatprep.subr.bf16.mxu0 0
  %4020 = vmatpush1.bf16.msra.mxu0 0
  %4021 = vmatprep.subr.bf16.mxu0 0
  %4022 = vmatpush1.bf16.msra.mxu0 0
  %4023 = vmatprep.subr.bf16.mxu0 0
  %4024 = vmatpush1.bf16.msra.mxu0 0
  %4025 = vmatprep.mubr.bf16.mxu0 0
  %4026 = vmatmul.mubr.bf16.gmra.mrb[0].mxu0 %v3985
  %v4027 = vpop.f32.mrb[0].mxu0
  %v4028 = vadd.f32 0.0, %v4027
  %v4029 = vpop.f32.mrb[0].mxu0
  %v4030 = vpop.f32.mrb[0].mxu0
  %v4031 = vadd.f32 0.0, %v4030
  %v4032 = vpop.f32.mrb[0].mxu0
  %4033 = vmatprep.mubr.bf16.mxu0 0
  %4034 = vmatmul.mubr.bf16.gmra.mrb[0].mxu0 %v3988
  %v4035 = vpop.f32.mrb[0].mxu0
  %v4036 = vadd.f32 0.0, %v4035
  %v4037 = vpop.f32.mrb[0].mxu0
  %v4038 = vpop.f32.mrb[0].mxu0
  %v4039 = vadd.f32 0.0, %v4038
  %v4040 = vpop.f32.mrb[0].mxu0
  %4041 = vmatprep.mubr.bf16.mxu0 0
  %4042 = vmatmul.mubr.bf16.gmra.mrb[0].mxu0 %v3991
  %v4043 = vpop.f32.mrb[0].mxu0
  %v4044 = vadd.f32 0.0, %v4043
  %v4045 = vpop.f32.mrb[0].mxu0
  %v4046 = vpop.f32.mrb[0].mxu0
  %v4047 = vadd.f32 0.0, %v4046
  %v4048 = vpop.f32.mrb[0].mxu0
  %4049 = vdwg.mxu0
  %v4054 = vunpack.c.l.b16 %v3960
  %v4055 = vunpack.c.l.b16 %v3961
  %v4056 = vunpack.c.l.b16 %v3962
  %v4057 = vunpack.c.l.b16 %v3963
  %v4058 = vpack.c.b16 %v4055, %v4054
  %v4059 = vpack.c.b16 %v4057, %v4056
  %4062 = vmatprep.subr.bf16.mxu0 0
  %4063 = vmatpush1.bf16.msra.mxu0 %v4058
  %4064 = vmatprep.subr.bf16.mxu0 0
  %4065 = vmatpush1.bf16.msra.mxu0 %v4059
  %4066 = vmatprep.subr.bf16.mxu0 0
  %4067 = vmatpush1.bf16.msra.mxu0 0
  %4068 = vmatprep.subr.bf16.mxu0 0
  %4069 = vmatpush1.bf16.msra.mxu0 0
  %4070 = vmatprep.subr.bf16.mxu0 0
  %4071 = vmatpush1.bf16.msra.mxu0 0
  %4072 = vmatprep.subr.bf16.mxu0 0
  %4073 = vmatpush1.bf16.msra.mxu0 0
  %4074 = vmatprep.subr.bf16.mxu0 0
  %4075 = vmatpush1.bf16.msra.mxu0 0
  %4076 = vmatprep.subr.bf16.mxu0 0
  %4077 = vmatpush1.bf16.msra.mxu0 0
  %4078 = vmatprep.subr.bf16.mxu0 0
  %4079 = vmatpush1.bf16.msra.mxu0 0
  %4080 = vmatprep.subr.bf16.mxu0 0
  %4081 = vmatpush1.bf16.msra.mxu0 0
  %4082 = vmatprep.subr.bf16.mxu0 0
  %4083 = vmatpush1.bf16.msra.mxu0 0
  %4084 = vmatprep.subr.bf16.mxu0 0
  %4085 = vmatpush1.bf16.msra.mxu0 0
  %4086 = vmatprep.subr.bf16.mxu0 0
  %4087 = vmatpush1.bf16.msra.mxu0 0
  %4088 = vmatprep.subr.bf16.mxu0 0
  %4089 = vmatpush1.bf16.msra.mxu0 0
  %4090 = vmatprep.subr.bf16.mxu0 0
  %4091 = vmatpush1.bf16.msra.mxu0 0
  %4092 = vmatprep.subr.bf16.mxu0 0
  %4093 = vmatpush1.bf16.msra.mxu0 0
  %4094 = vmatprep.mubr.bf16.mxu0 0
  %4095 = vmatmul.mubr.bf16.gmra.mrb[0].mxu0 %v3985
  %v4096 = vpop.f32.mrb[0].mxu0
  %v4097 = vadd.f32 0.0, %v4096
  %v4098 = vpop.f32.mrb[0].mxu0
  %v4099 = vpop.f32.mrb[0].mxu0
  %v4100 = vadd.f32 0.0, %v4099
  %v4101 = vpop.f32.mrb[0].mxu0
  %4102 = vmatprep.mubr.bf16.mxu0 0
  %4103 = vmatmul.mubr.bf16.gmra.mrb[0].mxu0 %v3988
  %v4104 = vpop.f32.mrb[0].mxu0
  %v4105 = vadd.f32 0.0, %v4104
  %v4106 = vpop.f32.mrb[0].mxu0
  %v4107 = vpop.f32.mrb[0].mxu0
  %v4108 = vadd.f32 0.0, %v4107
  %v4109 = vpop.f32.mrb[0].mxu0
  %4110 = vmatprep.mubr.bf16.mxu0 0
  %4111 = vmatmul.mubr.bf16.gmra.mrb[0].mxu0 %v3991
  %v4112 = vpop.f32.mrb[0].mxu0
  %v4113 = vadd.f32 0.0, %v4112
  %v4114 = vpop.f32.mrb[0].mxu0
  %v4115 = vpop.f32.mrb[0].mxu0
  %v4116 = vadd.f32 0.0, %v4115
  %v4117 = vpop.f32.mrb[0].mxu0
  %4118 = vdwg.mxu0
  %v4123 = vunpack.c.l.b16 %v3964
  %v4124 = vunpack.c.l.b16 %v3965
  %v4125 = vunpack.c.l.b16 %v3966
  %v4126 = vunpack.c.l.b16 %v3967
  %v4127 = vpack.c.b16 %v4124, %v4123
  %v4128 = vpack.c.b16 %v4126, %v4125
  %4131 = vmatprep.subr.bf16.mxu0 0
  %4132 = vmatpush1.bf16.msra.mxu0 %v4127
  %4133 = vmatprep.subr.bf16.mxu0 0
  %4134 = vmatpush1.bf16.msra.mxu0 %v4128
  %4135 = vmatprep.subr.bf16.mxu0 0
  %4136 = vmatpush1.bf16.msra.mxu0 0
  %4137 = vmatprep.subr.bf16.mxu0 0
  %4138 = vmatpush1.bf16.msra.mxu0 0
  %4139 = vmatprep.subr.bf16.mxu0 0
  %4140 = vmatpush1.bf16.msra.mxu0 0
  %4141 = vmatprep.subr.bf16.mxu0 0
  %4142 = vmatpush1.bf16.msra.mxu0 0
  %4143 = vmatprep.subr.bf16.mxu0 0
  %4144 = vmatpush1.bf16.msra.mxu0 0
  %4145 = vmatprep.subr.bf16.mxu0 0
  %4146 = vmatpush1.bf16.msra.mxu0 0
  %4147 = vmatprep.subr.bf16.mxu0 0
  %4148 = vmatpush1.bf16.msra.mxu0 0
  %4149 = vmatprep.subr.bf16.mxu0 0
  %4150 = vmatpush1.bf16.msra.mxu0 0
  %4151 = vmatprep.subr.bf16.mxu0 0
  %4152 = vmatpush1.bf16.msra.mxu0 0
  %4153 = vmatprep.subr.bf16.mxu0 0
  %4154 = vmatpush1.bf16.msra.mxu0 0
  %4155 = vmatprep.subr.bf16.mxu0 0
  %4156 = vmatpush1.bf16.msra.mxu0 0
  %4157 = vmatprep.subr.bf16.mxu0 0
  %4158 = vmatpush1.bf16.msra.mxu0 0
  %4159 = vmatprep.subr.bf16.mxu0 0
  %4160 = vmatpush1.bf16.msra.mxu0 0
  %4161 = vmatprep.subr.bf16.mxu0 0
  %4162 = vmatpush1.bf16.msra.mxu0 0
  %4163 = vmatprep.mubr.bf16.mxu0 0
  %4164 = vmatmul.mubr.bf16.gmra.mrb[0].mxu0 %v3985
  %v4165 = vpop.f32.mrb[0].mxu0
  %v4166 = vadd.f32 0.0, %v4165
  %v4167 = vpop.f32.mrb[0].mxu0
  %v4168 = vpop.f32.mrb[0].mxu0
  %v4169 = vadd.f32 0.0, %v4168
  %v4170 = vpop.f32.mrb[0].mxu0
  %4171 = vmatprep.mubr.bf16.mxu0 0
  %4172 = vmatmul.mubr.bf16.gmra.mrb[0].mxu0 %v3988
  %v4173 = vpop.f32.mrb[0].mxu0
  %v4174 = vadd.f32 0.0, %v4173
  %v4175 = vpop.f32.mrb[0].mxu0
  %v4176 = vpop.f32.mrb[0].mxu0
  %v4177 = vadd.f32 0.0, %v4176
  %v4178 = vpop.f32.mrb[0].mxu0
  %4179 = vmatprep.mubr.bf16.mxu0 0
  %4180 = vmatmul.mubr.bf16.gmra.mrb[0].mxu0 %v3991
  %v4181 = vpop.f32.mrb[0].mxu0
  %v4182 = vadd.f32 0.0, %v4181
  %v4183 = vpop.f32.mrb[0].mxu0
  %v4184 = vpop.f32.mrb[0].mxu0
  %v4185 = vadd.f32 0.0, %v4184
  %v4186 = vpop.f32.mrb[0].mxu0
  %4187 = vdwg.mxu0
  %v4192 = vunpack.c.l.b16 %v3968
  %v4193 = vunpack.c.l.b16 %v3969
  %v4194 = vunpack.c.l.b16 %v3970
  %v4195 = vunpack.c.l.b16 %v3971
  %v4196 = vpack.c.b16 %v4193, %v4192
  %v4197 = vpack.c.b16 %v4195, %v4194
  %4200 = vmatprep.subr.bf16.mxu0 0
  %4201 = vmatpush1.bf16.msra.mxu0 %v4196
  %4202 = vmatprep.subr.bf16.mxu0 0
  %4203 = vmatpush1.bf16.msra.mxu0 %v4197
  %4204 = vmatprep.subr.bf16.mxu0 0
  %4205 = vmatpush1.bf16.msra.mxu0 0
  %4206 = vmatprep.subr.bf16.mxu0 0
  %4207 = vmatpush1.bf16.msra.mxu0 0
  %4208 = vmatprep.subr.bf16.mxu0 0
  %4209 = vmatpush1.bf16.msra.mxu0 0
  %4210 = vmatprep.subr.bf16.mxu0 0
  %4211 = vmatpush1.bf16.msra.mxu0 0
  %4212 = vmatprep.subr.bf16.mxu0 0
  %4213 = vmatpush1.bf16.msra.mxu0 0
  %4214 = vmatprep.subr.bf16.mxu0 0
  %4215 = vmatpush1.bf16.msra.mxu0 0
  %4216 = vmatprep.subr.bf16.mxu0 0
  %4217 = vmatpush1.bf16.msra.mxu0 0
  %4218 = vmatprep.subr.bf16.mxu0 0
  %4219 = vmatpush1.bf16.msra.mxu0 0
  %4220 = vmatprep.subr.bf16.mxu0 0
  %4221 = vmatpush1.bf16.msra.mxu0 0
  %4222 = vmatprep.subr.bf16.mxu0 0
  %4223 = vmatpush1.bf16.msra.mxu0 0
  %4224 = vmatprep.subr.bf16.mxu0 0
  %4225 = vmatpush1.bf16.msra.mxu0 0
  %4226 = vmatprep.subr.bf16.mxu0 0
  %4227 = vmatpush1.bf16.msra.mxu0 0
  %4228 = vmatprep.subr.bf16.mxu0 0
  %4229 = vmatpush1.bf16.msra.mxu0 0
  %4230 = vmatprep.subr.bf16.mxu0 0
  %4231 = vmatpush1.bf16.msra.mxu0 0
  %4232 = vmatprep.mubr.bf16.mxu0 0
  %4233 = vmatmul.mubr.bf16.gmra.mrb[0].mxu0 %v3985
  %v4234 = vpop.f32.mrb[0].mxu0
  %v4235 = vadd.f32 0.0, %v4234
  %v4236 = vpop.f32.mrb[0].mxu0
  %v4237 = vpop.f32.mrb[0].mxu0
  %v4238 = vadd.f32 0.0, %v4237
  %v4239 = vpop.f32.mrb[0].mxu0
  %4240 = vmatprep.mubr.bf16.mxu0 0
  %4241 = vmatmul.mubr.bf16.gmra.mrb[0].mxu0 %v3988
  %v4242 = vpop.f32.mrb[0].mxu0
  %v4243 = vadd.f32 0.0, %v4242
  %v4244 = vpop.f32.mrb[0].mxu0
  %v4245 = vpop.f32.mrb[0].mxu0
  %v4246 = vadd.f32 0.0, %v4245
  %v4247 = vpop.f32.mrb[0].mxu0
  %4248 = vmatprep.mubr.bf16.mxu0 0
  %4249 = vmatmul.mubr.bf16.gmra.mrb[0].mxu0 %v3991
  %v4250 = vpop.f32.mrb[0].mxu0
  %v4251 = vadd.f32 0.0, %v4250
  %v4252 = vpop.f32.mrb[0].mxu0
  %v4253 = vpop.f32.mrb[0].mxu0
  %v4254 = vadd.f32 0.0, %v4253
  %v4255 = vpop.f32.mrb[0].mxu0
  %4256 = vdwg.mxu0
  %v4257 = vmul.f32 %v4028, 0.25
  %v4258 = vmul.f32 %v4031, 0.25
  %v4259 = vmul.f32 %v4036, 0.25
  %v4260 = vmul.f32 %v4039, 0.25
  %v4261 = vmul.f32 %v4044, 0.25
  %v4262 = vmul.f32 %v4047, 0.25
  %v4263 = vmul.f32 %v4097, 0.25
  %v4264 = vmul.f32 %v4100, 0.25
  %v4265 = vmul.f32 %v4105, 0.25
  %v4266 = vmul.f32 %v4108, 0.25
  %v4267 = vmul.f32 %v4113, 0.25
  %v4268 = vmul.f32 %v4116, 0.25
  %v4269 = vmul.f32 %v4166, 0.25
  %v4270 = vmul.f32 %v4169, 0.25
  %v4271 = vmul.f32 %v4174, 0.25
  %v4272 = vmul.f32 %v4177, 0.25
  %v4273 = vmul.f32 %v4182, 0.25
  %v4274 = vmul.f32 %v4185, 0.25
  %v4275 = vmul.f32 %v4235, 0.25
  %v4276 = vmul.f32 %v4238, 0.25
  %v4277 = vmul.f32 %v4243, 0.25
  %v4278 = vmul.f32 %v4246, 0.25
  %v4279 = vmul.f32 %v4251, 0.25
  %v4280 = vmul.f32 %v4254, 0.25
  %s4281 = scalar_lea.vmem %s11, 16
  %v4282 = vld [vmem:[%s4281] sm:$0xf]
  %v4283 = vld [vmem:[%s4281 + $0x4] sm:$0xf]
  %v4284 = vld [vmem:[%s4281 + $0x8] sm:$0xf]
  %v4285 = vld [vmem:[%s4281 + $0xc] sm:$0xf]
  %v4290 = vunpack.c.l.b16 %v4282
  %v4291 = vunpack.c.l.b16 %v4283
  %v4292 = vunpack.c.l.b16 %v4284
  %v4293 = vunpack.c.l.b16 %v4285
  %v4294 = vpack.c.b16 %v4291, %v4290
  %v4295 = vpack.c.b16 %v4293, %v4292
  %4298 = vmatprep.subr.bf16.mxu0 0
  %4299 = vmatpush1.bf16.msra.mxu0 %v4294
  %4300 = vmatprep.subr.bf16.mxu0 0
  %4301 = vmatpush1.bf16.msra.mxu0 %v4295
  %4302 = vmatprep.subr.bf16.mxu0 0
  %4303 = vmatpush1.bf16.msra.mxu0 0
  %4304 = vmatprep.subr.bf16.mxu0 0
  %4305 = vmatpush1.bf16.msra.mxu0 0
  %4306 = vmatprep.subr.bf16.mxu0 0
  %4307 = vmatpush1.bf16.msra.mxu0 0
  %4308 = vmatprep.subr.bf16.mxu0 0
  %4309 = vmatpush1.bf16.msra.mxu0 0
  %4310 = vmatprep.subr.bf16.mxu0 0
  %4311 = vmatpush1.bf16.msra.mxu0 0
  %4312 = vmatprep.subr.bf16.mxu0 0
  %4313 = vmatpush1.bf16.msra.mxu0 0
  %4314 = vmatprep.subr.bf16.mxu0 0
  %4315 = vmatpush1.bf16.msra.mxu0 0
  %4316 = vmatprep.subr.bf16.mxu0 0
  %4317 = vmatpush1.bf16.msra.mxu0 0
  %4318 = vmatprep.subr.bf16.mxu0 0
  %4319 = vmatpush1.bf16.msra.mxu0 0
  %4320 = vmatprep.subr.bf16.mxu0 0
  %4321 = vmatpush1.bf16.msra.mxu0 0
  %4322 = vmatprep.subr.bf16.mxu0 0
  %4323 = vmatpush1.bf16.msra.mxu0 0
  %4324 = vmatprep.subr.bf16.mxu0 0
  %4325 = vmatpush1.bf16.msra.mxu0 0
  %4326 = vmatprep.subr.bf16.mxu0 0
  %4327 = vmatpush1.bf16.msra.mxu0 0
  %4328 = vmatprep.subr.bf16.mxu0 0
  %4329 = vmatpush1.bf16.msra.mxu0 0
  %4330 = vmatprep.mubr.bf16.mxu0 0
  %4331 = vmatmul.mubr.bf16.gmra.mrb[0].mxu0 %v3985
  %v4332 = vpop.f32.mrb[0].mxu0
  %v4333 = vadd.f32 0.0, %v4332
  %v4334 = vpop.f32.mrb[0].mxu0
  %v4335 = vpop.f32.mrb[0].mxu0
  %v4336 = vadd.f32 0.0, %v4335
  %v4337 = vpop.f32.mrb[0].mxu0
  %4338 = vmatprep.mubr.bf16.mxu0 0
  %4339 = vmatmul.mubr.bf16.gmra.mrb[0].mxu0 %v3988
  %v4340 = vpop.f32.mrb[0].mxu0
  %v4341 = vadd.f32 0.0, %v4340
  %v4342 = vpop.f32.mrb[0].mxu0
  %v4343 = vpop.f32.mrb[0].mxu0
  %v4344 = vadd.f32 0.0, %v4343
  %v4345 = vpop.f32.mrb[0].mxu0
  %4346 = vmatprep.mubr.bf16.mxu0 0
  %4347 = vmatmul.mubr.bf16.gmra.mrb[0].mxu0 %v3991
  %v4348 = vpop.f32.mrb[0].mxu0
  %v4349 = vadd.f32 0.0, %v4348
  %v4350 = vpop.f32.mrb[0].mxu0
  %v4351 = vpop.f32.mrb[0].mxu0
  %v4352 = vadd.f32 0.0, %v4351
  %v4353 = vpop.f32.mrb[0].mxu0
  %4354 = vdwg.mxu0
  %s4355 = scalar_lea.vmem %s12, 16
  %v4356 = vld [vmem:[%s4355] sm:$0xf]
  %v4357 = vld [vmem:[%s4355 + $0x4] sm:$0xf]
  %v4358 = vld [vmem:[%s4355 + $0x8] sm:$0xf]
  %v4359 = vld [vmem:[%s4355 + $0xc] sm:$0xf]
  %v4364 = vunpack.c.l.b16 %v4356
  %v4365 = vunpack.c.l.b16 %v4357
  %v4366 = vunpack.c.l.b16 %v4358
  %v4367 = vunpack.c.l.b16 %v4359
  %v4368 = vpack.c.b16 %v4365, %v4364
  %v4369 = vpack.c.b16 %v4367, %v4366
  %4372 = vmatprep.subr.bf16.mxu0 0
  %4373 = vmatpush1.bf16.msra.mxu0 %v4368
  %4374 = vmatprep.subr.bf16.mxu0 0
  %4375 = vmatpush1.bf16.msra.mxu0 %v4369
  %4376 = vmatprep.subr.bf16.mxu0 0
  %4377 = vmatpush1.bf16.msra.mxu0 0
  %4378 = vmatprep.subr.bf16.mxu0 0
  %4379 = vmatpush1.bf16.msra.mxu0 0
  %4380 = vmatprep.subr.bf16.mxu0 0
  %4381 = vmatpush1.bf16.msra.mxu0 0
  %4382 = vmatprep.subr.bf16.mxu0 0
  %4383 = vmatpush1.bf16.msra.mxu0 0
  %4384 = vmatprep.subr.bf16.mxu0 0
  %4385 = vmatpush1.bf16.msra.mxu0 0
  %4386 = vmatprep.subr.bf16.mxu0 0
  %4387 = vmatpush1.bf16.msra.mxu0 0
  %4388 = vmatprep.subr.bf16.mxu0 0
  %4389 = vmatpush1.bf16.msra.mxu0 0
  %4390 = vmatprep.subr.bf16.mxu0 0
  %4391 = vmatpush1.bf16.msra.mxu0 0
  %4392 = vmatprep.subr.bf16.mxu0 0
  %4393 = vmatpush1.bf16.msra.mxu0 0
  %4394 = vmatprep.subr.bf16.mxu0 0
  %4395 = vmatpush1.bf16.msra.mxu0 0
  %4396 = vmatprep.subr.bf16.mxu0 0
  %4397 = vmatpush1.bf16.msra.mxu0 0
  %4398 = vmatprep.subr.bf16.mxu0 0
  %4399 = vmatpush1.bf16.msra.mxu0 0
  %4400 = vmatprep.subr.bf16.mxu0 0
  %4401 = vmatpush1.bf16.msra.mxu0 0
  %4402 = vmatprep.subr.bf16.mxu0 0
  %4403 = vmatpush1.bf16.msra.mxu0 0
  %4404 = vmatprep.mubr.bf16.mxu0 0
  %4405 = vmatmul.mubr.bf16.gmra.mrb[0].mxu0 %v3985
  %v4406 = vpop.f32.mrb[0].mxu0
  %v4407 = vadd.f32 0.0, %v4406
  %v4408 = vpop.f32.mrb[0].mxu0
  %v4409 = vpop.f32.mrb[0].mxu0
  %v4410 = vadd.f32 0.0, %v4409
  %v4411 = vpop.f32.mrb[0].mxu0
  %4412 = vmatprep.mubr.bf16.mxu0 0
  %4413 = vmatmul.mubr.bf16.gmra.mrb[0].mxu0 %v3988
  %v4414 = vpop.f32.mrb[0].mxu0
  %v4415 = vadd.f32 0.0, %v4414
  %v4416 = vpop.f32.mrb[0].mxu0
  %v4417 = vpop.f32.mrb[0].mxu0
  %v4418 = vadd.f32 0.0, %v4417
  %v4419 = vpop.f32.mrb[0].mxu0
  %4420 = vmatprep.mubr.bf16.mxu0 0
  %4421 = vmatmul.mubr.bf16.gmra.mrb[0].mxu0 %v3991
  %v4422 = vpop.f32.mrb[0].mxu0
  %v4423 = vadd.f32 0.0, %v4422
  %v4424 = vpop.f32.mrb[0].mxu0
  %v4425 = vpop.f32.mrb[0].mxu0
  %v4426 = vadd.f32 0.0, %v4425
  %v4427 = vpop.f32.mrb[0].mxu0
  %4428 = vdwg.mxu0
  %v4429 = vpack.c.bf16 %v4258, %v4257
  %v4430 = vpack.c.bf16 %v4260, %v4259
  %v4431 = vpack.c.bf16 %v4262, %v4261
  %v4432 = vpack.c.bf16 %v4264, %v4263
  %v4433 = vpack.c.bf16 %v4266, %v4265
  %v4434 = vpack.c.bf16 %v4268, %v4267
  %v4435 = vpack.c.bf16 %v4270, %v4269
  %v4436 = vpack.c.bf16 %v4272, %v4271
  %v4437 = vpack.c.bf16 %v4274, %v4273
  %v4438 = vpack.c.bf16 %v4276, %v4275
  %v4439 = vpack.c.bf16 %v4278, %v4277
  %v4440 = vpack.c.bf16 %v4280, %v4279
  %v4441 = vpack.c.bf16 %v4336, %v4333
  %v4442 = vpack.c.bf16 %v4344, %v4341
  %v4443 = vpack.c.bf16 %v4352, %v4349
  %v4445 = vsel %vm1442, %v4429, 0
  %v4448 = vsel %vm1442, %v4430, 0
  %v4451 = vsel %vm1442, %v4431, 0
  %v4454 = vsel %vm1442, %v4432, 0
  %v4457 = vsel %vm1442, %v4433, 0
  %v4460 = vsel %vm1442, %v4434, 0
  %v4463 = vsel %vm1442, %v4435, 0
  %v4466 = vsel %vm1442, %v4436, 0
  %v4469 = vsel %vm1442, %v4437, 0
  %v4472 = vsel %vm1442, %v4438, 0
  %v4475 = vsel %vm1442, %v4439, 0
  %v4478 = vsel %vm1442, %v4440, 0
  %v4481 = vsel %vm1442, %v4441, 0
  %v4484 = vsel %vm1442, %v4442, 0
  %v4487 = vsel %vm1442, %v4443, 0
  %4489 = vmatprep.subr.bf16.mxu0 0
  %4490 = vmatpush1.bf16.xpose.msra.mxu0 %v4481
  %4491 = vmatprep.subr.bf16.mxu0 0
  %4492 = vmatpush1.bf16.xpose.msra.mxu0 %v4484
  %4493 = vmatprep.subr.bf16.mxu0 0
  %4494 = vmatpush1.bf16.xpose.msra.mxu0 %v4487
  %4495 = vmatprep.subr.bf16.mxu0 0
  %4496 = vmatpush1.bf16.xpose.msra.mxu0 0
  %4497 = vmatprep.subr.bf16.mxu0 0
  %4498 = vmatpush1.bf16.xpose.msra.mxu0 0
  %4499 = vmatprep.subr.bf16.mxu0 0
  %4500 = vmatpush1.bf16.xpose.msra.mxu0 0
  %4501 = vmatprep.subr.bf16.mxu0 0
  %4502 = vmatpush1.bf16.xpose.msra.mxu0 0
  %4503 = vmatprep.subr.bf16.mxu0 0
  %4504 = vmatpush1.bf16.xpose.msra.mxu0 0
  %4505 = vmatprep.subr.bf16.mxu0 0
  %4506 = vmatpush1.bf16.xpose.msra.mxu0 0
  %4507 = vmatprep.subr.bf16.mxu0 0
  %4508 = vmatpush1.bf16.xpose.msra.mxu0 0
  %4509 = vmatprep.subr.bf16.mxu0 0
  %4510 = vmatpush1.bf16.xpose.msra.mxu0 0
  %4511 = vmatprep.subr.bf16.mxu0 0
  %4512 = vmatpush1.bf16.xpose.msra.mxu0 0
  %4513 = vmatprep.subr.bf16.mxu0 0
  %4514 = vmatpush1.bf16.xpose.msra.mxu0 0
  %4515 = vmatprep.subr.bf16.mxu0 0
  %4516 = vmatpush1.bf16.xpose.msra.mxu0 0
  %4517 = vmatprep.subr.bf16.mxu0 0
  %4518 = vmatpush1.bf16.xpose.msra.mxu0 0
  %4519 = vmatprep.subr.bf16.mxu0 0
  %4520 = vmatpush1.bf16.xpose.msra.mxu0 0
  %4521 = vmatprep.mubr.bf16.mxu0 0
  %4522 = vmatmul.mubr.bf16.gmra.mrb[0].mxu0 %v4445
  %v4523 = vpop.f32.mrb[0].mxu0
  %v4524 = vadd.f32 %v2059, %v4523
  %v4525 = vpop.f32.mrb[0].mxu0
  %v4526 = vpop.f32.mrb[0].mxu0
  %v4527 = vadd.f32 %v2060, %v4526
  %v4528 = vpop.f32.mrb[0].mxu0
  %4529 = vmatprep.mubr.bf16.mxu0 0
  %4530 = vmatmul.mubr.bf16.gmra.mrb[0].mxu0 %v4448
  %v4531 = vpop.f32.mrb[0].mxu0
  %v4532 = vadd.f32 %v2061, %v4531
  %v4533 = vpop.f32.mrb[0].mxu0
  %v4534 = vpop.f32.mrb[0].mxu0
  %v4535 = vadd.f32 %v2062, %v4534
  %v4536 = vpop.f32.mrb[0].mxu0
  %4537 = vmatprep.mubr.bf16.mxu0 0
  %4538 = vmatmul.mubr.bf16.gmra.mrb[0].mxu0 %v4451
  %v4539 = vpop.f32.mrb[0].mxu0
  %v4540 = vadd.f32 %v2063, %v4539
  %v4541 = vpop.f32.mrb[0].mxu0
  %v4542 = vpop.f32.mrb[0].mxu0
  %v4543 = vadd.f32 %v2064, %v4542
  %v4544 = vpop.f32.mrb[0].mxu0
  %4545 = vmatprep.mubr.bf16.mxu0 0
  %4546 = vmatmul.mubr.bf16.gmra.mrb[0].mxu0 %v4454
  %v4547 = vpop.f32.mrb[0].mxu0
  %v4548 = vadd.f32 %v2065, %v4547
  %v4549 = vpop.f32.mrb[0].mxu0
  %v4550 = vpop.f32.mrb[0].mxu0
  %v4551 = vadd.f32 %v2066, %v4550
  %v4552 = vpop.f32.mrb[0].mxu0
  %4553 = vmatprep.mubr.bf16.mxu0 0
  %4554 = vmatmul.mubr.bf16.gmra.mrb[0].mxu0 %v4457
  %v4555 = vpop.f32.mrb[0].mxu0
  %v4556 = vadd.f32 %v2067, %v4555
  %v4557 = vpop.f32.mrb[0].mxu0
  %v4558 = vpop.f32.mrb[0].mxu0
  %v4559 = vadd.f32 %v2068, %v4558
  %v4560 = vpop.f32.mrb[0].mxu0
  %4561 = vmatprep.mubr.bf16.mxu0 0
  %4562 = vmatmul.mubr.bf16.gmra.mrb[0].mxu0 %v4460
  %v4563 = vpop.f32.mrb[0].mxu0
  %v4564 = vadd.f32 %v2069, %v4563
  %v4565 = vpop.f32.mrb[0].mxu0
  %v4566 = vpop.f32.mrb[0].mxu0
  %v4567 = vadd.f32 %v2070, %v4566
  %v4568 = vpop.f32.mrb[0].mxu0
  %4569 = vmatprep.mubr.bf16.mxu0 0
  %4570 = vmatmul.mubr.bf16.gmra.mrb[0].mxu0 %v4463
  %v4571 = vpop.f32.mrb[0].mxu0
  %v4572 = vadd.f32 %v2071, %v4571
  %v4573 = vpop.f32.mrb[0].mxu0
  %v4574 = vpop.f32.mrb[0].mxu0
  %v4575 = vadd.f32 %v2072, %v4574
  %v4576 = vpop.f32.mrb[0].mxu0
  %4577 = vmatprep.mubr.bf16.mxu0 0
  %4578 = vmatmul.mubr.bf16.gmra.mrb[0].mxu0 %v4466
  %v4579 = vpop.f32.mrb[0].mxu0
  %v4580 = vadd.f32 %v2073, %v4579
  %v4581 = vpop.f32.mrb[0].mxu0
  %v4582 = vpop.f32.mrb[0].mxu0
  %v4583 = vadd.f32 %v2074, %v4582
  %v4584 = vpop.f32.mrb[0].mxu0
  %4585 = vmatprep.mubr.bf16.mxu0 0
  %4586 = vmatmul.mubr.bf16.gmra.mrb[0].mxu0 %v4469
  %v4587 = vpop.f32.mrb[0].mxu0
  %v4588 = vadd.f32 %v2075, %v4587
  %v4589 = vpop.f32.mrb[0].mxu0
  %v4590 = vpop.f32.mrb[0].mxu0
  %v4591 = vadd.f32 %v2076, %v4590
  %v4592 = vpop.f32.mrb[0].mxu0
  %4593 = vmatprep.mubr.bf16.mxu0 0
  %4594 = vmatmul.mubr.bf16.gmra.mrb[0].mxu0 %v4472
  %v4595 = vpop.f32.mrb[0].mxu0
  %v4596 = vadd.f32 %v2077, %v4595
  %v4597 = vpop.f32.mrb[0].mxu0
  %v4598 = vpop.f32.mrb[0].mxu0
  %v4599 = vadd.f32 %v2078, %v4598
  %v4600 = vpop.f32.mrb[0].mxu0
  %4601 = vmatprep.mubr.bf16.mxu0 0
  %4602 = vmatmul.mubr.bf16.gmra.mrb[0].mxu0 %v4475
  %v4603 = vpop.f32.mrb[0].mxu0
  %v4604 = vadd.f32 %v2079, %v4603
  %v4605 = vpop.f32.mrb[0].mxu0
  %v4606 = vpop.f32.mrb[0].mxu0
  %v4607 = vadd.f32 %v2080, %v4606
  %v4608 = vpop.f32.mrb[0].mxu0
  %4609 = vmatprep.mubr.bf16.mxu0 0
  %4610 = vmatmul.mubr.bf16.gmra.mrb[0].mxu0 %v4478
  %v4611 = vpop.f32.mrb[0].mxu0
  %v4612 = vadd.f32 %v2081, %v4611
  %v4613 = vpop.f32.mrb[0].mxu0
  %v4614 = vpop.f32.mrb[0].mxu0
  %v4615 = vadd.f32 %v2082, %v4614
  %v4616 = vpop.f32.mrb[0].mxu0
  %4617 = vdwg.mxu0
  %v4618 = vsel %vm148, %v4524, -inf
  %4619 = vmax.xlane.f32.xlu0 %v4618
  %v4620 = vpop.xlane.xlu0 %4619
  %v4621 = vsel %vm148, %v4527, -inf
  %4622 = vmax.xlane.f32.xlu0 %v4621
  %v4623 = vpop.xlane.xlu0 %4622
  %v4624 = vsel %vm148, %v4532, -inf
  %4625 = vmax.xlane.f32.xlu0 %v4624
  %v4626 = vpop.xlane.xlu0 %4625
  %v4627 = vsel %vm148, %v4535, -inf
  %4628 = vmax.xlane.f32.xlu0 %v4627
  %v4629 = vpop.xlane.xlu0 %4628
  %v4630 = vsel %vm148, %v4540, -inf
  %4631 = vmax.xlane.f32.xlu0 %v4630
  %v4632 = vpop.xlane.xlu0 %4631
  %v4633 = vsel %vm148, %v4543, -inf
  %4634 = vmax.xlane.f32.xlu0 %v4633
  %v4635 = vpop.xlane.xlu0 %4634
  %v4636 = vsel %vm148, %v4548, -inf
  %4637 = vmax.xlane.f32.xlu0 %v4636
  %v4638 = vpop.xlane.xlu0 %4637
  %v4639 = vsel %vm148, %v4551, -inf
  %4640 = vmax.xlane.f32.xlu0 %v4639
  %v4641 = vpop.xlane.xlu0 %4640
  %v4642 = vsel %vm148, %v4556, -inf
  %4643 = vmax.xlane.f32.xlu0 %v4642
  %v4644 = vpop.xlane.xlu0 %4643
  %v4645 = vsel %vm148, %v4559, -inf
  %4646 = vmax.xlane.f32.xlu0 %v4645
  %v4647 = vpop.xlane.xlu0 %4646
  %v4648 = vsel %vm148, %v4564, -inf
  %4649 = vmax.xlane.f32.xlu0 %v4648
  %v4650 = vpop.xlane.xlu0 %4649
  %v4651 = vsel %vm148, %v4567, -inf
  %4652 = vmax.xlane.f32.xlu0 %v4651
  %v4653 = vpop.xlane.xlu0 %4652
  %v4654 = vsel %vm148, %v4572, -inf
  %4655 = vmax.xlane.f32.xlu0 %v4654
  %v4656 = vpop.xlane.xlu0 %4655
  %v4657 = vsel %vm148, %v4575, -inf
  %4658 = vmax.xlane.f32.xlu0 %v4657
  %v4659 = vpop.xlane.xlu0 %4658
  %v4660 = vsel %vm148, %v4580, -inf
  %4661 = vmax.xlane.f32.xlu0 %v4660
  %v4662 = vpop.xlane.xlu0 %4661
  %v4663 = vsel %vm148, %v4583, -inf
  %4664 = vmax.xlane.f32.xlu0 %v4663
  %v4665 = vpop.xlane.xlu0 %4664
  %v4666 = vsel %vm148, %v4588, -inf
  %4667 = vmax.xlane.f32.xlu0 %v4666
  %v4668 = vpop.xlane.xlu0 %4667
  %v4669 = vsel %vm148, %v4591, -inf
  %4670 = vmax.xlane.f32.xlu0 %v4669
  %v4671 = vpop.xlane.xlu0 %4670
  %v4672 = vsel %vm148, %v4596, -inf
  %4673 = vmax.xlane.f32.xlu0 %v4672
  %v4674 = vpop.xlane.xlu0 %4673
  %v4675 = vsel %vm148, %v4599, -inf
  %4676 = vmax.xlane.f32.xlu0 %v4675
  %v4677 = vpop.xlane.xlu0 %4676
  %v4678 = vsel %vm148, %v4604, -inf
  %4679 = vmax.xlane.f32.xlu0 %v4678
  %v4680 = vpop.xlane.xlu0 %4679
  %v4681 = vsel %vm148, %v4607, -inf
  %4682 = vmax.xlane.f32.xlu0 %v4681
  %v4683 = vpop.xlane.xlu0 %4682
  %v4684 = vsel %vm148, %v4612, -inf
  %4685 = vmax.xlane.f32.xlu0 %v4684
  %v4686 = vpop.xlane.xlu0 %4685
  %v4687 = vsel %vm148, %v4615, -inf
  %4688 = vmax.xlane.f32.xlu0 %v4687
  %v4689 = vpop.xlane.xlu0 %4688
  %v4690 = vsub.f32 %v4524, %v4620
  %v4691 = vsub.f32 %v4527, %v4623
  %v4692 = vsub.f32 %v4532, %v4626
  %v4693 = vsub.f32 %v4535, %v4629
  %v4694 = vsub.f32 %v4540, %v4632
  %v4695 = vsub.f32 %v4543, %v4635
  %v4696 = vsub.f32 %v4548, %v4638
  %v4697 = vsub.f32 %v4551, %v4641
  %v4698 = vsub.f32 %v4556, %v4644
  %v4699 = vsub.f32 %v4559, %v4647
  %v4700 = vsub.f32 %v4564, %v4650
  %v4701 = vsub.f32 %v4567, %v4653
  %v4702 = vsub.f32 %v4572, %v4656
  %v4703 = vsub.f32 %v4575, %v4659
  %v4704 = vsub.f32 %v4580, %v4662
  %v4705 = vsub.f32 %v4583, %v4665
  %v4706 = vsub.f32 %v4588, %v4668
  %v4707 = vsub.f32 %v4591, %v4671
  %v4708 = vsub.f32 %v4596, %v4674
  %v4709 = vsub.f32 %v4599, %v4677
  %v4710 = vsub.f32 %v4604, %v4680
  %v4711 = vsub.f32 %v4607, %v4683
  %v4712 = vsub.f32 %v4612, %v4686
  %v4713 = vsub.f32 %v4615, %v4689
  %v4714 = vmul.f32 %v4690, 1.442695
  %v4715 = vpow.pop %v4714
  %v4716 = vmul.f32 %v4691, 1.442695
  %v4717 = vpow.pop %v4716
  %v4718 = vmul.f32 %v4692, 1.442695
  %v4719 = vpow.pop %v4718
  %v4720 = vmul.f32 %v4693, 1.442695
  %v4721 = vpow.pop %v4720
  %v4722 = vmul.f32 %v4694, 1.442695
  %v4723 = vpow.pop %v4722
  %v4724 = vmul.f32 %v4695, 1.442695
  %v4725 = vpow.pop %v4724
  %v4726 = vmul.f32 %v4696, 1.442695
  %v4727 = vpow.pop %v4726
  %v4728 = vmul.f32 %v4697, 1.442695
  %v4729 = vpow.pop %v4728
  %v4730 = vmul.f32 %v4698, 1.442695
  %v4731 = vpow.pop %v4730
  %v4732 = vmul.f32 %v4699, 1.442695
  %v4733 = vpow.pop %v4732
  %v4734 = vmul.f32 %v4700, 1.442695
  %v4735 = vpow.pop %v4734
  %v4736 = vmul.f32 %v4701, 1.442695
  %v4737 = vpow.pop %v4736
  %v4738 = vmul.f32 %v4702, 1.442695
  %v4739 = vpow.pop %v4738
  %v4740 = vmul.f32 %v4703, 1.442695
  %v4741 = vpow.pop %v4740
  %v4742 = vmul.f32 %v4704, 1.442695
  %v4743 = vpow.pop %v4742
  %v4744 = vmul.f32 %v4705, 1.442695
  %v4745 = vpow.pop %v4744
  %v4746 = vmul.f32 %v4706, 1.442695
  %v4747 = vpow.pop %v4746
  %v4748 = vmul.f32 %v4707, 1.442695
  %v4749 = vpow.pop %v4748
  %v4750 = vmul.f32 %v4708, 1.442695
  %v4751 = vpow.pop %v4750
  %v4752 = vmul.f32 %v4709, 1.442695
  %v4753 = vpow.pop %v4752
  %v4754 = vmul.f32 %v4710, 1.442695
  %v4755 = vpow.pop %v4754
  %v4756 = vmul.f32 %v4711, 1.442695
  %v4757 = vpow.pop %v4756
  %v4758 = vmul.f32 %v4712, 1.442695
  %v4759 = vpow.pop %v4758
  %v4760 = vmul.f32 %v4713, 1.442695
  %v4761 = vpow.pop %v4760
  %v4762 = vsel %vm148, %v4715, 0.0
  %4763 = vadd.xlane.f32.xlu0 %v4762
  %v4764 = vpop.xlane.xlu0 %4763
  %v4765 = vsel %vm148, %v4717, 0.0
  %4766 = vadd.xlane.f32.xlu0 %v4765
  %v4767 = vpop.xlane.xlu0 %4766
  %v4768 = vsel %vm148, %v4719, 0.0
  %4769 = vadd.xlane.f32.xlu0 %v4768
  %v4770 = vpop.xlane.xlu0 %4769
  %v4771 = vsel %vm148, %v4721, 0.0
  %4772 = vadd.xlane.f32.xlu0 %v4771
  %v4773 = vpop.xlane.xlu0 %4772
  %v4774 = vsel %vm148, %v4723, 0.0
  %4775 = vadd.xlane.f32.xlu0 %v4774
  %v4776 = vpop.xlane.xlu0 %4775
  %v4777 = vsel %vm148, %v4725, 0.0
  %4778 = vadd.xlane.f32.xlu0 %v4777
  %v4779 = vpop.xlane.xlu0 %4778
  %v4780 = vsel %vm148, %v4727, 0.0
  %4781 = vadd.xlane.f32.xlu0 %v4780
  %v4782 = vpop.xlane.xlu0 %4781
  %v4783 = vsel %vm148, %v4729, 0.0
  %4784 = vadd.xlane.f32.xlu0 %v4783
  %v4785 = vpop.xlane.xlu0 %4784
  %v4786 = vsel %vm148, %v4731, 0.0
  %4787 = vadd.xlane.f32.xlu0 %v4786
  %v4788 = vpop.xlane.xlu0 %4787
  %v4789 = vsel %vm148, %v4733, 0.0
  %4790 = vadd.xlane.f32.xlu0 %v4789
  %v4791 = vpop.xlane.xlu0 %4790
  %v4792 = vsel %vm148, %v4735, 0.0
  %4793 = vadd.xlane.f32.xlu0 %v4792
  %v4794 = vpop.xlane.xlu0 %4793
  %v4795 = vsel %vm148, %v4737, 0.0
  %4796 = vadd.xlane.f32.xlu0 %v4795
  %v4797 = vpop.xlane.xlu0 %4796
  %v4798 = vsel %vm148, %v4739, 0.0
  %4799 = vadd.xlane.f32.xlu0 %v4798
  %v4800 = vpop.xlane.xlu0 %4799
  %v4801 = vsel %vm148, %v4741, 0.0
  %4802 = vadd.xlane.f32.xlu0 %v4801
  %v4803 = vpop.xlane.xlu0 %4802
  %v4804 = vsel %vm148, %v4743, 0.0
  %4805 = vadd.xlane.f32.xlu0 %v4804
  %v4806 = vpop.xlane.xlu0 %4805
  %v4807 = vsel %vm148, %v4745, 0.0
  %4808 = vadd.xlane.f32.xlu0 %v4807
  %v4809 = vpop.xlane.xlu0 %4808
  %v4810 = vsel %vm148, %v4747, 0.0
  %4811 = vadd.xlane.f32.xlu0 %v4810
  %v4812 = vpop.xlane.xlu0 %4811
  %v4813 = vsel %vm148, %v4749, 0.0
  %4814 = vadd.xlane.f32.xlu0 %v4813
  %v4815 = vpop.xlane.xlu0 %4814
  %v4816 = vsel %vm148, %v4751, 0.0
  %4817 = vadd.xlane.f32.xlu0 %v4816
  %v4818 = vpop.xlane.xlu0 %4817
  %v4819 = vsel %vm148, %v4753, 0.0
  %4820 = vadd.xlane.f32.xlu0 %v4819
  %v4821 = vpop.xlane.xlu0 %4820
  %v4822 = vsel %vm148, %v4755, 0.0
  %4823 = vadd.xlane.f32.xlu0 %v4822
  %v4824 = vpop.xlane.xlu0 %4823
  %v4825 = vsel %vm148, %v4757, 0.0
  %4826 = vadd.xlane.f32.xlu0 %v4825
  %v4827 = vpop.xlane.xlu0 %4826
  %v4828 = vsel %vm148, %v4759, 0.0
  %4829 = vadd.xlane.f32.xlu0 %v4828
  %v4830 = vpop.xlane.xlu0 %4829
  %v4831 = vsel %vm148, %v4761, 0.0
  %4832 = vadd.xlane.f32.xlu0 %v4831
  %v4833 = vpop.xlane.xlu0 %4832
  %v4834 = vrcp.pop %v4764
  %v4835 = vrcp.pop %v4767
  %v4836 = vrcp.pop %v4770
  %v4837 = vrcp.pop %v4773
  %v4838 = vrcp.pop %v4776
  %v4839 = vrcp.pop %v4779
  %v4840 = vrcp.pop %v4782
  %v4841 = vrcp.pop %v4785
  %v4842 = vrcp.pop %v4788
  %v4843 = vrcp.pop %v4791
  %v4844 = vrcp.pop %v4794
  %v4845 = vrcp.pop %v4797
  %v4846 = vrcp.pop %v4800
  %v4847 = vrcp.pop %v4803
  %v4848 = vrcp.pop %v4806
  %v4849 = vrcp.pop %v4809
  %v4850 = vrcp.pop %v4812
  %v4851 = vrcp.pop %v4815
  %v4852 = vrcp.pop %v4818
  %v4853 = vrcp.pop %v4821
  %v4854 = vrcp.pop %v4824
  %v4855 = vrcp.pop %v4827
  %v4856 = vrcp.pop %v4830
  %v4857 = vrcp.pop %v4833
  %v4858 = vmul.f32 %v4715, %v4834
  %v4859 = vmul.f32 %v4717, %v4835
  %v4860 = vmul.f32 %v4719, %v4836
  %v4861 = vmul.f32 %v4721, %v4837
  %v4862 = vmul.f32 %v4723, %v4838
  %v4863 = vmul.f32 %v4725, %v4839
  %v4864 = vmul.f32 %v4727, %v4840
  %v4865 = vmul.f32 %v4729, %v4841
  %v4866 = vmul.f32 %v4731, %v4842
  %v4867 = vmul.f32 %v4733, %v4843
  %v4868 = vmul.f32 %v4735, %v4844
  %v4869 = vmul.f32 %v4737, %v4845
  %v4870 = vmul.f32 %v4739, %v4846
  %v4871 = vmul.f32 %v4741, %v4847
  %v4872 = vmul.f32 %v4743, %v4848
  %v4873 = vmul.f32 %v4745, %v4849
  %v4874 = vmul.f32 %v4747, %v4850
  %v4875 = vmul.f32 %v4749, %v4851
  %v4876 = vmul.f32 %v4751, %v4852
  %v4877 = vmul.f32 %v4753, %v4853
  %v4878 = vmul.f32 %v4755, %v4854
  %v4879 = vmul.f32 %v4757, %v4855
  %v4880 = vmul.f32 %v4759, %v4856
  %v4881 = vmul.f32 %v4761, %v4857
  %v4882 = vpack.c.bf16 %v4859, %v4858
  %v4883 = vpack.c.bf16 %v4861, %v4860
  %v4884 = vpack.c.bf16 %v4863, %v4862
  %v4885 = vpack.c.bf16 %v4865, %v4864
  %v4886 = vpack.c.bf16 %v4867, %v4866
  %v4887 = vpack.c.bf16 %v4869, %v4868
  %v4888 = vpack.c.bf16 %v4871, %v4870
  %v4889 = vpack.c.bf16 %v4873, %v4872
  %v4890 = vpack.c.bf16 %v4875, %v4874
  %v4891 = vpack.c.bf16 %v4877, %v4876
  %v4892 = vpack.c.bf16 %v4879, %v4878
  %v4893 = vpack.c.bf16 %v4881, %v4880
  %v4894 = vpack.c.bf16 %v4410, %v4407
  %v4895 = vpack.c.bf16 %v4418, %v4415
  %v4896 = vpack.c.bf16 %v4426, %v4423
  %v4898 = vsel %vm148, %v4882, 0
  %v4901 = vsel %vm148, %v4883, 0
  %v4904 = vsel %vm148, %v4884, 0
  %v4907 = vsel %vm148, %v4885, 0
  %v4910 = vsel %vm148, %v4886, 0
  %v4913 = vsel %vm148, %v4887, 0
  %v4916 = vsel %vm148, %v4888, 0
  %v4919 = vsel %vm148, %v4889, 0
  %v4922 = vsel %vm148, %v4890, 0
  %v4925 = vsel %vm148, %v4891, 0
  %v4928 = vsel %vm148, %v4892, 0
  %v4931 = vsel %vm148, %v4893, 0
  %4933 = vmatprep.subr.bf16.mxu0 0
  %4934 = vmatpush1.bf16.msra.mxu0 %v4894
  %4935 = vmatprep.subr.bf16.mxu0 0
  %4936 = vmatpush1.bf16.msra.mxu0 %v4895
  %4937 = vmatprep.subr.bf16.mxu0 0
  %4938 = vmatpush1.bf16.msra.mxu0 %v4896
  %4939 = vmatprep.subr.bf16.mxu0 0
  %4940 = vmatpush1.bf16.msra.mxu0 0
  %4941 = vmatprep.subr.bf16.mxu0 0
  %4942 = vmatpush1.bf16.msra.mxu0 0
  %4943 = vmatprep.subr.bf16.mxu0 0
  %4944 = vmatpush1.bf16.msra.mxu0 0
  %4945 = vmatprep.subr.bf16.mxu0 0
  %4946 = vmatpush1.bf16.msra.mxu0 0
  %4947 = vmatprep.subr.bf16.mxu0 0
  %4948 = vmatpush1.bf16.msra.mxu0 0
  %4949 = vmatprep.subr.bf16.mxu0 0
  %4950 = vmatpush1.bf16.msra.mxu0 0
  %4951 = vmatprep.subr.bf16.mxu0 0
  %4952 = vmatpush1.bf16.msra.mxu0 0
  %4953 = vmatprep.subr.bf16.mxu0 0
  %4954 = vmatpush1.bf16.msra.mxu0 0
  %4955 = vmatprep.subr.bf16.mxu0 0
  %4956 = vmatpush1.bf16.msra.mxu0 0
  %4957 = vmatprep.subr.bf16.mxu0 0
  %4958 = vmatpush1.bf16.msra.mxu0 0
  %4959 = vmatprep.subr.bf16.mxu0 0
  %4960 = vmatpush1.bf16.msra.mxu0 0
  %4961 = vmatprep.subr.bf16.mxu0 0
  %4962 = vmatpush1.bf16.msra.mxu0 0
  %4963 = vmatprep.subr.bf16.mxu0 0
  %4964 = vmatpush1.bf16.msra.mxu0 0
  %4965 = vmatprep.mubr.bf16.mxu0 0
  %4966 = vmatmul.mubr.bf16.gmra.mrb[0].mxu0 %v4898
  %v4967 = vpop.f32.mrb[0].mxu0
  %v4968 = vadd.f32 0.0, %v4967
  %v4969 = vpop.f32.mrb[0].mxu0
  %v4970 = vpop.f32.mrb[0].mxu0
  %v4971 = vadd.f32 0.0, %v4970
  %v4972 = vpop.f32.mrb[0].mxu0
  %4973 = vmatprep.mubr.bf16.mxu0 0
  %4974 = vmatmul.mubr.bf16.gmra.mrb[0].mxu0 %v4901
  %v4975 = vpop.f32.mrb[0].mxu0
  %v4976 = vadd.f32 0.0, %v4975
  %v4977 = vpop.f32.mrb[0].mxu0
  %v4978 = vpop.f32.mrb[0].mxu0
  %v4979 = vadd.f32 0.0, %v4978
  %v4980 = vpop.f32.mrb[0].mxu0
  %4981 = vmatprep.mubr.bf16.mxu0 0
  %4982 = vmatmul.mubr.bf16.gmra.mrb[0].mxu0 %v4904
  %v4983 = vpop.f32.mrb[0].mxu0
  %v4984 = vadd.f32 0.0, %v4983
  %v4985 = vpop.f32.mrb[0].mxu0
  %v4986 = vpop.f32.mrb[0].mxu0
  %v4987 = vadd.f32 0.0, %v4986
  %v4988 = vpop.f32.mrb[0].mxu0
  %4989 = vmatprep.mubr.bf16.mxu0 0
  %4990 = vmatmul.mubr.bf16.gmra.mrb[0].mxu0 %v4907
  %v4991 = vpop.f32.mrb[0].mxu0
  %v4992 = vadd.f32 0.0, %v4991
  %v4993 = vpop.f32.mrb[0].mxu0
  %v4994 = vpop.f32.mrb[0].mxu0
  %v4995 = vadd.f32 0.0, %v4994
  %v4996 = vpop.f32.mrb[0].mxu0
  %4997 = vmatprep.mubr.bf16.mxu0 0
  %4998 = vmatmul.mubr.bf16.gmra.mrb[0].mxu0 %v4910
  %v4999 = vpop.f32.mrb[0].mxu0
  %v5000 = vadd.f32 0.0, %v4999
  %v5001 = vpop.f32.mrb[0].mxu0
  %v5002 = vpop.f32.mrb[0].mxu0
  %v5003 = vadd.f32 0.0, %v5002
  %v5004 = vpop.f32.mrb[0].mxu0
  %5005 = vmatprep.mubr.bf16.mxu0 0
  %5006 = vmatmul.mubr.bf16.gmra.mrb[0].mxu0 %v4913
  %v5007 = vpop.f32.mrb[0].mxu0
  %v5008 = vadd.f32 0.0, %v5007
  %v5009 = vpop.f32.mrb[0].mxu0
  %v5010 = vpop.f32.mrb[0].mxu0
  %v5011 = vadd.f32 0.0, %v5010
  %v5012 = vpop.f32.mrb[0].mxu0
  %5013 = vmatprep.mubr.bf16.mxu0 0
  %5014 = vmatmul.mubr.bf16.gmra.mrb[0].mxu0 %v4916
  %v5015 = vpop.f32.mrb[0].mxu0
  %v5016 = vadd.f32 0.0, %v5015
  %v5017 = vpop.f32.mrb[0].mxu0
  %v5018 = vpop.f32.mrb[0].mxu0
  %v5019 = vadd.f32 0.0, %v5018
  %v5020 = vpop.f32.mrb[0].mxu0
  %5021 = vmatprep.mubr.bf16.mxu0 0
  %5022 = vmatmul.mubr.bf16.gmra.mrb[0].mxu0 %v4919
  %v5023 = vpop.f32.mrb[0].mxu0
  %v5024 = vadd.f32 0.0, %v5023
  %v5025 = vpop.f32.mrb[0].mxu0
  %v5026 = vpop.f32.mrb[0].mxu0
  %v5027 = vadd.f32 0.0, %v5026
  %v5028 = vpop.f32.mrb[0].mxu0
  %5029 = vmatprep.mubr.bf16.mxu0 0
  %5030 = vmatmul.mubr.bf16.gmra.mrb[0].mxu0 %v4922
  %v5031 = vpop.f32.mrb[0].mxu0
  %v5032 = vadd.f32 0.0, %v5031
  %v5033 = vpop.f32.mrb[0].mxu0
  %v5034 = vpop.f32.mrb[0].mxu0
  %v5035 = vadd.f32 0.0, %v5034
  %v5036 = vpop.f32.mrb[0].mxu0
  %5037 = vmatprep.mubr.bf16.mxu0 0
  %5038 = vmatmul.mubr.bf16.gmra.mrb[0].mxu0 %v4925
  %v5039 = vpop.f32.mrb[0].mxu0
  %v5040 = vadd.f32 0.0, %v5039
  %v5041 = vpop.f32.mrb[0].mxu0
  %v5042 = vpop.f32.mrb[0].mxu0
  %v5043 = vadd.f32 0.0, %v5042
  %v5044 = vpop.f32.mrb[0].mxu0
  %5045 = vmatprep.mubr.bf16.mxu0 0
  %5046 = vmatmul.mubr.bf16.gmra.mrb[0].mxu0 %v4928
  %v5047 = vpop.f32.mrb[0].mxu0
  %v5048 = vadd.f32 0.0, %v5047
  %v5049 = vpop.f32.mrb[0].mxu0
  %v5050 = vpop.f32.mrb[0].mxu0
  %v5051 = vadd.f32 0.0, %v5050
  %v5052 = vpop.f32.mrb[0].mxu0
  %5053 = vmatprep.mubr.bf16.mxu0 0
  %5054 = vmatmul.mubr.bf16.gmra.mrb[0].mxu0 %v4931
  %v5055 = vpop.f32.mrb[0].mxu0
  %v5056 = vadd.f32 0.0, %v5055
  %v5057 = vpop.f32.mrb[0].mxu0
  %v5058 = vpop.f32.mrb[0].mxu0
  %v5059 = vadd.f32 0.0, %v5058
  %v5060 = vpop.f32.mrb[0].mxu0
  %5061 = vdwg.mxu0
  %5068 = vrot.lane.b32.xlu0 %v4992, 16
  %v5069 = vpop.permute.xlu0 %5068
  %5070 = vrot.lane.b32.xlu0 %v4995, 16
  %v5071 = vpop.permute.xlu0 %5070
  %5072 = vrot.lane.b32.xlu0 %v5000, 16
  %v5073 = vpop.permute.xlu0 %5072
  %5074 = vrot.lane.b32.xlu0 %v5003, 16
  %v5075 = vpop.permute.xlu0 %5074
  %5076 = vrot.lane.b32.xlu0 %v5008, 16
  %v5077 = vpop.permute.xlu0 %5076
  %5078 = vrot.lane.b32.xlu0 %v5011, 16
  %v5079 = vpop.permute.xlu0 %5078
  %5092 = vrot.lane.b32.xlu0 %v5016, 32
  %v5093 = vpop.permute.xlu0 %5092
  %5094 = vrot.lane.b32.xlu0 %v5019, 32
  %v5095 = vpop.permute.xlu0 %5094
  %5096 = vrot.lane.b32.xlu0 %v5024, 32
  %v5097 = vpop.permute.xlu0 %5096
  %5098 = vrot.lane.b32.xlu0 %v5027, 32
  %v5099 = vpop.permute.xlu0 %5098
  %5100 = vrot.lane.b32.xlu0 %v5032, 32
  %v5101 = vpop.permute.xlu0 %5100
  %5102 = vrot.lane.b32.xlu0 %v5035, 32
  %v5103 = vpop.permute.xlu0 %5102
  %5116 = vrot.lane.b32.xlu0 %v5040, 48
  %v5117 = vpop.permute.xlu0 %5116
  %5118 = vrot.lane.b32.xlu0 %v5043, 48
  %v5119 = vpop.permute.xlu0 %5118
  %5120 = vrot.lane.b32.xlu0 %v5048, 48
  %v5121 = vpop.permute.xlu0 %5120
  %5122 = vrot.lane.b32.xlu0 %v5051, 48
  %v5123 = vpop.permute.xlu0 %5122
  %5124 = vrot.lane.b32.xlu0 %v5056, 48
  %v5125 = vpop.permute.xlu0 %5124
  %5126 = vrot.lane.b32.xlu0 %v5059, 48
  %v5127 = vpop.permute.xlu0 %5126
  %v5134 = vsel %vm1442, %v4968, %v5069
  %v5135 = vsel %vm1442, %v4971, %v5071
  %v5136 = vsel %vm1442, %v4976, %v5073
  %v5137 = vsel %vm1442, %v4979, %v5075
  %v5138 = vsel %vm1442, %v4984, %v5077
  %v5139 = vsel %vm1442, %v4987, %v5079
  %v5140 = vsel %vm324, %v5134, %v5093
  %v5141 = vsel %vm324, %v5135, %v5095
  %v5142 = vsel %vm324, %v5136, %v5097
  %v5143 = vsel %vm324, %v5137, %v5099
  %v5144 = vsel %vm324, %v5138, %v5101
  %v5145 = vsel %vm324, %v5139, %v5103
  %v5146 = vsel %vm148, %v5140, %v5117
  %v5147 = vsel %vm148, %v5141, %v5119
  %v5148 = vsel %vm148, %v5142, %v5121
  %v5149 = vsel %vm148, %v5143, %v5123
  %v5150 = vsel %vm148, %v5144, %v5125
  %v5151 = vsel %vm148, %v5145, %v5127
  %v5152 = vpack.c.bf16 %v5147, %v5146
  %v5153 = vpack.c.bf16 %v5149, %v5148
  %v5154 = vpack.c.bf16 %v5151, %v5150
  %s5155 = scalar_lea.vmem %s13, 32
  %v5156 = vld [vmem:[%s5155] sm:$0xf]
  %v5157 = vld [vmem:[%s5155 + $0x4] sm:$0xf]
  %v5158 = vld [vmem:[%s5155 + $0x8] sm:$0xf]
  %v5159 = vld [vmem:[%s5155 + $0xc] sm:$0xf]
  %v5160 = vld [vmem:[%s5155 + $0x10] sm:$0xf]
  %v5161 = vld [vmem:[%s5155 + $0x14] sm:$0xf]
  %v5162 = vld [vmem:[%s5155 + $0x18] sm:$0xf]
  %v5163 = vld [vmem:[%s5155 + $0x1c] sm:$0xf]
  %v5172 = vunpack.c.l.b16 %v5156
  %v5173 = vunpack.c.l.b16 %v5157
  %v5174 = vunpack.c.l.b16 %v5158
  %v5175 = vunpack.c.l.b16 %v5159
  %v5176 = vunpack.c.l.b16 %v5160
  %v5177 = vunpack.c.l.b16 %v5161
  %v5178 = vunpack.c.l.b16 %v5162
  %v5179 = vunpack.c.l.b16 %v5163
  %v5180 = vpack.c.b16 %v5173, %v5172
  %v5181 = vpack.c.b16 %v5175, %v5174
  %v5182 = vpack.c.b16 %v5177, %v5176
  %v5183 = vpack.c.b16 %v5179, %v5178
  %v5189 = vsel %vm3407, %v5152, 0
  %v5192 = vsel %vm3407, %v5153, 0
  %v5195 = vsel %vm3407, %v5154, 0
  %5197 = vmatprep.subr.bf16.mxu0 0
  %5198 = vmatpush1.bf16.msra.mxu0 %v5180
  %5199 = vmatprep.subr.bf16.mxu0 0
  %5200 = vmatpush1.bf16.msra.mxu0 %v5181
  %5201 = vmatprep.subr.bf16.mxu0 0
  %5202 = vmatpush1.bf16.msra.mxu0 %v5182
  %5203 = vmatprep.subr.bf16.mxu0 0
  %5204 = vmatpush1.bf16.msra.mxu0 %v5183
  %5205 = vmatprep.subr.bf16.mxu0 0
  %5206 = vmatpush1.bf16.msra.mxu0 0
  %5207 = vmatprep.subr.bf16.mxu0 0
  %5208 = vmatpush1.bf16.msra.mxu0 0
  %5209 = vmatprep.subr.bf16.mxu0 0
  %5210 = vmatpush1.bf16.msra.mxu0 0
  %5211 = vmatprep.subr.bf16.mxu0 0
  %5212 = vmatpush1.bf16.msra.mxu0 0
  %5213 = vmatprep.subr.bf16.mxu0 0
  %5214 = vmatpush1.bf16.msra.mxu0 0
  %5215 = vmatprep.subr.bf16.mxu0 0
  %5216 = vmatpush1.bf16.msra.mxu0 0
  %5217 = vmatprep.subr.bf16.mxu0 0
  %5218 = vmatpush1.bf16.msra.mxu0 0
  %5219 = vmatprep.subr.bf16.mxu0 0
  %5220 = vmatpush1.bf16.msra.mxu0 0
  %5221 = vmatprep.subr.bf16.mxu0 0
  %5222 = vmatpush1.bf16.msra.mxu0 0
  %5223 = vmatprep.subr.bf16.mxu0 0
  %5224 = vmatpush1.bf16.msra.mxu0 0
  %5225 = vmatprep.subr.bf16.mxu0 0
  %5226 = vmatpush1.bf16.msra.mxu0 0
  %5227 = vmatprep.subr.bf16.mxu0 0
  %5228 = vmatpush1.bf16.msra.mxu0 0
  %5229 = vmatprep.mubr.bf16.mxu0 0
  %5230 = vmatmul.mubr.bf16.gmra.mrb[0].mxu0 %v5189
  %v5231 = vpop.f32.mrb[0].mxu0
  %v5232 = vadd.f32 0.0, %v5231
  %v5233 = vpop.f32.mrb[0].mxu0
  %v5234 = vpop.f32.mrb[0].mxu0
  %v5235 = vadd.f32 0.0, %v5234
  %v5236 = vpop.f32.mrb[0].mxu0
  %5237 = vmatprep.mubr.bf16.mxu0 0
  %5238 = vmatmul.mubr.bf16.gmra.mrb[0].mxu0 %v5192
  %v5239 = vpop.f32.mrb[0].mxu0
  %v5240 = vadd.f32 0.0, %v5239
  %v5241 = vpop.f32.mrb[0].mxu0
  %v5242 = vpop.f32.mrb[0].mxu0
  %v5243 = vadd.f32 0.0, %v5242
  %v5244 = vpop.f32.mrb[0].mxu0
  %5245 = vmatprep.mubr.bf16.mxu0 0
  %5246 = vmatmul.mubr.bf16.gmra.mrb[0].mxu0 %v5195
  %v5247 = vpop.f32.mrb[0].mxu0
  %v5248 = vadd.f32 0.0, %v5247
  %v5249 = vpop.f32.mrb[0].mxu0
  %v5250 = vpop.f32.mrb[0].mxu0
  %v5251 = vadd.f32 0.0, %v5250
  %v5252 = vpop.f32.mrb[0].mxu0
  %5253 = vdwg.mxu0
  %v5254 = vadd.f32 %v3854, %v5232
  %v5255 = vadd.f32 %v3855, %v5235
  %v5256 = vadd.f32 %v3856, %v5240
  %v5257 = vadd.f32 %v3857, %v5243
  %v5258 = vadd.f32 %v3858, %v5248
  %v5259 = vadd.f32 %v3859, %v5251
  %s5260 = scalar_lea.vmem %s14, 1
  %v5261 = vld [vmem:[%s5260] sm:$0x1]
  %v5262 = vsel %vm324, %v5254, 0.0
  %5263 = vadd.xlane.f32.xlu0 %v5262
  %v5264 = vpop.xlane.xlu0 %5263
  %v5265 = vsel %vm324, %v5255, 0.0
  %5266 = vadd.xlane.f32.xlu0 %v5265
  %v5267 = vpop.xlane.xlu0 %5266
  %v5268 = vsel %vm324, %v5256, 0.0
  %5269 = vadd.xlane.f32.xlu0 %v5268
  %v5270 = vpop.xlane.xlu0 %5269
  %v5271 = vsel %vm324, %v5257, 0.0
  %5272 = vadd.xlane.f32.xlu0 %v5271
  %v5273 = vpop.xlane.xlu0 %5272
  %v5274 = vsel %vm324, %v5258, 0.0
  %5275 = vadd.xlane.f32.xlu0 %v5274
  %v5276 = vpop.xlane.xlu0 %5275
  %v5277 = vsel %vm324, %v5259, 0.0
  %5278 = vadd.xlane.f32.xlu0 %v5277
  %v5279 = vpop.xlane.xlu0 %5278
  %v5280 = vmul.f32 %v5264, %v2102
  %v5281 = vmul.f32 %v5267, %v2102
  %v5282 = vmul.f32 %v5270, %v2102
  %v5283 = vmul.f32 %v5273, %v2102
  %v5284 = vmul.f32 %v5276, %v2102
  %v5285 = vmul.f32 %v5279, %v2102
  %v5286 = vsub.f32 %v5254, %v5280
  %v5287 = vsub.f32 %v5255, %v5281
  %v5288 = vsub.f32 %v5256, %v5282
  %v5289 = vsub.f32 %v5257, %v5283
  %v5290 = vsub.f32 %v5258, %v5284
  %v5291 = vsub.f32 %v5259, %v5285
  %v5292 = vmul.f32 %v5286, %v5286
  %v5293 = vmul.f32 %v5287, %v5287
  %v5294 = vmul.f32 %v5288, %v5288
  %v5295 = vmul.f32 %v5289, %v5289
  %v5296 = vmul.f32 %v5290, %v5290
  %v5297 = vmul.f32 %v5291, %v5291
  %v5298 = vsel %vm324, %v5292, 0.0
  %5299 = vadd.xlane.f32.xlu0 %v5298
  %v5300 = vpop.xlane.xlu0 %5299
  %v5301 = vsel %vm324, %v5293, 0.0
  %5302 = vadd.xlane.f32.xlu0 %v5301
  %v5303 = vpop.xlane.xlu0 %5302
  %v5304 = vsel %vm324, %v5294, 0.0
  %5305 = vadd.xlane.f32.xlu0 %v5304
  %v5306 = vpop.xlane.xlu0 %5305
  %v5307 = vsel %vm324, %v5295, 0.0
  %5308 = vadd.xlane.f32.xlu0 %v5307
  %v5309 = vpop.xlane.xlu0 %5308
  %v5310 = vsel %vm324, %v5296, 0.0
  %5311 = vadd.xlane.f32.xlu0 %v5310
  %v5312 = vpop.xlane.xlu0 %5311
  %v5313 = vsel %vm324, %v5297, 0.0
  %5314 = vadd.xlane.f32.xlu0 %v5313
  %v5315 = vpop.xlane.xlu0 %5314
  %v5316 = vmul.f32 %v5300, %v2102
  %v5317 = vmul.f32 %v5303, %v2102
  %v5318 = vmul.f32 %v5306, %v2102
  %v5319 = vmul.f32 %v5309, %v2102
  %v5320 = vmul.f32 %v5312, %v2102
  %v5321 = vmul.f32 %v5315, %v2102
  %v5322 = vadd.f32 %v5316, 1e-05
  %v5323 = vadd.f32 %v5317, 1e-05
  %v5324 = vadd.f32 %v5318, 1e-05
  %v5325 = vadd.f32 %v5319, 1e-05
  %v5326 = vadd.f32 %v5320, 1e-05
  %v5327 = vadd.f32 %v5321, 1e-05
  %v5328 = vrsqrt.pop %v5322
  %v5329 = vrsqrt.pop %v5323
  %v5330 = vrsqrt.pop %v5324
  %v5331 = vrsqrt.pop %v5325
  %v5332 = vrsqrt.pop %v5326
  %v5333 = vrsqrt.pop %v5327
  %v5334 = vmul.f32 %v5286, %v5328
  %v5335 = vmul.f32 %v5287, %v5329
  %v5336 = vmul.f32 %v5288, %v5330
  %v5337 = vmul.f32 %v5289, %v5331
  %v5338 = vmul.f32 %v5290, %v5332
  %v5339 = vmul.f32 %v5291, %v5333
  %v5341 = vlaneseq
  %v5342 = vshrl.u32 %v5341, 7
  %v5343 = vsub.s32 0, %v5342
  %v5344 = vrot.slane %v5261, %v5343
  %v5346 = vmul.f32 %v5334, %v5344
  %v5347 = vmul.f32 %v5335, %v5344
  %v5348 = vmul.f32 %v5336, %v5344
  %v5349 = vmul.f32 %v5337, %v5344
  %v5350 = vmul.f32 %v5338, %v5344
  %v5351 = vmul.f32 %v5339, %v5344
  %v5352 = vpack.c.bf16 %v5347, %v5346
  %v5353 = vpack.c.bf16 %v5349, %v5348
  %v5354 = vpack.c.bf16 %v5351, %v5350
  %s5355 = scalar_lea.vmem %s15, 16
  %v5356 = vld [vmem:[%s5355] sm:$0xf]
  %v5357 = vld [vmem:[%s5355 + $0x4] sm:$0xf]
  %v5358 = vld [vmem:[%s5355 + $0x8] sm:$0xf]
  %v5359 = vld [vmem:[%s5355 + $0xc] sm:$0xf]
  %s5360 = scalar_lea.vmem %s16, 1
  %v5361 = vld [vmem:[%s5360] sm:$0x1]
  %v5363 = vlaneseq
  %v5364 = vshrl.u32 %v5363, 7
  %v5365 = vsub.s32 0, %v5364
  %v5366 = vrot.slane %v5361, %v5365
  %v5372 = vunpack.c.l.b16 %v5356
  %v5373 = vunpack.c.l.b16 %v5357
  %v5374 = vunpack.c.l.b16 %v5358
  %v5375 = vunpack.c.l.b16 %v5359
  %v5376 = vpack.c.b16 %v5373, %v5372
  %v5377 = vpack.c.b16 %v5375, %v5374
  %v5381 = vsel %vm324, %v5352, 0
  %v5384 = vsel %vm324, %v5353, 0
  %v5387 = vsel %vm324, %v5354, 0
  %5389 = vmatprep.subr.bf16.mxu0 0
  %5390 = vmatpush1.bf16.msra.mxu0 %v5376
  %5391 = vmatprep.subr.bf16.mxu0 0
  %5392 = vmatpush1.bf16.msra.mxu0 %v5377
  %5393 = vmatprep.subr.bf16.mxu0 0
  %5394 = vmatpush1.bf16.msra.mxu0 0
  %5395 = vmatprep.subr.bf16.mxu0 0
  %5396 = vmatpush1.bf16.msra.mxu0 0
  %5397 = vmatprep.subr.bf16.mxu0 0
  %5398 = vmatpush1.bf16.msra.mxu0 0
  %5399 = vmatprep.subr.bf16.mxu0 0
  %5400 = vmatpush1.bf16.msra.mxu0 0
  %5401 = vmatprep.subr.bf16.mxu0 0
  %5402 = vmatpush1.bf16.msra.mxu0 0
  %5403 = vmatprep.subr.bf16.mxu0 0
  %5404 = vmatpush1.bf16.msra.mxu0 0
  %5405 = vmatprep.subr.bf16.mxu0 0
  %5406 = vmatpush1.bf16.msra.mxu0 0
  %5407 = vmatprep.subr.bf16.mxu0 0
  %5408 = vmatpush1.bf16.msra.mxu0 0
  %5409 = vmatprep.subr.bf16.mxu0 0
  %5410 = vmatpush1.bf16.msra.mxu0 0
  %5411 = vmatprep.subr.bf16.mxu0 0
  %5412 = vmatpush1.bf16.msra.mxu0 0
  %5413 = vmatprep.subr.bf16.mxu0 0
  %5414 = vmatpush1.bf16.msra.mxu0 0
  %5415 = vmatprep.subr.bf16.mxu0 0
  %5416 = vmatpush1.bf16.msra.mxu0 0
  %5417 = vmatprep.subr.bf16.mxu0 0
  %5418 = vmatpush1.bf16.msra.mxu0 0
  %5419 = vmatprep.subr.bf16.mxu0 0
  %5420 = vmatpush1.bf16.msra.mxu0 0
  %5421 = vmatprep.mubr.bf16.mxu0 0
  %5422 = vmatmul.mubr.bf16.gmra.mrb[0].mxu0 %v5381
  %v5423 = vpop.f32.mrb[0].mxu0
  %v5424 = vadd.f32 %v5366, %v5423
  %v5425 = vpop.f32.mrb[0].mxu0
  %v5426 = vpop.f32.mrb[0].mxu0
  %v5427 = vadd.f32 %v5366, %v5426
  %v5428 = vpop.f32.mrb[0].mxu0
  %5429 = vmatprep.mubr.bf16.mxu0 0
  %5430 = vmatmul.mubr.bf16.gmra.mrb[0].mxu0 %v5384
  %v5431 = vpop.f32.mrb[0].mxu0
  %v5432 = vadd.f32 %v5366, %v5431
  %v5433 = vpop.f32.mrb[0].mxu0
  %v5434 = vpop.f32.mrb[0].mxu0
  %v5435 = vadd.f32 %v5366, %v5434
  %v5436 = vpop.f32.mrb[0].mxu0
  %5437 = vmatprep.mubr.bf16.mxu0 0
  %5438 = vmatmul.mubr.bf16.gmra.mrb[0].mxu0 %v5387
  %v5439 = vpop.f32.mrb[0].mxu0
  %v5440 = vadd.f32 %v5366, %v5439
  %v5441 = vpop.f32.mrb[0].mxu0
  %v5442 = vpop.f32.mrb[0].mxu0
  %v5443 = vadd.f32 %v5366, %v5442
  %v5444 = vpop.f32.mrb[0].mxu0
  %5445 = vdwg.mxu0
  %v5446 = vmul.f32 %v5424, 0.5
  %v5447 = vmul.f32 %v5427, 0.5
  %v5448 = vmul.f32 %v5432, 0.5
  %v5449 = vmul.f32 %v5435, 0.5
  %v5450 = vmul.f32 %v5440, 0.5
  %v5451 = vmul.f32 %v5443, 0.5
  %v5452 = vmul.f32 %v5424, 0.044715
  %v5453 = vmul.f32 %v5427, 0.044715
  %v5454 = vmul.f32 %v5432, 0.044715
  %v5455 = vmul.f32 %v5435, 0.044715
  %v5456 = vmul.f32 %v5440, 0.044715
  %v5457 = vmul.f32 %v5443, 0.044715
  %v5458 = vmul.f32 %v5452, %v5424
  %v5459 = vmul.f32 %v5453, %v5427
  %v5460 = vmul.f32 %v5454, %v5432
  %v5461 = vmul.f32 %v5455, %v5435
  %v5462 = vmul.f32 %v5456, %v5440
  %v5463 = vmul.f32 %v5457, %v5443
  %v5464 = vmul.f32 %v5458, %v5424
  %v5465 = vmul.f32 %v5459, %v5427
  %v5466 = vmul.f32 %v5460, %v5432
  %v5467 = vmul.f32 %v5461, %v5435
  %v5468 = vmul.f32 %v5462, %v5440
  %v5469 = vmul.f32 %v5463, %v5443
  %v5470 = vadd.f32 %v5424, %v5464
  %v5471 = vadd.f32 %v5427, %v5465
  %v5472 = vadd.f32 %v5432, %v5466
  %v5473 = vadd.f32 %v5435, %v5467
  %v5474 = vadd.f32 %v5440, %v5468
  %v5475 = vadd.f32 %v5443, %v5469
  %v5476 = vmul.f32 %v5470, 0.7978846
  %v5477 = vmul.f32 %v5471, 0.7978846
  %v5478 = vmul.f32 %v5472, 0.7978846
  %v5479 = vmul.f32 %v5473, 0.7978846
  %v5480 = vmul.f32 %v5474, 0.7978846
  %v5481 = vmul.f32 %v5475, 0.7978846
  %v5482 = vtanh.pop %v5476
  %v5483 = vtanh.pop %v5477
  %v5484 = vtanh.pop %v5478
  %v5485 = vtanh.pop %v5479
  %v5486 = vtanh.pop %v5480
  %v5487 = vtanh.pop %v5481
  %v5488 = vadd.f32 %v5482, 1.0
  %v5489 = vadd.f32 %v5483, 1.0
  %v5490 = vadd.f32 %v5484, 1.0
  %v5491 = vadd.f32 %v5485, 1.0
  %v5492 = vadd.f32 %v5486, 1.0
  %v5493 = vadd.f32 %v5487, 1.0
  %v5494 = vmul.f32 %v5446, %v5488
  %v5495 = vmul.f32 %v5447, %v5489
  %v5496 = vmul.f32 %v5448, %v5490
  %v5497 = vmul.f32 %v5449, %v5491
  %v5498 = vmul.f32 %v5450, %v5492
  %v5499 = vmul.f32 %v5451, %v5493
  %v5500 = vpack.c.bf16 %v5495, %v5494
  %v5501 = vpack.c.bf16 %v5497, %v5496
  %v5502 = vpack.c.bf16 %v5499, %v5498
  %s5503 = scalar_lea.vmem %s17, 64
  %v5504 = vld [vmem:[%s5503] sm:$0xf]
  %v5505 = vld [vmem:[%s5503 + $0x4] sm:$0xf]
  %v5506 = vld [vmem:[%s5503 + $0x8] sm:$0xf]
  %v5507 = vld [vmem:[%s5503 + $0xc] sm:$0xf]
  %v5508 = vld [vmem:[%s5503 + $0x10] sm:$0xf]
  %v5509 = vld [vmem:[%s5503 + $0x14] sm:$0xf]
  %v5510 = vld [vmem:[%s5503 + $0x18] sm:$0xf]
  %v5511 = vld [vmem:[%s5503 + $0x1c] sm:$0xf]
  %v5512 = vld [vmem:[%s5503 + $0x20] sm:$0xf]
  %v5513 = vld [vmem:[%s5503 + $0x24] sm:$0xf]
  %v5514 = vld [vmem:[%s5503 + $0x28] sm:$0xf]
  %v5515 = vld [vmem:[%s5503 + $0x2c] sm:$0xf]
  %v5516 = vld [vmem:[%s5503 + $0x30] sm:$0xf]
  %v5517 = vld [vmem:[%s5503 + $0x34] sm:$0xf]
  %v5518 = vld [vmem:[%s5503 + $0x38] sm:$0xf]
  %v5519 = vld [vmem:[%s5503 + $0x3c] sm:$0xf]
  %v5536 = vunpack.c.l.b16 %v5504
  %v5537 = vunpack.c.l.b16 %v5505
  %v5538 = vunpack.c.l.b16 %v5506
  %v5539 = vunpack.c.l.b16 %v5507
  %v5540 = vunpack.c.l.b16 %v5508
  %v5541 = vunpack.c.l.b16 %v5509
  %v5542 = vunpack.c.l.b16 %v5510
  %v5543 = vunpack.c.l.b16 %v5511
  %v5544 = vunpack.c.l.b16 %v5512
  %v5545 = vunpack.c.l.b16 %v5513
  %v5546 = vunpack.c.l.b16 %v5514
  %v5547 = vunpack.c.l.b16 %v5515
  %v5548 = vunpack.c.l.b16 %v5516
  %v5549 = vunpack.c.l.b16 %v5517
  %v5550 = vunpack.c.l.b16 %v5518
  %v5551 = vunpack.c.l.b16 %v5519
  %v5552 = vpack.c.b16 %v5537, %v5536
  %v5553 = vpack.c.b16 %v5539, %v5538
  %v5554 = vpack.c.b16 %v5541, %v5540
  %v5555 = vpack.c.b16 %v5543, %v5542
  %v5556 = vpack.c.b16 %v5545, %v5544
  %v5557 = vpack.c.b16 %v5547, %v5546
  %v5558 = vpack.c.b16 %v5549, %v5548
  %v5559 = vpack.c.b16 %v5551, %v5550
  %5568 = vmatprep.subr.bf16.mxu0 0
  %5569 = vmatpush1.bf16.msra.mxu0 %v5552
  %5570 = vmatprep.subr.bf16.mxu0 0
  %5571 = vmatpush1.bf16.msra.mxu0 %v5553
  %5572 = vmatprep.subr.bf16.mxu0 0
  %5573 = vmatpush1.bf16.msra.mxu0 %v5554
  %5574 = vmatprep.subr.bf16.mxu0 0
  %5575 = vmatpush1.bf16.msra.mxu0 %v5555
  %5576 = vmatprep.subr.bf16.mxu0 0
  %5577 = vmatpush1.bf16.msra.mxu0 %v5556
  %5578 = vmatprep.subr.bf16.mxu0 0
  %5579 = vmatpush1.bf16.msra.mxu0 %v5557
  %5580 = vmatprep.subr.bf16.mxu0 0
  %5581 = vmatpush1.bf16.msra.mxu0 %v5558
  %5582 = vmatprep.subr.bf16.mxu0 0
  %5583 = vmatpush1.bf16.msra.mxu0 %v5559
  %5584 = vmatprep.subr.bf16.mxu0 0
  %5585 = vmatpush1.bf16.msra.mxu0 0
  %5586 = vmatprep.subr.bf16.mxu0 0
  %5587 = vmatpush1.bf16.msra.mxu0 0
  %5588 = vmatprep.subr.bf16.mxu0 0
  %5589 = vmatpush1.bf16.msra.mxu0 0
  %5590 = vmatprep.subr.bf16.mxu0 0
  %5591 = vmatpush1.bf16.msra.mxu0 0
  %5592 = vmatprep.subr.bf16.mxu0 0
  %5593 = vmatpush1.bf16.msra.mxu0 0
  %5594 = vmatprep.subr.bf16.mxu0 0
  %5595 = vmatpush1.bf16.msra.mxu0 0
  %5596 = vmatprep.subr.bf16.mxu0 0
  %5597 = vmatpush1.bf16.msra.mxu0 0
  %5598 = vmatprep.subr.bf16.mxu0 0
  %5599 = vmatpush1.bf16.msra.mxu0 0
  %5600 = vmatprep.mubr.bf16.mxu0 0
  %5601 = vmatmul.mubr.bf16.gmra.mrb[0].mxu0 %v5500
  %v5602 = vpop.f32.mrb[0].mxu0
  %v5603 = vadd.f32 0.0, %v5602
  %v5604 = vpop.f32.mrb[0].mxu0
  %v5605 = vpop.f32.mrb[0].mxu0
  %v5606 = vadd.f32 0.0, %v5605
  %v5607 = vpop.f32.mrb[0].mxu0
  %5608 = vmatprep.mubr.bf16.mxu0 0
  %5609 = vmatmul.mubr.bf16.gmra.mrb[0].mxu0 %v5501
  %v5610 = vpop.f32.mrb[0].mxu0
  %v5611 = vadd.f32 0.0, %v5610
  %v5612 = vpop.f32.mrb[0].mxu0
  %v5613 = vpop.f32.mrb[0].mxu0
  %v5614 = vadd.f32 0.0, %v5613
  %v5615 = vpop.f32.mrb[0].mxu0
  %5616 = vmatprep.mubr.bf16.mxu0 0
  %5617 = vmatmul.mubr.bf16.gmra.mrb[0].mxu0 %v5502
  %v5618 = vpop.f32.mrb[0].mxu0
  %v5619 = vadd.f32 0.0, %v5618
  %v5620 = vpop.f32.mrb[0].mxu0
  %v5621 = vpop.f32.mrb[0].mxu0
  %v5622 = vadd.f32 0.0, %v5621
  %v5623 = vpop.f32.mrb[0].mxu0
  %5624 = vdwg.mxu0
  %v5625 = vadd.f32 %v5254, %v5603
  %v5626 = vadd.f32 %v5255, %v5606
  %v5627 = vadd.f32 %v5256, %v5611
  %v5628 = vadd.f32 %v5257, %v5614
  %v5629 = vadd.f32 %v5258, %v5619
  %v5630 = vadd.f32 %v5259, %v5622
  %s5631 = scalar_lea.vmem %s18, 1
  %v5632 = vld [vmem:[%s5631] sm:$0x1]
  %v5634 = vlaneseq
  %v5635 = vshrl.u32 %v5634, 7
  %v5636 = vsub.s32 0, %v5635
  %v5637 = vrot.slane %v5632, %v5636
  %v5639 = vadd.f32 %v5625, %v5637
  %v5640 = vadd.f32 %v5626, %v5637
  %v5641 = vadd.f32 %v5627, %v5637
  %v5642 = vadd.f32 %v5628, %v5637
  %v5643 = vadd.f32 %v5629, %v5637
  %v5644 = vadd.f32 %v5630, %v5637
  %v5645 = vld [vmem:[%s19] sm:$0x7]
  %v5646 = vpack.c.bf16 %v5640, %v5639
  %v5647 = vpack.c.bf16 %v5642, %v5641
  %v5648 = vpack.c.bf16 %v5644, %v5643
  %v5650 = vsel %vm148, %v5645, 0
  %5652 = vmatprep.subr.bf16.mxu0 0
  %5653 = vmatpush1.bf16.msra.mxu0 %v5646
  %5654 = vmatprep.subr.bf16.mxu0 0
  %5655 = vmatpush1.bf16.msra.mxu0 %v5647
  %5656 = vmatprep.subr.bf16.mxu0 0
  %5657 = vmatpush1.bf16.msra.mxu0 %v5648
  %5658 = vmatprep.subr.bf16.mxu0 0
  %5659 = vmatpush1.bf16.msra.mxu0 0
  %5660 = vmatprep.subr.bf16.mxu0 0
  %5661 = vmatpush1.bf16.msra.mxu0 0
  %5662 = vmatprep.subr.bf16.mxu0 0
  %5663 = vmatpush1.bf16.msra.mxu0 0
  %5664 = vmatprep.subr.bf16.mxu0 0
  %5665 = vmatpush1.bf16.msra.mxu0 0
  %5666 = vmatprep.subr.bf16.mxu0 0
  %5667 = vmatpush1.bf16.msra.mxu0 0
  %5668 = vmatprep.subr.bf16.mxu0 0
  %5669 = vmatpush1.bf16.msra.mxu0 0
  %5670 = vmatprep.subr.bf16.mxu0 0
  %5671 = vmatpush1.bf16.msra.mxu0 0
  %5672 = vmatprep.subr.bf16.mxu0 0
  %5673 = vmatpush1.bf16.msra.mxu0 0
  %5674 = vmatprep.subr.bf16.mxu0 0
  %5675 = vmatpush1.bf16.msra.mxu0 0
  %5676 = vmatprep.subr.bf16.mxu0 0
  %5677 = vmatpush1.bf16.msra.mxu0 0
  %5678 = vmatprep.subr.bf16.mxu0 0
  %5679 = vmatpush1.bf16.msra.mxu0 0
  %5680 = vmatprep.subr.bf16.mxu0 0
  %5681 = vmatpush1.bf16.msra.mxu0 0
  %5682 = vmatprep.subr.bf16.mxu0 0
  %5683 = vmatpush1.bf16.msra.mxu0 0
  %5684 = vmatprep.mubr.bf16.mxu0 0
  %5685 = vmatmul.mubr.bf16.gmra.mrb[0].mxu0 %v5650
  %v5686 = vpop.f32.mrb[0].mxu0
  %v5687 = vadd.f32 0.0, %v5686
  %v5688 = vpop.f32.mrb[0].mxu0
  %v5689 = vpop.f32.mrb[0].mxu0
  %v5690 = vpop.f32.mrb[0].mxu0
  %5691 = vdwg.mxu0
  %v5692 = vld [vmem:[%s20] sm:$0x1]
  %vm5693 = vcmask 259072
  %v5694 = vsel %vm5693, %v5687, 0.0
  %5695 = vadd.xlane.f32.xlu0 %v5694
  %v5696 = vpop.xlane.xlu0 %5695
  %v5697 = vmul.f32 %v5696, %v2102
  %v5698 = vsub.f32 %v5687, %v5697
  %v5699 = vmul.f32 %v5698, %v5698
  %v5700 = vsel %vm5693, %v5699, 0.0
  %5701 = vadd.xlane.f32.xlu0 %v5700
  %v5702 = vpop.xlane.xlu0 %5701
  %v5703 = vmul.f32 %v5702, %v2102
  %v5704 = vadd.f32 %v5703, 1e-05
  %v5705 = vrsqrt.pop %v5704
  %v5706 = vmul.f32 %v5698, %v5705
  %v5708 = vlaneseq
  %v5709 = vshrl.u32 %v5708, 7
  %v5710 = vsub.s32 0, %v5709
  %v5711 = vrot.slane %v5692, %v5710
  %v5713 = vmul.f32 %v5706, %v5711
  %v5714 = vpack.c.bf16 %v5713, %v5713
  %v5715 = vld [vmem:[%s21] sm:$0xff]
  %v5716 = vld [vmem:[%s21 + $0x8] sm:$0xff]
  %v5717 = vld [vmem:[%s21 + $0x10] sm:$0xff]
  %v5718 = vld [vmem:[%s21 + $0x18] sm:$0xff]
  %v5719 = vld [vmem:[%s21 + $0x20] sm:$0xff]
  %v5720 = vld [vmem:[%s21 + $0x28] sm:$0xff]
  %v5721 = vld [vmem:[%s21 + $0x30] sm:$0xff]
  %v5722 = vld [vmem:[%s21 + $0x38] sm:$0xff]
  %v5723 = vld [vmem:[%s21 + $0x40] sm:$0xff]
  %v5724 = vld [vmem:[%s21 + $0x48] sm:$0xff]
  %v5725 = vld [vmem:[%s21 + $0x50] sm:$0xff]
  %v5726 = vld [vmem:[%s21 + $0x58] sm:$0xff]
  %v5727 = vld [vmem:[%s21 + $0x60] sm:$0xff]
  %v5728 = vld [vmem:[%s21 + $0x68] sm:$0xff]
  %v5729 = vld [vmem:[%s21 + $0x70] sm:$0xff]
  %v5730 = vld [vmem:[%s21 + $0x78] sm:$0xff]
  %v5731 = vld [vmem:[%s21 + $0x80] sm:$0xff]
  %v5732 = vld [vmem:[%s21 + $0x88] sm:$0xff]
  %v5733 = vld [vmem:[%s21 + $0x90] sm:$0xff]
  %v5734 = vld [vmem:[%s21 + $0x98] sm:$0xff]
  %v5735 = vld [vmem:[%s21 + $0xa0] sm:$0xff]
  %v5736 = vld [vmem:[%s21 + $0xa8] sm:$0xff]
  %v5737 = vld [vmem:[%s21 + $0xb0] sm:$0xff]
  %v5738 = vld [vmem:[%s21 + $0xb8] sm:$0xff]
  %v5739 = vld [vmem:[%s21 + $0xc0] sm:$0xff]
  %v5740 = vld [vmem:[%s21 + $0xc8] sm:$0xff]
  %v5741 = vld [vmem:[%s21 + $0xd0] sm:$0xff]
  %v5742 = vld [vmem:[%s21 + $0xd8] sm:$0xff]
  %v5743 = vld [vmem:[%s21 + $0xe0] sm:$0xff]
  %v5744 = vld [vmem:[%s21 + $0xe8] sm:$0xff]
  %v5745 = vld [vmem:[%s21 + $0xf0] sm:$0xff]
  %v5746 = vld [vmem:[%s21 + $0xf8] sm:$0xff]
  %v5747 = vld [vmem:[%s21 + $0x100] sm:$0xff]
  %v5748 = vld [vmem:[%s21 + $0x108] sm:$0xff]
  %v5749 = vld [vmem:[%s21 + $0x110] sm:$0xff]
  %v5750 = vld [vmem:[%s21 + $0x118] sm:$0xff]
  %v5751 = vld [vmem:[%s21 + $0x120] sm:$0xff]
  %v5752 = vld [vmem:[%s21 + $0x128] sm:$0xff]
  %v5753 = vld [vmem:[%s21 + $0x130] sm:$0xff]
  %v5754 = vld [vmem:[%s21 + $0x138] sm:$0xff]
  %v5755 = vld [vmem:[%s21 + $0x140] sm:$0xff]
  %v5756 = vld [vmem:[%s21 + $0x148] sm:$0xff]
  %v5757 = vld [vmem:[%s21 + $0x150] sm:$0xff]
  %v5758 = vld [vmem:[%s21 + $0x158] sm:$0xff]
  %v5759 = vld [vmem:[%s22] sm:$0xff]
  %v5760 = vld [vmem:[%s22 + $0x8] sm:$0xff]
  %v5761 = vld [vmem:[%s22 + $0x10] sm:$0x3f]
  %v5765 = vlaneseq
  %v5766 = vshrl.u32 %v5765, 7
  %v5767 = vsub.s32 0, %v5766
  %v5768 = vrot.slane %v5759, %v5767
  %v5769 = vlaneseq
  %v5770 = vshrl.u32 %v5769, 7
  %v5771 = vsub.s32 1, %v5770
  %v5772 = vrot.slane %v5759, %v5771
  %v5773 = vlaneseq
  %v5774 = vshrl.u32 %v5773, 7
  %v5775 = vsub.s32 2, %v5774
  %v5776 = vrot.slane %v5759, %v5775
  %v5777 = vlaneseq
  %v5778 = vshrl.u32 %v5777, 7
  %v5779 = vsub.s32 3, %v5778
  %v5780 = vrot.slane %v5759, %v5779
  %v5781 = vlaneseq
  %v5782 = vshrl.u32 %v5781, 7
  %v5783 = vsub.s32 4, %v5782
  %v5784 = vrot.slane %v5759, %v5783
  %v5785 = vlaneseq
  %v5786 = vshrl.u32 %v5785, 7
  %v5787 = vsub.s32 5, %v5786
  %v5788 = vrot.slane %v5759, %v5787
  %v5789 = vlaneseq
  %v5790 = vshrl.u32 %v5789, 7
  %v5791 = vsub.s32 6, %v5790
  %v5792 = vrot.slane %v5759, %v5791
  %v5793 = vlaneseq
  %v5794 = vshrl.u32 %v5793, 7
  %v5795 = vsub.s32 7, %v5794
  %v5796 = vrot.slane %v5759, %v5795
  %v5797 = vlaneseq
  %v5798 = vshrl.u32 %v5797, 7
  %v5799 = vsub.s32 0, %v5798
  %v5800 = vrot.slane %v5760, %v5799
  %v5801 = vlaneseq
  %v5802 = vshrl.u32 %v5801, 7
  %v5803 = vsub.s32 1, %v5802
  %v5804 = vrot.slane %v5760, %v5803
  %v5805 = vlaneseq
  %v5806 = vshrl.u32 %v5805, 7
  %v5807 = vsub.s32 2, %v5806
  %v5808 = vrot.slane %v5760, %v5807
  %v5809 = vlaneseq
  %v5810 = vshrl.u32 %v5809, 7
  %v5811 = vsub.s32 3, %v5810
  %v5812 = vrot.slane %v5760, %v5811
  %v5813 = vlaneseq
  %v5814 = vshrl.u32 %v5813, 7
  %v5815 = vsub.s32 4, %v5814
  %v5816 = vrot.slane %v5760, %v5815
  %v5817 = vlaneseq
  %v5818 = vshrl.u32 %v5817, 7
  %v5819 = vsub.s32 5, %v5818
  %v5820 = vrot.slane %v5760, %v5819
  %v5821 = vlaneseq
  %v5822 = vshrl.u32 %v5821, 7
  %v5823 = vsub.s32 6, %v5822
  %v5824 = vrot.slane %v5760, %v5823
  %v5825 = vlaneseq
  %v5826 = vshrl.u32 %v5825, 7
  %v5827 = vsub.s32 7, %v5826
  %v5828 = vrot.slane %v5760, %v5827
  %v5829 = vlaneseq
  %v5830 = vshrl.u32 %v5829, 7
  %v5831 = vsub.s32 0, %v5830
  %v5832 = vrot.slane %v5761, %v5831
  %v5833 = vlaneseq
  %v5834 = vshrl.u32 %v5833, 7
  %v5835 = vsub.s32 1, %v5834
  %v5836 = vrot.slane %v5761, %v5835
  %v5837 = vlaneseq
  %v5838 = vshrl.u32 %v5837, 7
  %v5839 = vsub.s32 2, %v5838
  %v5840 = vrot.slane %v5761, %v5839
  %v5841 = vlaneseq
  %v5842 = vshrl.u32 %v5841, 7
  %v5843 = vsub.s32 3, %v5842
  %v5844 = vrot.slane %v5761, %v5843
  %v5845 = vlaneseq
  %v5846 = vshrl.u32 %v5845, 7
  %v5847 = vsub.s32 4, %v5846
  %v5848 = vrot.slane %v5761, %v5847
  %v5849 = vlaneseq
  %v5850 = vshrl.u32 %v5849, 7
  %v5851 = vsub.s32 5, %v5850
  %v5852 = vrot.slane %v5761, %v5851
  %v5919 = vunpack.c.l.b16 %v5715
  %v5920 = vunpack.c.h.b16 %v5715
  %v5921 = vunpack.c.l.b16 %v5716
  %v5922 = vunpack.c.h.b16 %v5716
  %v5923 = vunpack.c.l.b16 %v5717
  %v5924 = vunpack.c.h.b16 %v5717
  %v5925 = vunpack.c.l.b16 %v5718
  %v5926 = vunpack.c.h.b16 %v5718
  %v5927 = vunpack.c.l.b16 %v5719
  %v5928 = vunpack.c.h.b16 %v5719
  %v5929 = vunpack.c.l.b16 %v5720
  %v5930 = vunpack.c.h.b16 %v5720
  %v5931 = vunpack.c.l.b16 %v5721
  %v5932 = vunpack.c.h.b16 %v5721
  %v5933 = vunpack.c.l.b16 %v5722
  %v5934 = vunpack.c.h.b16 %v5722
  %v5935 = vunpack.c.l.b16 %v5723
  %v5936 = vunpack.c.h.b16 %v5723
  %v5937 = vunpack.c.l.b16 %v5724
  %v5938 = vunpack.c.h.b16 %v5724
  %v5939 = vunpack.c.l.b16 %v5725
  %v5940 = vunpack.c.h.b16 %v5725
  %v5941 = vunpack.c.l.b16 %v5726
  %v5942 = vunpack.c.h.b16 %v5726
  %v5943 = vunpack.c.l.b16 %v5727
  %v5944 = vunpack.c.h.b16 %v5727
  %v5945 = vunpack.c.l.b16 %v5728
  %v5946 = vunpack.c.h.b16 %v5728
  %v5947 = vunpack.c.l.b16 %v5729
  %v5948 = vunpack.c.h.b16 %v5729
  %v5949 = vunpack.c.l.b16 %v5730
  %v5950 = vunpack.c.h.b16 %v5730
  %v5951 = vunpack.c.l.b16 %v5731
  %v5952 = vunpack.c.h.b16 %v5731
  %v5953 = vunpack.c.l.b16 %v5732
  %v5954 = vunpack.c.h.b16 %v5732
  %v5955 = vunpack.c.l.b16 %v5733
  %v5956 = vunpack.c.h.b16 %v5733
  %v5957 = vunpack.c.l.b16 %v5734
  %v5958 = vunpack.c.h.b16 %v5734
  %v5959 = vunpack.c.l.b16 %v5735
  %v5960 = vunpack.c.h.b16 %v5735
  %v5961 = vunpack.c.l.b16 %v5736
  %v5962 = vunpack.c.h.b16 %v5736
  %v5963 = vunpack.c.l.b16 %v5737
  %v5964 = vunpack.c.h.b16 %v5737
  %v5965 = vunpack.c.l.b16 %v5738
  %v5966 = vunpack.c.h.b16 %v5738
  %v5967 = vunpack.c.l.b16 %v5739
  %v5968 = vunpack.c.h.b16 %v5739
  %v5969 = vunpack.c.l.b16 %v5740
  %v5970 = vunpack.c.h.b16 %v5740
  %v5971 = vunpack.c.l.b16 %v5741
  %v5972 = vunpack.c.h.b16 %v5741
  %v5973 = vunpack.c.l.b16 %v5742
  %v5974 = vunpack.c.h.b16 %v5742
  %v5975 = vunpack.c.l.b16 %v5743
  %v5976 = vunpack.c.h.b16 %v5743
  %v5977 = vunpack.c.l.b16 %v5744
  %v5978 = vunpack.c.h.b16 %v5744
  %v5979 = vunpack.c.l.b16 %v5745
  %v5980 = vunpack.c.h.b16 %v5745
  %v5981 = vunpack.c.l.b16 %v5746
  %v5982 = vunpack.c.h.b16 %v5746
  %v5983 = vunpack.c.l.b16 %v5747
  %v5984 = vunpack.c.h.b16 %v5747
  %v5985 = vunpack.c.l.b16 %v5748
  %v5986 = vunpack.c.h.b16 %v5748
  %v5987 = vunpack.c.l.b16 %v5749
  %v5988 = vunpack.c.h.b16 %v5749
  %v5989 = vunpack.c.l.b16 %v5750
  %v5990 = vunpack.c.h.b16 %v5750
  %v5991 = vunpack.c.l.b16 %v5751
  %v5992 = vunpack.c.h.b16 %v5751
  %v5993 = vunpack.c.l.b16 %v5752
  %v5994 = vunpack.c.h.b16 %v5752
  %v5995 = vunpack.c.l.b16 %v5753
  %v5996 = vunpack.c.h.b16 %v5753
  %v5997 = vunpack.c.l.b16 %v5754
  %v5998 = vunpack.c.h.b16 %v5754
  %v5999 = vunpack.c.l.b16 %v5755
  %v6000 = vunpack.c.h.b16 %v5755
  %v6001 = vunpack.c.l.b16 %v5756
  %v6002 = vunpack.c.h.b16 %v5756
  %v6003 = vunpack.c.l.b16 %v5757
  %v6004 = vunpack.c.h.b16 %v5757
  %v6005 = vunpack.c.l.b16 %v5758
  %v6006 = vunpack.c.h.b16 %v5758
  %v6007 = vpack.c.b16 %v5941, %v5919
  %v6008 = vpack.c.b16 %v5942, %v5920
  %v6009 = vpack.c.b16 %v5943, %v5921
  %v6010 = vpack.c.b16 %v5944, %v5922
  %v6011 = vpack.c.b16 %v5945, %v5923
  %v6012 = vpack.c.b16 %v5946, %v5924
  %v6013 = vpack.c.b16 %v5947, %v5925
  %v6014 = vpack.c.b16 %v5948, %v5926
  %v6015 = vpack.c.b16 %v5949, %v5927
  %v6016 = vpack.c.b16 %v5950, %v5928
  %v6017 = vpack.c.b16 %v5951, %v5929
  %v6018 = vpack.c.b16 %v5952, %v5930
  %v6019 = vpack.c.b16 %v5953, %v5931
  %v6020 = vpack.c.b16 %v5954, %v5932
  %v6021 = vpack.c.b16 %v5955, %v5933
  %v6022 = vpack.c.b16 %v5956, %v5934
  %v6023 = vpack.c.b16 %v5957, %v5935
  %v6024 = vpack.c.b16 %v5958, %v5936
  %v6025 = vpack.c.b16 %v5959, %v5937
  %v6026 = vpack.c.b16 %v5960, %v5938
  %v6027 = vpack.c.b16 %v5961, %v5939
  %v6028 = vpack.c.b16 %v5962, %v5940
  %v6029 = vpack.c.b16 %v5985, %v5963
  %v6030 = vpack.c.b16 %v5986, %v5964
  %v6031 = vpack.c.b16 %v5987, %v5965
  %v6032 = vpack.c.b16 %v5988, %v5966
  %v6033 = vpack.c.b16 %v5989, %v5967
  %v6034 = vpack.c.b16 %v5990, %v5968
  %v6035 = vpack.c.b16 %v5991, %v5969
  %v6036 = vpack.c.b16 %v5992, %v5970
  %v6037 = vpack.c.b16 %v5993, %v5971
  %v6038 = vpack.c.b16 %v5994, %v5972
  %v6039 = vpack.c.b16 %v5995, %v5973
  %v6040 = vpack.c.b16 %v5996, %v5974
  %v6041 = vpack.c.b16 %v5997, %v5975
  %v6042 = vpack.c.b16 %v5998, %v5976
  %v6043 = vpack.c.b16 %v5999, %v5977
  %v6044 = vpack.c.b16 %v6000, %v5978
  %v6045 = vpack.c.b16 %v6001, %v5979
  %v6046 = vpack.c.b16 %v6002, %v5980
  %v6047 = vpack.c.b16 %v6003, %v5981
  %v6048 = vpack.c.b16 %v6004, %v5982
  %v6049 = vpack.c.b16 %v6005, %v5983
  %v6050 = vpack.c.b16 %v6006, %v5984
  %v6096 = vsel %vm324, %v5714, 0
  %6098 = vmatprep.subr.bf16.mxu0 %v6008
  %6099 = vmatpush1.bf16.msra.mxu0 %v6007
  %6100 = vmatprep.subr.bf16.mxu0 %v6030
  %6101 = vmatpush1.bf16.msra.mxu0 %v6029
  %6102 = vmatprep.subr.bf16.mxu0 0
  %6103 = vmatpush1.bf16.msra.mxu0 0
  %6104 = vmatprep.subr.bf16.mxu0 0
  %6105 = vmatpush1.bf16.msra.mxu0 0
  %6106 = vmatprep.subr.bf16.mxu0 0
  %6107 = vmatpush1.bf16.msra.mxu0 0
  %6108 = vmatprep.subr.bf16.mxu0 0
  %6109 = vmatpush1.bf16.msra.mxu0 0
  %6110 = vmatprep.subr.bf16.mxu0 0
  %6111 = vmatpush1.bf16.msra.mxu0 0
  %6112 = vmatprep.subr.bf16.mxu0 0
  %6113 = vmatpush1.bf16.msra.mxu0 0
  %6114 = vmatprep.subr.bf16.mxu0 0
  %6115 = vmatpush1.bf16.msra.mxu0 0
  %6116 = vmatprep.subr.bf16.mxu0 0
  %6117 = vmatpush1.bf16.msra.mxu0 0
  %6118 = vmatprep.subr.bf16.mxu0 0
  %6119 = vmatpush1.bf16.msra.mxu0 0
  %6120 = vmatprep.subr.bf16.mxu0 0
  %6121 = vmatpush1.bf16.msra.mxu0 0
  %6122 = vmatprep.subr.bf16.mxu0 0
  %6123 = vmatpush1.bf16.msra.mxu0 0
  %6124 = vmatprep.subr.bf16.mxu0 0
  %6125 = vmatpush1.bf16.msra.mxu0 0
  %6126 = vmatprep.subr.bf16.mxu0 0
  %6127 = vmatpush1.bf16.msra.mxu0 0
  %6128 = vmatprep.subr.bf16.mxu0 0
  %6129 = vmatpush1.bf16.msra.mxu0 0
  %6130 = vmatprep.mubr.bf16.mxu0 0
  %6131 = vmatmul.mubr.bf16.gmra.mrb[0].mxu0 %v6096
  %v6132 = vpop.f32.mrb[0].mxu0
  %v6133 = vadd.f32 %v5768, %v6132
  %v6134 = vpop.f32.mrb[0].mxu0
  %v6135 = vadd.f32 %v5772, %v6134
  %v6136 = vpop.f32.mrb[0].mxu0
  %v6137 = vpop.f32.mrb[0].mxu0
  %6138 = vdwg.mxu0
  %6139 = vmatprep.subr.bf16.mxu0 %v6010
  %6140 = vmatpush1.bf16.msra.mxu0 %v6009
  %6141 = vmatprep.subr.bf16.mxu0 %v6032
  %6142 = vmatpush1.bf16.msra.mxu0 %v6031
  %6143 = vmatprep.subr.bf16.mxu0 0
  %6144 = vmatpush1.bf16.msra.mxu0 0
  %6145 = vmatprep.subr.bf16.mxu0 0
  %6146 = vmatpush1.bf16.msra.mxu0 0
  %6147 = vmatprep.subr.bf16.mxu0 0
  %6148 = vmatpush1.bf16.msra.mxu0 0
  %6149 = vmatprep.subr.bf16.mxu0 0
  %6150 = vmatpush1.bf16.msra.mxu0 0
  %6151 = vmatprep.subr.bf16.mxu0 0
  %6152 = vmatpush1.bf16.msra.mxu0 0
  %6153 = vmatprep.subr.bf16.mxu0 0
  %6154 = vmatpush1.bf16.msra.mxu0 0
  %6155 = vmatprep.subr.bf16.mxu0 0
  %6156 = vmatpush1.bf16.msra.mxu0 0
  %6157 = vmatprep.subr.bf16.mxu0 0
  %6158 = vmatpush1.bf16.msra.mxu0 0
  %6159 = vmatprep.subr.bf16.mxu0 0
  %6160 = vmatpush1.bf16.msra.mxu0 0
  %6161 = vmatprep.subr.bf16.mxu0 0
  %6162 = vmatpush1.bf16.msra.mxu0 0
  %6163 = vmatprep.subr.bf16.mxu0 0
  %6164 = vmatpush1.bf16.msra.mxu0 0
  %6165 = vmatprep.subr.bf16.mxu0 0
  %6166 = vmatpush1.bf16.msra.mxu0 0
  %6167 = vmatprep.subr.bf16.mxu0 0
  %6168 = vmatpush1.bf16.msra.mxu0 0
  %6169 = vmatprep.subr.bf16.mxu0 0
  %6170 = vmatpush1.bf16.msra.mxu0 0
  %6171 = vmatprep.mubr.bf16.mxu0 0
  %6172 = vmatmul.mubr.bf16.gmra.mrb[0].mxu0 %v6096
  %v6173 = vpop.f32.mrb[0].mxu0
  %v6174 = vadd.f32 %v5776, %v6173
  %v6175 = vpop.f32.mrb[0].mxu0
  %v6176 = vadd.f32 %v5780, %v6175
  %v6177 = vpop.f32.mrb[0].mxu0
  %v6178 = vpop.f32.mrb[0].mxu0
  %6179 = vdwg.mxu0
  %6180 = vmatprep.subr.bf16.mxu0 %v6012
  %6181 = vmatpush1.bf16.msra.mxu0 %v6011
  %6182 = vmatprep.subr.bf16.mxu0 %v6034
  %6183 = vmatpush1.bf16.msra.mxu0 %v6033
  %6184 = vmatprep.subr.bf16.mxu0 0
  %6185 = vmatpush1.bf16.msra.mxu0 0
  %6186 = vmatprep.subr.bf16.mxu0 0
  %6187 = vmatpush1.bf16.msra.mxu0 0
  %6188 = vmatprep.subr.bf16.mxu0 0
  %6189 = vmatpush1.bf16.msra.mxu0 0
  %6190 = vmatprep.subr.bf16.mxu0 0
  %6191 = vmatpush1.bf16.msra.mxu0 0
  %6192 = vmatprep.subr.bf16.mxu0 0
  %6193 = vmatpush1.bf16.msra.mxu0 0
  %6194 = vmatprep.subr.bf16.mxu0 0
  %6195 = vmatpush1.bf16.msra.mxu0 0
  %6196 = vmatprep.subr.bf16.mxu0 0
  %6197 = vmatpush1.bf16.msra.mxu0 0
  %6198 = vmatprep.subr.bf16.mxu0 0
  %6199 = vmatpush1.bf16.msra.mxu0 0
  %6200 = vmatprep.subr.bf16.mxu0 0
  %6201 = vmatpush1.bf16.msra.mxu0 0
  %6202 = vmatprep.subr.bf16.mxu0 0
  %6203 = vmatpush1.bf16.msra.mxu0 0
  %6204 = vmatprep.subr.bf16.mxu0 0
  %6205 = vmatpush1.bf16.msra.mxu0 0
  %6206 = vmatprep.subr.bf16.mxu0 0
  %6207 = vmatpush1.bf16.msra.mxu0 0
  %6208 = vmatprep.subr.bf16.mxu0 0
  %6209 = vmatpush1.bf16.msra.mxu0 0
  %6210 = vmatprep.subr.bf16.mxu0 0
  %6211 = vmatpush1.bf16.msra.mxu0 0
  %6212 = vmatprep.mubr.bf16.mxu0 0
  %6213 = vmatmul.mubr.bf16.gmra.mrb[0].mxu0 %v6096
  %v6214 = vpop.f32.mrb[0].mxu0
  %v6215 = vadd.f32 %v5784, %v6214
  %v6216 = vpop.f32.mrb[0].mxu0
  %v6217 = vadd.f32 %v5788, %v6216
  %v6218 = vpop.f32.mrb[0].mxu0
  %v6219 = vpop.f32.mrb[0].mxu0
  %6220 = vdwg.mxu0
  %6221 = vmatprep.subr.bf16.mxu0 %v6014
  %6222 = vmatpush1.bf16.msra.mxu0 %v6013
  %6223 = vmatprep.subr.bf16.mxu0 %v6036
  %6224 = vmatpush1.bf16.msra.mxu0 %v6035
  %6225 = vmatprep.subr.bf16.mxu0 0
  %6226 = vmatpush1.bf16.msra.mxu0 0
  %6227 = vmatprep.subr.bf16.mxu0 0
  %6228 = vmatpush1.bf16.msra.mxu0 0
  %6229 = vmatprep.subr.bf16.mxu0 0
  %6230 = vmatpush1.bf16.msra.mxu0 0
  %6231 = vmatprep.subr.bf16.mxu0 0
  %6232 = vmatpush1.bf16.msra.mxu0 0
  %6233 = vmatprep.subr.bf16.mxu0 0
  %6234 = vmatpush1.bf16.msra.mxu0 0
  %6235 = vmatprep.subr.bf16.mxu0 0
  %6236 = vmatpush1.bf16.msra.mxu0 0
  %6237 = vmatprep.subr.bf16.mxu0 0
  %6238 = vmatpush1.bf16.msra.mxu0 0
  %6239 = vmatprep.subr.bf16.mxu0 0
  %6240 = vmatpush1.bf16.msra.mxu0 0
  %6241 = vmatprep.subr.bf16.mxu0 0
  %6242 = vmatpush1.bf16.msra.mxu0 0
  %6243 = vmatprep.subr.bf16.mxu0 0
  %6244 = vmatpush1.bf16.msra.mxu0 0
  %6245 = vmatprep.subr.bf16.mxu0 0
  %6246 = vmatpush1.bf16.msra.mxu0 0
  %6247 = vmatprep.subr.bf16.mxu0 0
  %6248 = vmatpush1.bf16.msra.mxu0 0
  %6249 = vmatprep.subr.bf16.mxu0 0
  %6250 = vmatpush1.bf16.msra.mxu0 0
  %6251 = vmatprep.subr.bf16.mxu0 0
  %6252 = vmatpush1.bf16.msra.mxu0 0
  %6253 = vmatprep.mubr.bf16.mxu0 0
  %6254 = vmatmul.mubr.bf16.gmra.mrb[0].mxu0 %v6096
  %v6255 = vpop.f32.mrb[0].mxu0
  %v6256 = vadd.f32 %v5792, %v6255
  %v6257 = vpop.f32.mrb[0].mxu0
  %v6258 = vadd.f32 %v5796, %v6257
  %v6259 = vpop.f32.mrb[0].mxu0
  %v6260 = vpop.f32.mrb[0].mxu0
  %6261 = vdwg.mxu0
  %6262 = vmatprep.subr.bf16.mxu0 %v6016
  %6263 = vmatpush1.bf16.msra.mxu0 %v6015
  %6264 = vmatprep.subr.bf16.mxu0 %v6038
  %6265 = vmatpush1.bf16.msra.mxu0 %v6037
  %6266 = vmatprep.subr.bf16.mxu0 0
  %6267 = vmatpush1.bf16.msra.mxu0 0
  %6268 = vmatprep.subr.bf16.mxu0 0
  %6269 = vmatpush1.bf16.msra.mxu0 0
  %6270 = vmatprep.subr.bf16.mxu0 0
  %6271 = vmatpush1.bf16.msra.mxu0 0
  %6272 = vmatprep.subr.bf16.mxu0 0
  %6273 = vmatpush1.bf16.msra.mxu0 0
  %6274 = vmatprep.subr.bf16.mxu0 0
  %6275 = vmatpush1.bf16.msra.mxu0 0
  %6276 = vmatprep.subr.bf16.mxu0 0
  %6277 = vmatpush1.bf16.msra.mxu0 0
  %6278 = vmatprep.subr.bf16.mxu0 0
  %6279 = vmatpush1.bf16.msra.mxu0 0
  %6280 = vmatprep.subr.bf16.mxu0 0
  %6281 = vmatpush1.bf16.msra.mxu0 0
  %6282 = vmatprep.subr.bf16.mxu0 0
  %6283 = vmatpush1.bf16.msra.mxu0 0
  %6284 = vmatprep.subr.bf16.mxu0 0
  %6285 = vmatpush1.bf16.msra.mxu0 0
  %6286 = vmatprep.subr.bf16.mxu0 0
  %6287 = vmatpush1.bf16.msra.mxu0 0
  %6288 = vmatprep.subr.bf16.mxu0 0
  %6289 = vmatpush1.bf16.msra.mxu0 0
  %6290 = vmatprep.subr.bf16.mxu0 0
  %6291 = vmatpush1.bf16.msra.mxu0 0
  %6292 = vmatprep.subr.bf16.mxu0 0
  %6293 = vmatpush1.bf16.msra.mxu0 0
  %6294 = vmatprep.mubr.bf16.mxu0 0
  %6295 = vmatmul.mubr.bf16.gmra.mrb[0].mxu0 %v6096
  %v6296 = vpop.f32.mrb[0].mxu0
  %v6297 = vadd.f32 %v5800, %v6296
  %v6298 = vpop.f32.mrb[0].mxu0
  %v6299 = vadd.f32 %v5804, %v6298
  %v6300 = vpop.f32.mrb[0].mxu0
  %v6301 = vpop.f32.mrb[0].mxu0
  %6302 = vdwg.mxu0
  %6303 = vmatprep.subr.bf16.mxu0 %v6018
  %6304 = vmatpush1.bf16.msra.mxu0 %v6017
  %6305 = vmatprep.subr.bf16.mxu0 %v6040
  %6306 = vmatpush1.bf16.msra.mxu0 %v6039
  %6307 = vmatprep.subr.bf16.mxu0 0
  %6308 = vmatpush1.bf16.msra.mxu0 0
  %6309 = vmatprep.subr.bf16.mxu0 0
  %6310 = vmatpush1.bf16.msra.mxu0 0
  %6311 = vmatprep.subr.bf16.mxu0 0
  %6312 = vmatpush1.bf16.msra.mxu0 0
  %6313 = vmatprep.subr.bf16.mxu0 0
  %6314 = vmatpush1.bf16.msra.mxu0 0
  %6315 = vmatprep.subr.bf16.mxu0 0
  %6316 = vmatpush1.bf16.msra.mxu0 0
  %6317 = vmatprep.subr.bf16.mxu0 0
  %6318 = vmatpush1.bf16.msra.mxu0 0
  %6319 = vmatprep.subr.bf16.mxu0 0
  %6320 = vmatpush1.bf16.msra.mxu0 0
  %6321 = vmatprep.subr.bf16.mxu0 0
  %6322 = vmatpush1.bf16.msra.mxu0 0
  %6323 = vmatprep.subr.bf16.mxu0 0
  %6324 = vmatpush1.bf16.msra.mxu0 0
  %6325 = vmatprep.subr.bf16.mxu0 0
  %6326 = vmatpush1.bf16.msra.mxu0 0
  %6327 = vmatprep.subr.bf16.mxu0 0
  %6328 = vmatpush1.bf16.msra.mxu0 0
  %6329 = vmatprep.subr.bf16.mxu0 0
  %6330 = vmatpush1.bf16.msra.mxu0 0
  %6331 = vmatprep.subr.bf16.mxu0 0
  %6332 = vmatpush1.bf16.msra.mxu0 0
  %6333 = vmatprep.subr.bf16.mxu0 0
  %6334 = vmatpush1.bf16.msra.mxu0 0
  %6335 = vmatprep.mubr.bf16.mxu0 0
  %6336 = vmatmul.mubr.bf16.gmra.mrb[0].mxu0 %v6096
  %v6337 = vpop.f32.mrb[0].mxu0
  %v6338 = vadd.f32 %v5808, %v6337
  %v6339 = vpop.f32.mrb[0].mxu0
  %v6340 = vadd.f32 %v5812, %v6339
  %v6341 = vpop.f32.mrb[0].mxu0
  %v6342 = vpop.f32.mrb[0].mxu0
  %6343 = vdwg.mxu0
  %6344 = vmatprep.subr.bf16.mxu0 %v6020
  %6345 = vmatpush1.bf16.msra.mxu0 %v6019
  %6346 = vmatprep.subr.bf16.mxu0 %v6042
  %6347 = vmatpush1.bf16.msra.mxu0 %v6041
  %6348 = vmatprep.subr.bf16.mxu0 0
  %6349 = vmatpush1.bf16.msra.mxu0 0
  %6350 = vmatprep.subr.bf16.mxu0 0
  %6351 = vmatpush1.bf16.msra.mxu0 0
  %6352 = vmatprep.subr.bf16.mxu0 0
  %6353 = vmatpush1.bf16.msra.mxu0 0
  %6354 = vmatprep.subr.bf16.mxu0 0
  %6355 = vmatpush1.bf16.msra.mxu0 0
  %6356 = vmatprep.subr.bf16.mxu0 0
  %6357 = vmatpush1.bf16.msra.mxu0 0
  %6358 = vmatprep.subr.bf16.mxu0 0
  %6359 = vmatpush1.bf16.msra.mxu0 0
  %6360 = vmatprep.subr.bf16.mxu0 0
  %6361 = vmatpush1.bf16.msra.mxu0 0
  %6362 = vmatprep.subr.bf16.mxu0 0
  %6363 = vmatpush1.bf16.msra.mxu0 0
  %6364 = vmatprep.subr.bf16.mxu0 0
  %6365 = vmatpush1.bf16.msra.mxu0 0
  %6366 = vmatprep.subr.bf16.mxu0 0
  %6367 = vmatpush1.bf16.msra.mxu0 0
  %6368 = vmatprep.subr.bf16.mxu0 0
  %6369 = vmatpush1.bf16.msra.mxu0 0
  %6370 = vmatprep.subr.bf16.mxu0 0
  %6371 = vmatpush1.bf16.msra.mxu0 0
  %6372 = vmatprep.subr.bf16.mxu0 0
  %6373 = vmatpush1.bf16.msra.mxu0 0
  %6374 = vmatprep.subr.bf16.mxu0 0
  %6375 = vmatpush1.bf16.msra.mxu0 0
  %6376 = vmatprep.mubr.bf16.mxu0 0
  %6377 = vmatmul.mubr.bf16.gmra.mrb[0].mxu0 %v6096
  %v6378 = vpop.f32.mrb[0].mxu0
  %v6379 = vadd.f32 %v5816, %v6378
  %v6380 = vpop.f32.mrb[0].mxu0
  %v6381 = vadd.f32 %v5820, %v6380
  %v6382 = vpop.f32.mrb[0].mxu0
  %v6383 = vpop.f32.mrb[0].mxu0
  %6384 = vdwg.mxu0
  %6385 = vmatprep.subr.bf16.mxu0 %v6022
  %6386 = vmatpush1.bf16.msra.mxu0 %v6021
  %6387 = vmatprep.subr.bf16.mxu0 %v6044
  %6388 = vmatpush1.bf16.msra.mxu0 %v6043
  %6389 = vmatprep.subr.bf16.mxu0 0
  %6390 = vmatpush1.bf16.msra.mxu0 0
  %6391 = vmatprep.subr.bf16.mxu0 0
  %6392 = vmatpush1.bf16.msra.mxu0 0
  %6393 = vmatprep.subr.bf16.mxu0 0
  %6394 = vmatpush1.bf16.msra.mxu0 0
  %6395 = vmatprep.subr.bf16.mxu0 0
  %6396 = vmatpush1.bf16.msra.mxu0 0
  %6397 = vmatprep.subr.bf16.mxu0 0
  %6398 = vmatpush1.bf16.msra.mxu0 0
  %6399 = vmatprep.subr.bf16.mxu0 0
  %6400 = vmatpush1.bf16.msra.mxu0 0
  %6401 = vmatprep.subr.bf16.mxu0 0
  %6402 = vmatpush1.bf16.msra.mxu0 0
  %6403 = vmatprep.subr.bf16.mxu0 0
  %6404 = vmatpush1.bf16.msra.mxu0 0
  %6405 = vmatprep.subr.bf16.mxu0 0
  %6406 = vmatpush1.bf16.msra.mxu0 0
  %6407 = vmatprep.subr.bf16.mxu0 0
  %6408 = vmatpush1.bf16.msra.mxu0 0
  %6409 = vmatprep.subr.bf16.mxu0 0
  %6410 = vmatpush1.bf16.msra.mxu0 0
  %6411 = vmatprep.subr.bf16.mxu0 0
  %6412 = vmatpush1.bf16.msra.mxu0 0
  %6413 = vmatprep.subr.bf16.mxu0 0
  %6414 = vmatpush1.bf16.msra.mxu0 0
  %6415 = vmatprep.subr.bf16.mxu0 0
  %6416 = vmatpush1.bf16.msra.mxu0 0
  %6417 = vmatprep.mubr.bf16.mxu0 0
  %6418 = vmatmul.mubr.bf16.gmra.mrb[0].mxu0 %v6096
  %v6419 = vpop.f32.mrb[0].mxu0
  %v6420 = vadd.f32 %v5824, %v6419
  %v6421 = vpop.f32.mrb[0].mxu0
  %v6422 = vadd.f32 %v5828, %v6421
  %v6423 = vpop.f32.mrb[0].mxu0
  %v6424 = vpop.f32.mrb[0].mxu0
  %6425 = vdwg.mxu0
  %6426 = vmatprep.subr.bf16.mxu0 %v6024
  %6427 = vmatpush1.bf16.msra.mxu0 %v6023
  %6428 = vmatprep.subr.bf16.mxu0 %v6046
  %6429 = vmatpush1.bf16.msra.mxu0 %v6045
  %6430 = vmatprep.subr.bf16.mxu0 0
  %6431 = vmatpush1.bf16.msra.mxu0 0
  %6432 = vmatprep.subr.bf16.mxu0 0
  %6433 = vmatpush1.bf16.msra.mxu0 0
  %6434 = vmatprep.subr.bf16.mxu0 0
  %6435 = vmatpush1.bf16.msra.mxu0 0
  %6436 = vmatprep.subr.bf16.mxu0 0
  %6437 = vmatpush1.bf16.msra.mxu0 0
  %6438 = vmatprep.subr.bf16.mxu0 0
  %6439 = vmatpush1.bf16.msra.mxu0 0
  %6440 = vmatprep.subr.bf16.mxu0 0
  %6441 = vmatpush1.bf16.msra.mxu0 0
  %6442 = vmatprep.subr.bf16.mxu0 0
  %6443 = vmatpush1.bf16.msra.mxu0 0
  %6444 = vmatprep.subr.bf16.mxu0 0
  %6445 = vmatpush1.bf16.msra.mxu0 0
  %6446 = vmatprep.subr.bf16.mxu0 0
  %6447 = vmatpush1.bf16.msra.mxu0 0
  %6448 = vmatprep.subr.bf16.mxu0 0
  %6449 = vmatpush1.bf16.msra.mxu0 0
  %6450 = vmatprep.subr.bf16.mxu0 0
  %6451 = vmatpush1.bf16.msra.mxu0 0
  %6452 = vmatprep.subr.bf16.mxu0 0
  %6453 = vmatpush1.bf16.msra.mxu0 0
  %6454 = vmatprep.subr.bf16.mxu0 0
  %6455 = vmatpush1.bf16.msra.mxu0 0
  %6456 = vmatprep.subr.bf16.mxu0 0
  %6457 = vmatpush1.bf16.msra.mxu0 0
  %6458 = vmatprep.mubr.bf16.mxu0 0
  %6459 = vmatmul.mubr.bf16.gmra.mrb[0].mxu0 %v6096
  %v6460 = vpop.f32.mrb[0].mxu0
  %v6461 = vadd.f32 %v5832, %v6460
  %v6462 = vpop.f32.mrb[0].mxu0
  %v6463 = vadd.f32 %v5836, %v6462
  %v6464 = vpop.f32.mrb[0].mxu0
  %v6465 = vpop.f32.mrb[0].mxu0
  %6466 = vdwg.mxu0
  %6467 = vmatprep.subr.bf16.mxu0 %v6026
  %6468 = vmatpush1.bf16.msra.mxu0 %v6025
  %6469 = vmatprep.subr.bf16.mxu0 %v6048
  %6470 = vmatpush1.bf16.msra.mxu0 %v6047
  %6471 = vmatprep.subr.bf16.mxu0 0
  %6472 = vmatpush1.bf16.msra.mxu0 0
  %6473 = vmatprep.subr.bf16.mxu0 0
  %6474 = vmatpush1.bf16.msra.mxu0 0
  %6475 = vmatprep.subr.bf16.mxu0 0
  %6476 = vmatpush1.bf16.msra.mxu0 0
  %6477 = vmatprep.subr.bf16.mxu0 0
  %6478 = vmatpush1.bf16.msra.mxu0 0
  %6479 = vmatprep.subr.bf16.mxu0 0
  %6480 = vmatpush1.bf16.msra.mxu0 0
  %6481 = vmatprep.subr.bf16.mxu0 0
  %6482 = vmatpush1.bf16.msra.mxu0 0
  %6483 = vmatprep.subr.bf16.mxu0 0
  %6484 = vmatpush1.bf16.msra.mxu0 0
  %6485 = vmatprep.subr.bf16.mxu0 0
  %6486 = vmatpush1.bf16.msra.mxu0 0
  %6487 = vmatprep.subr.bf16.mxu0 0
  %6488 = vmatpush1.bf16.msra.mxu0 0
  %6489 = vmatprep.subr.bf16.mxu0 0
  %6490 = vmatpush1.bf16.msra.mxu0 0
  %6491 = vmatprep.subr.bf16.mxu0 0
  %6492 = vmatpush1.bf16.msra.mxu0 0
  %6493 = vmatprep.subr.bf16.mxu0 0
  %6494 = vmatpush1.bf16.msra.mxu0 0
  %6495 = vmatprep.subr.bf16.mxu0 0
  %6496 = vmatpush1.bf16.msra.mxu0 0
  %6497 = vmatprep.subr.bf16.mxu0 0
  %6498 = vmatpush1.bf16.msra.mxu0 0
  %6499 = vmatprep.mubr.bf16.mxu0 0
  %6500 = vmatmul.mubr.bf16.gmra.mrb[0].mxu0 %v6096
  %v6501 = vpop.f32.mrb[0].mxu0
  %v6502 = vadd.f32 %v5840, %v6501
  %v6503 = vpop.f32.mrb[0].mxu0
  %v6504 = vadd.f32 %v5844, %v6503
  %v6505 = vpop.f32.mrb[0].mxu0
  %v6506 = vpop.f32.mrb[0].mxu0
  %6507 = vdwg.mxu0
  %6508 = vmatprep.subr.bf16.mxu0 %v6028
  %6509 = vmatpush1.bf16.msra.mxu0 %v6027
  %6510 = vmatprep.subr.bf16.mxu0 %v6050
  %6511 = vmatpush1.bf16.msra.mxu0 %v6049
  %6512 = vmatprep.subr.bf16.mxu0 0
  %6513 = vmatpush1.bf16.msra.mxu0 0
  %6514 = vmatprep.subr.bf16.mxu0 0
  %6515 = vmatpush1.bf16.msra.mxu0 0
  %6516 = vmatprep.subr.bf16.mxu0 0
  %6517 = vmatpush1.bf16.msra.mxu0 0
  %6518 = vmatprep.subr.bf16.mxu0 0
  %6519 = vmatpush1.bf16.msra.mxu0 0
  %6520 = vmatprep.subr.bf16.mxu0 0
  %6521 = vmatpush1.bf16.msra.mxu0 0
  %6522 = vmatprep.subr.bf16.mxu0 0
  %6523 = vmatpush1.bf16.msra.mxu0 0
  %6524 = vmatprep.subr.bf16.mxu0 0
  %6525 = vmatpush1.bf16.msra.mxu0 0
  %6526 = vmatprep.subr.bf16.mxu0 0
  %6527 = vmatpush1.bf16.msra.mxu0 0
  %6528 = vmatprep.subr.bf16.mxu0 0
  %6529 = vmatpush1.bf16.msra.mxu0 0
  %6530 = vmatprep.subr.bf16.mxu0 0
  %6531 = vmatpush1.bf16.msra.mxu0 0
  %6532 = vmatprep.subr.bf16.mxu0 0
  %6533 = vmatpush1.bf16.msra.mxu0 0
  %6534 = vmatprep.subr.bf16.mxu0 0
  %6535 = vmatpush1.bf16.msra.mxu0 0
  %6536 = vmatprep.subr.bf16.mxu0 0
  %6537 = vmatpush1.bf16.msra.mxu0 0
  %6538 = vmatprep.subr.bf16.mxu0 0
  %6539 = vmatpush1.bf16.msra.mxu0 0
  %6540 = vmatprep.mubr.bf16.mxu0 0
  %6541 = vmatmul.mubr.bf16.gmra.mrb[0].mxu0 %v6096
  %v6542 = vpop.f32.mrb[0].mxu0
  %v6543 = vadd.f32 %v5848, %v6542
  %v6544 = vpop.f32.mrb[0].mxu0
  %v6545 = vadd.f32 %v5852, %v6544
  %v6546 = vpop.f32.mrb[0].mxu0
  %v6547 = vpop.f32.mrb[0].mxu0
  %6548 = vdwg.mxu0
  %6549 = vst [vmem:[%s23] sm:$0x3f] %v6133
  %6550 = vst [vmem:[%s23 + $0x8] sm:$0x3f] %v6135
  %6551 = vst [vmem:[%s23 + $0x10] sm:$0x3f] %v6174
  %6552 = vst [vmem:[%s23 + $0x18] sm:$0x3f] %v6176
  %6553 = vst [vmem:[%s23 + $0x20] sm:$0x3f] %v6215
  %6554 = vst [vmem:[%s23 + $0x28] sm:$0x3f] %v6217
  %6555 = vst [vmem:[%s23 + $0x30] sm:$0x3f] %v6256
  %6556 = vst [vmem:[%s23 + $0x38] sm:$0x3f] %v6258
  %6557 = vst [vmem:[%s23 + $0x40] sm:$0x3f] %v6297
  %6558 = vst [vmem:[%s23 + $0x48] sm:$0x3f] %v6299
  %6559 = vst [vmem:[%s23 + $0x50] sm:$0x3f] %v6338
  %6560 = vst [vmem:[%s23 + $0x58] sm:$0x3f] %v6340
  %6561 = vst [vmem:[%s23 + $0x60] sm:$0x3f] %v6379
  %6562 = vst [vmem:[%s23 + $0x68] sm:$0x3f] %v6381
  %6563 = vst [vmem:[%s23 + $0x70] sm:$0x3f] %v6420
  %6564 = vst [vmem:[%s23 + $0x78] sm:$0x3f] %v6422
  %6565 = vst [vmem:[%s23 + $0x80] sm:$0x3f] %v6461
  %6566 = vst [vmem:[%s23 + $0x88] sm:$0x3f] %v6463
  %6567 = vst [vmem:[%s23 + $0x90] sm:$0x3f] %v6502
  %6568 = vst [vmem:[%s23 + $0x98] sm:$0x3f] %v6504
  %6569 = vst [vmem:[%s23 + $0xa0] sm:$0x3f] %v6543
  %6570 = vst [vmem:[%s23 + $0xa8] sm:$0x3f] %v6545
  // Predicated region
  $region94: #{rt1_forward.1} parent=0 // pred_check
    _
  $region95: #{rt1_forward.1} parent=0 // pred_check_branch
    %6572 = sbr.rel (0) target = $region97
  $region96: #{rt1_forward.1} parent=0 // pred_region
    _
  $region97: #{rt1_forward.1} parent=0 // pred_fallthru
    _
  // Predicated region
  $region98: #{rt1_forward.1} parent=0 // pred_check
    _
  $region99: #{rt1_forward.1} parent=0 // pred_check_branch
    %6574 = sbr.rel (0) target = $region101
  $region100: #{rt1_forward.1} parent=0 // pred_region
    _
  $region101: #{rt1_forward.1} parent=0 // pred_fallthru
    _

</llo_original>
